<compile_context>
chip_gen: v6e
topology: v6e:2x2x1
jax: 0.10.0
libtpu: 0.0.40
codegen_flags: <defaults>
</compile_context>

<pallas_src>
import jax
import jax.numpy as jnp
from jax.experimental import pallas as pl
from jax.experimental.pallas import tpu as pltpu


# ------------------------- fixed architecture sizes -------------------------
K = 5                 # conv kernel size
H0, W0 = 28, 28       # input spatial size (required by the fixed view(-1, 320))
C1, C2 = 10, 20       # conv1 / conv2 output channels
OH1, OW1 = 24, 24     # conv1 output spatial
PH1, PW1 = 12, 12     # after 2x2 pool
OH2, OW2 = 8, 8       # conv2 output spatial
PH2, PW2 = 4, 4       # after 2x2 pool
NF1, NF2 = 50, 10     # fc1 / fc2 output features

TB_MAX = 32           # max batch tile (multiple of 8: batch lives in sublanes)
LANES = 128           # channel / feature lane padding
T1P = 32              # conv1 tap contraction dim padded 25 -> 32
CI2P = 16             # conv2 per-kw lane stride (10 channels padded to 16)
CF1P = 32             # fc1 per-spatial-column lane stride (20 channels -> 32)
NEG = -1e30           # mask value for padded logit lanes


# --------------------------------- kernel -----------------------------------
def _net_kernel(x_ref, w1_ref, b1_ref, w2_ref, b2_ref,
                wf1_ref, bf1_ref, wf2_ref, bf2_ref, o_ref):
    """Whole Net forward for one batch tile of TB images; VMEM-resident.

    Activation layout: (H, W, TB, C) -- batch tile in the sublane dim, channels
    padded to 128 in the lane dim.  All reshapes only merge / split leading
    dims with the (8-aligned) sublane dim (layout-preserving).
    """
    f32 = jnp.float32
    bf16 = jnp.bfloat16
    TBk = x_ref.shape[2]

    # ------------------ conv1: 1 -> 10, k5 (single matmul, K=32) ------------
    # x_ref: (OH1, OW1, TB, T1P) bf16 with x[i, j, b, kh*5+kw] = img[b, i+kh, j+kw]
    a = x_ref[...].reshape(OH1 * OW1 * TBk, T1P)          # rows = (i, j, b)
    h1 = jnp.dot(a, w1_ref[...], preferred_element_type=f32)   # (rows, 128)
    h1 = h1 + b1_ref[...]
    h1 = h1.reshape(OH1, OW1, TBk, LANES)

    # 2x2 max-pool + relu  (relu(max_pool(x)), exactly as in PyTorch)
    y = h1.reshape(PH1, 2, PW1, 2, TBk, LANES)
    h1p = jnp.maximum(jnp.maximum(y[:, 0, :, 0], y[:, 0, :, 1]),
                      jnp.maximum(y[:, 1, :, 0], y[:, 1, :, 1]))
    h1p = jnp.maximum(h1p, 0.0)                           # (PH1, PW1, TB, 128)
    # padded lanes >= C1 are exactly 0 (zero weights/bias -> relu(max(0)) = 0)

    # ------------------ conv2: 10 -> 20 (partial im2col, 5 matmuls K=128) ---
    # Fold the 5 kw taps into lanes: g[p, q, b, kw*16 + c] = h1p[p, q+kw, b, c].
    # pltpu.roll is circular, but wrapped-in lanes come from zero-padded lanes.
    rows1 = PH1 * OW2 * TBk
    g = h1p[:, 0:OW2, :, :].reshape(rows1, LANES)
    for kw in range(1, K):
        s = h1p[:, kw:kw + OW2, :, :].reshape(rows1, LANES)
        g = g + pltpu.roll(s, shift=kw * CI2P, axis=1)
    gb = g.astype(bf16).reshape(PH1, OW2 * TBk, LANES)

    rows2 = OH2 * OW2 * TBk
    h2 = jnp.dot(gb[0:OH2].reshape(rows2, LANES), w2_ref[0],
                 preferred_element_type=f32)
    for kh in range(1, K):
        s = gb[kh:kh + OH2].reshape(rows2, LANES)
        h2 = h2 + jnp.dot(s, w2_ref[kh], preferred_element_type=f32)
    h2 = h2 + b2_ref[...]
    # TODO(synk): conv2_drop (Dropout2d) uses eval-mode identity semantics.
    h2 = h2.reshape(OH2, OW2, TBk, LANES)

    y = h2.reshape(PH2, 2, PW2, 2, TBk, LANES)
    h2p = jnp.maximum(jnp.maximum(y[:, 0, :, 0], y[:, 0, :, 1]),
                      jnp.maximum(y[:, 1, :, 0], y[:, 1, :, 1]))
    h2p = jnp.maximum(h2p, 0.0)                           # (PH2, PW2, TB, 128)

    # ------------------ fc1 (320 -> 50) + relu (4 matmuls, K=128) -----------
    # Lane-pack the 4 spatial columns of each pooled row: lane ww*32 + c.
    # The NCHW flatten permutation is folded into the fc1 weight layout.
    f1 = None
    for hh in range(PH2):
        blk = h2p[hh, 0]                                  # (TB, 128), lanes>=20 zero
        for ww in range(1, PW2):
            blk = blk + pltpu.roll(h2p[hh, ww], shift=ww * CF1P, axis=1)
        d = jnp.dot(blk.astype(bf16), wf1_ref[hh], preferred_element_type=f32)
        f1 = d if f1 is None else f1 + d
    f1 = jnp.maximum(f1 + bf1_ref[...], 0.0)              # (TB, 128); cols >=50 == 0
    # TODO(synk): F.dropout uses eval-mode identity semantics.

    # ------------------ fc2 (50 -> 10) + log_softmax ------------------------
    logits = jnp.dot(f1.astype(bf16), wf2_ref[...], preferred_element_type=f32)
    logits = logits + bf2_ref[...]
    lane = jax.lax.broadcasted_iota(jnp.int32, logits.shape, 1)
    logits = jnp.where(lane < NF2, logits, NEG)           # mask padded class lanes
    z = logits - jnp.max(logits, axis=-1, keepdims=True)
    o_ref[...] = z - jnp.log(jnp.sum(jnp.exp(z), axis=-1, keepdims=True))


# ---------------------- parameter / input preparation -----------------------
def _prep_params(p):
    f32 = jnp.float32
    bf16 = jnp.bfloat16

    # conv1: (T1P, 128) RHS with w1[kh*5+kw, o] = Wc1[o, 0, kh, kw]
    w1 = p["w_conv1"].astype(f32)[:, 0].reshape(C1, K * K).T      # (25, 10)
    w1 = jnp.pad(w1, ((0, T1P - K * K), (0, LANES - C1))).astype(bf16)
    b1 = jnp.pad(p["b_conv1"].astype(f32), (0, LANES - C1)).reshape(1, LANES)

    # conv2: per-kh (128, 128) RHS with row kw*16 + c -> output channel o
    w2 = jnp.transpose(p["w_conv2"].astype(f32), (2, 3, 1, 0))    # (kh, kw, c, o)
    w2 = jnp.pad(w2, ((0, 0), (0, 0), (0, CI2P - C1), (0, LANES - C2)))
    w2 = w2.reshape(K, K * CI2P, LANES)                           # (5, 80, 128)
    w2 = jnp.pad(w2, ((0, 0), (0, LANES - K * CI2P), (0, 0))).astype(bf16)
    b2 = jnp.pad(p["b_conv2"].astype(f32), (0, LANES - C2)).reshape(1, LANES)

    # fc1: fold the NCHW flatten (idx = c*16 + hh*4 + ww) into a per-hh
    # (128, 128) weight with row ww*32 + c.
    wf1 = p["w_fc1"].astype(f32).reshape(NF1, C2, PH2, PW2)       # (n, c, h, w)
    wf1 = jnp.transpose(wf1, (2, 3, 1, 0))                        # (h, w, c, n)
    wf1 = jnp.pad(wf1, ((0, 0), (0, 0), (0, CF1P - C2), (0, LANES - NF1)))
    wf1 = wf1.reshape(PH2, PW2 * CF1P, LANES).astype(bf16)        # (4, 128, 128)
    bf1 = jnp.pad(p["b_fc1"].astype(f32), (0, LANES - NF1)).reshape(1, LANES)

    wf2 = jnp.pad(p["w_fc2"].astype(f32).T,
                  ((0, LANES - NF1), (0, LANES - NF2))).astype(bf16)
    bf2 = jnp.pad(p["b_fc2"].astype(f32), (0, LANES - NF2)).reshape(1, LANES)
    return w1, b1, w2, b2, wf1, bf1, wf2, bf2


def net_forward(params, x):
    """x: (B, 1, 28, 28) float32 NCHW  ->  (B, 10) float32 log-probabilities."""
    assert x.shape[1:] == (1, H0, W0), x.shape
    B = x.shape[0]
    # Batch tile: up to 32 images per grid step (multiple of 8), shrunk for
    # small batches.  Per-generation note: TB<=32 keeps live VMEM ~30 MB, which
    # fits v7x's 64 MiB VMEM; v5e/v6e (128 MiB) could go larger still.
    TB = min(TB_MAX, 8 * ((B + 7) // 8))
    Bp = TB * ((B + TB - 1) // TB)

    x = x.astype(jnp.float32)[:, 0]                               # (B, 28, 28)
    x = jnp.pad(x, ((0, Bp - B), (0, 0), (0, 0)))
    # Full 25-tap unfold (done once in XLA, ~37 KB/image in bf16):
    #   x25[i, j, b, kh*5+kw] = x[b, i+kh, j+kw]
    patches = [x[:, kh:kh + OH1, kw:kw + OW1]
               for kh in range(K) for kw in range(K)]
    x25 = jnp.stack(patches, axis=-1)                             # (Bp,24,24,25)
    x25 = jnp.pad(x25, ((0, 0), (0, 0), (0, 0), (0, T1P - K * K)))
    x25 = jnp.transpose(x25, (1, 2, 0, 3)).astype(jnp.bfloat16)   # (24,24,Bp,32)

    w1, b1, w2, b2, wf1, bf1, wf2, bf2 = _prep_params(params)

    out = pl.pallas_call(
        _net_kernel,
        out_shape=jax.ShapeDtypeStruct((Bp, LANES), jnp.float32),
        grid_spec=pltpu.PrefetchScalarGridSpec(
            num_scalar_prefetch=0,
            grid=(Bp // TB,),
            in_specs=[
                pl.BlockSpec((OH1, OW1, TB, T1P), lambda b: (0, 0, b, 0)),
                pl.BlockSpec(w1.shape, lambda b: (0, 0)),
                pl.BlockSpec(b1.shape, lambda b: (0, 0)),
                pl.BlockSpec(w2.shape, lambda b: (0, 0, 0)),
                pl.BlockSpec(b2.shape, lambda b: (0, 0)),
                pl.BlockSpec(wf1.shape, lambda b: (0, 0, 0)),
                pl.BlockSpec(bf1.shape, lambda b: (0, 0)),
                pl.BlockSpec(wf2.shape, lambda b: (0, 0)),
                pl.BlockSpec(bf2.shape, lambda b: (0, 0)),
            ],
            out_specs=pl.BlockSpec((TB, LANES), lambda b: (b, 0)),
        ),
        compiler_params=pltpu.CompilerParams(
            dimension_semantics=("parallel",),          # megacore-shard batch tiles
            vmem_limit_bytes=48 * 1024 * 1024,          # fits v7x 64MiB, > v5e 16MiB default
        ),
    )(x25, w1, b1, w2, b2, wf1, bf1, wf2, bf2)

    return out[:B, :NF2]   # drop batch padding and padded class lanes at the end


# ----------------------------- plain-XLA reference --------------------------
def net_forward_ref(params, x):
    f32 = jnp.float32
    hi = jax.lax.Precision.HIGHEST
    x = x.astype(f32)
    y = jax.lax.conv_general_dilated(
        x, params["w_conv1"].astype(f32), (1, 1), "VALID",
        dimension_numbers=("NCHW", "OIHW", "NCHW"), precision=hi)
    y = y + params["b_conv1"].reshape(1, -1, 1, 1)
    y = jax.lax.reduce_window(y, -jnp.inf, jax.lax.max,
                              (1, 1, 2, 2), (1, 1, 2, 2), "VALID")
    y = jnp.maximum(y, 0.0)
    y = jax.lax.conv_general_dilated(
        y, params["w_conv2"].astype(f32), (1, 1), "VALID",
        dimension_numbers=("NCHW", "OIHW", "NCHW"), precision=hi)
    y = y + params["b_conv2"].reshape(1, -1, 1, 1)
    y = jax.lax.reduce_window(y, -jnp.inf, jax.lax.max,
                              (1, 1, 2, 2), (1, 1, 2, 2), "VALID")
    y = jnp.maximum(y, 0.0)
    v = y.reshape(y.shape[0], 320)
    f1 = jnp.maximum(jnp.dot(v, params["w_fc1"].T, precision=hi)
                     + params["b_fc1"], 0.0)
    logits = jnp.dot(f1, params["w_fc2"].T, precision=hi) + params["b_fc2"]
    return jax.nn.log_softmax(logits, axis=-1)


# --------------------------------- params -----------------------------------
def init_params(key):
    keys = jax.random.split(key, 8)

    def u(k, shape, fan_in):
        bound = 1.0 / (fan_in ** 0.5)
        return jax.random.uniform(k, shape, jnp.float32, -bound, bound)

    return {
        "w_conv1": u(keys[0], (10, 1, 5, 5), 1 * 5 * 5),
        "b_conv1": u(keys[1], (10,), 1 * 5 * 5),
        "w_conv2": u(keys[2], (20, 10, 5, 5), 10 * 5 * 5),
        "b_conv2": u(keys[3], (20,), 10 * 5 * 5),
        "w_fc1":   u(keys[4], (50, 320), 320),
        "b_fc1":   u(keys[5], (50,), 320),
        "w_fc2":   u(keys[6], (10, 50), 50),
        "b_fc2":   u(keys[7], (10,), 50),
    }


if __name__ == "__main__":
    key = jax.random.PRNGKey(0)
    k_param, k_x = jax.random.split(key)
    params = init_params(k_param)
    # MNIST-shaped input (28x28 is required by the fixed view(-1, 320)).
    x = jax.random.normal(k_x, (2, 1, 28, 28), dtype=jnp.float32)

    fwd = jax.jit(net_forward)
    out = jax.block_until_ready(fwd(params, x))

    assert out.shape == (2, 10), out.shape
    assert out.dtype == jnp.float32
    assert bool(jnp.all(jnp.isfinite(out)))
    # log_softmax rows must exponentiate-and-sum to ~1.
    assert jnp.allclose(jnp.exp(out).sum(axis=-1), 1.0, atol=1e-4)
    # Match the plain-XLA reference forward pass (bf16 matmuls, f32 accumulate).
    ref = jax.block_until_ready(jax.jit(net_forward_ref)(params, x))
    max_err = float(jnp.max(jnp.abs(out - ref)))
    assert jnp.allclose(out, ref, atol=5e-2, rtol=1e-3), max_err
    print("KERNEL_OK")
</pallas_src>

<mosaic_0001>
module attributes {stable_mosaic.version = 11 : i64} {
  func.func @_net_kernel(%arg0: i32, %arg1: memref<24x24x8x32xbf16, #tpu.memory_space<vmem>>, %arg2: memref<32x128xbf16, #tpu.memory_space<vmem>>, %arg3: memref<1x128xf32, #tpu.memory_space<vmem>>, %arg4: memref<5x128x128xbf16, #tpu.memory_space<vmem>>, %arg5: memref<1x128xf32, #tpu.memory_space<vmem>>, %arg6: memref<4x128x128xbf16, #tpu.memory_space<vmem>>, %arg7: memref<1x128xf32, #tpu.memory_space<vmem>>, %arg8: memref<128x128xbf16, #tpu.memory_space<vmem>>, %arg9: memref<1x128xf32, #tpu.memory_space<vmem>>, %arg10: memref<8x128xf32, #tpu.memory_space<vmem>>) attributes {dimension_semantics = [#tpu.dimension_semantics<parallel>], iteration_bounds = array<i64: 1>, scalar_prefetch = 0 : i64, scratch_operands = 0 : i64, tpu.core_type = #tpu.core_type<tc>, window_params = [{transform_indices = @transform_0, window_bounds = array<i64: 24, 24, 8, 32>}, {pipeline_mode = #tpu.pipeline_mode<synchronous>, transform_indices = @transform_1, window_bounds = array<i64: 32, 128>}, {pipeline_mode = #tpu.pipeline_mode<synchronous>, transform_indices = @transform_2, window_bounds = array<i64: 1, 128>}, {pipeline_mode = #tpu.pipeline_mode<synchronous>, transform_indices = @transform_3, window_bounds = array<i64: 5, 128, 128>}, {pipeline_mode = #tpu.pipeline_mode<synchronous>, transform_indices = @transform_4, window_bounds = array<i64: 1, 128>}, {pipeline_mode = #tpu.pipeline_mode<synchronous>, transform_indices = @transform_5, window_bounds = array<i64: 4, 128, 128>}, {pipeline_mode = #tpu.pipeline_mode<synchronous>, transform_indices = @transform_6, window_bounds = array<i64: 1, 128>}, {pipeline_mode = #tpu.pipeline_mode<synchronous>, transform_indices = @transform_7, window_bounds = array<i64: 128, 128>}, {pipeline_mode = #tpu.pipeline_mode<synchronous>, transform_indices = @transform_8, window_bounds = array<i64: 1, 128>}, {transform_indices = @transform_9, window_bounds = array<i64: 8, 128>}]} {
    %c0 = arith.constant 0 : index
    %c0_0 = arith.constant 0 : index
    %c0_1 = arith.constant 0 : index
    %c0_2 = arith.constant 0 : index
    %0 = vector.load %arg1[%c0, %c0_0, %c0_1, %c0_2] : memref<24x24x8x32xbf16, #tpu.memory_space<vmem>>, vector<24x24x8x32xbf16>
    %1 = vector.shape_cast %0 : vector<24x24x8x32xbf16> to vector<4608x32xbf16>
    %c0_3 = arith.constant 0 : index
    %c0_4 = arith.constant 0 : index
    %2 = vector.load %arg2[%c0_3, %c0_4] : memref<32x128xbf16, #tpu.memory_space<vmem>>, vector<32x128xbf16>
    %cst = arith.constant dense<0.000000e+00> : vector<4608x128xf32>
    %3 = tpu.matmul %1, %2, %cst {dimension_numbers = #tpu.dot_dimension_numbers<[1], [0], [0], [1], [0, 0, 1, 1], [], []>} : vector<4608x32xbf16>, vector<32x128xbf16>, vector<4608x128xf32> -> vector<4608x128xf32>
    %c0_5 = arith.constant 0 : index
    %c0_6 = arith.constant 0 : index
    %4 = vector.load %arg3[%c0_5, %c0_6] : memref<1x128xf32, #tpu.memory_space<vmem>>, vector<1x128xf32>
    %5 = vector.broadcast %4 : vector<1x128xf32> to vector<4608x128xf32>
    %6 = arith.addf %3, %5 : vector<4608x128xf32>
    %7 = vector.shape_cast %6 : vector<4608x128xf32> to vector<24x24x8x128xf32>
    %8 = vector.shape_cast %7 : vector<24x24x8x128xf32> to vector<12x2x12x2x8x128xf32>
    %9 = vector.extract_strided_slice %8 {offsets = [0, 0, 0, 0, 0, 0], sizes = [12, 1, 12, 1, 8, 128], strides = [1, 1, 1, 1, 1, 1]} : vector<12x2x12x2x8x128xf32> to vector<12x1x12x1x8x128xf32>
    %10 = vector.shape_cast %9 : vector<12x1x12x1x8x128xf32> to vector<12x12x8x128xf32>
    %11 = vector.extract_strided_slice %8 {offsets = [0, 0, 0, 1, 0, 0], sizes = [12, 1, 12, 1, 8, 128], strides = [1, 1, 1, 1, 1, 1]} : vector<12x2x12x2x8x128xf32> to vector<12x1x12x1x8x128xf32>
    %12 = vector.shape_cast %11 : vector<12x1x12x1x8x128xf32> to vector<12x12x8x128xf32>
    %13 = arith.maximumf %10, %12 : vector<12x12x8x128xf32>
    %14 = vector.extract_strided_slice %8 {offsets = [0, 1, 0, 0, 0, 0], sizes = [12, 1, 12, 1, 8, 128], strides = [1, 1, 1, 1, 1, 1]} : vector<12x2x12x2x8x128xf32> to vector<12x1x12x1x8x128xf32>
    %15 = vector.shape_cast %14 : vector<12x1x12x1x8x128xf32> to vector<12x12x8x128xf32>
    %16 = vector.extract_strided_slice %8 {offsets = [0, 1, 0, 1, 0, 0], sizes = [12, 1, 12, 1, 8, 128], strides = [1, 1, 1, 1, 1, 1]} : vector<12x2x12x2x8x128xf32> to vector<12x1x12x1x8x128xf32>
    %17 = vector.shape_cast %16 : vector<12x1x12x1x8x128xf32> to vector<12x12x8x128xf32>
    %18 = arith.maximumf %15, %17 : vector<12x12x8x128xf32>
    %19 = arith.maximumf %13, %18 : vector<12x12x8x128xf32>
    %cst_7 = arith.constant 0.000000e+00 : f32
    %20 = vector.broadcast %cst_7 : f32 to vector<12x12x8x128xf32>
    %21 = arith.maximumf %19, %20 : vector<12x12x8x128xf32>
    %22 = vector.extract_strided_slice %21 {offsets = [0, 0, 0, 0], sizes = [12, 8, 8, 128], strides = [1, 1, 1, 1]} : vector<12x12x8x128xf32> to vector<12x8x8x128xf32>
    %23 = vector.shape_cast %22 : vector<12x8x8x128xf32> to vector<768x128xf32>
    %24 = vector.extract_strided_slice %21 {offsets = [0, 1, 0, 0], sizes = [12, 8, 8, 128], strides = [1, 1, 1, 1]} : vector<12x12x8x128xf32> to vector<12x8x8x128xf32>
    %25 = vector.shape_cast %24 : vector<12x8x8x128xf32> to vector<768x128xf32>
    %c16_i32 = arith.constant 16 : i32
    %26 = tpu.dynamic_rotate %25 by %c16_i32 dim 1 : vector<768x128xf32>, i32 -> vector<768x128xf32>
    %27 = arith.addf %23, %26 : vector<768x128xf32>
    %28 = vector.extract_strided_slice %21 {offsets = [0, 2, 0, 0], sizes = [12, 8, 8, 128], strides = [1, 1, 1, 1]} : vector<12x12x8x128xf32> to vector<12x8x8x128xf32>
    %29 = vector.shape_cast %28 : vector<12x8x8x128xf32> to vector<768x128xf32>
    %c32_i32 = arith.constant 32 : i32
    %30 = tpu.dynamic_rotate %29 by %c32_i32 dim 1 : vector<768x128xf32>, i32 -> vector<768x128xf32>
    %31 = arith.addf %27, %30 : vector<768x128xf32>
    %32 = vector.extract_strided_slice %21 {offsets = [0, 3, 0, 0], sizes = [12, 8, 8, 128], strides = [1, 1, 1, 1]} : vector<12x12x8x128xf32> to vector<12x8x8x128xf32>
    %33 = vector.shape_cast %32 : vector<12x8x8x128xf32> to vector<768x128xf32>
    %c48_i32 = arith.constant 48 : i32
    %34 = tpu.dynamic_rotate %33 by %c48_i32 dim 1 : vector<768x128xf32>, i32 -> vector<768x128xf32>
    %35 = arith.addf %31, %34 : vector<768x128xf32>
    %36 = vector.extract_strided_slice %21 {offsets = [0, 4, 0, 0], sizes = [12, 8, 8, 128], strides = [1, 1, 1, 1]} : vector<12x12x8x128xf32> to vector<12x8x8x128xf32>
    %37 = vector.shape_cast %36 : vector<12x8x8x128xf32> to vector<768x128xf32>
    %c64_i32 = arith.constant 64 : i32
    %38 = tpu.dynamic_rotate %37 by %c64_i32 dim 1 : vector<768x128xf32>, i32 -> vector<768x128xf32>
    %39 = arith.addf %35, %38 : vector<768x128xf32>
    %40 = arith.truncf %39 : vector<768x128xf32> to vector<768x128xbf16>
    %41 = vector.shape_cast %40 : vector<768x128xbf16> to vector<12x64x128xbf16>
    %42 = vector.extract_strided_slice %41 {offsets = [0, 0, 0], sizes = [8, 64, 128], strides = [1, 1, 1]} : vector<12x64x128xbf16> to vector<8x64x128xbf16>
    %43 = vector.shape_cast %42 : vector<8x64x128xbf16> to vector<512x128xbf16>
    %c0_8 = arith.constant 0 : index
    %c0_9 = arith.constant 0 : index
    %c0_10 = arith.constant 0 : index
    %44 = vector.load %arg4[%c0_8, %c0_9, %c0_10] : memref<5x128x128xbf16, #tpu.memory_space<vmem>>, vector<1x128x128xbf16>
    %45 = vector.shape_cast %44 : vector<1x128x128xbf16> to vector<128x128xbf16>
    %cst_11 = arith.constant dense<0.000000e+00> : vector<512x128xf32>
    %46 = tpu.matmul %43, %45, %cst_11 {dimension_numbers = #tpu.dot_dimension_numbers<[1], [0], [0], [1], [0, 0, 1, 1], [], []>} : vector<512x128xbf16>, vector<128x128xbf16>, vector<512x128xf32> -> vector<512x128xf32>
    %47 = vector.extract_strided_slice %41 {offsets = [1, 0, 0], sizes = [8, 64, 128], strides = [1, 1, 1]} : vector<12x64x128xbf16> to vector<8x64x128xbf16>
    %48 = vector.shape_cast %47 : vector<8x64x128xbf16> to vector<512x128xbf16>
    %c1 = arith.constant 1 : index
    %c0_12 = arith.constant 0 : index
    %c0_13 = arith.constant 0 : index
    %49 = vector.load %arg4[%c1, %c0_12, %c0_13] : memref<5x128x128xbf16, #tpu.memory_space<vmem>>, vector<1x128x128xbf16>
    %50 = vector.shape_cast %49 : vector<1x128x128xbf16> to vector<128x128xbf16>
    %cst_14 = arith.constant dense<0.000000e+00> : vector<512x128xf32>
    %51 = tpu.matmul %48, %50, %cst_14 {dimension_numbers = #tpu.dot_dimension_numbers<[1], [0], [0], [1], [0, 0, 1, 1], [], []>} : vector<512x128xbf16>, vector<128x128xbf16>, vector<512x128xf32> -> vector<512x128xf32>
    %52 = arith.addf %46, %51 : vector<512x128xf32>
    %53 = vector.extract_strided_slice %41 {offsets = [2, 0, 0], sizes = [8, 64, 128], strides = [1, 1, 1]} : vector<12x64x128xbf16> to vector<8x64x128xbf16>
    %54 = vector.shape_cast %53 : vector<8x64x128xbf16> to vector<512x128xbf16>
    %c2 = arith.constant 2 : index
    %c0_15 = arith.constant 0 : index
    %c0_16 = arith.constant 0 : index
    %55 = vector.load %arg4[%c2, %c0_15, %c0_16] : memref<5x128x128xbf16, #tpu.memory_space<vmem>>, vector<1x128x128xbf16>
    %56 = vector.shape_cast %55 : vector<1x128x128xbf16> to vector<128x128xbf16>
    %cst_17 = arith.constant dense<0.000000e+00> : vector<512x128xf32>
    %57 = tpu.matmul %54, %56, %cst_17 {dimension_numbers = #tpu.dot_dimension_numbers<[1], [0], [0], [1], [0, 0, 1, 1], [], []>} : vector<512x128xbf16>, vector<128x128xbf16>, vector<512x128xf32> -> vector<512x128xf32>
    %58 = arith.addf %52, %57 : vector<512x128xf32>
    %59 = vector.extract_strided_slice %41 {offsets = [3, 0, 0], sizes = [8, 64, 128], strides = [1, 1, 1]} : vector<12x64x128xbf16> to vector<8x64x128xbf16>
    %60 = vector.shape_cast %59 : vector<8x64x128xbf16> to vector<512x128xbf16>
    %c3 = arith.constant 3 : index
    %c0_18 = arith.constant 0 : index
    %c0_19 = arith.constant 0 : index
    %61 = vector.load %arg4[%c3, %c0_18, %c0_19] : memref<5x128x128xbf16, #tpu.memory_space<vmem>>, vector<1x128x128xbf16>
    %62 = vector.shape_cast %61 : vector<1x128x128xbf16> to vector<128x128xbf16>
    %cst_20 = arith.constant dense<0.000000e+00> : vector<512x128xf32>
    %63 = tpu.matmul %60, %62, %cst_20 {dimension_numbers = #tpu.dot_dimension_numbers<[1], [0], [0], [1], [0, 0, 1, 1], [], []>} : vector<512x128xbf16>, vector<128x128xbf16>, vector<512x128xf32> -> vector<512x128xf32>
    %64 = arith.addf %58, %63 : vector<512x128xf32>
    %65 = vector.extract_strided_slice %41 {offsets = [4, 0, 0], sizes = [8, 64, 128], strides = [1, 1, 1]} : vector<12x64x128xbf16> to vector<8x64x128xbf16>
    %66 = vector.shape_cast %65 : vector<8x64x128xbf16> to vector<512x128xbf16>
    %c4 = arith.constant 4 : index
    %c0_21 = arith.constant 0 : index
    %c0_22 = arith.constant 0 : index
    %67 = vector.load %arg4[%c4, %c0_21, %c0_22] : memref<5x128x128xbf16, #tpu.memory_space<vmem>>, vector<1x128x128xbf16>
    %68 = vector.shape_cast %67 : vector<1x128x128xbf16> to vector<128x128xbf16>
    %cst_23 = arith.constant dense<0.000000e+00> : vector<512x128xf32>
    %69 = tpu.matmul %66, %68, %cst_23 {dimension_numbers = #tpu.dot_dimension_numbers<[1], [0], [0], [1], [0, 0, 1, 1], [], []>} : vector<512x128xbf16>, vector<128x128xbf16>, vector<512x128xf32> -> vector<512x128xf32>
    %70 = arith.addf %64, %69 : vector<512x128xf32>
    %c0_24 = arith.constant 0 : index
    %c0_25 = arith.constant 0 : index
    %71 = vector.load %arg5[%c0_24, %c0_25] : memref<1x128xf32, #tpu.memory_space<vmem>>, vector<1x128xf32>
    %72 = vector.broadcast %71 : vector<1x128xf32> to vector<512x128xf32>
    %73 = arith.addf %70, %72 : vector<512x128xf32>
    %74 = vector.shape_cast %73 : vector<512x128xf32> to vector<8x8x8x128xf32>
    %75 = vector.shape_cast %74 : vector<8x8x8x128xf32> to vector<4x2x4x2x8x128xf32>
    %76 = vector.extract_strided_slice %75 {offsets = [0, 0, 0, 0, 0, 0], sizes = [4, 1, 4, 1, 8, 128], strides = [1, 1, 1, 1, 1, 1]} : vector<4x2x4x2x8x128xf32> to vector<4x1x4x1x8x128xf32>
    %77 = vector.shape_cast %76 : vector<4x1x4x1x8x128xf32> to vector<4x4x8x128xf32>
    %78 = vector.extract_strided_slice %75 {offsets = [0, 0, 0, 1, 0, 0], sizes = [4, 1, 4, 1, 8, 128], strides = [1, 1, 1, 1, 1, 1]} : vector<4x2x4x2x8x128xf32> to vector<4x1x4x1x8x128xf32>
    %79 = vector.shape_cast %78 : vector<4x1x4x1x8x128xf32> to vector<4x4x8x128xf32>
    %80 = arith.maximumf %77, %79 : vector<4x4x8x128xf32>
    %81 = vector.extract_strided_slice %75 {offsets = [0, 1, 0, 0, 0, 0], sizes = [4, 1, 4, 1, 8, 128], strides = [1, 1, 1, 1, 1, 1]} : vector<4x2x4x2x8x128xf32> to vector<4x1x4x1x8x128xf32>
    %82 = vector.shape_cast %81 : vector<4x1x4x1x8x128xf32> to vector<4x4x8x128xf32>
    %83 = vector.extract_strided_slice %75 {offsets = [0, 1, 0, 1, 0, 0], sizes = [4, 1, 4, 1, 8, 128], strides = [1, 1, 1, 1, 1, 1]} : vector<4x2x4x2x8x128xf32> to vector<4x1x4x1x8x128xf32>
    %84 = vector.shape_cast %83 : vector<4x1x4x1x8x128xf32> to vector<4x4x8x128xf32>
    %85 = arith.maximumf %82, %84 : vector<4x4x8x128xf32>
    %86 = arith.maximumf %80, %85 : vector<4x4x8x128xf32>
    %cst_26 = arith.constant 0.000000e+00 : f32
    %87 = vector.broadcast %cst_26 : f32 to vector<4x4x8x128xf32>
    %88 = arith.maximumf %86, %87 : vector<4x4x8x128xf32>
    %89 = vector.extract_strided_slice %88 {offsets = [0, 0, 0, 0], sizes = [1, 1, 8, 128], strides = [1, 1, 1, 1]} : vector<4x4x8x128xf32> to vector<1x1x8x128xf32>
    %90 = vector.shape_cast %89 : vector<1x1x8x128xf32> to vector<8x128xf32>
    %91 = vector.extract_strided_slice %88 {offsets = [0, 1, 0, 0], sizes = [1, 1, 8, 128], strides = [1, 1, 1, 1]} : vector<4x4x8x128xf32> to vector<1x1x8x128xf32>
    %92 = vector.shape_cast %91 : vector<1x1x8x128xf32> to vector<8x128xf32>
    %c32_i32_27 = arith.constant 32 : i32
    %93 = tpu.dynamic_rotate %92 by %c32_i32_27 dim 1 : vector<8x128xf32>, i32 -> vector<8x128xf32>
    %94 = arith.addf %90, %93 : vector<8x128xf32>
    %95 = vector.extract_strided_slice %88 {offsets = [0, 2, 0, 0], sizes = [1, 1, 8, 128], strides = [1, 1, 1, 1]} : vector<4x4x8x128xf32> to vector<1x1x8x128xf32>
    %96 = vector.shape_cast %95 : vector<1x1x8x128xf32> to vector<8x128xf32>
    %c64_i32_28 = arith.constant 64 : i32
    %97 = tpu.dynamic_rotate %96 by %c64_i32_28 dim 1 : vector<8x128xf32>, i32 -> vector<8x128xf32>
    %98 = arith.addf %94, %97 : vector<8x128xf32>
    %99 = vector.extract_strided_slice %88 {offsets = [0, 3, 0, 0], sizes = [1, 1, 8, 128], strides = [1, 1, 1, 1]} : vector<4x4x8x128xf32> to vector<1x1x8x128xf32>
    %100 = vector.shape_cast %99 : vector<1x1x8x128xf32> to vector<8x128xf32>
    %c96_i32 = arith.constant 96 : i32
    %101 = tpu.dynamic_rotate %100 by %c96_i32 dim 1 : vector<8x128xf32>, i32 -> vector<8x128xf32>
    %102 = arith.addf %98, %101 : vector<8x128xf32>
    %103 = arith.truncf %102 : vector<8x128xf32> to vector<8x128xbf16>
    %c0_29 = arith.constant 0 : index
    %c0_30 = arith.constant 0 : index
    %c0_31 = arith.constant 0 : index
    %104 = vector.load %arg6[%c0_29, %c0_30, %c0_31] : memref<4x128x128xbf16, #tpu.memory_space<vmem>>, vector<1x128x128xbf16>
    %105 = vector.shape_cast %104 : vector<1x128x128xbf16> to vector<128x128xbf16>
    %cst_32 = arith.constant dense<0.000000e+00> : vector<8x128xf32>
    %106 = tpu.matmul %103, %105, %cst_32 {dimension_numbers = #tpu.dot_dimension_numbers<[1], [0], [0], [1], [0, 0, 1, 1], [], []>} : vector<8x128xbf16>, vector<128x128xbf16>, vector<8x128xf32> -> vector<8x128xf32>
    %107 = vector.extract_strided_slice %88 {offsets = [1, 0, 0, 0], sizes = [1, 1, 8, 128], strides = [1, 1, 1, 1]} : vector<4x4x8x128xf32> to vector<1x1x8x128xf32>
    %108 = vector.shape_cast %107 : vector<1x1x8x128xf32> to vector<8x128xf32>
    %109 = vector.extract_strided_slice %88 {offsets = [1, 1, 0, 0], sizes = [1, 1, 8, 128], strides = [1, 1, 1, 1]} : vector<4x4x8x128xf32> to vector<1x1x8x128xf32>
    %110 = vector.shape_cast %109 : vector<1x1x8x128xf32> to vector<8x128xf32>
    %c32_i32_33 = arith.constant 32 : i32
    %111 = tpu.dynamic_rotate %110 by %c32_i32_33 dim 1 : vector<8x128xf32>, i32 -> vector<8x128xf32>
    %112 = arith.addf %108, %111 : vector<8x128xf32>
    %113 = vector.extract_strided_slice %88 {offsets = [1, 2, 0, 0], sizes = [1, 1, 8, 128], strides = [1, 1, 1, 1]} : vector<4x4x8x128xf32> to vector<1x1x8x128xf32>
    %114 = vector.shape_cast %113 : vector<1x1x8x128xf32> to vector<8x128xf32>
    %c64_i32_34 = arith.constant 64 : i32
    %115 = tpu.dynamic_rotate %114 by %c64_i32_34 dim 1 : vector<8x128xf32>, i32 -> vector<8x128xf32>
    %116 = arith.addf %112, %115 : vector<8x128xf32>
    %117 = vector.extract_strided_slice %88 {offsets = [1, 3, 0, 0], sizes = [1, 1, 8, 128], strides = [1, 1, 1, 1]} : vector<4x4x8x128xf32> to vector<1x1x8x128xf32>
    %118 = vector.shape_cast %117 : vector<1x1x8x128xf32> to vector<8x128xf32>
    %c96_i32_35 = arith.constant 96 : i32
    %119 = tpu.dynamic_rotate %118 by %c96_i32_35 dim 1 : vector<8x128xf32>, i32 -> vector<8x128xf32>
    %120 = arith.addf %116, %119 : vector<8x128xf32>
    %121 = arith.truncf %120 : vector<8x128xf32> to vector<8x128xbf16>
    %c1_36 = arith.constant 1 : index
    %c0_37 = arith.constant 0 : index
    %c0_38 = arith.constant 0 : index
    %122 = vector.load %arg6[%c1_36, %c0_37, %c0_38] : memref<4x128x128xbf16, #tpu.memory_space<vmem>>, vector<1x128x128xbf16>
    %123 = vector.shape_cast %122 : vector<1x128x128xbf16> to vector<128x128xbf16>
    %cst_39 = arith.constant dense<0.000000e+00> : vector<8x128xf32>
    %124 = tpu.matmul %121, %123, %cst_39 {dimension_numbers = #tpu.dot_dimension_numbers<[1], [0], [0], [1], [0, 0, 1, 1], [], []>} : vector<8x128xbf16>, vector<128x128xbf16>, vector<8x128xf32> -> vector<8x128xf32>
    %125 = arith.addf %106, %124 : vector<8x128xf32>
    %126 = vector.extract_strided_slice %88 {offsets = [2, 0, 0, 0], sizes = [1, 1, 8, 128], strides = [1, 1, 1, 1]} : vector<4x4x8x128xf32> to vector<1x1x8x128xf32>
    %127 = vector.shape_cast %126 : vector<1x1x8x128xf32> to vector<8x128xf32>
    %128 = vector.extract_strided_slice %88 {offsets = [2, 1, 0, 0], sizes = [1, 1, 8, 128], strides = [1, 1, 1, 1]} : vector<4x4x8x128xf32> to vector<1x1x8x128xf32>
    %129 = vector.shape_cast %128 : vector<1x1x8x128xf32> to vector<8x128xf32>
    %c32_i32_40 = arith.constant 32 : i32
    %130 = tpu.dynamic_rotate %129 by %c32_i32_40 dim 1 : vector<8x128xf32>, i32 -> vector<8x128xf32>
    %131 = arith.addf %127, %130 : vector<8x128xf32>
    %132 = vector.extract_strided_slice %88 {offsets = [2, 2, 0, 0], sizes = [1, 1, 8, 128], strides = [1, 1, 1, 1]} : vector<4x4x8x128xf32> to vector<1x1x8x128xf32>
    %133 = vector.shape_cast %132 : vector<1x1x8x128xf32> to vector<8x128xf32>
    %c64_i32_41 = arith.constant 64 : i32
    %134 = tpu.dynamic_rotate %133 by %c64_i32_41 dim 1 : vector<8x128xf32>, i32 -> vector<8x128xf32>
    %135 = arith.addf %131, %134 : vector<8x128xf32>
    %136 = vector.extract_strided_slice %88 {offsets = [2, 3, 0, 0], sizes = [1, 1, 8, 128], strides = [1, 1, 1, 1]} : vector<4x4x8x128xf32> to vector<1x1x8x128xf32>
    %137 = vector.shape_cast %136 : vector<1x1x8x128xf32> to vector<8x128xf32>
    %c96_i32_42 = arith.constant 96 : i32
    %138 = tpu.dynamic_rotate %137 by %c96_i32_42 dim 1 : vector<8x128xf32>, i32 -> vector<8x128xf32>
    %139 = arith.addf %135, %138 : vector<8x128xf32>
    %140 = arith.truncf %139 : vector<8x128xf32> to vector<8x128xbf16>
    %c2_43 = arith.constant 2 : index
    %c0_44 = arith.constant 0 : index
    %c0_45 = arith.constant 0 : index
    %141 = vector.load %arg6[%c2_43, %c0_44, %c0_45] : memref<4x128x128xbf16, #tpu.memory_space<vmem>>, vector<1x128x128xbf16>
    %142 = vector.shape_cast %141 : vector<1x128x128xbf16> to vector<128x128xbf16>
    %cst_46 = arith.constant dense<0.000000e+00> : vector<8x128xf32>
    %143 = tpu.matmul %140, %142, %cst_46 {dimension_numbers = #tpu.dot_dimension_numbers<[1], [0], [0], [1], [0, 0, 1, 1], [], []>} : vector<8x128xbf16>, vector<128x128xbf16>, vector<8x128xf32> -> vector<8x128xf32>
    %144 = arith.addf %125, %143 : vector<8x128xf32>
    %145 = vector.extract_strided_slice %88 {offsets = [3, 0, 0, 0], sizes = [1, 1, 8, 128], strides = [1, 1, 1, 1]} : vector<4x4x8x128xf32> to vector<1x1x8x128xf32>
    %146 = vector.shape_cast %145 : vector<1x1x8x128xf32> to vector<8x128xf32>
    %147 = vector.extract_strided_slice %88 {offsets = [3, 1, 0, 0], sizes = [1, 1, 8, 128], strides = [1, 1, 1, 1]} : vector<4x4x8x128xf32> to vector<1x1x8x128xf32>
    %148 = vector.shape_cast %147 : vector<1x1x8x128xf32> to vector<8x128xf32>
    %c32_i32_47 = arith.constant 32 : i32
    %149 = tpu.dynamic_rotate %148 by %c32_i32_47 dim 1 : vector<8x128xf32>, i32 -> vector<8x128xf32>
    %150 = arith.addf %146, %149 : vector<8x128xf32>
    %151 = vector.extract_strided_slice %88 {offsets = [3, 2, 0, 0], sizes = [1, 1, 8, 128], strides = [1, 1, 1, 1]} : vector<4x4x8x128xf32> to vector<1x1x8x128xf32>
    %152 = vector.shape_cast %151 : vector<1x1x8x128xf32> to vector<8x128xf32>
    %c64_i32_48 = arith.constant 64 : i32
    %153 = tpu.dynamic_rotate %152 by %c64_i32_48 dim 1 : vector<8x128xf32>, i32 -> vector<8x128xf32>
    %154 = arith.addf %150, %153 : vector<8x128xf32>
    %155 = vector.extract_strided_slice %88 {offsets = [3, 3, 0, 0], sizes = [1, 1, 8, 128], strides = [1, 1, 1, 1]} : vector<4x4x8x128xf32> to vector<1x1x8x128xf32>
    %156 = vector.shape_cast %155 : vector<1x1x8x128xf32> to vector<8x128xf32>
    %c96_i32_49 = arith.constant 96 : i32
    %157 = tpu.dynamic_rotate %156 by %c96_i32_49 dim 1 : vector<8x128xf32>, i32 -> vector<8x128xf32>
    %158 = arith.addf %154, %157 : vector<8x128xf32>
    %159 = arith.truncf %158 : vector<8x128xf32> to vector<8x128xbf16>
    %c3_50 = arith.constant 3 : index
    %c0_51 = arith.constant 0 : index
    %c0_52 = arith.constant 0 : index
    %160 = vector.load %arg6[%c3_50, %c0_51, %c0_52] : memref<4x128x128xbf16, #tpu.memory_space<vmem>>, vector<1x128x128xbf16>
    %161 = vector.shape_cast %160 : vector<1x128x128xbf16> to vector<128x128xbf16>
    %cst_53 = arith.constant dense<0.000000e+00> : vector<8x128xf32>
    %162 = tpu.matmul %159, %161, %cst_53 {dimension_numbers = #tpu.dot_dimension_numbers<[1], [0], [0], [1], [0, 0, 1, 1], [], []>} : vector<8x128xbf16>, vector<128x128xbf16>, vector<8x128xf32> -> vector<8x128xf32>
    %163 = arith.addf %144, %162 : vector<8x128xf32>
    %c0_54 = arith.constant 0 : index
    %c0_55 = arith.constant 0 : index
    %164 = vector.load %arg7[%c0_54, %c0_55] : memref<1x128xf32, #tpu.memory_space<vmem>>, vector<1x128xf32>
    %165 = vector.broadcast %164 : vector<1x128xf32> to vector<8x128xf32>
    %166 = arith.addf %163, %165 : vector<8x128xf32>
    %cst_56 = arith.constant 0.000000e+00 : f32
    %167 = vector.broadcast %cst_56 : f32 to vector<8x128xf32>
    %168 = arith.maximumf %166, %167 : vector<8x128xf32>
    %169 = arith.truncf %168 : vector<8x128xf32> to vector<8x128xbf16>
    %c0_57 = arith.constant 0 : index
    %c0_58 = arith.constant 0 : index
    %170 = vector.load %arg8[%c0_57, %c0_58] : memref<128x128xbf16, #tpu.memory_space<vmem>>, vector<128x128xbf16>
    %cst_59 = arith.constant dense<0.000000e+00> : vector<8x128xf32>
    %171 = tpu.matmul %169, %170, %cst_59 {dimension_numbers = #tpu.dot_dimension_numbers<[1], [0], [0], [1], [0, 0, 1, 1], [], []>} : vector<8x128xbf16>, vector<128x128xbf16>, vector<8x128xf32> -> vector<8x128xf32>
    %c0_60 = arith.constant 0 : index
    %c0_61 = arith.constant 0 : index
    %172 = vector.load %arg9[%c0_60, %c0_61] : memref<1x128xf32, #tpu.memory_space<vmem>>, vector<1x128xf32>
    %173 = vector.broadcast %172 : vector<1x128xf32> to vector<8x128xf32>
    %174 = arith.addf %171, %173 : vector<8x128xf32>
    %175 = tpu.iota {dimensions = array<i32: 1>} : vector<8x128xi32>
    %c10_i32 = arith.constant 10 : i32
    %176 = vector.broadcast %c10_i32 : i32 to vector<8x128xi32>
    %177 = arith.cmpi slt, %175, %176 : vector<8x128xi32>
    %cst_62 = arith.constant -1.000000e+30 : f32
    %178 = vector.broadcast %cst_62 : f32 to vector<8x128xf32>
    %179 = arith.select %177, %174, %178 : vector<8x128xi1>, vector<8x128xf32>
    %cst_63 = arith.constant dense<0xFF800000> : vector<8xf32>
    %180 = vector.multi_reduction <maximumf>, %179, %cst_63 [1] : vector<8x128xf32> to vector<8xf32>
    %181 = vector.shape_cast %180 : vector<8xf32> to vector<8x1xf32>
    %182 = vector.broadcast %181 : vector<8x1xf32> to vector<8x128xf32>
    %183 = arith.subf %179, %182 : vector<8x128xf32>
    %184 = math.exp %183 : vector<8x128xf32>
    %cst_64 = arith.constant dense<0.000000e+00> : vector<8xf32>
    %185 = vector.multi_reduction <add>, %184, %cst_64 [1] : vector<8x128xf32> to vector<8xf32>
    %186 = vector.shape_cast %185 : vector<8xf32> to vector<8x1xf32>
    %187 = math.log %186 : vector<8x1xf32>
    %188 = vector.broadcast %187 : vector<8x1xf32> to vector<8x128xf32>
    %189 = arith.subf %183, %188 : vector<8x128xf32>
    %c0_65 = arith.constant 0 : index
    %c0_66 = arith.constant 0 : index
    %190 = vector.load %arg10[%c0_65, %c0_66] : memref<8x128xf32, #tpu.memory_space<vmem>>, vector<8x128xf32>
    tpu.vector_store %arg10[%c0_65, %c0_66], %189 {strides = array<i32>} : memref<8x128xf32, #tpu.memory_space<vmem>>, vector<8x128xf32>,
    return
  }
  func.func @transform_0(%arg0: i32) -> (i32, i32, i32, i32) {
    %c0_i32 = arith.constant 0 : i32
    %c0_i32_0 = arith.constant 0 : i32
    %c0_i32_1 = arith.constant 0 : i32
    %c0_i32_2 = arith.constant 0 : i32
    return %c0_i32, %c0_i32_0, %arg0, %c0_i32_1 : i32, i32, i32, i32
  }
  func.func @transform_1(%arg0: i32) -> (i32, i32) {
    %c0_i32 = arith.constant 0 : i32
    %c0_i32_0 = arith.constant 0 : i32
    %c0_i32_1 = arith.constant 0 : i32
    return %c0_i32, %c0_i32_0 : i32, i32
  }
  func.func @transform_2(%arg0: i32) -> (i32, i32) {
    %c0_i32 = arith.constant 0 : i32
    %c0_i32_0 = arith.constant 0 : i32
    %c0_i32_1 = arith.constant 0 : i32
    return %c0_i32, %c0_i32_0 : i32, i32
  }
  func.func @transform_3(%arg0: i32) -> (i32, i32, i32) {
    %c0_i32 = arith.constant 0 : i32
    %c0_i32_0 = arith.constant 0 : i32
    %c0_i32_1 = arith.constant 0 : i32
    %c0_i32_2 = arith.constant 0 : i32
    return %c0_i32, %c0_i32_0, %c0_i32_1 : i32, i32, i32
  }
  func.func @transform_4(%arg0: i32) -> (i32, i32) {
    %c0_i32 = arith.constant 0 : i32
    %c0_i32_0 = arith.constant 0 : i32
    %c0_i32_1 = arith.constant 0 : i32
    return %c0_i32, %c0_i32_0 : i32, i32
  }
  func.func @transform_5(%arg0: i32) -> (i32, i32, i32) {
    %c0_i32 = arith.constant 0 : i32
    %c0_i32_0 = arith.constant 0 : i32
    %c0_i32_1 = arith.constant 0 : i32
    %c0_i32_2 = arith.constant 0 : i32
    return %c0_i32, %c0_i32_0, %c0_i32_1 : i32, i32, i32
  }
  func.func @transform_6(%arg0: i32) -> (i32, i32) {
    %c0_i32 = arith.constant 0 : i32
    %c0_i32_0 = arith.constant 0 : i32
    %c0_i32_1 = arith.constant 0 : i32
    return %c0_i32, %c0_i32_0 : i32, i32
  }
  func.func @transform_7(%arg0: i32) -> (i32, i32) {
    %c0_i32 = arith.constant 0 : i32
    %c0_i32_0 = arith.constant 0 : i32
    %c0_i32_1 = arith.constant 0 : i32
    return %c0_i32, %c0_i32_0 : i32, i32
  }
  func.func @transform_8(%arg0: i32) -> (i32, i32) {
    %c0_i32 = arith.constant 0 : i32
    %c0_i32_0 = arith.constant 0 : i32
    %c0_i32_1 = arith.constant 0 : i32
    return %c0_i32, %c0_i32_0 : i32, i32
  }
  func.func @transform_9(%arg0: i32) -> (i32, i32) {
    %c0_i32 = arith.constant 0 : i32
    %c0_i32_0 = arith.constant 0 : i32
    return %arg0, %c0_i32 : i32, i32
  }
}

</mosaic_0001>

<llo_original>
// kernel: squeeze.0
$region0: #{squeeze.0}
  %s0 = inlined_call_operand.vmem [shape: bf16[10,5,5], index: 0, kind: input, shape index: {}]
  %s1 = inlined_call_operand.vmem [shape: bf16[10,25], index: 1, kind: output, shape index: {}]
  $region1: #{squeeze.0} parent=0
    #allocation0 [shape = 'u8[16384]{0}', space=vmem, size = 0x4000, scoped, tag = 'scoped mem for output reshape']
    #allocation1 [shape = 'u8[20480]{0}', space=vmem, size = 0x5000, scoped, tag = 'scoped mem for input reshape']
    %s3 = smul.u32 4, 2
    %s4 = sshll.u32 1, %s3
    %s5 = ssub.s32 %s4, 1
    %s6 = smul.addr 4, 4
    %s7 = scalar_lea.vmem %s0, %s6
    %s8 = sshrl.u32 %s5, 1
    %s9 = sor.u32 %s5, %s8
    %s10 = sand.u32 %s9, 85
    %s11 = sshrl.u32 %s10, 1
    %s12 = sor.u32 %s10, %s11
    %s13 = sand.u32 51, %s12
    %s14 = sshrl.u32 %s13, 2
    %s15 = sor.u32 %s13, %s14
    %s16 = sand.u32 15, %s15
    %v17 = vld [vmem:[%s7] sm:%s16]
    %v18 = vunpack.c.l.bf16 %v17
    %v19 = vunpack.c.h.bf16 %v17
    %s20 = scalar_lea.vmem [#allocation1], 32
    %21 = vst [vmem:[%s20] sm:%s5] %v18
    %s22 = smul.addr 4, 3
    %s23 = scalar_lea.vmem %s0, %s22
    %s24 = sshrl.u32 %s5, 1
    %s25 = sor.u32 %s5, %s24
    %s26 = sand.u32 %s25, 85
    %s27 = sshrl.u32 %s26, 1
    %s28 = sor.u32 %s26, %s27
    %s29 = sand.u32 51, %s28
    %s30 = sshrl.u32 %s29, 2
    %s31 = sor.u32 %s29, %s30
    %s32 = sand.u32 15, %s31
    %v33 = vld [vmem:[%s23] sm:%s32]
    %v34 = vunpack.c.l.bf16 %v33
    %v35 = vunpack.c.h.bf16 %v33
    %s36 = scalar_lea.vmem [#allocation1], 24
    %37 = vst [vmem:[%s36] sm:%s5] %v34
    %s38 = smul.addr 4, 2
    %s39 = scalar_lea.vmem %s0, %s38
    %s40 = sshrl.u32 %s5, 1
    %s41 = sor.u32 %s5, %s40
    %s42 = sand.u32 %s41, 85
    %s43 = sshrl.u32 %s42, 1
    %s44 = sor.u32 %s42, %s43
    %s45 = sand.u32 51, %s44
    %s46 = sshrl.u32 %s45, 2
    %s47 = sor.u32 %s45, %s46
    %s48 = sand.u32 15, %s47
    %v49 = vld [vmem:[%s39] sm:%s48]
    %v50 = vunpack.c.l.bf16 %v49
    %v51 = vunpack.c.h.bf16 %v49
    %s52 = scalar_lea.vmem [#allocation1], 16
    %53 = vst [vmem:[%s52] sm:%s5] %v50
    %s54 = scalar_lea.vmem %s0, 4
    %s55 = sshrl.u32 %s5, 1
    %s56 = sor.u32 %s5, %s55
    %s57 = sand.u32 %s56, 85
    %s58 = sshrl.u32 %s57, 1
    %s59 = sor.u32 %s57, %s58
    %s60 = sand.u32 51, %s59
    %s61 = sshrl.u32 %s60, 2
    %s62 = sor.u32 %s60, %s61
    %s63 = sand.u32 15, %s62
    %v64 = vld [vmem:[%s54] sm:%s63]
    %v65 = vunpack.c.l.bf16 %v64
    %v66 = vunpack.c.h.bf16 %v64
    %s67 = scalar_lea.vmem [#allocation1], 8
    %68 = vst [vmem:[%s67] sm:%s5] %v65
    %s69 = sshrl.u32 %s5, 1
    %s70 = sor.u32 %s5, %s69
    %s71 = sand.u32 %s70, 85
    %s72 = sshrl.u32 %s71, 1
    %s73 = sor.u32 %s71, %s72
    %s74 = sand.u32 51, %s73
    %s75 = sshrl.u32 %s74, 2
    %s76 = sor.u32 %s74, %s75
    %s77 = sand.u32 15, %s76
    %v78 = vld [vmem:[%s0] sm:%s77]
    %v79 = vunpack.c.l.bf16 %v78
    %v80 = vunpack.c.h.bf16 %v78
    %81 = vst [vmem:[#allocation1] sm:%s5] %v79
    %v82 = vld [vmem:[#allocation1] sm:$0x1f]
    %vm83 = vcmask 80896
    %84 = vst.msk [vmem:[#allocation0] sm:$0x1f] %vm83, %v82
    %s85 = scalar_lea.vmem [#allocation1], 8
    %v86 = vld [vmem:[%s85] sm:$0x1f]
    %vm87 = vcmask 80896
    %s88 = scalar_lea.vmem [#allocation0], 5
    %89 = vst.msk [vmem:[%s88] sm:$0x1f] %vm87, %v86
    %s90 = scalar_lea.vmem [#allocation1], 16
    %v91 = vld [vmem:[%s90] sm:$0x1f]
    %vm92 = vcmask 80896
    %s93 = scalar_lea.vmem [#allocation0], 10
    %94 = vst.msk [vmem:[%s93] sm:$0x1f] %vm92, %v91
    %s95 = scalar_lea.vmem [#allocation1], 24
    %v96 = vld [vmem:[%s95] sm:$0x1f]
    %vm97 = vcmask 80896
    %s98 = scalar_lea.vmem [#allocation0], 15
    %99 = vst.msk [vmem:[%s98] sm:$0x1f] %vm97, %v96
    %s100 = scalar_lea.vmem [#allocation1], 32
    %v101 = vld [vmem:[%s100] sm:$0x1f]
    %vm102 = vcmask 80896
    %s103 = scalar_lea.vmem [#allocation0], 20
    %104 = vst.msk [vmem:[%s103] sm:$0x1f] %vm102, %v101
    %s106 = smul.u32 4, 2
    %s107 = sshll.u32 1, %s106
    %s108 = ssub.s32 %s107, 1
    %s109 = sshrl.u32 %s106, 1
    %v110 = vld [vmem:[#allocation0] sm:%s108]
    %v111 = vpack.c.bf16 0.0, %v110
    %s112 = sshll.u32 1, %s109
    %s113 = ssub.s32 %s112, 1
    %114 = vst [vmem:[%s1] sm:%s113] %v111
    %s115 = scalar_lea.vmem [#allocation0], 8
    %v116 = vld [vmem:[%s115] sm:%s108]
    %v117 = vpack.c.bf16 0.0, %v116
    %s118 = sshll.u32 1, %s109
    %s119 = ssub.s32 %s118, 1
    %s120 = scalar_lea.vmem %s1, 4
    %121 = vst [vmem:[%s120] sm:%s119] %v117
    %s122 = scalar_lea.vmem [#allocation0], 16
    %v123 = vld [vmem:[%s122] sm:%s108]
    %v124 = vpack.c.bf16 0.0, %v123
    %s125 = sshll.u32 1, %s109
    %s126 = ssub.s32 %s125, 1
    %s127 = smul.addr 4, 2
    %s128 = scalar_lea.vmem %s1, %s127
    %129 = vst [vmem:[%s128] sm:%s126] %v124
    %s130 = scalar_lea.vmem [#allocation0], 24
    %v131 = vld [vmem:[%s130] sm:%s108]
    %v132 = vpack.c.bf16 0.0, %v131
    %s133 = sshll.u32 1, %s109
    %s134 = ssub.s32 %s133, 1
    %s135 = smul.addr 4, 3
    %s136 = scalar_lea.vmem %s1, %s135
    %137 = vst [vmem:[%s136] sm:%s134] %v132

// kernel: net_forward.1
$region0: #{net_forward.1}
  #allocation0 [shape = 'u32[]', space=smem, size = 0x4, offset = 0x4, fixed_abs, tag = 'smem constant byte address 0x4 - core index']
  #allocation1 [shape = 'u32[144,128]{1,0:T(1,128)}', space=vmem, size = 0x12000, scoped, tag = 'internal scratch']
  %s0 = inlined_call_operand.vmem [shape: bf16[24,24,8,32], index: 0, kind: input, shape index: {}]
  %s1 = inlined_call_operand.vmem [shape: bf16[32,128], index: 1, kind: input, shape index: {}]
  %s2 = inlined_call_operand.vmem [shape: f32[1,128], index: 2, kind: input, shape index: {}]
  %s3 = inlined_call_operand.vmem [shape: bf16[5,128,128], index: 3, kind: input, shape index: {}]
  %s4 = inlined_call_operand.vmem [shape: f32[1,128], index: 4, kind: input, shape index: {}]
  %s5 = inlined_call_operand.vmem [shape: bf16[4,128,128], index: 5, kind: input, shape index: {}]
  %s6 = inlined_call_operand.vmem [shape: f32[1,128], index: 6, kind: input, shape index: {}]
  %s7 = inlined_call_operand.vmem [shape: bf16[128,128], index: 7, kind: input, shape index: {}]
  %s8 = inlined_call_operand.vmem [shape: f32[1,128], index: 8, kind: input, shape index: {}]
  %s9 = inlined_call_operand.vmem [shape: f32[8,128], index: 9, kind: output, shape index: {}]
  %s10 = sld [smem:[#allocation0]]
  $region46: #{net_forward.1} parent=0
    _
  %s12 = ssub.s32 1, %s10
  %s13 = scalar_select 0, %s12, %s10
  // Predicated region
  $region2: #{net_forward.1} parent=0 // pred_check
    _
  $region3: #{net_forward.1} parent=0 // pred_check_branch
    %15 = sbr.rel (0) target = $region5
  $region4: #{net_forward.1} parent=0 // pred_region
    _
  $region5: #{net_forward.1} parent=0 // pred_fallthru
    _
  // Predicated region
  $region6: #{net_forward.1} parent=0 // pred_check
    _
  $region7: #{net_forward.1} parent=0 // pred_check_branch
    %17 = sbr.rel (0) target = $region9
  $region8: #{net_forward.1} parent=0 // pred_region
    _
  $region9: #{net_forward.1} parent=0 // pred_fallthru
    _
  // Predicated region
  $region10: #{net_forward.1} parent=0 // pred_check
    _
  $region11: #{net_forward.1} parent=0 // pred_check_branch
    %19 = sbr.rel (0) target = $region13
  $region12: #{net_forward.1} parent=0 // pred_region
    _
  $region13: #{net_forward.1} parent=0 // pred_fallthru
    _
  // Predicated region
  $region14: #{net_forward.1} parent=0 // pred_check
    _
  $region15: #{net_forward.1} parent=0 // pred_check_branch
    %21 = sbr.rel (0) target = $region17
  $region16: #{net_forward.1} parent=0 // pred_region
    _
  $region17: #{net_forward.1} parent=0 // pred_fallthru
    _
  // Predicated region
  $region18: #{net_forward.1} parent=0 // pred_check
    _
  $region19: #{net_forward.1} parent=0 // pred_check_branch
    %23 = sbr.rel (0) target = $region21
  $region20: #{net_forward.1} parent=0 // pred_region
    _
  $region21: #{net_forward.1} parent=0 // pred_fallthru
    _
  // Predicated region
  $region22: #{net_forward.1} parent=0 // pred_check
    _
  $region23: #{net_forward.1} parent=0 // pred_check_branch
    %25 = sbr.rel (0) target = $region25
  $region24: #{net_forward.1} parent=0 // pred_region
    _
  $region25: #{net_forward.1} parent=0 // pred_fallthru
    _
  // Predicated region
  $region26: #{net_forward.1} parent=0 // pred_check
    _
  $region27: #{net_forward.1} parent=0 // pred_check_branch
    %27 = sbr.rel (0) target = $region29
  $region28: #{net_forward.1} parent=0 // pred_region
    _
  $region29: #{net_forward.1} parent=0 // pred_fallthru
    _
  // Predicated region
  $region30: #{net_forward.1} parent=0 // pred_check
    _
  $region31: #{net_forward.1} parent=0 // pred_check_branch
    %29 = sbr.rel (0) target = $region33
  $region32: #{net_forward.1} parent=0 // pred_region
    _
  $region33: #{net_forward.1} parent=0 // pred_fallthru
    _
  // Predicated region
  $region34: #{net_forward.1} parent=0 // pred_check
    _
  $region35: #{net_forward.1} parent=0 // pred_check_branch
    %31 = sbr.rel (0) target = $region37
  $region36: #{net_forward.1} parent=0 // pred_region
    _
  $region37: #{net_forward.1} parent=0 // pred_fallthru
    _
  %v33 = vld [vmem:[%s0] sm:$0xf]
  %v34 = vld [vmem:[%s0 + $0x4] sm:$0xf]
  %v35 = vld [vmem:[%s0 + $0x8] sm:$0xf]
  %v36 = vld [vmem:[%s0 + $0xc] sm:$0xf]
  %v37 = vld [vmem:[%s0 + $0x10] sm:$0xf]
  %v38 = vld [vmem:[%s0 + $0x14] sm:$0xf]
  %v39 = vld [vmem:[%s0 + $0x18] sm:$0xf]
  %v40 = vld [vmem:[%s0 + $0x1c] sm:$0xf]
  %v41 = vld [vmem:[%s0 + $0x20] sm:$0xf]
  %v42 = vld [vmem:[%s0 + $0x24] sm:$0xf]
  %v43 = vld [vmem:[%s0 + $0x28] sm:$0xf]
  %v44 = vld [vmem:[%s0 + $0x2c] sm:$0xf]
  %v45 = vld [vmem:[%s0 + $0x30] sm:$0xf]
  %v46 = vld [vmem:[%s0 + $0x34] sm:$0xf]
  %v47 = vld [vmem:[%s0 + $0x38] sm:$0xf]
  %v48 = vld [vmem:[%s0 + $0x3c] sm:$0xf]
  %v49 = vld [vmem:[%s0 + $0x40] sm:$0xf]
  %v50 = vld [vmem:[%s0 + $0x44] sm:$0xf]
  %v51 = vld [vmem:[%s0 + $0x48] sm:$0xf]
  %v52 = vld [vmem:[%s0 + $0x4c] sm:$0xf]
  %v53 = vld [vmem:[%s0 + $0x50] sm:$0xf]
  %v54 = vld [vmem:[%s0 + $0x54] sm:$0xf]
  %v55 = vld [vmem:[%s0 + $0x58] sm:$0xf]
  %v56 = vld [vmem:[%s0 + $0x5c] sm:$0xf]
  %v57 = vld [vmem:[%s0 + $0x60] sm:$0xf]
  %v58 = vld [vmem:[%s0 + $0x64] sm:$0xf]
  %v59 = vld [vmem:[%s0 + $0x68] sm:$0xf]
  %v60 = vld [vmem:[%s0 + $0x6c] sm:$0xf]
  %v61 = vld [vmem:[%s0 + $0x70] sm:$0xf]
  %v62 = vld [vmem:[%s0 + $0x74] sm:$0xf]
  %v63 = vld [vmem:[%s0 + $0x78] sm:$0xf]
  %v64 = vld [vmem:[%s0 + $0x7c] sm:$0xf]
  %v65 = vld [vmem:[%s0 + $0x80] sm:$0xf]
  %v66 = vld [vmem:[%s0 + $0x84] sm:$0xf]
  %v67 = vld [vmem:[%s0 + $0x88] sm:$0xf]
  %v68 = vld [vmem:[%s0 + $0x8c] sm:$0xf]
  %v69 = vld [vmem:[%s0 + $0x90] sm:$0xf]
  %v70 = vld [vmem:[%s0 + $0x94] sm:$0xf]
  %v71 = vld [vmem:[%s0 + $0x98] sm:$0xf]
  %v72 = vld [vmem:[%s0 + $0x9c] sm:$0xf]
  %v73 = vld [vmem:[%s0 + $0xa0] sm:$0xf]
  %v74 = vld [vmem:[%s0 + $0xa4] sm:$0xf]
  %v75 = vld [vmem:[%s0 + $0xa8] sm:$0xf]
  %v76 = vld [vmem:[%s0 + $0xac] sm:$0xf]
  %v77 = vld [vmem:[%s0 + $0xb0] sm:$0xf]
  %v78 = vld [vmem:[%s0 + $0xb4] sm:$0xf]
  %v79 = vld [vmem:[%s0 + $0xb8] sm:$0xf]
  %v80 = vld [vmem:[%s0 + $0xbc] sm:$0xf]
  %v81 = vld [vmem:[%s0 + $0xc0] sm:$0xf]
  %v82 = vld [vmem:[%s0 + $0xc4] sm:$0xf]
  %v83 = vld [vmem:[%s0 + $0xc8] sm:$0xf]
  %v84 = vld [vmem:[%s0 + $0xcc] sm:$0xf]
  %v85 = vld [vmem:[%s0 + $0xd0] sm:$0xf]
  %v86 = vld [vmem:[%s0 + $0xd4] sm:$0xf]
  %v87 = vld [vmem:[%s0 + $0xd8] sm:$0xf]
  %v88 = vld [vmem:[%s0 + $0xdc] sm:$0xf]
  %v89 = vld [vmem:[%s0 + $0xe0] sm:$0xf]
  %v90 = vld [vmem:[%s0 + $0xe4] sm:$0xf]
  %v91 = vld [vmem:[%s0 + $0xe8] sm:$0xf]
  %v92 = vld [vmem:[%s0 + $0xec] sm:$0xf]
  %v93 = vld [vmem:[%s0 + $0xf0] sm:$0xf]
  %v94 = vld [vmem:[%s0 + $0xf4] sm:$0xf]
  %v95 = vld [vmem:[%s0 + $0xf8] sm:$0xf]
  %v96 = vld [vmem:[%s0 + $0xfc] sm:$0xf]
  %v97 = vld [vmem:[%s0 + $0x100] sm:$0xf]
  %v98 = vld [vmem:[%s0 + $0x104] sm:$0xf]
  %v99 = vld [vmem:[%s0 + $0x108] sm:$0xf]
  %v100 = vld [vmem:[%s0 + $0x10c] sm:$0xf]
  %v101 = vld [vmem:[%s0 + $0x110] sm:$0xf]
  %v102 = vld [vmem:[%s0 + $0x114] sm:$0xf]
  %v103 = vld [vmem:[%s0 + $0x118] sm:$0xf]
  %v104 = vld [vmem:[%s0 + $0x11c] sm:$0xf]
  %v105 = vld [vmem:[%s0 + $0x120] sm:$0xf]
  %v106 = vld [vmem:[%s0 + $0x124] sm:$0xf]
  %v107 = vld [vmem:[%s0 + $0x128] sm:$0xf]
  %v108 = vld [vmem:[%s0 + $0x12c] sm:$0xf]
  %v109 = vld [vmem:[%s0 + $0x130] sm:$0xf]
  %v110 = vld [vmem:[%s0 + $0x134] sm:$0xf]
  %v111 = vld [vmem:[%s0 + $0x138] sm:$0xf]
  %v112 = vld [vmem:[%s0 + $0x13c] sm:$0xf]
  %v113 = vld [vmem:[%s0 + $0x140] sm:$0xf]
  %v114 = vld [vmem:[%s0 + $0x144] sm:$0xf]
  %v115 = vld [vmem:[%s0 + $0x148] sm:$0xf]
  %v116 = vld [vmem:[%s0 + $0x14c] sm:$0xf]
  %v117 = vld [vmem:[%s0 + $0x150] sm:$0xf]
  %v118 = vld [vmem:[%s0 + $0x154] sm:$0xf]
  %v119 = vld [vmem:[%s0 + $0x158] sm:$0xf]
  %v120 = vld [vmem:[%s0 + $0x15c] sm:$0xf]
  %v121 = vld [vmem:[%s0 + $0x160] sm:$0xf]
  %v122 = vld [vmem:[%s0 + $0x164] sm:$0xf]
  %v123 = vld [vmem:[%s0 + $0x168] sm:$0xf]
  %v124 = vld [vmem:[%s0 + $0x16c] sm:$0xf]
  %v125 = vld [vmem:[%s0 + $0x170] sm:$0xf]
  %v126 = vld [vmem:[%s0 + $0x174] sm:$0xf]
  %v127 = vld [vmem:[%s0 + $0x178] sm:$0xf]
  %v128 = vld [vmem:[%s0 + $0x17c] sm:$0xf]
  %v129 = vld [vmem:[%s0 + $0x180] sm:$0xf]
  %v130 = vld [vmem:[%s0 + $0x184] sm:$0xf]
  %v131 = vld [vmem:[%s0 + $0x188] sm:$0xf]
  %v132 = vld [vmem:[%s0 + $0x18c] sm:$0xf]
  %v133 = vld [vmem:[%s0 + $0x190] sm:$0xf]
  %v134 = vld [vmem:[%s0 + $0x194] sm:$0xf]
  %v135 = vld [vmem:[%s0 + $0x198] sm:$0xf]
  %v136 = vld [vmem:[%s0 + $0x19c] sm:$0xf]
  %v137 = vld [vmem:[%s0 + $0x1a0] sm:$0xf]
  %v138 = vld [vmem:[%s0 + $0x1a4] sm:$0xf]
  %v139 = vld [vmem:[%s0 + $0x1a8] sm:$0xf]
  %v140 = vld [vmem:[%s0 + $0x1ac] sm:$0xf]
  %v141 = vld [vmem:[%s0 + $0x1b0] sm:$0xf]
  %v142 = vld [vmem:[%s0 + $0x1b4] sm:$0xf]
  %v143 = vld [vmem:[%s0 + $0x1b8] sm:$0xf]
  %v144 = vld [vmem:[%s0 + $0x1bc] sm:$0xf]
  %v145 = vld [vmem:[%s0 + $0x1c0] sm:$0xf]
  %v146 = vld [vmem:[%s0 + $0x1c4] sm:$0xf]
  %v147 = vld [vmem:[%s0 + $0x1c8] sm:$0xf]
  %v148 = vld [vmem:[%s0 + $0x1cc] sm:$0xf]
  %v149 = vld [vmem:[%s0 + $0x1d0] sm:$0xf]
  %v150 = vld [vmem:[%s0 + $0x1d4] sm:$0xf]
  %v151 = vld [vmem:[%s0 + $0x1d8] sm:$0xf]
  %v152 = vld [vmem:[%s0 + $0x1dc] sm:$0xf]
  %v153 = vld [vmem:[%s0 + $0x1e0] sm:$0xf]
  %v154 = vld [vmem:[%s0 + $0x1e4] sm:$0xf]
  %v155 = vld [vmem:[%s0 + $0x1e8] sm:$0xf]
  %v156 = vld [vmem:[%s0 + $0x1ec] sm:$0xf]
  %v157 = vld [vmem:[%s0 + $0x1f0] sm:$0xf]
  %v158 = vld [vmem:[%s0 + $0x1f4] sm:$0xf]
  %v159 = vld [vmem:[%s0 + $0x1f8] sm:$0xf]
  %v160 = vld [vmem:[%s0 + $0x1fc] sm:$0xf]
  %v161 = vld [vmem:[%s0 + $0x200] sm:$0xf]
  %v162 = vld [vmem:[%s0 + $0x204] sm:$0xf]
  %v163 = vld [vmem:[%s0 + $0x208] sm:$0xf]
  %v164 = vld [vmem:[%s0 + $0x20c] sm:$0xf]
  %v165 = vld [vmem:[%s0 + $0x210] sm:$0xf]
  %v166 = vld [vmem:[%s0 + $0x214] sm:$0xf]
  %v167 = vld [vmem:[%s0 + $0x218] sm:$0xf]
  %v168 = vld [vmem:[%s0 + $0x21c] sm:$0xf]
  %v169 = vld [vmem:[%s0 + $0x220] sm:$0xf]
  %v170 = vld [vmem:[%s0 + $0x224] sm:$0xf]
  %v171 = vld [vmem:[%s0 + $0x228] sm:$0xf]
  %v172 = vld [vmem:[%s0 + $0x22c] sm:$0xf]
  %v173 = vld [vmem:[%s0 + $0x230] sm:$0xf]
  %v174 = vld [vmem:[%s0 + $0x234] sm:$0xf]
  %v175 = vld [vmem:[%s0 + $0x238] sm:$0xf]
  %v176 = vld [vmem:[%s0 + $0x23c] sm:$0xf]
  %v177 = vld [vmem:[%s0 + $0x240] sm:$0xf]
  %v178 = vld [vmem:[%s0 + $0x244] sm:$0xf]
  %v179 = vld [vmem:[%s0 + $0x248] sm:$0xf]
  %v180 = vld [vmem:[%s0 + $0x24c] sm:$0xf]
  %v181 = vld [vmem:[%s0 + $0x250] sm:$0xf]
  %v182 = vld [vmem:[%s0 + $0x254] sm:$0xf]
  %v183 = vld [vmem:[%s0 + $0x258] sm:$0xf]
  %v184 = vld [vmem:[%s0 + $0x25c] sm:$0xf]
  %v185 = vld [vmem:[%s0 + $0x260] sm:$0xf]
  %v186 = vld [vmem:[%s0 + $0x264] sm:$0xf]
  %v187 = vld [vmem:[%s0 + $0x268] sm:$0xf]
  %v188 = vld [vmem:[%s0 + $0x26c] sm:$0xf]
  %v189 = vld [vmem:[%s0 + $0x270] sm:$0xf]
  %v190 = vld [vmem:[%s0 + $0x274] sm:$0xf]
  %v191 = vld [vmem:[%s0 + $0x278] sm:$0xf]
  %v192 = vld [vmem:[%s0 + $0x27c] sm:$0xf]
  %v193 = vld [vmem:[%s0 + $0x280] sm:$0xf]
  %v194 = vld [vmem:[%s0 + $0x284] sm:$0xf]
  %v195 = vld [vmem:[%s0 + $0x288] sm:$0xf]
  %v196 = vld [vmem:[%s0 + $0x28c] sm:$0xf]
  %v197 = vld [vmem:[%s0 + $0x290] sm:$0xf]
  %v198 = vld [vmem:[%s0 + $0x294] sm:$0xf]
  %v199 = vld [vmem:[%s0 + $0x298] sm:$0xf]
  %v200 = vld [vmem:[%s0 + $0x29c] sm:$0xf]
  %v201 = vld [vmem:[%s0 + $0x2a0] sm:$0xf]
  %v202 = vld [vmem:[%s0 + $0x2a4] sm:$0xf]
  %v203 = vld [vmem:[%s0 + $0x2a8] sm:$0xf]
  %v204 = vld [vmem:[%s0 + $0x2ac] sm:$0xf]
  %v205 = vld [vmem:[%s0 + $0x2b0] sm:$0xf]
  %v206 = vld [vmem:[%s0 + $0x2b4] sm:$0xf]
  %v207 = vld [vmem:[%s0 + $0x2b8] sm:$0xf]
  %v208 = vld [vmem:[%s0 + $0x2bc] sm:$0xf]
  %v209 = vld [vmem:[%s0 + $0x2c0] sm:$0xf]
  %v210 = vld [vmem:[%s0 + $0x2c4] sm:$0xf]
  %v211 = vld [vmem:[%s0 + $0x2c8] sm:$0xf]
  %v212 = vld [vmem:[%s0 + $0x2cc] sm:$0xf]
  %v213 = vld [vmem:[%s0 + $0x2d0] sm:$0xf]
  %v214 = vld [vmem:[%s0 + $0x2d4] sm:$0xf]
  %v215 = vld [vmem:[%s0 + $0x2d8] sm:$0xf]
  %v216 = vld [vmem:[%s0 + $0x2dc] sm:$0xf]
  %v217 = vld [vmem:[%s0 + $0x2e0] sm:$0xf]
  %v218 = vld [vmem:[%s0 + $0x2e4] sm:$0xf]
  %v219 = vld [vmem:[%s0 + $0x2e8] sm:$0xf]
  %v220 = vld [vmem:[%s0 + $0x2ec] sm:$0xf]
  %v221 = vld [vmem:[%s0 + $0x2f0] sm:$0xf]
  %v222 = vld [vmem:[%s0 + $0x2f4] sm:$0xf]
  %v223 = vld [vmem:[%s0 + $0x2f8] sm:$0xf]
  %v224 = vld [vmem:[%s0 + $0x2fc] sm:$0xf]
  %v225 = vld [vmem:[%s0 + $0x300] sm:$0xf]
  %v226 = vld [vmem:[%s0 + $0x304] sm:$0xf]
  %v227 = vld [vmem:[%s0 + $0x308] sm:$0xf]
  %v228 = vld [vmem:[%s0 + $0x30c] sm:$0xf]
  %v229 = vld [vmem:[%s0 + $0x310] sm:$0xf]
  %v230 = vld [vmem:[%s0 + $0x314] sm:$0xf]
  %v231 = vld [vmem:[%s0 + $0x318] sm:$0xf]
  %v232 = vld [vmem:[%s0 + $0x31c] sm:$0xf]
  %v233 = vld [vmem:[%s0 + $0x320] sm:$0xf]
  %v234 = vld [vmem:[%s0 + $0x324] sm:$0xf]
  %v235 = vld [vmem:[%s0 + $0x328] sm:$0xf]
  %v236 = vld [vmem:[%s0 + $0x32c] sm:$0xf]
  %v237 = vld [vmem:[%s0 + $0x330] sm:$0xf]
  %v238 = vld [vmem:[%s0 + $0x334] sm:$0xf]
  %v239 = vld [vmem:[%s0 + $0x338] sm:$0xf]
  %v240 = vld [vmem:[%s0 + $0x33c] sm:$0xf]
  %v241 = vld [vmem:[%s0 + $0x340] sm:$0xf]
  %v242 = vld [vmem:[%s0 + $0x344] sm:$0xf]
  %v243 = vld [vmem:[%s0 + $0x348] sm:$0xf]
  %v244 = vld [vmem:[%s0 + $0x34c] sm:$0xf]
  %v245 = vld [vmem:[%s0 + $0x350] sm:$0xf]
  %v246 = vld [vmem:[%s0 + $0x354] sm:$0xf]
  %v247 = vld [vmem:[%s0 + $0x358] sm:$0xf]
  %v248 = vld [vmem:[%s0 + $0x35c] sm:$0xf]
  %v249 = vld [vmem:[%s0 + $0x360] sm:$0xf]
  %v250 = vld [vmem:[%s0 + $0x364] sm:$0xf]
  %v251 = vld [vmem:[%s0 + $0x368] sm:$0xf]
  %v252 = vld [vmem:[%s0 + $0x36c] sm:$0xf]
  %v253 = vld [vmem:[%s0 + $0x370] sm:$0xf]
  %v254 = vld [vmem:[%s0 + $0x374] sm:$0xf]
  %v255 = vld [vmem:[%s0 + $0x378] sm:$0xf]
  %v256 = vld [vmem:[%s0 + $0x37c] sm:$0xf]
  %v257 = vld [vmem:[%s0 + $0x380] sm:$0xf]
  %v258 = vld [vmem:[%s0 + $0x384] sm:$0xf]
  %v259 = vld [vmem:[%s0 + $0x388] sm:$0xf]
  %v260 = vld [vmem:[%s0 + $0x38c] sm:$0xf]
  %v261 = vld [vmem:[%s0 + $0x390] sm:$0xf]
  %v262 = vld [vmem:[%s0 + $0x394] sm:$0xf]
  %v263 = vld [vmem:[%s0 + $0x398] sm:$0xf]
  %v264 = vld [vmem:[%s0 + $0x39c] sm:$0xf]
  %v265 = vld [vmem:[%s0 + $0x3a0] sm:$0xf]
  %v266 = vld [vmem:[%s0 + $0x3a4] sm:$0xf]
  %v267 = vld [vmem:[%s0 + $0x3a8] sm:$0xf]
  %v268 = vld [vmem:[%s0 + $0x3ac] sm:$0xf]
  %v269 = vld [vmem:[%s0 + $0x3b0] sm:$0xf]
  %v270 = vld [vmem:[%s0 + $0x3b4] sm:$0xf]
  %v271 = vld [vmem:[%s0 + $0x3b8] sm:$0xf]
  %v272 = vld [vmem:[%s0 + $0x3bc] sm:$0xf]
  %v273 = vld [vmem:[%s0 + $0x3c0] sm:$0xf]
  %v274 = vld [vmem:[%s0 + $0x3c4] sm:$0xf]
  %v275 = vld [vmem:[%s0 + $0x3c8] sm:$0xf]
  %v276 = vld [vmem:[%s0 + $0x3cc] sm:$0xf]
  %v277 = vld [vmem:[%s0 + $0x3d0] sm:$0xf]
  %v278 = vld [vmem:[%s0 + $0x3d4] sm:$0xf]
  %v279 = vld [vmem:[%s0 + $0x3d8] sm:$0xf]
  %v280 = vld [vmem:[%s0 + $0x3dc] sm:$0xf]
  %v281 = vld [vmem:[%s0 + $0x3e0] sm:$0xf]
  %v282 = vld [vmem:[%s0 + $0x3e4] sm:$0xf]
  %v283 = vld [vmem:[%s0 + $0x3e8] sm:$0xf]
  %v284 = vld [vmem:[%s0 + $0x3ec] sm:$0xf]
  %v285 = vld [vmem:[%s0 + $0x3f0] sm:$0xf]
  %v286 = vld [vmem:[%s0 + $0x3f4] sm:$0xf]
  %v287 = vld [vmem:[%s0 + $0x3f8] sm:$0xf]
  %v288 = vld [vmem:[%s0 + $0x3fc] sm:$0xf]
  %v289 = vld [vmem:[%s0 + $0x400] sm:$0xf]
  %v290 = vld [vmem:[%s0 + $0x404] sm:$0xf]
  %v291 = vld [vmem:[%s0 + $0x408] sm:$0xf]
  %v292 = vld [vmem:[%s0 + $0x40c] sm:$0xf]
  %v293 = vld [vmem:[%s0 + $0x410] sm:$0xf]
  %v294 = vld [vmem:[%s0 + $0x414] sm:$0xf]
  %v295 = vld [vmem:[%s0 + $0x418] sm:$0xf]
  %v296 = vld [vmem:[%s0 + $0x41c] sm:$0xf]
  %v297 = vld [vmem:[%s0 + $0x420] sm:$0xf]
  %v298 = vld [vmem:[%s0 + $0x424] sm:$0xf]
  %v299 = vld [vmem:[%s0 + $0x428] sm:$0xf]
  %v300 = vld [vmem:[%s0 + $0x42c] sm:$0xf]
  %v301 = vld [vmem:[%s0 + $0x430] sm:$0xf]
  %v302 = vld [vmem:[%s0 + $0x434] sm:$0xf]
  %v303 = vld [vmem:[%s0 + $0x438] sm:$0xf]
  %v304 = vld [vmem:[%s0 + $0x43c] sm:$0xf]
  %v305 = vld [vmem:[%s0 + $0x440] sm:$0xf]
  %v306 = vld [vmem:[%s0 + $0x444] sm:$0xf]
  %v307 = vld [vmem:[%s0 + $0x448] sm:$0xf]
  %v308 = vld [vmem:[%s0 + $0x44c] sm:$0xf]
  %v309 = vld [vmem:[%s0 + $0x450] sm:$0xf]
  %v310 = vld [vmem:[%s0 + $0x454] sm:$0xf]
  %v311 = vld [vmem:[%s0 + $0x458] sm:$0xf]
  %v312 = vld [vmem:[%s0 + $0x45c] sm:$0xf]
  %v313 = vld [vmem:[%s0 + $0x460] sm:$0xf]
  %v314 = vld [vmem:[%s0 + $0x464] sm:$0xf]
  %v315 = vld [vmem:[%s0 + $0x468] sm:$0xf]
  %v316 = vld [vmem:[%s0 + $0x46c] sm:$0xf]
  %v317 = vld [vmem:[%s0 + $0x470] sm:$0xf]
  %v318 = vld [vmem:[%s0 + $0x474] sm:$0xf]
  %v319 = vld [vmem:[%s0 + $0x478] sm:$0xf]
  %v320 = vld [vmem:[%s0 + $0x47c] sm:$0xf]
  %v321 = vld [vmem:[%s0 + $0x480] sm:$0xf]
  %v322 = vld [vmem:[%s0 + $0x484] sm:$0xf]
  %v323 = vld [vmem:[%s0 + $0x488] sm:$0xf]
  %v324 = vld [vmem:[%s0 + $0x48c] sm:$0xf]
  %v325 = vld [vmem:[%s0 + $0x490] sm:$0xf]
  %v326 = vld [vmem:[%s0 + $0x494] sm:$0xf]
  %v327 = vld [vmem:[%s0 + $0x498] sm:$0xf]
  %v328 = vld [vmem:[%s0 + $0x49c] sm:$0xf]
  %v329 = vld [vmem:[%s0 + $0x4a0] sm:$0xf]
  %v330 = vld [vmem:[%s0 + $0x4a4] sm:$0xf]
  %v331 = vld [vmem:[%s0 + $0x4a8] sm:$0xf]
  %v332 = vld [vmem:[%s0 + $0x4ac] sm:$0xf]
  %v333 = vld [vmem:[%s0 + $0x4b0] sm:$0xf]
  %v334 = vld [vmem:[%s0 + $0x4b4] sm:$0xf]
  %v335 = vld [vmem:[%s0 + $0x4b8] sm:$0xf]
  %v336 = vld [vmem:[%s0 + $0x4bc] sm:$0xf]
  %v337 = vld [vmem:[%s0 + $0x4c0] sm:$0xf]
  %v338 = vld [vmem:[%s0 + $0x4c4] sm:$0xf]
  %v339 = vld [vmem:[%s0 + $0x4c8] sm:$0xf]
  %v340 = vld [vmem:[%s0 + $0x4cc] sm:$0xf]
  %v341 = vld [vmem:[%s0 + $0x4d0] sm:$0xf]
  %v342 = vld [vmem:[%s0 + $0x4d4] sm:$0xf]
  %v343 = vld [vmem:[%s0 + $0x4d8] sm:$0xf]
  %v344 = vld [vmem:[%s0 + $0x4dc] sm:$0xf]
  %v345 = vld [vmem:[%s0 + $0x4e0] sm:$0xf]
  %v346 = vld [vmem:[%s0 + $0x4e4] sm:$0xf]
  %v347 = vld [vmem:[%s0 + $0x4e8] sm:$0xf]
  %v348 = vld [vmem:[%s0 + $0x4ec] sm:$0xf]
  %v349 = vld [vmem:[%s0 + $0x4f0] sm:$0xf]
  %v350 = vld [vmem:[%s0 + $0x4f4] sm:$0xf]
  %v351 = vld [vmem:[%s0 + $0x4f8] sm:$0xf]
  %v352 = vld [vmem:[%s0 + $0x4fc] sm:$0xf]
  %v353 = vld [vmem:[%s0 + $0x500] sm:$0xf]
  %v354 = vld [vmem:[%s0 + $0x504] sm:$0xf]
  %v355 = vld [vmem:[%s0 + $0x508] sm:$0xf]
  %v356 = vld [vmem:[%s0 + $0x50c] sm:$0xf]
  %v357 = vld [vmem:[%s0 + $0x510] sm:$0xf]
  %v358 = vld [vmem:[%s0 + $0x514] sm:$0xf]
  %v359 = vld [vmem:[%s0 + $0x518] sm:$0xf]
  %v360 = vld [vmem:[%s0 + $0x51c] sm:$0xf]
  %v361 = vld [vmem:[%s0 + $0x520] sm:$0xf]
  %v362 = vld [vmem:[%s0 + $0x524] sm:$0xf]
  %v363 = vld [vmem:[%s0 + $0x528] sm:$0xf]
  %v364 = vld [vmem:[%s0 + $0x52c] sm:$0xf]
  %v365 = vld [vmem:[%s0 + $0x530] sm:$0xf]
  %v366 = vld [vmem:[%s0 + $0x534] sm:$0xf]
  %v367 = vld [vmem:[%s0 + $0x538] sm:$0xf]
  %v368 = vld [vmem:[%s0 + $0x53c] sm:$0xf]
  %v369 = vld [vmem:[%s0 + $0x540] sm:$0xf]
  %v370 = vld [vmem:[%s0 + $0x544] sm:$0xf]
  %v371 = vld [vmem:[%s0 + $0x548] sm:$0xf]
  %v372 = vld [vmem:[%s0 + $0x54c] sm:$0xf]
  %v373 = vld [vmem:[%s0 + $0x550] sm:$0xf]
  %v374 = vld [vmem:[%s0 + $0x554] sm:$0xf]
  %v375 = vld [vmem:[%s0 + $0x558] sm:$0xf]
  %v376 = vld [vmem:[%s0 + $0x55c] sm:$0xf]
  %v377 = vld [vmem:[%s0 + $0x560] sm:$0xf]
  %v378 = vld [vmem:[%s0 + $0x564] sm:$0xf]
  %v379 = vld [vmem:[%s0 + $0x568] sm:$0xf]
  %v380 = vld [vmem:[%s0 + $0x56c] sm:$0xf]
  %v381 = vld [vmem:[%s0 + $0x570] sm:$0xf]
  %v382 = vld [vmem:[%s0 + $0x574] sm:$0xf]
  %v383 = vld [vmem:[%s0 + $0x578] sm:$0xf]
  %v384 = vld [vmem:[%s0 + $0x57c] sm:$0xf]
  %v385 = vld [vmem:[%s0 + $0x580] sm:$0xf]
  %v386 = vld [vmem:[%s0 + $0x584] sm:$0xf]
  %v387 = vld [vmem:[%s0 + $0x588] sm:$0xf]
  %v388 = vld [vmem:[%s0 + $0x58c] sm:$0xf]
  %v389 = vld [vmem:[%s0 + $0x590] sm:$0xf]
  %v390 = vld [vmem:[%s0 + $0x594] sm:$0xf]
  %v391 = vld [vmem:[%s0 + $0x598] sm:$0xf]
  %v392 = vld [vmem:[%s0 + $0x59c] sm:$0xf]
  %v393 = vld [vmem:[%s0 + $0x5a0] sm:$0xf]
  %v394 = vld [vmem:[%s0 + $0x5a4] sm:$0xf]
  %v395 = vld [vmem:[%s0 + $0x5a8] sm:$0xf]
  %v396 = vld [vmem:[%s0 + $0x5ac] sm:$0xf]
  %v397 = vld [vmem:[%s0 + $0x5b0] sm:$0xf]
  %v398 = vld [vmem:[%s0 + $0x5b4] sm:$0xf]
  %v399 = vld [vmem:[%s0 + $0x5b8] sm:$0xf]
  %v400 = vld [vmem:[%s0 + $0x5bc] sm:$0xf]
  %v401 = vld [vmem:[%s0 + $0x5c0] sm:$0xf]
  %v402 = vld [vmem:[%s0 + $0x5c4] sm:$0xf]
  %v403 = vld [vmem:[%s0 + $0x5c8] sm:$0xf]
  %v404 = vld [vmem:[%s0 + $0x5cc] sm:$0xf]
  %v405 = vld [vmem:[%s0 + $0x5d0] sm:$0xf]
  %v406 = vld [vmem:[%s0 + $0x5d4] sm:$0xf]
  %v407 = vld [vmem:[%s0 + $0x5d8] sm:$0xf]
  %v408 = vld [vmem:[%s0 + $0x5dc] sm:$0xf]
  %v409 = vld [vmem:[%s0 + $0x5e0] sm:$0xf]
  %v410 = vld [vmem:[%s0 + $0x5e4] sm:$0xf]
  %v411 = vld [vmem:[%s0 + $0x5e8] sm:$0xf]
  %v412 = vld [vmem:[%s0 + $0x5ec] sm:$0xf]
  %v413 = vld [vmem:[%s0 + $0x5f0] sm:$0xf]
  %v414 = vld [vmem:[%s0 + $0x5f4] sm:$0xf]
  %v415 = vld [vmem:[%s0 + $0x5f8] sm:$0xf]
  %v416 = vld [vmem:[%s0 + $0x5fc] sm:$0xf]
  %v417 = vld [vmem:[%s0 + $0x600] sm:$0xf]
  %v418 = vld [vmem:[%s0 + $0x604] sm:$0xf]
  %v419 = vld [vmem:[%s0 + $0x608] sm:$0xf]
  %v420 = vld [vmem:[%s0 + $0x60c] sm:$0xf]
  %v421 = vld [vmem:[%s0 + $0x610] sm:$0xf]
  %v422 = vld [vmem:[%s0 + $0x614] sm:$0xf]
  %v423 = vld [vmem:[%s0 + $0x618] sm:$0xf]
  %v424 = vld [vmem:[%s0 + $0x61c] sm:$0xf]
  %v425 = vld [vmem:[%s0 + $0x620] sm:$0xf]
  %v426 = vld [vmem:[%s0 + $0x624] sm:$0xf]
  %v427 = vld [vmem:[%s0 + $0x628] sm:$0xf]
  %v428 = vld [vmem:[%s0 + $0x62c] sm:$0xf]
  %v429 = vld [vmem:[%s0 + $0x630] sm:$0xf]
  %v430 = vld [vmem:[%s0 + $0x634] sm:$0xf]
  %v431 = vld [vmem:[%s0 + $0x638] sm:$0xf]
  %v432 = vld [vmem:[%s0 + $0x63c] sm:$0xf]
  %v433 = vld [vmem:[%s0 + $0x640] sm:$0xf]
  %v434 = vld [vmem:[%s0 + $0x644] sm:$0xf]
  %v435 = vld [vmem:[%s0 + $0x648] sm:$0xf]
  %v436 = vld [vmem:[%s0 + $0x64c] sm:$0xf]
  %v437 = vld [vmem:[%s0 + $0x650] sm:$0xf]
  %v438 = vld [vmem:[%s0 + $0x654] sm:$0xf]
  %v439 = vld [vmem:[%s0 + $0x658] sm:$0xf]
  %v440 = vld [vmem:[%s0 + $0x65c] sm:$0xf]
  %v441 = vld [vmem:[%s0 + $0x660] sm:$0xf]
  %v442 = vld [vmem:[%s0 + $0x664] sm:$0xf]
  %v443 = vld [vmem:[%s0 + $0x668] sm:$0xf]
  %v444 = vld [vmem:[%s0 + $0x66c] sm:$0xf]
  %v445 = vld [vmem:[%s0 + $0x670] sm:$0xf]
  %v446 = vld [vmem:[%s0 + $0x674] sm:$0xf]
  %v447 = vld [vmem:[%s0 + $0x678] sm:$0xf]
  %v448 = vld [vmem:[%s0 + $0x67c] sm:$0xf]
  %v449 = vld [vmem:[%s0 + $0x680] sm:$0xf]
  %v450 = vld [vmem:[%s0 + $0x684] sm:$0xf]
  %v451 = vld [vmem:[%s0 + $0x688] sm:$0xf]
  %v452 = vld [vmem:[%s0 + $0x68c] sm:$0xf]
  %v453 = vld [vmem:[%s0 + $0x690] sm:$0xf]
  %v454 = vld [vmem:[%s0 + $0x694] sm:$0xf]
  %v455 = vld [vmem:[%s0 + $0x698] sm:$0xf]
  %v456 = vld [vmem:[%s0 + $0x69c] sm:$0xf]
  %v457 = vld [vmem:[%s0 + $0x6a0] sm:$0xf]
  %v458 = vld [vmem:[%s0 + $0x6a4] sm:$0xf]
  %v459 = vld [vmem:[%s0 + $0x6a8] sm:$0xf]
  %v460 = vld [vmem:[%s0 + $0x6ac] sm:$0xf]
  %v461 = vld [vmem:[%s0 + $0x6b0] sm:$0xf]
  %v462 = vld [vmem:[%s0 + $0x6b4] sm:$0xf]
  %v463 = vld [vmem:[%s0 + $0x6b8] sm:$0xf]
  %v464 = vld [vmem:[%s0 + $0x6bc] sm:$0xf]
  %v465 = vld [vmem:[%s0 + $0x6c0] sm:$0xf]
  %v466 = vld [vmem:[%s0 + $0x6c4] sm:$0xf]
  %v467 = vld [vmem:[%s0 + $0x6c8] sm:$0xf]
  %v468 = vld [vmem:[%s0 + $0x6cc] sm:$0xf]
  %v469 = vld [vmem:[%s0 + $0x6d0] sm:$0xf]
  %v470 = vld [vmem:[%s0 + $0x6d4] sm:$0xf]
  %v471 = vld [vmem:[%s0 + $0x6d8] sm:$0xf]
  %v472 = vld [vmem:[%s0 + $0x6dc] sm:$0xf]
  %v473 = vld [vmem:[%s0 + $0x6e0] sm:$0xf]
  %v474 = vld [vmem:[%s0 + $0x6e4] sm:$0xf]
  %v475 = vld [vmem:[%s0 + $0x6e8] sm:$0xf]
  %v476 = vld [vmem:[%s0 + $0x6ec] sm:$0xf]
  %v477 = vld [vmem:[%s0 + $0x6f0] sm:$0xf]
  %v478 = vld [vmem:[%s0 + $0x6f4] sm:$0xf]
  %v479 = vld [vmem:[%s0 + $0x6f8] sm:$0xf]
  %v480 = vld [vmem:[%s0 + $0x6fc] sm:$0xf]
  %v481 = vld [vmem:[%s0 + $0x700] sm:$0xf]
  %v482 = vld [vmem:[%s0 + $0x704] sm:$0xf]
  %v483 = vld [vmem:[%s0 + $0x708] sm:$0xf]
  %v484 = vld [vmem:[%s0 + $0x70c] sm:$0xf]
  %v485 = vld [vmem:[%s0 + $0x710] sm:$0xf]
  %v486 = vld [vmem:[%s0 + $0x714] sm:$0xf]
  %v487 = vld [vmem:[%s0 + $0x718] sm:$0xf]
  %v488 = vld [vmem:[%s0 + $0x71c] sm:$0xf]
  %v489 = vld [vmem:[%s0 + $0x720] sm:$0xf]
  %v490 = vld [vmem:[%s0 + $0x724] sm:$0xf]
  %v491 = vld [vmem:[%s0 + $0x728] sm:$0xf]
  %v492 = vld [vmem:[%s0 + $0x72c] sm:$0xf]
  %v493 = vld [vmem:[%s0 + $0x730] sm:$0xf]
  %v494 = vld [vmem:[%s0 + $0x734] sm:$0xf]
  %v495 = vld [vmem:[%s0 + $0x738] sm:$0xf]
  %v496 = vld [vmem:[%s0 + $0x73c] sm:$0xf]
  %v497 = vld [vmem:[%s0 + $0x740] sm:$0xf]
  %v498 = vld [vmem:[%s0 + $0x744] sm:$0xf]
  %v499 = vld [vmem:[%s0 + $0x748] sm:$0xf]
  %v500 = vld [vmem:[%s0 + $0x74c] sm:$0xf]
  %v501 = vld [vmem:[%s0 + $0x750] sm:$0xf]
  %v502 = vld [vmem:[%s0 + $0x754] sm:$0xf]
  %v503 = vld [vmem:[%s0 + $0x758] sm:$0xf]
  %v504 = vld [vmem:[%s0 + $0x75c] sm:$0xf]
  %v505 = vld [vmem:[%s0 + $0x760] sm:$0xf]
  %v506 = vld [vmem:[%s0 + $0x764] sm:$0xf]
  %v507 = vld [vmem:[%s0 + $0x768] sm:$0xf]
  %v508 = vld [vmem:[%s0 + $0x76c] sm:$0xf]
  %v509 = vld [vmem:[%s0 + $0x770] sm:$0xf]
  %v510 = vld [vmem:[%s0 + $0x774] sm:$0xf]
  %v511 = vld [vmem:[%s0 + $0x778] sm:$0xf]
  %v512 = vld [vmem:[%s0 + $0x77c] sm:$0xf]
  %v513 = vld [vmem:[%s0 + $0x780] sm:$0xf]
  %v514 = vld [vmem:[%s0 + $0x784] sm:$0xf]
  %v515 = vld [vmem:[%s0 + $0x788] sm:$0xf]
  %v516 = vld [vmem:[%s0 + $0x78c] sm:$0xf]
  %v517 = vld [vmem:[%s0 + $0x790] sm:$0xf]
  %v518 = vld [vmem:[%s0 + $0x794] sm:$0xf]
  %v519 = vld [vmem:[%s0 + $0x798] sm:$0xf]
  %v520 = vld [vmem:[%s0 + $0x79c] sm:$0xf]
  %v521 = vld [vmem:[%s0 + $0x7a0] sm:$0xf]
  %v522 = vld [vmem:[%s0 + $0x7a4] sm:$0xf]
  %v523 = vld [vmem:[%s0 + $0x7a8] sm:$0xf]
  %v524 = vld [vmem:[%s0 + $0x7ac] sm:$0xf]
  %v525 = vld [vmem:[%s0 + $0x7b0] sm:$0xf]
  %v526 = vld [vmem:[%s0 + $0x7b4] sm:$0xf]
  %v527 = vld [vmem:[%s0 + $0x7b8] sm:$0xf]
  %v528 = vld [vmem:[%s0 + $0x7bc] sm:$0xf]
  %v529 = vld [vmem:[%s0 + $0x7c0] sm:$0xf]
  %v530 = vld [vmem:[%s0 + $0x7c4] sm:$0xf]
  %v531 = vld [vmem:[%s0 + $0x7c8] sm:$0xf]
  %v532 = vld [vmem:[%s0 + $0x7cc] sm:$0xf]
  %v533 = vld [vmem:[%s0 + $0x7d0] sm:$0xf]
  %v534 = vld [vmem:[%s0 + $0x7d4] sm:$0xf]
  %v535 = vld [vmem:[%s0 + $0x7d8] sm:$0xf]
  %v536 = vld [vmem:[%s0 + $0x7dc] sm:$0xf]
  %v537 = vld [vmem:[%s0 + $0x7e0] sm:$0xf]
  %v538 = vld [vmem:[%s0 + $0x7e4] sm:$0xf]
  %v539 = vld [vmem:[%s0 + $0x7e8] sm:$0xf]
  %v540 = vld [vmem:[%s0 + $0x7ec] sm:$0xf]
  %v541 = vld [vmem:[%s0 + $0x7f0] sm:$0xf]
  %v542 = vld [vmem:[%s0 + $0x7f4] sm:$0xf]
  %v543 = vld [vmem:[%s0 + $0x7f8] sm:$0xf]
  %v544 = vld [vmem:[%s0 + $0x7fc] sm:$0xf]
  %v545 = vld [vmem:[%s0 + $0x800] sm:$0xf]
  %v546 = vld [vmem:[%s0 + $0x804] sm:$0xf]
  %v547 = vld [vmem:[%s0 + $0x808] sm:$0xf]
  %v548 = vld [vmem:[%s0 + $0x80c] sm:$0xf]
  %v549 = vld [vmem:[%s0 + $0x810] sm:$0xf]
  %v550 = vld [vmem:[%s0 + $0x814] sm:$0xf]
  %v551 = vld [vmem:[%s0 + $0x818] sm:$0xf]
  %v552 = vld [vmem:[%s0 + $0x81c] sm:$0xf]
  %v553 = vld [vmem:[%s0 + $0x820] sm:$0xf]
  %v554 = vld [vmem:[%s0 + $0x824] sm:$0xf]
  %v555 = vld [vmem:[%s0 + $0x828] sm:$0xf]
  %v556 = vld [vmem:[%s0 + $0x82c] sm:$0xf]
  %v557 = vld [vmem:[%s0 + $0x830] sm:$0xf]
  %v558 = vld [vmem:[%s0 + $0x834] sm:$0xf]
  %v559 = vld [vmem:[%s0 + $0x838] sm:$0xf]
  %v560 = vld [vmem:[%s0 + $0x83c] sm:$0xf]
  %v561 = vld [vmem:[%s0 + $0x840] sm:$0xf]
  %v562 = vld [vmem:[%s0 + $0x844] sm:$0xf]
  %v563 = vld [vmem:[%s0 + $0x848] sm:$0xf]
  %v564 = vld [vmem:[%s0 + $0x84c] sm:$0xf]
  %v565 = vld [vmem:[%s0 + $0x850] sm:$0xf]
  %v566 = vld [vmem:[%s0 + $0x854] sm:$0xf]
  %v567 = vld [vmem:[%s0 + $0x858] sm:$0xf]
  %v568 = vld [vmem:[%s0 + $0x85c] sm:$0xf]
  %v569 = vld [vmem:[%s0 + $0x860] sm:$0xf]
  %v570 = vld [vmem:[%s0 + $0x864] sm:$0xf]
  %v571 = vld [vmem:[%s0 + $0x868] sm:$0xf]
  %v572 = vld [vmem:[%s0 + $0x86c] sm:$0xf]
  %v573 = vld [vmem:[%s0 + $0x870] sm:$0xf]
  %v574 = vld [vmem:[%s0 + $0x874] sm:$0xf]
  %v575 = vld [vmem:[%s0 + $0x878] sm:$0xf]
  %v576 = vld [vmem:[%s0 + $0x87c] sm:$0xf]
  %v577 = vld [vmem:[%s0 + $0x880] sm:$0xf]
  %v578 = vld [vmem:[%s0 + $0x884] sm:$0xf]
  %v579 = vld [vmem:[%s0 + $0x888] sm:$0xf]
  %v580 = vld [vmem:[%s0 + $0x88c] sm:$0xf]
  %v581 = vld [vmem:[%s0 + $0x890] sm:$0xf]
  %v582 = vld [vmem:[%s0 + $0x894] sm:$0xf]
  %v583 = vld [vmem:[%s0 + $0x898] sm:$0xf]
  %v584 = vld [vmem:[%s0 + $0x89c] sm:$0xf]
  %v585 = vld [vmem:[%s0 + $0x8a0] sm:$0xf]
  %v586 = vld [vmem:[%s0 + $0x8a4] sm:$0xf]
  %v587 = vld [vmem:[%s0 + $0x8a8] sm:$0xf]
  %v588 = vld [vmem:[%s0 + $0x8ac] sm:$0xf]
  %v589 = vld [vmem:[%s0 + $0x8b0] sm:$0xf]
  %v590 = vld [vmem:[%s0 + $0x8b4] sm:$0xf]
  %v591 = vld [vmem:[%s0 + $0x8b8] sm:$0xf]
  %v592 = vld [vmem:[%s0 + $0x8bc] sm:$0xf]
  %v593 = vld [vmem:[%s0 + $0x8c0] sm:$0xf]
  %v594 = vld [vmem:[%s0 + $0x8c4] sm:$0xf]
  %v595 = vld [vmem:[%s0 + $0x8c8] sm:$0xf]
  %v596 = vld [vmem:[%s0 + $0x8cc] sm:$0xf]
  %v597 = vld [vmem:[%s0 + $0x8d0] sm:$0xf]
  %v598 = vld [vmem:[%s0 + $0x8d4] sm:$0xf]
  %v599 = vld [vmem:[%s0 + $0x8d8] sm:$0xf]
  %v600 = vld [vmem:[%s0 + $0x8dc] sm:$0xf]
  %v601 = vld [vmem:[%s0 + $0x8e0] sm:$0xf]
  %v602 = vld [vmem:[%s0 + $0x8e4] sm:$0xf]
  %v603 = vld [vmem:[%s0 + $0x8e8] sm:$0xf]
  %v604 = vld [vmem:[%s0 + $0x8ec] sm:$0xf]
  %v605 = vld [vmem:[%s0 + $0x8f0] sm:$0xf]
  %v606 = vld [vmem:[%s0 + $0x8f4] sm:$0xf]
  %v607 = vld [vmem:[%s0 + $0x8f8] sm:$0xf]
  %v608 = vld [vmem:[%s0 + $0x8fc] sm:$0xf]
  %v609 = vld [vmem:[%s1] sm:$0xf]
  %v610 = vld [vmem:[%s1 + $0x4] sm:$0xf]
  %v611 = vld [vmem:[%s1 + $0x8] sm:$0xf]
  %v612 = vld [vmem:[%s1 + $0xc] sm:$0xf]
  %v613 = vld [vmem:[%s2] sm:$0x1]
  %v615 = vlaneseq
  %v616 = vshrl.u32 %v615, 7
  %v617 = vsub.s32 0, %v616
  %v618 = vrot.slane %v613, %v617
  %v1196 = vunpack.c.l.b16 %v33
  %v1197 = vunpack.c.l.b16 %v34
  %v1198 = vunpack.c.l.b16 %v35
  %v1199 = vunpack.c.l.b16 %v36
  %v1200 = vunpack.c.l.b16 %v37
  %v1201 = vunpack.c.l.b16 %v38
  %v1202 = vunpack.c.l.b16 %v39
  %v1203 = vunpack.c.l.b16 %v40
  %v1204 = vunpack.c.l.b16 %v41
  %v1205 = vunpack.c.l.b16 %v42
  %v1206 = vunpack.c.l.b16 %v43
  %v1207 = vunpack.c.l.b16 %v44
  %v1208 = vunpack.c.l.b16 %v45
  %v1209 = vunpack.c.l.b16 %v46
  %v1210 = vunpack.c.l.b16 %v47
  %v1211 = vunpack.c.l.b16 %v48
  %v1212 = vunpack.c.l.b16 %v49
  %v1213 = vunpack.c.l.b16 %v50
  %v1214 = vunpack.c.l.b16 %v51
  %v1215 = vunpack.c.l.b16 %v52
  %v1216 = vunpack.c.l.b16 %v53
  %v1217 = vunpack.c.l.b16 %v54
  %v1218 = vunpack.c.l.b16 %v55
  %v1219 = vunpack.c.l.b16 %v56
  %v1220 = vunpack.c.l.b16 %v57
  %v1221 = vunpack.c.l.b16 %v58
  %v1222 = vunpack.c.l.b16 %v59
  %v1223 = vunpack.c.l.b16 %v60
  %v1224 = vunpack.c.l.b16 %v61
  %v1225 = vunpack.c.l.b16 %v62
  %v1226 = vunpack.c.l.b16 %v63
  %v1227 = vunpack.c.l.b16 %v64
  %v1228 = vunpack.c.l.b16 %v65
  %v1229 = vunpack.c.l.b16 %v66
  %v1230 = vunpack.c.l.b16 %v67
  %v1231 = vunpack.c.l.b16 %v68
  %v1232 = vunpack.c.l.b16 %v69
  %v1233 = vunpack.c.l.b16 %v70
  %v1234 = vunpack.c.l.b16 %v71
  %v1235 = vunpack.c.l.b16 %v72
  %v1236 = vunpack.c.l.b16 %v73
  %v1237 = vunpack.c.l.b16 %v74
  %v1238 = vunpack.c.l.b16 %v75
  %v1239 = vunpack.c.l.b16 %v76
  %v1240 = vunpack.c.l.b16 %v77
  %v1241 = vunpack.c.l.b16 %v78
  %v1242 = vunpack.c.l.b16 %v79
  %v1243 = vunpack.c.l.b16 %v80
  %v1244 = vunpack.c.l.b16 %v81
  %v1245 = vunpack.c.l.b16 %v82
  %v1246 = vunpack.c.l.b16 %v83
  %v1247 = vunpack.c.l.b16 %v84
  %v1248 = vunpack.c.l.b16 %v85
  %v1249 = vunpack.c.l.b16 %v86
  %v1250 = vunpack.c.l.b16 %v87
  %v1251 = vunpack.c.l.b16 %v88
  %v1252 = vunpack.c.l.b16 %v89
  %v1253 = vunpack.c.l.b16 %v90
  %v1254 = vunpack.c.l.b16 %v91
  %v1255 = vunpack.c.l.b16 %v92
  %v1256 = vunpack.c.l.b16 %v93
  %v1257 = vunpack.c.l.b16 %v94
  %v1258 = vunpack.c.l.b16 %v95
  %v1259 = vunpack.c.l.b16 %v96
  %v1260 = vunpack.c.l.b16 %v97
  %v1261 = vunpack.c.l.b16 %v98
  %v1262 = vunpack.c.l.b16 %v99
  %v1263 = vunpack.c.l.b16 %v100
  %v1264 = vunpack.c.l.b16 %v101
  %v1265 = vunpack.c.l.b16 %v102
  %v1266 = vunpack.c.l.b16 %v103
  %v1267 = vunpack.c.l.b16 %v104
  %v1268 = vunpack.c.l.b16 %v105
  %v1269 = vunpack.c.l.b16 %v106
  %v1270 = vunpack.c.l.b16 %v107
  %v1271 = vunpack.c.l.b16 %v108
  %v1272 = vunpack.c.l.b16 %v109
  %v1273 = vunpack.c.l.b16 %v110
  %v1274 = vunpack.c.l.b16 %v111
  %v1275 = vunpack.c.l.b16 %v112
  %v1276 = vunpack.c.l.b16 %v113
  %v1277 = vunpack.c.l.b16 %v114
  %v1278 = vunpack.c.l.b16 %v115
  %v1279 = vunpack.c.l.b16 %v116
  %v1280 = vunpack.c.l.b16 %v117
  %v1281 = vunpack.c.l.b16 %v118
  %v1282 = vunpack.c.l.b16 %v119
  %v1283 = vunpack.c.l.b16 %v120
  %v1284 = vunpack.c.l.b16 %v121
  %v1285 = vunpack.c.l.b16 %v122
  %v1286 = vunpack.c.l.b16 %v123
  %v1287 = vunpack.c.l.b16 %v124
  %v1288 = vunpack.c.l.b16 %v125
  %v1289 = vunpack.c.l.b16 %v126
  %v1290 = vunpack.c.l.b16 %v127
  %v1291 = vunpack.c.l.b16 %v128
  %v1292 = vunpack.c.l.b16 %v129
  %v1293 = vunpack.c.l.b16 %v130
  %v1294 = vunpack.c.l.b16 %v131
  %v1295 = vunpack.c.l.b16 %v132
  %v1296 = vunpack.c.l.b16 %v133
  %v1297 = vunpack.c.l.b16 %v134
  %v1298 = vunpack.c.l.b16 %v135
  %v1299 = vunpack.c.l.b16 %v136
  %v1300 = vunpack.c.l.b16 %v137
  %v1301 = vunpack.c.l.b16 %v138
  %v1302 = vunpack.c.l.b16 %v139
  %v1303 = vunpack.c.l.b16 %v140
  %v1304 = vunpack.c.l.b16 %v141
  %v1305 = vunpack.c.l.b16 %v142
  %v1306 = vunpack.c.l.b16 %v143
  %v1307 = vunpack.c.l.b16 %v144
  %v1308 = vunpack.c.l.b16 %v145
  %v1309 = vunpack.c.l.b16 %v146
  %v1310 = vunpack.c.l.b16 %v147
  %v1311 = vunpack.c.l.b16 %v148
  %v1312 = vunpack.c.l.b16 %v149
  %v1313 = vunpack.c.l.b16 %v150
  %v1314 = vunpack.c.l.b16 %v151
  %v1315 = vunpack.c.l.b16 %v152
  %v1316 = vunpack.c.l.b16 %v153
  %v1317 = vunpack.c.l.b16 %v154
  %v1318 = vunpack.c.l.b16 %v155
  %v1319 = vunpack.c.l.b16 %v156
  %v1320 = vunpack.c.l.b16 %v157
  %v1321 = vunpack.c.l.b16 %v158
  %v1322 = vunpack.c.l.b16 %v159
  %v1323 = vunpack.c.l.b16 %v160
  %v1324 = vunpack.c.l.b16 %v161
  %v1325 = vunpack.c.l.b16 %v162
  %v1326 = vunpack.c.l.b16 %v163
  %v1327 = vunpack.c.l.b16 %v164
  %v1328 = vunpack.c.l.b16 %v165
  %v1329 = vunpack.c.l.b16 %v166
  %v1330 = vunpack.c.l.b16 %v167
  %v1331 = vunpack.c.l.b16 %v168
  %v1332 = vunpack.c.l.b16 %v169
  %v1333 = vunpack.c.l.b16 %v170
  %v1334 = vunpack.c.l.b16 %v171
  %v1335 = vunpack.c.l.b16 %v172
  %v1336 = vunpack.c.l.b16 %v173
  %v1337 = vunpack.c.l.b16 %v174
  %v1338 = vunpack.c.l.b16 %v175
  %v1339 = vunpack.c.l.b16 %v176
  %v1340 = vunpack.c.l.b16 %v177
  %v1341 = vunpack.c.l.b16 %v178
  %v1342 = vunpack.c.l.b16 %v179
  %v1343 = vunpack.c.l.b16 %v180
  %v1344 = vunpack.c.l.b16 %v181
  %v1345 = vunpack.c.l.b16 %v182
  %v1346 = vunpack.c.l.b16 %v183
  %v1347 = vunpack.c.l.b16 %v184
  %v1348 = vunpack.c.l.b16 %v185
  %v1349 = vunpack.c.l.b16 %v186
  %v1350 = vunpack.c.l.b16 %v187
  %v1351 = vunpack.c.l.b16 %v188
  %v1352 = vunpack.c.l.b16 %v189
  %v1353 = vunpack.c.l.b16 %v190
  %v1354 = vunpack.c.l.b16 %v191
  %v1355 = vunpack.c.l.b16 %v192
  %v1356 = vunpack.c.l.b16 %v193
  %v1357 = vunpack.c.l.b16 %v194
  %v1358 = vunpack.c.l.b16 %v195
  %v1359 = vunpack.c.l.b16 %v196
  %v1360 = vunpack.c.l.b16 %v197
  %v1361 = vunpack.c.l.b16 %v198
  %v1362 = vunpack.c.l.b16 %v199
  %v1363 = vunpack.c.l.b16 %v200
  %v1364 = vunpack.c.l.b16 %v201
  %v1365 = vunpack.c.l.b16 %v202
  %v1366 = vunpack.c.l.b16 %v203
  %v1367 = vunpack.c.l.b16 %v204
  %v1368 = vunpack.c.l.b16 %v205
  %v1369 = vunpack.c.l.b16 %v206
  %v1370 = vunpack.c.l.b16 %v207
  %v1371 = vunpack.c.l.b16 %v208
  %v1372 = vunpack.c.l.b16 %v209
  %v1373 = vunpack.c.l.b16 %v210
  %v1374 = vunpack.c.l.b16 %v211
  %v1375 = vunpack.c.l.b16 %v212
  %v1376 = vunpack.c.l.b16 %v213
  %v1377 = vunpack.c.l.b16 %v214
  %v1378 = vunpack.c.l.b16 %v215
  %v1379 = vunpack.c.l.b16 %v216
  %v1380 = vunpack.c.l.b16 %v217
  %v1381 = vunpack.c.l.b16 %v218
  %v1382 = vunpack.c.l.b16 %v219
  %v1383 = vunpack.c.l.b16 %v220
  %v1384 = vunpack.c.l.b16 %v221
  %v1385 = vunpack.c.l.b16 %v222
  %v1386 = vunpack.c.l.b16 %v223
  %v1387 = vunpack.c.l.b16 %v224
  %v1388 = vunpack.c.l.b16 %v225
  %v1389 = vunpack.c.l.b16 %v226
  %v1390 = vunpack.c.l.b16 %v227
  %v1391 = vunpack.c.l.b16 %v228
  %v1392 = vunpack.c.l.b16 %v229
  %v1393 = vunpack.c.l.b16 %v230
  %v1394 = vunpack.c.l.b16 %v231
  %v1395 = vunpack.c.l.b16 %v232
  %v1396 = vunpack.c.l.b16 %v233
  %v1397 = vunpack.c.l.b16 %v234
  %v1398 = vunpack.c.l.b16 %v235
  %v1399 = vunpack.c.l.b16 %v236
  %v1400 = vunpack.c.l.b16 %v237
  %v1401 = vunpack.c.l.b16 %v238
  %v1402 = vunpack.c.l.b16 %v239
  %v1403 = vunpack.c.l.b16 %v240
  %v1404 = vunpack.c.l.b16 %v241
  %v1405 = vunpack.c.l.b16 %v242
  %v1406 = vunpack.c.l.b16 %v243
  %v1407 = vunpack.c.l.b16 %v244
  %v1408 = vunpack.c.l.b16 %v245
  %v1409 = vunpack.c.l.b16 %v246
  %v1410 = vunpack.c.l.b16 %v247
  %v1411 = vunpack.c.l.b16 %v248
  %v1412 = vunpack.c.l.b16 %v249
  %v1413 = vunpack.c.l.b16 %v250
  %v1414 = vunpack.c.l.b16 %v251
  %v1415 = vunpack.c.l.b16 %v252
  %v1416 = vunpack.c.l.b16 %v253
  %v1417 = vunpack.c.l.b16 %v254
  %v1418 = vunpack.c.l.b16 %v255
  %v1419 = vunpack.c.l.b16 %v256
  %v1420 = vunpack.c.l.b16 %v257
  %v1421 = vunpack.c.l.b16 %v258
  %v1422 = vunpack.c.l.b16 %v259
  %v1423 = vunpack.c.l.b16 %v260
  %v1424 = vunpack.c.l.b16 %v261
  %v1425 = vunpack.c.l.b16 %v262
  %v1426 = vunpack.c.l.b16 %v263
  %v1427 = vunpack.c.l.b16 %v264
  %v1428 = vunpack.c.l.b16 %v265
  %v1429 = vunpack.c.l.b16 %v266
  %v1430 = vunpack.c.l.b16 %v267
  %v1431 = vunpack.c.l.b16 %v268
  %v1432 = vunpack.c.l.b16 %v269
  %v1433 = vunpack.c.l.b16 %v270
  %v1434 = vunpack.c.l.b16 %v271
  %v1435 = vunpack.c.l.b16 %v272
  %v1436 = vunpack.c.l.b16 %v273
  %v1437 = vunpack.c.l.b16 %v274
  %v1438 = vunpack.c.l.b16 %v275
  %v1439 = vunpack.c.l.b16 %v276
  %v1440 = vunpack.c.l.b16 %v277
  %v1441 = vunpack.c.l.b16 %v278
  %v1442 = vunpack.c.l.b16 %v279
  %v1443 = vunpack.c.l.b16 %v280
  %v1444 = vunpack.c.l.b16 %v281
  %v1445 = vunpack.c.l.b16 %v282
  %v1446 = vunpack.c.l.b16 %v283
  %v1447 = vunpack.c.l.b16 %v284
  %v1448 = vunpack.c.l.b16 %v285
  %v1449 = vunpack.c.l.b16 %v286
  %v1450 = vunpack.c.l.b16 %v287
  %v1451 = vunpack.c.l.b16 %v288
  %v1452 = vunpack.c.l.b16 %v289
  %v1453 = vunpack.c.l.b16 %v290
  %v1454 = vunpack.c.l.b16 %v291
  %v1455 = vunpack.c.l.b16 %v292
  %v1456 = vunpack.c.l.b16 %v293
  %v1457 = vunpack.c.l.b16 %v294
  %v1458 = vunpack.c.l.b16 %v295
  %v1459 = vunpack.c.l.b16 %v296
  %v1460 = vunpack.c.l.b16 %v297
  %v1461 = vunpack.c.l.b16 %v298
  %v1462 = vunpack.c.l.b16 %v299
  %v1463 = vunpack.c.l.b16 %v300
  %v1464 = vunpack.c.l.b16 %v301
  %v1465 = vunpack.c.l.b16 %v302
  %v1466 = vunpack.c.l.b16 %v303
  %v1467 = vunpack.c.l.b16 %v304
  %v1468 = vunpack.c.l.b16 %v305
  %v1469 = vunpack.c.l.b16 %v306
  %v1470 = vunpack.c.l.b16 %v307
  %v1471 = vunpack.c.l.b16 %v308
  %v1472 = vunpack.c.l.b16 %v309
  %v1473 = vunpack.c.l.b16 %v310
  %v1474 = vunpack.c.l.b16 %v311
  %v1475 = vunpack.c.l.b16 %v312
  %v1476 = vunpack.c.l.b16 %v313
  %v1477 = vunpack.c.l.b16 %v314
  %v1478 = vunpack.c.l.b16 %v315
  %v1479 = vunpack.c.l.b16 %v316
  %v1480 = vunpack.c.l.b16 %v317
  %v1481 = vunpack.c.l.b16 %v318
  %v1482 = vunpack.c.l.b16 %v319
  %v1483 = vunpack.c.l.b16 %v320
  %v1484 = vunpack.c.l.b16 %v321
  %v1485 = vunpack.c.l.b16 %v322
  %v1486 = vunpack.c.l.b16 %v323
  %v1487 = vunpack.c.l.b16 %v324
  %v1488 = vunpack.c.l.b16 %v325
  %v1489 = vunpack.c.l.b16 %v326
  %v1490 = vunpack.c.l.b16 %v327
  %v1491 = vunpack.c.l.b16 %v328
  %v1492 = vunpack.c.l.b16 %v329
  %v1493 = vunpack.c.l.b16 %v330
  %v1494 = vunpack.c.l.b16 %v331
  %v1495 = vunpack.c.l.b16 %v332
  %v1496 = vunpack.c.l.b16 %v333
  %v1497 = vunpack.c.l.b16 %v334
  %v1498 = vunpack.c.l.b16 %v335
  %v1499 = vunpack.c.l.b16 %v336
  %v1500 = vunpack.c.l.b16 %v337
  %v1501 = vunpack.c.l.b16 %v338
  %v1502 = vunpack.c.l.b16 %v339
  %v1503 = vunpack.c.l.b16 %v340
  %v1504 = vunpack.c.l.b16 %v341
  %v1505 = vunpack.c.l.b16 %v342
  %v1506 = vunpack.c.l.b16 %v343
  %v1507 = vunpack.c.l.b16 %v344
  %v1508 = vunpack.c.l.b16 %v345
  %v1509 = vunpack.c.l.b16 %v346
  %v1510 = vunpack.c.l.b16 %v347
  %v1511 = vunpack.c.l.b16 %v348
  %v1512 = vunpack.c.l.b16 %v349
  %v1513 = vunpack.c.l.b16 %v350
  %v1514 = vunpack.c.l.b16 %v351
  %v1515 = vunpack.c.l.b16 %v352
  %v1516 = vunpack.c.l.b16 %v353
  %v1517 = vunpack.c.l.b16 %v354
  %v1518 = vunpack.c.l.b16 %v355
  %v1519 = vunpack.c.l.b16 %v356
  %v1520 = vunpack.c.l.b16 %v357
  %v1521 = vunpack.c.l.b16 %v358
  %v1522 = vunpack.c.l.b16 %v359
  %v1523 = vunpack.c.l.b16 %v360
  %v1524 = vunpack.c.l.b16 %v361
  %v1525 = vunpack.c.l.b16 %v362
  %v1526 = vunpack.c.l.b16 %v363
  %v1527 = vunpack.c.l.b16 %v364
  %v1528 = vunpack.c.l.b16 %v365
  %v1529 = vunpack.c.l.b16 %v366
  %v1530 = vunpack.c.l.b16 %v367
  %v1531 = vunpack.c.l.b16 %v368
  %v1532 = vunpack.c.l.b16 %v369
  %v1533 = vunpack.c.l.b16 %v370
  %v1534 = vunpack.c.l.b16 %v371
  %v1535 = vunpack.c.l.b16 %v372
  %v1536 = vunpack.c.l.b16 %v373
  %v1537 = vunpack.c.l.b16 %v374
  %v1538 = vunpack.c.l.b16 %v375
  %v1539 = vunpack.c.l.b16 %v376
  %v1540 = vunpack.c.l.b16 %v377
  %v1541 = vunpack.c.l.b16 %v378
  %v1542 = vunpack.c.l.b16 %v379
  %v1543 = vunpack.c.l.b16 %v380
  %v1544 = vunpack.c.l.b16 %v381
  %v1545 = vunpack.c.l.b16 %v382
  %v1546 = vunpack.c.l.b16 %v383
  %v1547 = vunpack.c.l.b16 %v384
  %v1548 = vunpack.c.l.b16 %v385
  %v1549 = vunpack.c.l.b16 %v386
  %v1550 = vunpack.c.l.b16 %v387
  %v1551 = vunpack.c.l.b16 %v388
  %v1552 = vunpack.c.l.b16 %v389
  %v1553 = vunpack.c.l.b16 %v390
  %v1554 = vunpack.c.l.b16 %v391
  %v1555 = vunpack.c.l.b16 %v392
  %v1556 = vunpack.c.l.b16 %v393
  %v1557 = vunpack.c.l.b16 %v394
  %v1558 = vunpack.c.l.b16 %v395
  %v1559 = vunpack.c.l.b16 %v396
  %v1560 = vunpack.c.l.b16 %v397
  %v1561 = vunpack.c.l.b16 %v398
  %v1562 = vunpack.c.l.b16 %v399
  %v1563 = vunpack.c.l.b16 %v400
  %v1564 = vunpack.c.l.b16 %v401
  %v1565 = vunpack.c.l.b16 %v402
  %v1566 = vunpack.c.l.b16 %v403
  %v1567 = vunpack.c.l.b16 %v404
  %v1568 = vunpack.c.l.b16 %v405
  %v1569 = vunpack.c.l.b16 %v406
  %v1570 = vunpack.c.l.b16 %v407
  %v1571 = vunpack.c.l.b16 %v408
  %v1572 = vunpack.c.l.b16 %v409
  %v1573 = vunpack.c.l.b16 %v410
  %v1574 = vunpack.c.l.b16 %v411
  %v1575 = vunpack.c.l.b16 %v412
  %v1576 = vunpack.c.l.b16 %v413
  %v1577 = vunpack.c.l.b16 %v414
  %v1578 = vunpack.c.l.b16 %v415
  %v1579 = vunpack.c.l.b16 %v416
  %v1580 = vunpack.c.l.b16 %v417
  %v1581 = vunpack.c.l.b16 %v418
  %v1582 = vunpack.c.l.b16 %v419
  %v1583 = vunpack.c.l.b16 %v420
  %v1584 = vunpack.c.l.b16 %v421
  %v1585 = vunpack.c.l.b16 %v422
  %v1586 = vunpack.c.l.b16 %v423
  %v1587 = vunpack.c.l.b16 %v424
  %v1588 = vunpack.c.l.b16 %v425
  %v1589 = vunpack.c.l.b16 %v426
  %v1590 = vunpack.c.l.b16 %v427
  %v1591 = vunpack.c.l.b16 %v428
  %v1592 = vunpack.c.l.b16 %v429
  %v1593 = vunpack.c.l.b16 %v430
  %v1594 = vunpack.c.l.b16 %v431
  %v1595 = vunpack.c.l.b16 %v432
  %v1596 = vunpack.c.l.b16 %v433
  %v1597 = vunpack.c.l.b16 %v434
  %v1598 = vunpack.c.l.b16 %v435
  %v1599 = vunpack.c.l.b16 %v436
  %v1600 = vunpack.c.l.b16 %v437
  %v1601 = vunpack.c.l.b16 %v438
  %v1602 = vunpack.c.l.b16 %v439
  %v1603 = vunpack.c.l.b16 %v440
  %v1604 = vunpack.c.l.b16 %v441
  %v1605 = vunpack.c.l.b16 %v442
  %v1606 = vunpack.c.l.b16 %v443
  %v1607 = vunpack.c.l.b16 %v444
  %v1608 = vunpack.c.l.b16 %v445
  %v1609 = vunpack.c.l.b16 %v446
  %v1610 = vunpack.c.l.b16 %v447
  %v1611 = vunpack.c.l.b16 %v448
  %v1612 = vunpack.c.l.b16 %v449
  %v1613 = vunpack.c.l.b16 %v450
  %v1614 = vunpack.c.l.b16 %v451
  %v1615 = vunpack.c.l.b16 %v452
  %v1616 = vunpack.c.l.b16 %v453
  %v1617 = vunpack.c.l.b16 %v454
  %v1618 = vunpack.c.l.b16 %v455
  %v1619 = vunpack.c.l.b16 %v456
  %v1620 = vunpack.c.l.b16 %v457
  %v1621 = vunpack.c.l.b16 %v458
  %v1622 = vunpack.c.l.b16 %v459
  %v1623 = vunpack.c.l.b16 %v460
  %v1624 = vunpack.c.l.b16 %v461
  %v1625 = vunpack.c.l.b16 %v462
  %v1626 = vunpack.c.l.b16 %v463
  %v1627 = vunpack.c.l.b16 %v464
  %v1628 = vunpack.c.l.b16 %v465
  %v1629 = vunpack.c.l.b16 %v466
  %v1630 = vunpack.c.l.b16 %v467
  %v1631 = vunpack.c.l.b16 %v468
  %v1632 = vunpack.c.l.b16 %v469
  %v1633 = vunpack.c.l.b16 %v470
  %v1634 = vunpack.c.l.b16 %v471
  %v1635 = vunpack.c.l.b16 %v472
  %v1636 = vunpack.c.l.b16 %v473
  %v1637 = vunpack.c.l.b16 %v474
  %v1638 = vunpack.c.l.b16 %v475
  %v1639 = vunpack.c.l.b16 %v476
  %v1640 = vunpack.c.l.b16 %v477
  %v1641 = vunpack.c.l.b16 %v478
  %v1642 = vunpack.c.l.b16 %v479
  %v1643 = vunpack.c.l.b16 %v480
  %v1644 = vunpack.c.l.b16 %v481
  %v1645 = vunpack.c.l.b16 %v482
  %v1646 = vunpack.c.l.b16 %v483
  %v1647 = vunpack.c.l.b16 %v484
  %v1648 = vunpack.c.l.b16 %v485
  %v1649 = vunpack.c.l.b16 %v486
  %v1650 = vunpack.c.l.b16 %v487
  %v1651 = vunpack.c.l.b16 %v488
  %v1652 = vunpack.c.l.b16 %v489
  %v1653 = vunpack.c.l.b16 %v490
  %v1654 = vunpack.c.l.b16 %v491
  %v1655 = vunpack.c.l.b16 %v492
  %v1656 = vunpack.c.l.b16 %v493
  %v1657 = vunpack.c.l.b16 %v494
  %v1658 = vunpack.c.l.b16 %v495
  %v1659 = vunpack.c.l.b16 %v496
  %v1660 = vunpack.c.l.b16 %v497
  %v1661 = vunpack.c.l.b16 %v498
  %v1662 = vunpack.c.l.b16 %v499
  %v1663 = vunpack.c.l.b16 %v500
  %v1664 = vunpack.c.l.b16 %v501
  %v1665 = vunpack.c.l.b16 %v502
  %v1666 = vunpack.c.l.b16 %v503
  %v1667 = vunpack.c.l.b16 %v504
  %v1668 = vunpack.c.l.b16 %v505
  %v1669 = vunpack.c.l.b16 %v506
  %v1670 = vunpack.c.l.b16 %v507
  %v1671 = vunpack.c.l.b16 %v508
  %v1672 = vunpack.c.l.b16 %v509
  %v1673 = vunpack.c.l.b16 %v510
  %v1674 = vunpack.c.l.b16 %v511
  %v1675 = vunpack.c.l.b16 %v512
  %v1676 = vunpack.c.l.b16 %v513
  %v1677 = vunpack.c.l.b16 %v514
  %v1678 = vunpack.c.l.b16 %v515
  %v1679 = vunpack.c.l.b16 %v516
  %v1680 = vunpack.c.l.b16 %v517
  %v1681 = vunpack.c.l.b16 %v518
  %v1682 = vunpack.c.l.b16 %v519
  %v1683 = vunpack.c.l.b16 %v520
  %v1684 = vunpack.c.l.b16 %v521
  %v1685 = vunpack.c.l.b16 %v522
  %v1686 = vunpack.c.l.b16 %v523
  %v1687 = vunpack.c.l.b16 %v524
  %v1688 = vunpack.c.l.b16 %v525
  %v1689 = vunpack.c.l.b16 %v526
  %v1690 = vunpack.c.l.b16 %v527
  %v1691 = vunpack.c.l.b16 %v528
  %v1692 = vunpack.c.l.b16 %v529
  %v1693 = vunpack.c.l.b16 %v530
  %v1694 = vunpack.c.l.b16 %v531
  %v1695 = vunpack.c.l.b16 %v532
  %v1696 = vunpack.c.l.b16 %v533
  %v1697 = vunpack.c.l.b16 %v534
  %v1698 = vunpack.c.l.b16 %v535
  %v1699 = vunpack.c.l.b16 %v536
  %v1700 = vunpack.c.l.b16 %v537
  %v1701 = vunpack.c.l.b16 %v538
  %v1702 = vunpack.c.l.b16 %v539
  %v1703 = vunpack.c.l.b16 %v540
  %v1704 = vunpack.c.l.b16 %v541
  %v1705 = vunpack.c.l.b16 %v542
  %v1706 = vunpack.c.l.b16 %v543
  %v1707 = vunpack.c.l.b16 %v544
  %v1708 = vunpack.c.l.b16 %v545
  %v1709 = vunpack.c.l.b16 %v546
  %v1710 = vunpack.c.l.b16 %v547
  %v1711 = vunpack.c.l.b16 %v548
  %v1712 = vunpack.c.l.b16 %v549
  %v1713 = vunpack.c.l.b16 %v550
  %v1714 = vunpack.c.l.b16 %v551
  %v1715 = vunpack.c.l.b16 %v552
  %v1716 = vunpack.c.l.b16 %v553
  %v1717 = vunpack.c.l.b16 %v554
  %v1718 = vunpack.c.l.b16 %v555
  %v1719 = vunpack.c.l.b16 %v556
  %v1720 = vunpack.c.l.b16 %v557
  %v1721 = vunpack.c.l.b16 %v558
  %v1722 = vunpack.c.l.b16 %v559
  %v1723 = vunpack.c.l.b16 %v560
  %v1724 = vunpack.c.l.b16 %v561
  %v1725 = vunpack.c.l.b16 %v562
  %v1726 = vunpack.c.l.b16 %v563
  %v1727 = vunpack.c.l.b16 %v564
  %v1728 = vunpack.c.l.b16 %v565
  %v1729 = vunpack.c.l.b16 %v566
  %v1730 = vunpack.c.l.b16 %v567
  %v1731 = vunpack.c.l.b16 %v568
  %v1732 = vunpack.c.l.b16 %v569
  %v1733 = vunpack.c.l.b16 %v570
  %v1734 = vunpack.c.l.b16 %v571
  %v1735 = vunpack.c.l.b16 %v572
  %v1736 = vunpack.c.l.b16 %v573
  %v1737 = vunpack.c.l.b16 %v574
  %v1738 = vunpack.c.l.b16 %v575
  %v1739 = vunpack.c.l.b16 %v576
  %v1740 = vunpack.c.l.b16 %v577
  %v1741 = vunpack.c.l.b16 %v578
  %v1742 = vunpack.c.l.b16 %v579
  %v1743 = vunpack.c.l.b16 %v580
  %v1744 = vunpack.c.l.b16 %v581
  %v1745 = vunpack.c.l.b16 %v582
  %v1746 = vunpack.c.l.b16 %v583
  %v1747 = vunpack.c.l.b16 %v584
  %v1748 = vunpack.c.l.b16 %v585
  %v1749 = vunpack.c.l.b16 %v586
  %v1750 = vunpack.c.l.b16 %v587
  %v1751 = vunpack.c.l.b16 %v588
  %v1752 = vunpack.c.l.b16 %v589
  %v1753 = vunpack.c.l.b16 %v590
  %v1754 = vunpack.c.l.b16 %v591
  %v1755 = vunpack.c.l.b16 %v592
  %v1756 = vunpack.c.l.b16 %v593
  %v1757 = vunpack.c.l.b16 %v594
  %v1758 = vunpack.c.l.b16 %v595
  %v1759 = vunpack.c.l.b16 %v596
  %v1760 = vunpack.c.l.b16 %v597
  %v1761 = vunpack.c.l.b16 %v598
  %v1762 = vunpack.c.l.b16 %v599
  %v1763 = vunpack.c.l.b16 %v600
  %v1764 = vunpack.c.l.b16 %v601
  %v1765 = vunpack.c.l.b16 %v602
  %v1766 = vunpack.c.l.b16 %v603
  %v1767 = vunpack.c.l.b16 %v604
  %v1768 = vunpack.c.l.b16 %v605
  %v1769 = vunpack.c.l.b16 %v606
  %v1770 = vunpack.c.l.b16 %v607
  %v1771 = vunpack.c.l.b16 %v608
  %v1772 = vpack.c.b16 %v1197, %v1196
  %v1773 = vpack.c.b16 %v1199, %v1198
  %v1774 = vpack.c.b16 %v1201, %v1200
  %v1775 = vpack.c.b16 %v1203, %v1202
  %v1776 = vpack.c.b16 %v1205, %v1204
  %v1777 = vpack.c.b16 %v1207, %v1206
  %v1778 = vpack.c.b16 %v1209, %v1208
  %v1779 = vpack.c.b16 %v1211, %v1210
  %v1780 = vpack.c.b16 %v1213, %v1212
  %v1781 = vpack.c.b16 %v1215, %v1214
  %v1782 = vpack.c.b16 %v1217, %v1216
  %v1783 = vpack.c.b16 %v1219, %v1218
  %v1784 = vpack.c.b16 %v1221, %v1220
  %v1785 = vpack.c.b16 %v1223, %v1222
  %v1786 = vpack.c.b16 %v1225, %v1224
  %v1787 = vpack.c.b16 %v1227, %v1226
  %v1788 = vpack.c.b16 %v1229, %v1228
  %v1789 = vpack.c.b16 %v1231, %v1230
  %v1790 = vpack.c.b16 %v1233, %v1232
  %v1791 = vpack.c.b16 %v1235, %v1234
  %v1792 = vpack.c.b16 %v1237, %v1236
  %v1793 = vpack.c.b16 %v1239, %v1238
  %v1794 = vpack.c.b16 %v1241, %v1240
  %v1795 = vpack.c.b16 %v1243, %v1242
  %v1796 = vpack.c.b16 %v1245, %v1244
  %v1797 = vpack.c.b16 %v1247, %v1246
  %v1798 = vpack.c.b16 %v1249, %v1248
  %v1799 = vpack.c.b16 %v1251, %v1250
  %v1800 = vpack.c.b16 %v1253, %v1252
  %v1801 = vpack.c.b16 %v1255, %v1254
  %v1802 = vpack.c.b16 %v1257, %v1256
  %v1803 = vpack.c.b16 %v1259, %v1258
  %v1804 = vpack.c.b16 %v1261, %v1260
  %v1805 = vpack.c.b16 %v1263, %v1262
  %v1806 = vpack.c.b16 %v1265, %v1264
  %v1807 = vpack.c.b16 %v1267, %v1266
  %v1808 = vpack.c.b16 %v1269, %v1268
  %v1809 = vpack.c.b16 %v1271, %v1270
  %v1810 = vpack.c.b16 %v1273, %v1272
  %v1811 = vpack.c.b16 %v1275, %v1274
  %v1812 = vpack.c.b16 %v1277, %v1276
  %v1813 = vpack.c.b16 %v1279, %v1278
  %v1814 = vpack.c.b16 %v1281, %v1280
  %v1815 = vpack.c.b16 %v1283, %v1282
  %v1816 = vpack.c.b16 %v1285, %v1284
  %v1817 = vpack.c.b16 %v1287, %v1286
  %v1818 = vpack.c.b16 %v1289, %v1288
  %v1819 = vpack.c.b16 %v1291, %v1290
  %v1820 = vpack.c.b16 %v1293, %v1292
  %v1821 = vpack.c.b16 %v1295, %v1294
  %v1822 = vpack.c.b16 %v1297, %v1296
  %v1823 = vpack.c.b16 %v1299, %v1298
  %v1824 = vpack.c.b16 %v1301, %v1300
  %v1825 = vpack.c.b16 %v1303, %v1302
  %v1826 = vpack.c.b16 %v1305, %v1304
  %v1827 = vpack.c.b16 %v1307, %v1306
  %v1828 = vpack.c.b16 %v1309, %v1308
  %v1829 = vpack.c.b16 %v1311, %v1310
  %v1830 = vpack.c.b16 %v1313, %v1312
  %v1831 = vpack.c.b16 %v1315, %v1314
  %v1832 = vpack.c.b16 %v1317, %v1316
  %v1833 = vpack.c.b16 %v1319, %v1318
  %v1834 = vpack.c.b16 %v1321, %v1320
  %v1835 = vpack.c.b16 %v1323, %v1322
  %v1836 = vpack.c.b16 %v1325, %v1324
  %v1837 = vpack.c.b16 %v1327, %v1326
  %v1838 = vpack.c.b16 %v1329, %v1328
  %v1839 = vpack.c.b16 %v1331, %v1330
  %v1840 = vpack.c.b16 %v1333, %v1332
  %v1841 = vpack.c.b16 %v1335, %v1334
  %v1842 = vpack.c.b16 %v1337, %v1336
  %v1843 = vpack.c.b16 %v1339, %v1338
  %v1844 = vpack.c.b16 %v1341, %v1340
  %v1845 = vpack.c.b16 %v1343, %v1342
  %v1846 = vpack.c.b16 %v1345, %v1344
  %v1847 = vpack.c.b16 %v1347, %v1346
  %v1848 = vpack.c.b16 %v1349, %v1348
  %v1849 = vpack.c.b16 %v1351, %v1350
  %v1850 = vpack.c.b16 %v1353, %v1352
  %v1851 = vpack.c.b16 %v1355, %v1354
  %v1852 = vpack.c.b16 %v1357, %v1356
  %v1853 = vpack.c.b16 %v1359, %v1358
  %v1854 = vpack.c.b16 %v1361, %v1360
  %v1855 = vpack.c.b16 %v1363, %v1362
  %v1856 = vpack.c.b16 %v1365, %v1364
  %v1857 = vpack.c.b16 %v1367, %v1366
  %v1858 = vpack.c.b16 %v1369, %v1368
  %v1859 = vpack.c.b16 %v1371, %v1370
  %v1860 = vpack.c.b16 %v1373, %v1372
  %v1861 = vpack.c.b16 %v1375, %v1374
  %v1862 = vpack.c.b16 %v1377, %v1376
  %v1863 = vpack.c.b16 %v1379, %v1378
  %v1864 = vpack.c.b16 %v1381, %v1380
  %v1865 = vpack.c.b16 %v1383, %v1382
  %v1866 = vpack.c.b16 %v1385, %v1384
  %v1867 = vpack.c.b16 %v1387, %v1386
  %v1868 = vpack.c.b16 %v1389, %v1388
  %v1869 = vpack.c.b16 %v1391, %v1390
  %v1870 = vpack.c.b16 %v1393, %v1392
  %v1871 = vpack.c.b16 %v1395, %v1394
  %v1872 = vpack.c.b16 %v1397, %v1396
  %v1873 = vpack.c.b16 %v1399, %v1398
  %v1874 = vpack.c.b16 %v1401, %v1400
  %v1875 = vpack.c.b16 %v1403, %v1402
  %v1876 = vpack.c.b16 %v1405, %v1404
  %v1877 = vpack.c.b16 %v1407, %v1406
  %v1878 = vpack.c.b16 %v1409, %v1408
  %v1879 = vpack.c.b16 %v1411, %v1410
  %v1880 = vpack.c.b16 %v1413, %v1412
  %v1881 = vpack.c.b16 %v1415, %v1414
  %v1882 = vpack.c.b16 %v1417, %v1416
  %v1883 = vpack.c.b16 %v1419, %v1418
  %v1884 = vpack.c.b16 %v1421, %v1420
  %v1885 = vpack.c.b16 %v1423, %v1422
  %v1886 = vpack.c.b16 %v1425, %v1424
  %v1887 = vpack.c.b16 %v1427, %v1426
  %v1888 = vpack.c.b16 %v1429, %v1428
  %v1889 = vpack.c.b16 %v1431, %v1430
  %v1890 = vpack.c.b16 %v1433, %v1432
  %v1891 = vpack.c.b16 %v1435, %v1434
  %v1892 = vpack.c.b16 %v1437, %v1436
  %v1893 = vpack.c.b16 %v1439, %v1438
  %v1894 = vpack.c.b16 %v1441, %v1440
  %v1895 = vpack.c.b16 %v1443, %v1442
  %v1896 = vpack.c.b16 %v1445, %v1444
  %v1897 = vpack.c.b16 %v1447, %v1446
  %v1898 = vpack.c.b16 %v1449, %v1448
  %v1899 = vpack.c.b16 %v1451, %v1450
  %v1900 = vpack.c.b16 %v1453, %v1452
  %v1901 = vpack.c.b16 %v1455, %v1454
  %v1902 = vpack.c.b16 %v1457, %v1456
  %v1903 = vpack.c.b16 %v1459, %v1458
  %v1904 = vpack.c.b16 %v1461, %v1460
  %v1905 = vpack.c.b16 %v1463, %v1462
  %v1906 = vpack.c.b16 %v1465, %v1464
  %v1907 = vpack.c.b16 %v1467, %v1466
  %v1908 = vpack.c.b16 %v1469, %v1468
  %v1909 = vpack.c.b16 %v1471, %v1470
  %v1910 = vpack.c.b16 %v1473, %v1472
  %v1911 = vpack.c.b16 %v1475, %v1474
  %v1912 = vpack.c.b16 %v1477, %v1476
  %v1913 = vpack.c.b16 %v1479, %v1478
  %v1914 = vpack.c.b16 %v1481, %v1480
  %v1915 = vpack.c.b16 %v1483, %v1482
  %v1916 = vpack.c.b16 %v1485, %v1484
  %v1917 = vpack.c.b16 %v1487, %v1486
  %v1918 = vpack.c.b16 %v1489, %v1488
  %v1919 = vpack.c.b16 %v1491, %v1490
  %v1920 = vpack.c.b16 %v1493, %v1492
  %v1921 = vpack.c.b16 %v1495, %v1494
  %v1922 = vpack.c.b16 %v1497, %v1496
  %v1923 = vpack.c.b16 %v1499, %v1498
  %v1924 = vpack.c.b16 %v1501, %v1500
  %v1925 = vpack.c.b16 %v1503, %v1502
  %v1926 = vpack.c.b16 %v1505, %v1504
  %v1927 = vpack.c.b16 %v1507, %v1506
  %v1928 = vpack.c.b16 %v1509, %v1508
  %v1929 = vpack.c.b16 %v1511, %v1510
  %v1930 = vpack.c.b16 %v1513, %v1512
  %v1931 = vpack.c.b16 %v1515, %v1514
  %v1932 = vpack.c.b16 %v1517, %v1516
  %v1933 = vpack.c.b16 %v1519, %v1518
  %v1934 = vpack.c.b16 %v1521, %v1520
  %v1935 = vpack.c.b16 %v1523, %v1522
  %v1936 = vpack.c.b16 %v1525, %v1524
  %v1937 = vpack.c.b16 %v1527, %v1526
  %v1938 = vpack.c.b16 %v1529, %v1528
  %v1939 = vpack.c.b16 %v1531, %v1530
  %v1940 = vpack.c.b16 %v1533, %v1532
  %v1941 = vpack.c.b16 %v1535, %v1534
  %v1942 = vpack.c.b16 %v1537, %v1536
  %v1943 = vpack.c.b16 %v1539, %v1538
  %v1944 = vpack.c.b16 %v1541, %v1540
  %v1945 = vpack.c.b16 %v1543, %v1542
  %v1946 = vpack.c.b16 %v1545, %v1544
  %v1947 = vpack.c.b16 %v1547, %v1546
  %v1948 = vpack.c.b16 %v1549, %v1548
  %v1949 = vpack.c.b16 %v1551, %v1550
  %v1950 = vpack.c.b16 %v1553, %v1552
  %v1951 = vpack.c.b16 %v1555, %v1554
  %v1952 = vpack.c.b16 %v1557, %v1556
  %v1953 = vpack.c.b16 %v1559, %v1558
  %v1954 = vpack.c.b16 %v1561, %v1560
  %v1955 = vpack.c.b16 %v1563, %v1562
  %v1956 = vpack.c.b16 %v1565, %v1564
  %v1957 = vpack.c.b16 %v1567, %v1566
  %v1958 = vpack.c.b16 %v1569, %v1568
  %v1959 = vpack.c.b16 %v1571, %v1570
  %v1960 = vpack.c.b16 %v1573, %v1572
  %v1961 = vpack.c.b16 %v1575, %v1574
  %v1962 = vpack.c.b16 %v1577, %v1576
  %v1963 = vpack.c.b16 %v1579, %v1578
  %v1964 = vpack.c.b16 %v1581, %v1580
  %v1965 = vpack.c.b16 %v1583, %v1582
  %v1966 = vpack.c.b16 %v1585, %v1584
  %v1967 = vpack.c.b16 %v1587, %v1586
  %v1968 = vpack.c.b16 %v1589, %v1588
  %v1969 = vpack.c.b16 %v1591, %v1590
  %v1970 = vpack.c.b16 %v1593, %v1592
  %v1971 = vpack.c.b16 %v1595, %v1594
  %v1972 = vpack.c.b16 %v1597, %v1596
  %v1973 = vpack.c.b16 %v1599, %v1598
  %v1974 = vpack.c.b16 %v1601, %v1600
  %v1975 = vpack.c.b16 %v1603, %v1602
  %v1976 = vpack.c.b16 %v1605, %v1604
  %v1977 = vpack.c.b16 %v1607, %v1606
  %v1978 = vpack.c.b16 %v1609, %v1608
  %v1979 = vpack.c.b16 %v1611, %v1610
  %v1980 = vpack.c.b16 %v1613, %v1612
  %v1981 = vpack.c.b16 %v1615, %v1614
  %v1982 = vpack.c.b16 %v1617, %v1616
  %v1983 = vpack.c.b16 %v1619, %v1618
  %v1984 = vpack.c.b16 %v1621, %v1620
  %v1985 = vpack.c.b16 %v1623, %v1622
  %v1986 = vpack.c.b16 %v1625, %v1624
  %v1987 = vpack.c.b16 %v1627, %v1626
  %v1988 = vpack.c.b16 %v1629, %v1628
  %v1989 = vpack.c.b16 %v1631, %v1630
  %v1990 = vpack.c.b16 %v1633, %v1632
  %v1991 = vpack.c.b16 %v1635, %v1634
  %v1992 = vpack.c.b16 %v1637, %v1636
  %v1993 = vpack.c.b16 %v1639, %v1638
  %v1994 = vpack.c.b16 %v1641, %v1640
  %v1995 = vpack.c.b16 %v1643, %v1642
  %v1996 = vpack.c.b16 %v1645, %v1644
  %v1997 = vpack.c.b16 %v1647, %v1646
  %v1998 = vpack.c.b16 %v1649, %v1648
  %v1999 = vpack.c.b16 %v1651, %v1650
  %v2000 = vpack.c.b16 %v1653, %v1652
  %v2001 = vpack.c.b16 %v1655, %v1654
  %v2002 = vpack.c.b16 %v1657, %v1656
  %v2003 = vpack.c.b16 %v1659, %v1658
  %v2004 = vpack.c.b16 %v1661, %v1660
  %v2005 = vpack.c.b16 %v1663, %v1662
  %v2006 = vpack.c.b16 %v1665, %v1664
  %v2007 = vpack.c.b16 %v1667, %v1666
  %v2008 = vpack.c.b16 %v1669, %v1668
  %v2009 = vpack.c.b16 %v1671, %v1670
  %v2010 = vpack.c.b16 %v1673, %v1672
  %v2011 = vpack.c.b16 %v1675, %v1674
  %v2012 = vpack.c.b16 %v1677, %v1676
  %v2013 = vpack.c.b16 %v1679, %v1678
  %v2014 = vpack.c.b16 %v1681, %v1680
  %v2015 = vpack.c.b16 %v1683, %v1682
  %v2016 = vpack.c.b16 %v1685, %v1684
  %v2017 = vpack.c.b16 %v1687, %v1686
  %v2018 = vpack.c.b16 %v1689, %v1688
  %v2019 = vpack.c.b16 %v1691, %v1690
  %v2020 = vpack.c.b16 %v1693, %v1692
  %v2021 = vpack.c.b16 %v1695, %v1694
  %v2022 = vpack.c.b16 %v1697, %v1696
  %v2023 = vpack.c.b16 %v1699, %v1698
  %v2024 = vpack.c.b16 %v1701, %v1700
  %v2025 = vpack.c.b16 %v1703, %v1702
  %v2026 = vpack.c.b16 %v1705, %v1704
  %v2027 = vpack.c.b16 %v1707, %v1706
  %v2028 = vpack.c.b16 %v1709, %v1708
  %v2029 = vpack.c.b16 %v1711, %v1710
  %v2030 = vpack.c.b16 %v1713, %v1712
  %v2031 = vpack.c.b16 %v1715, %v1714
  %v2032 = vpack.c.b16 %v1717, %v1716
  %v2033 = vpack.c.b16 %v1719, %v1718
  %v2034 = vpack.c.b16 %v1721, %v1720
  %v2035 = vpack.c.b16 %v1723, %v1722
  %v2036 = vpack.c.b16 %v1725, %v1724
  %v2037 = vpack.c.b16 %v1727, %v1726
  %v2038 = vpack.c.b16 %v1729, %v1728
  %v2039 = vpack.c.b16 %v1731, %v1730
  %v2040 = vpack.c.b16 %v1733, %v1732
  %v2041 = vpack.c.b16 %v1735, %v1734
  %v2042 = vpack.c.b16 %v1737, %v1736
  %v2043 = vpack.c.b16 %v1739, %v1738
  %v2044 = vpack.c.b16 %v1741, %v1740
  %v2045 = vpack.c.b16 %v1743, %v1742
  %v2046 = vpack.c.b16 %v1745, %v1744
  %v2047 = vpack.c.b16 %v1747, %v1746
  %v2048 = vpack.c.b16 %v1749, %v1748
  %v2049 = vpack.c.b16 %v1751, %v1750
  %v2050 = vpack.c.b16 %v1753, %v1752
  %v2051 = vpack.c.b16 %v1755, %v1754
  %v2052 = vpack.c.b16 %v1757, %v1756
  %v2053 = vpack.c.b16 %v1759, %v1758
  %v2054 = vpack.c.b16 %v1761, %v1760
  %v2055 = vpack.c.b16 %v1763, %v1762
  %v2056 = vpack.c.b16 %v1765, %v1764
  %v2057 = vpack.c.b16 %v1767, %v1766
  %v2058 = vpack.c.b16 %v1769, %v1768
  %v2059 = vpack.c.b16 %v1771, %v1770
  %v2064 = vunpack.c.l.b16 %v609
  %v2065 = vunpack.c.l.b16 %v610
  %v2066 = vunpack.c.l.b16 %v611
  %v2067 = vunpack.c.l.b16 %v612
  %v2068 = vpack.c.b16 %v2065, %v2064
  %v2069 = vpack.c.b16 %v2067, %v2066
  %vm2072 = vcmask 261120
  %v2074 = vsel %vm2072, %v1772, 0
  %v2077 = vsel %vm2072, %v1773, 0
  %v2080 = vsel %vm2072, %v1774, 0
  %v2083 = vsel %vm2072, %v1775, 0
  %v2086 = vsel %vm2072, %v1776, 0
  %v2089 = vsel %vm2072, %v1777, 0
  %v2092 = vsel %vm2072, %v1778, 0
  %v2095 = vsel %vm2072, %v1779, 0
  %v2098 = vsel %vm2072, %v1780, 0
  %v2101 = vsel %vm2072, %v1781, 0
  %v2104 = vsel %vm2072, %v1782, 0
  %v2107 = vsel %vm2072, %v1783, 0
  %v2110 = vsel %vm2072, %v1784, 0
  %v2113 = vsel %vm2072, %v1785, 0
  %v2116 = vsel %vm2072, %v1786, 0
  %v2119 = vsel %vm2072, %v1787, 0
  %v2122 = vsel %vm2072, %v1788, 0
  %v2125 = vsel %vm2072, %v1789, 0
  %v2128 = vsel %vm2072, %v1790, 0
  %v2131 = vsel %vm2072, %v1791, 0
  %v2134 = vsel %vm2072, %v1792, 0
  %v2137 = vsel %vm2072, %v1793, 0
  %v2140 = vsel %vm2072, %v1794, 0
  %v2143 = vsel %vm2072, %v1795, 0
  %v2146 = vsel %vm2072, %v1796, 0
  %v2149 = vsel %vm2072, %v1797, 0
  %v2152 = vsel %vm2072, %v1798, 0
  %v2155 = vsel %vm2072, %v1799, 0
  %v2158 = vsel %vm2072, %v1800, 0
  %v2161 = vsel %vm2072, %v1801, 0
  %v2164 = vsel %vm2072, %v1802, 0
  %v2167 = vsel %vm2072, %v1803, 0
  %v2170 = vsel %vm2072, %v1804, 0
  %v2173 = vsel %vm2072, %v1805, 0
  %v2176 = vsel %vm2072, %v1806, 0
  %v2179 = vsel %vm2072, %v1807, 0
  %v2182 = vsel %vm2072, %v1808, 0
  %v2185 = vsel %vm2072, %v1809, 0
  %v2188 = vsel %vm2072, %v1810, 0
  %v2191 = vsel %vm2072, %v1811, 0
  %v2194 = vsel %vm2072, %v1812, 0
  %v2197 = vsel %vm2072, %v1813, 0
  %v2200 = vsel %vm2072, %v1814, 0
  %v2203 = vsel %vm2072, %v1815, 0
  %v2206 = vsel %vm2072, %v1816, 0
  %v2209 = vsel %vm2072, %v1817, 0
  %v2212 = vsel %vm2072, %v1818, 0
  %v2215 = vsel %vm2072, %v1819, 0
  %v2218 = vsel %vm2072, %v1820, 0
  %v2221 = vsel %vm2072, %v1821, 0
  %v2224 = vsel %vm2072, %v1822, 0
  %v2227 = vsel %vm2072, %v1823, 0
  %v2230 = vsel %vm2072, %v1824, 0
  %v2233 = vsel %vm2072, %v1825, 0
  %v2236 = vsel %vm2072, %v1826, 0
  %v2239 = vsel %vm2072, %v1827, 0
  %v2242 = vsel %vm2072, %v1828, 0
  %v2245 = vsel %vm2072, %v1829, 0
  %v2248 = vsel %vm2072, %v1830, 0
  %v2251 = vsel %vm2072, %v1831, 0
  %v2254 = vsel %vm2072, %v1832, 0
  %v2257 = vsel %vm2072, %v1833, 0
  %v2260 = vsel %vm2072, %v1834, 0
  %v2263 = vsel %vm2072, %v1835, 0
  %v2266 = vsel %vm2072, %v1836, 0
  %v2269 = vsel %vm2072, %v1837, 0
  %v2272 = vsel %vm2072, %v1838, 0
  %v2275 = vsel %vm2072, %v1839, 0
  %v2278 = vsel %vm2072, %v1840, 0
  %v2281 = vsel %vm2072, %v1841, 0
  %v2284 = vsel %vm2072, %v1842, 0
  %v2287 = vsel %vm2072, %v1843, 0
  %v2290 = vsel %vm2072, %v1844, 0
  %v2293 = vsel %vm2072, %v1845, 0
  %v2296 = vsel %vm2072, %v1846, 0
  %v2299 = vsel %vm2072, %v1847, 0
  %v2302 = vsel %vm2072, %v1848, 0
  %v2305 = vsel %vm2072, %v1849, 0
  %v2308 = vsel %vm2072, %v1850, 0
  %v2311 = vsel %vm2072, %v1851, 0
  %v2314 = vsel %vm2072, %v1852, 0
  %v2317 = vsel %vm2072, %v1853, 0
  %v2320 = vsel %vm2072, %v1854, 0
  %v2323 = vsel %vm2072, %v1855, 0
  %v2326 = vsel %vm2072, %v1856, 0
  %v2329 = vsel %vm2072, %v1857, 0
  %v2332 = vsel %vm2072, %v1858, 0
  %v2335 = vsel %vm2072, %v1859, 0
  %v2338 = vsel %vm2072, %v1860, 0
  %v2341 = vsel %vm2072, %v1861, 0
  %v2344 = vsel %vm2072, %v1862, 0
  %v2347 = vsel %vm2072, %v1863, 0
  %v2350 = vsel %vm2072, %v1864, 0
  %v2353 = vsel %vm2072, %v1865, 0
  %v2356 = vsel %vm2072, %v1866, 0
  %v2359 = vsel %vm2072, %v1867, 0
  %v2362 = vsel %vm2072, %v1868, 0
  %v2365 = vsel %vm2072, %v1869, 0
  %v2368 = vsel %vm2072, %v1870, 0
  %v2371 = vsel %vm2072, %v1871, 0
  %v2374 = vsel %vm2072, %v1872, 0
  %v2377 = vsel %vm2072, %v1873, 0
  %v2380 = vsel %vm2072, %v1874, 0
  %v2383 = vsel %vm2072, %v1875, 0
  %v2386 = vsel %vm2072, %v1876, 0
  %v2389 = vsel %vm2072, %v1877, 0
  %v2392 = vsel %vm2072, %v1878, 0
  %v2395 = vsel %vm2072, %v1879, 0
  %v2398 = vsel %vm2072, %v1880, 0
  %v2401 = vsel %vm2072, %v1881, 0
  %v2404 = vsel %vm2072, %v1882, 0
  %v2407 = vsel %vm2072, %v1883, 0
  %v2410 = vsel %vm2072, %v1884, 0
  %v2413 = vsel %vm2072, %v1885, 0
  %v2416 = vsel %vm2072, %v1886, 0
  %v2419 = vsel %vm2072, %v1887, 0
  %v2422 = vsel %vm2072, %v1888, 0
  %v2425 = vsel %vm2072, %v1889, 0
  %v2428 = vsel %vm2072, %v1890, 0
  %v2431 = vsel %vm2072, %v1891, 0
  %v2434 = vsel %vm2072, %v1892, 0
  %v2437 = vsel %vm2072, %v1893, 0
  %v2440 = vsel %vm2072, %v1894, 0
  %v2443 = vsel %vm2072, %v1895, 0
  %v2446 = vsel %vm2072, %v1896, 0
  %v2449 = vsel %vm2072, %v1897, 0
  %v2452 = vsel %vm2072, %v1898, 0
  %v2455 = vsel %vm2072, %v1899, 0
  %v2458 = vsel %vm2072, %v1900, 0
  %v2461 = vsel %vm2072, %v1901, 0
  %v2464 = vsel %vm2072, %v1902, 0
  %v2467 = vsel %vm2072, %v1903, 0
  %v2470 = vsel %vm2072, %v1904, 0
  %v2473 = vsel %vm2072, %v1905, 0
  %v2476 = vsel %vm2072, %v1906, 0
  %v2479 = vsel %vm2072, %v1907, 0
  %v2482 = vsel %vm2072, %v1908, 0
  %v2485 = vsel %vm2072, %v1909, 0
  %v2488 = vsel %vm2072, %v1910, 0
  %v2491 = vsel %vm2072, %v1911, 0
  %v2494 = vsel %vm2072, %v1912, 0
  %v2497 = vsel %vm2072, %v1913, 0
  %v2500 = vsel %vm2072, %v1914, 0
  %v2503 = vsel %vm2072, %v1915, 0
  %v2506 = vsel %vm2072, %v1916, 0
  %v2509 = vsel %vm2072, %v1917, 0
  %v2512 = vsel %vm2072, %v1918, 0
  %v2515 = vsel %vm2072, %v1919, 0
  %v2518 = vsel %vm2072, %v1920, 0
  %v2521 = vsel %vm2072, %v1921, 0
  %v2524 = vsel %vm2072, %v1922, 0
  %v2527 = vsel %vm2072, %v1923, 0
  %v2530 = vsel %vm2072, %v1924, 0
  %v2533 = vsel %vm2072, %v1925, 0
  %v2536 = vsel %vm2072, %v1926, 0
  %v2539 = vsel %vm2072, %v1927, 0
  %v2542 = vsel %vm2072, %v1928, 0
  %v2545 = vsel %vm2072, %v1929, 0
  %v2548 = vsel %vm2072, %v1930, 0
  %v2551 = vsel %vm2072, %v1931, 0
  %v2554 = vsel %vm2072, %v1932, 0
  %v2557 = vsel %vm2072, %v1933, 0
  %v2560 = vsel %vm2072, %v1934, 0
  %v2563 = vsel %vm2072, %v1935, 0
  %v2566 = vsel %vm2072, %v1936, 0
  %v2569 = vsel %vm2072, %v1937, 0
  %v2572 = vsel %vm2072, %v1938, 0
  %v2575 = vsel %vm2072, %v1939, 0
  %v2578 = vsel %vm2072, %v1940, 0
  %v2581 = vsel %vm2072, %v1941, 0
  %v2584 = vsel %vm2072, %v1942, 0
  %v2587 = vsel %vm2072, %v1943, 0
  %v2590 = vsel %vm2072, %v1944, 0
  %v2593 = vsel %vm2072, %v1945, 0
  %v2596 = vsel %vm2072, %v1946, 0
  %v2599 = vsel %vm2072, %v1947, 0
  %v2602 = vsel %vm2072, %v1948, 0
  %v2605 = vsel %vm2072, %v1949, 0
  %v2608 = vsel %vm2072, %v1950, 0
  %v2611 = vsel %vm2072, %v1951, 0
  %v2614 = vsel %vm2072, %v1952, 0
  %v2617 = vsel %vm2072, %v1953, 0
  %v2620 = vsel %vm2072, %v1954, 0
  %v2623 = vsel %vm2072, %v1955, 0
  %v2626 = vsel %vm2072, %v1956, 0
  %v2629 = vsel %vm2072, %v1957, 0
  %v2632 = vsel %vm2072, %v1958, 0
  %v2635 = vsel %vm2072, %v1959, 0
  %v2638 = vsel %vm2072, %v1960, 0
  %v2641 = vsel %vm2072, %v1961, 0
  %v2644 = vsel %vm2072, %v1962, 0
  %v2647 = vsel %vm2072, %v1963, 0
  %v2650 = vsel %vm2072, %v1964, 0
  %v2653 = vsel %vm2072, %v1965, 0
  %v2656 = vsel %vm2072, %v1966, 0
  %v2659 = vsel %vm2072, %v1967, 0
  %v2662 = vsel %vm2072, %v1968, 0
  %v2665 = vsel %vm2072, %v1969, 0
  %v2668 = vsel %vm2072, %v1970, 0
  %v2671 = vsel %vm2072, %v1971, 0
  %v2674 = vsel %vm2072, %v1972, 0
  %v2677 = vsel %vm2072, %v1973, 0
  %v2680 = vsel %vm2072, %v1974, 0
  %v2683 = vsel %vm2072, %v1975, 0
  %v2686 = vsel %vm2072, %v1976, 0
  %v2689 = vsel %vm2072, %v1977, 0
  %v2692 = vsel %vm2072, %v1978, 0
  %v2695 = vsel %vm2072, %v1979, 0
  %v2698 = vsel %vm2072, %v1980, 0
  %v2701 = vsel %vm2072, %v1981, 0
  %v2704 = vsel %vm2072, %v1982, 0
  %v2707 = vsel %vm2072, %v1983, 0
  %v2710 = vsel %vm2072, %v1984, 0
  %v2713 = vsel %vm2072, %v1985, 0
  %v2716 = vsel %vm2072, %v1986, 0
  %v2719 = vsel %vm2072, %v1987, 0
  %v2722 = vsel %vm2072, %v1988, 0
  %v2725 = vsel %vm2072, %v1989, 0
  %v2728 = vsel %vm2072, %v1990, 0
  %v2731 = vsel %vm2072, %v1991, 0
  %v2734 = vsel %vm2072, %v1992, 0
  %v2737 = vsel %vm2072, %v1993, 0
  %v2740 = vsel %vm2072, %v1994, 0
  %v2743 = vsel %vm2072, %v1995, 0
  %v2746 = vsel %vm2072, %v1996, 0
  %v2749 = vsel %vm2072, %v1997, 0
  %v2752 = vsel %vm2072, %v1998, 0
  %v2755 = vsel %vm2072, %v1999, 0
  %v2758 = vsel %vm2072, %v2000, 0
  %v2761 = vsel %vm2072, %v2001, 0
  %v2764 = vsel %vm2072, %v2002, 0
  %v2767 = vsel %vm2072, %v2003, 0
  %v2770 = vsel %vm2072, %v2004, 0
  %v2773 = vsel %vm2072, %v2005, 0
  %v2776 = vsel %vm2072, %v2006, 0
  %v2779 = vsel %vm2072, %v2007, 0
  %v2782 = vsel %vm2072, %v2008, 0
  %v2785 = vsel %vm2072, %v2009, 0
  %v2788 = vsel %vm2072, %v2010, 0
  %v2791 = vsel %vm2072, %v2011, 0
  %v2794 = vsel %vm2072, %v2012, 0
  %v2797 = vsel %vm2072, %v2013, 0
  %v2800 = vsel %vm2072, %v2014, 0
  %v2803 = vsel %vm2072, %v2015, 0
  %v2806 = vsel %vm2072, %v2016, 0
  %v2809 = vsel %vm2072, %v2017, 0
  %v2812 = vsel %vm2072, %v2018, 0
  %v2815 = vsel %vm2072, %v2019, 0
  %v2818 = vsel %vm2072, %v2020, 0
  %v2821 = vsel %vm2072, %v2021, 0
  %v2824 = vsel %vm2072, %v2022, 0
  %v2827 = vsel %vm2072, %v2023, 0
  %v2830 = vsel %vm2072, %v2024, 0
  %v2833 = vsel %vm2072, %v2025, 0
  %v2836 = vsel %vm2072, %v2026, 0
  %v2839 = vsel %vm2072, %v2027, 0
  %v2842 = vsel %vm2072, %v2028, 0
  %v2845 = vsel %vm2072, %v2029, 0
  %v2848 = vsel %vm2072, %v2030, 0
  %v2851 = vsel %vm2072, %v2031, 0
  %v2854 = vsel %vm2072, %v2032, 0
  %v2857 = vsel %vm2072, %v2033, 0
  %v2860 = vsel %vm2072, %v2034, 0
  %v2863 = vsel %vm2072, %v2035, 0
  %v2866 = vsel %vm2072, %v2036, 0
  %v2869 = vsel %vm2072, %v2037, 0
  %v2872 = vsel %vm2072, %v2038, 0
  %v2875 = vsel %vm2072, %v2039, 0
  %v2878 = vsel %vm2072, %v2040, 0
  %v2881 = vsel %vm2072, %v2041, 0
  %v2884 = vsel %vm2072, %v2042, 0
  %v2887 = vsel %vm2072, %v2043, 0
  %v2890 = vsel %vm2072, %v2044, 0
  %v2893 = vsel %vm2072, %v2045, 0
  %v2896 = vsel %vm2072, %v2046, 0
  %v2899 = vsel %vm2072, %v2047, 0
  %v2902 = vsel %vm2072, %v2048, 0
  %v2905 = vsel %vm2072, %v2049, 0
  %v2908 = vsel %vm2072, %v2050, 0
  %v2911 = vsel %vm2072, %v2051, 0
  %v2914 = vsel %vm2072, %v2052, 0
  %v2917 = vsel %vm2072, %v2053, 0
  %v2920 = vsel %vm2072, %v2054, 0
  %v2923 = vsel %vm2072, %v2055, 0
  %v2926 = vsel %vm2072, %v2056, 0
  %v2929 = vsel %vm2072, %v2057, 0
  %v2932 = vsel %vm2072, %v2058, 0
  %v2935 = vsel %vm2072, %v2059, 0
  %2937 = vmatprep.subr.bf16.mxu0 0
  %2938 = vmatpush1.bf16.msra.mxu0 0
  %2939 = vmatprep.subr.bf16.mxu0 0
  %2940 = vmatpush1.bf16.msra.mxu0 0
  %2941 = vmatprep.subr.bf16.mxu0 0
  %2942 = vmatpush1.bf16.msra.mxu0 0
  %2943 = vmatprep.subr.bf16.mxu0 0
  %2944 = vmatpush1.bf16.msra.mxu0 0
  %2945 = vmatprep.subr.bf16.mxu0 0
  %2946 = vmatpush1.bf16.msra.mxu0 0
  %2947 = vmatprep.subr.bf16.mxu0 0
  %2948 = vmatpush1.bf16.msra.mxu0 0
  %2949 = vmatprep.subr.bf16.mxu0 0
  %2950 = vmatpush1.bf16.msra.mxu0 %v2069
  %2951 = vmatprep.subr.bf16.mxu0 0
  %2952 = vmatpush1.bf16.msra.mxu0 %v2068
  %2953 = vmatprep.subr.bf16.mxu0 0
  %2954 = vmatpush2.bf16.msra.mxu0 0
  %2955 = vmatprep.subr.bf16.mxu0 0
  %2956 = vmatpush2.bf16.msra.mxu0 0
  %2957 = vmatprep.subr.bf16.mxu0 0
  %2958 = vmatpush2.bf16.msra.mxu0 0
  %2959 = vmatprep.subr.bf16.mxu0 0
  %2960 = vmatpush2.bf16.msra.mxu0 0
  %2961 = vmatprep.subr.bf16.mxu0 0
  %2962 = vmatpush2.bf16.msra.mxu0 0
  %2963 = vmatprep.subr.bf16.mxu0 0
  %2964 = vmatpush2.bf16.msra.mxu0 0
  %2965 = vmatprep.subr.bf16.mxu0 0
  %2966 = vmatpush2.bf16.msra.mxu0 0
  %2967 = vmatprep.subr.bf16.mxu0 0
  %2968 = vmatpush2.bf16.msra.mxu0 0
  %2969 = vmatprep.mubr.bf16.mxu0 0
  %2970 = vmatmul.mubr.bf16.gmra.mxu0 %v2074
  %v2971 = vpop.f32.mrf.mxu0
  %v2972 = vadd.f32 %v618, %v2971
  %v2973 = vpop.f32.mrf.mxu0
  %v2974 = vpop.f32.mrf.mxu0
  %v2975 = vadd.f32 %v618, %v2974
  %v2976 = vpop.f32.mrf.mxu0
  %2977 = vmatprep.mubr.bf16.mxu0 0
  %2978 = vmatmul.mubr.bf16.gmra.mxu0 %v2077
  %v2979 = vpop.f32.mrf.mxu0
  %v2980 = vadd.f32 %v618, %v2979
  %v2981 = vpop.f32.mrf.mxu0
  %v2982 = vpop.f32.mrf.mxu0
  %v2983 = vadd.f32 %v618, %v2982
  %v2984 = vpop.f32.mrf.mxu0
  %2985 = vmatprep.mubr.bf16.mxu0 0
  %2986 = vmatmul.mubr.bf16.gmra.mxu0 %v2080
  %v2987 = vpop.f32.mrf.mxu0
  %v2988 = vadd.f32 %v618, %v2987
  %v2989 = vpop.f32.mrf.mxu0
  %v2990 = vpop.f32.mrf.mxu0
  %v2991 = vadd.f32 %v618, %v2990
  %v2992 = vpop.f32.mrf.mxu0
  %2993 = vmatprep.mubr.bf16.mxu0 0
  %2994 = vmatmul.mubr.bf16.gmra.mxu0 %v2083
  %v2995 = vpop.f32.mrf.mxu0
  %v2996 = vadd.f32 %v618, %v2995
  %v2997 = vpop.f32.mrf.mxu0
  %v2998 = vpop.f32.mrf.mxu0
  %v2999 = vadd.f32 %v618, %v2998
  %v3000 = vpop.f32.mrf.mxu0
  %3001 = vmatprep.mubr.bf16.mxu0 0
  %3002 = vmatmul.mubr.bf16.gmra.mxu0 %v2086
  %v3003 = vpop.f32.mrf.mxu0
  %v3004 = vadd.f32 %v618, %v3003
  %v3005 = vpop.f32.mrf.mxu0
  %v3006 = vpop.f32.mrf.mxu0
  %v3007 = vadd.f32 %v618, %v3006
  %v3008 = vpop.f32.mrf.mxu0
  %3009 = vmatprep.mubr.bf16.mxu0 0
  %3010 = vmatmul.mubr.bf16.gmra.mxu0 %v2089
  %v3011 = vpop.f32.mrf.mxu0
  %v3012 = vadd.f32 %v618, %v3011
  %v3013 = vpop.f32.mrf.mxu0
  %v3014 = vpop.f32.mrf.mxu0
  %v3015 = vadd.f32 %v618, %v3014
  %v3016 = vpop.f32.mrf.mxu0
  %3017 = vmatprep.mubr.bf16.mxu0 0
  %3018 = vmatmul.mubr.bf16.gmra.mxu0 %v2092
  %v3019 = vpop.f32.mrf.mxu0
  %v3020 = vadd.f32 %v618, %v3019
  %v3021 = vpop.f32.mrf.mxu0
  %v3022 = vpop.f32.mrf.mxu0
  %v3023 = vadd.f32 %v618, %v3022
  %v3024 = vpop.f32.mrf.mxu0
  %3025 = vmatprep.mubr.bf16.mxu0 0
  %3026 = vmatmul.mubr.bf16.gmra.mxu0 %v2095
  %v3027 = vpop.f32.mrf.mxu0
  %v3028 = vadd.f32 %v618, %v3027
  %v3029 = vpop.f32.mrf.mxu0
  %v3030 = vpop.f32.mrf.mxu0
  %v3031 = vadd.f32 %v618, %v3030
  %v3032 = vpop.f32.mrf.mxu0
  %3033 = vmatprep.mubr.bf16.mxu0 0
  %3034 = vmatmul.mubr.bf16.gmra.mxu0 %v2098
  %v3035 = vpop.f32.mrf.mxu0
  %v3036 = vadd.f32 %v618, %v3035
  %v3037 = vpop.f32.mrf.mxu0
  %v3038 = vpop.f32.mrf.mxu0
  %v3039 = vadd.f32 %v618, %v3038
  %v3040 = vpop.f32.mrf.mxu0
  %3041 = vmatprep.mubr.bf16.mxu0 0
  %3042 = vmatmul.mubr.bf16.gmra.mxu0 %v2101
  %v3043 = vpop.f32.mrf.mxu0
  %v3044 = vadd.f32 %v618, %v3043
  %v3045 = vpop.f32.mrf.mxu0
  %v3046 = vpop.f32.mrf.mxu0
  %v3047 = vadd.f32 %v618, %v3046
  %v3048 = vpop.f32.mrf.mxu0
  %3049 = vmatprep.mubr.bf16.mxu0 0
  %3050 = vmatmul.mubr.bf16.gmra.mxu0 %v2104
  %v3051 = vpop.f32.mrf.mxu0
  %v3052 = vadd.f32 %v618, %v3051
  %v3053 = vpop.f32.mrf.mxu0
  %v3054 = vpop.f32.mrf.mxu0
  %v3055 = vadd.f32 %v618, %v3054
  %v3056 = vpop.f32.mrf.mxu0
  %3057 = vmatprep.mubr.bf16.mxu0 0
  %3058 = vmatmul.mubr.bf16.gmra.mxu0 %v2107
  %v3059 = vpop.f32.mrf.mxu0
  %v3060 = vadd.f32 %v618, %v3059
  %v3061 = vpop.f32.mrf.mxu0
  %v3062 = vpop.f32.mrf.mxu0
  %v3063 = vadd.f32 %v618, %v3062
  %v3064 = vpop.f32.mrf.mxu0
  %3065 = vmatprep.mubr.bf16.mxu0 0
  %3066 = vmatmul.mubr.bf16.gmra.mxu0 %v2110
  %v3067 = vpop.f32.mrf.mxu0
  %v3068 = vadd.f32 %v618, %v3067
  %v3069 = vpop.f32.mrf.mxu0
  %v3070 = vpop.f32.mrf.mxu0
  %v3071 = vadd.f32 %v618, %v3070
  %v3072 = vpop.f32.mrf.mxu0
  %3073 = vmatprep.mubr.bf16.mxu0 0
  %3074 = vmatmul.mubr.bf16.gmra.mxu0 %v2113
  %v3075 = vpop.f32.mrf.mxu0
  %v3076 = vadd.f32 %v618, %v3075
  %v3077 = vpop.f32.mrf.mxu0
  %v3078 = vpop.f32.mrf.mxu0
  %v3079 = vadd.f32 %v618, %v3078
  %v3080 = vpop.f32.mrf.mxu0
  %3081 = vmatprep.mubr.bf16.mxu0 0
  %3082 = vmatmul.mubr.bf16.gmra.mxu0 %v2116
  %v3083 = vpop.f32.mrf.mxu0
  %v3084 = vadd.f32 %v618, %v3083
  %v3085 = vpop.f32.mrf.mxu0
  %v3086 = vpop.f32.mrf.mxu0
  %v3087 = vadd.f32 %v618, %v3086
  %v3088 = vpop.f32.mrf.mxu0
  %3089 = vmatprep.mubr.bf16.mxu0 0
  %3090 = vmatmul.mubr.bf16.gmra.mxu0 %v2119
  %v3091 = vpop.f32.mrf.mxu0
  %v3092 = vadd.f32 %v618, %v3091
  %v3093 = vpop.f32.mrf.mxu0
  %v3094 = vpop.f32.mrf.mxu0
  %v3095 = vadd.f32 %v618, %v3094
  %v3096 = vpop.f32.mrf.mxu0
  %3097 = vmatprep.mubr.bf16.mxu0 0
  %3098 = vmatmul.mubr.bf16.gmra.mxu0 %v2122
  %v3099 = vpop.f32.mrf.mxu0
  %v3100 = vadd.f32 %v618, %v3099
  %v3101 = vpop.f32.mrf.mxu0
  %v3102 = vpop.f32.mrf.mxu0
  %v3103 = vadd.f32 %v618, %v3102
  %v3104 = vpop.f32.mrf.mxu0
  %3105 = vmatprep.mubr.bf16.mxu0 0
  %3106 = vmatmul.mubr.bf16.gmra.mxu0 %v2125
  %v3107 = vpop.f32.mrf.mxu0
  %v3108 = vadd.f32 %v618, %v3107
  %v3109 = vpop.f32.mrf.mxu0
  %v3110 = vpop.f32.mrf.mxu0
  %v3111 = vadd.f32 %v618, %v3110
  %v3112 = vpop.f32.mrf.mxu0
  %3113 = vmatprep.mubr.bf16.mxu0 0
  %3114 = vmatmul.mubr.bf16.gmra.mxu0 %v2128
  %v3115 = vpop.f32.mrf.mxu0
  %v3116 = vadd.f32 %v618, %v3115
  %v3117 = vpop.f32.mrf.mxu0
  %v3118 = vpop.f32.mrf.mxu0
  %v3119 = vadd.f32 %v618, %v3118
  %v3120 = vpop.f32.mrf.mxu0
  %3121 = vmatprep.mubr.bf16.mxu0 0
  %3122 = vmatmul.mubr.bf16.gmra.mxu0 %v2131
  %v3123 = vpop.f32.mrf.mxu0
  %v3124 = vadd.f32 %v618, %v3123
  %v3125 = vpop.f32.mrf.mxu0
  %v3126 = vpop.f32.mrf.mxu0
  %v3127 = vadd.f32 %v618, %v3126
  %v3128 = vpop.f32.mrf.mxu0
  %3129 = vmatprep.mubr.bf16.mxu0 0
  %3130 = vmatmul.mubr.bf16.gmra.mxu0 %v2134
  %v3131 = vpop.f32.mrf.mxu0
  %v3132 = vadd.f32 %v618, %v3131
  %v3133 = vpop.f32.mrf.mxu0
  %v3134 = vpop.f32.mrf.mxu0
  %v3135 = vadd.f32 %v618, %v3134
  %v3136 = vpop.f32.mrf.mxu0
  %3137 = vmatprep.mubr.bf16.mxu0 0
  %3138 = vmatmul.mubr.bf16.gmra.mxu0 %v2137
  %v3139 = vpop.f32.mrf.mxu0
  %v3140 = vadd.f32 %v618, %v3139
  %v3141 = vpop.f32.mrf.mxu0
  %v3142 = vpop.f32.mrf.mxu0
  %v3143 = vadd.f32 %v618, %v3142
  %v3144 = vpop.f32.mrf.mxu0
  %3145 = vmatprep.mubr.bf16.mxu0 0
  %3146 = vmatmul.mubr.bf16.gmra.mxu0 %v2140
  %v3147 = vpop.f32.mrf.mxu0
  %v3148 = vadd.f32 %v618, %v3147
  %v3149 = vpop.f32.mrf.mxu0
  %v3150 = vpop.f32.mrf.mxu0
  %v3151 = vadd.f32 %v618, %v3150
  %v3152 = vpop.f32.mrf.mxu0
  %3153 = vmatprep.mubr.bf16.mxu0 0
  %3154 = vmatmul.mubr.bf16.gmra.mxu0 %v2143
  %v3155 = vpop.f32.mrf.mxu0
  %v3156 = vadd.f32 %v618, %v3155
  %v3157 = vpop.f32.mrf.mxu0
  %v3158 = vpop.f32.mrf.mxu0
  %v3159 = vadd.f32 %v618, %v3158
  %v3160 = vpop.f32.mrf.mxu0
  %3161 = vmatprep.mubr.bf16.mxu0 0
  %3162 = vmatmul.mubr.bf16.gmra.mxu0 %v2146
  %v3163 = vpop.f32.mrf.mxu0
  %v3164 = vadd.f32 %v618, %v3163
  %v3165 = vpop.f32.mrf.mxu0
  %v3166 = vpop.f32.mrf.mxu0
  %v3167 = vadd.f32 %v618, %v3166
  %v3168 = vpop.f32.mrf.mxu0
  %3169 = vmatprep.mubr.bf16.mxu0 0
  %3170 = vmatmul.mubr.bf16.gmra.mxu0 %v2149
  %v3171 = vpop.f32.mrf.mxu0
  %v3172 = vadd.f32 %v618, %v3171
  %v3173 = vpop.f32.mrf.mxu0
  %v3174 = vpop.f32.mrf.mxu0
  %v3175 = vadd.f32 %v618, %v3174
  %v3176 = vpop.f32.mrf.mxu0
  %3177 = vmatprep.mubr.bf16.mxu0 0
  %3178 = vmatmul.mubr.bf16.gmra.mxu0 %v2152
  %v3179 = vpop.f32.mrf.mxu0
  %v3180 = vadd.f32 %v618, %v3179
  %v3181 = vpop.f32.mrf.mxu0
  %v3182 = vpop.f32.mrf.mxu0
  %v3183 = vadd.f32 %v618, %v3182
  %v3184 = vpop.f32.mrf.mxu0
  %3185 = vmatprep.mubr.bf16.mxu0 0
  %3186 = vmatmul.mubr.bf16.gmra.mxu0 %v2155
  %v3187 = vpop.f32.mrf.mxu0
  %v3188 = vadd.f32 %v618, %v3187
  %v3189 = vpop.f32.mrf.mxu0
  %v3190 = vpop.f32.mrf.mxu0
  %v3191 = vadd.f32 %v618, %v3190
  %v3192 = vpop.f32.mrf.mxu0
  %3193 = vmatprep.mubr.bf16.mxu0 0
  %3194 = vmatmul.mubr.bf16.gmra.mxu0 %v2158
  %v3195 = vpop.f32.mrf.mxu0
  %v3196 = vadd.f32 %v618, %v3195
  %v3197 = vpop.f32.mrf.mxu0
  %v3198 = vpop.f32.mrf.mxu0
  %v3199 = vadd.f32 %v618, %v3198
  %v3200 = vpop.f32.mrf.mxu0
  %3201 = vmatprep.mubr.bf16.mxu0 0
  %3202 = vmatmul.mubr.bf16.gmra.mxu0 %v2161
  %v3203 = vpop.f32.mrf.mxu0
  %v3204 = vadd.f32 %v618, %v3203
  %v3205 = vpop.f32.mrf.mxu0
  %v3206 = vpop.f32.mrf.mxu0
  %v3207 = vadd.f32 %v618, %v3206
  %v3208 = vpop.f32.mrf.mxu0
  %3209 = vmatprep.mubr.bf16.mxu0 0
  %3210 = vmatmul.mubr.bf16.gmra.mxu0 %v2164
  %v3211 = vpop.f32.mrf.mxu0
  %v3212 = vadd.f32 %v618, %v3211
  %v3213 = vpop.f32.mrf.mxu0
  %v3214 = vpop.f32.mrf.mxu0
  %v3215 = vadd.f32 %v618, %v3214
  %v3216 = vpop.f32.mrf.mxu0
  %3217 = vmatprep.mubr.bf16.mxu0 0
  %3218 = vmatmul.mubr.bf16.gmra.mxu0 %v2167
  %v3219 = vpop.f32.mrf.mxu0
  %v3220 = vadd.f32 %v618, %v3219
  %v3221 = vpop.f32.mrf.mxu0
  %v3222 = vpop.f32.mrf.mxu0
  %v3223 = vadd.f32 %v618, %v3222
  %v3224 = vpop.f32.mrf.mxu0
  %3225 = vmatprep.mubr.bf16.mxu0 0
  %3226 = vmatmul.mubr.bf16.gmra.mxu0 %v2170
  %v3227 = vpop.f32.mrf.mxu0
  %v3228 = vadd.f32 %v618, %v3227
  %v3229 = vpop.f32.mrf.mxu0
  %v3230 = vpop.f32.mrf.mxu0
  %v3231 = vadd.f32 %v618, %v3230
  %v3232 = vpop.f32.mrf.mxu0
  %3233 = vmatprep.mubr.bf16.mxu0 0
  %3234 = vmatmul.mubr.bf16.gmra.mxu0 %v2173
  %v3235 = vpop.f32.mrf.mxu0
  %v3236 = vadd.f32 %v618, %v3235
  %v3237 = vpop.f32.mrf.mxu0
  %v3238 = vpop.f32.mrf.mxu0
  %v3239 = vadd.f32 %v618, %v3238
  %v3240 = vpop.f32.mrf.mxu0
  %3241 = vmatprep.mubr.bf16.mxu0 0
  %3242 = vmatmul.mubr.bf16.gmra.mxu0 %v2176
  %v3243 = vpop.f32.mrf.mxu0
  %v3244 = vadd.f32 %v618, %v3243
  %v3245 = vpop.f32.mrf.mxu0
  %v3246 = vpop.f32.mrf.mxu0
  %v3247 = vadd.f32 %v618, %v3246
  %v3248 = vpop.f32.mrf.mxu0
  %3249 = vmatprep.mubr.bf16.mxu0 0
  %3250 = vmatmul.mubr.bf16.gmra.mxu0 %v2179
  %v3251 = vpop.f32.mrf.mxu0
  %v3252 = vadd.f32 %v618, %v3251
  %v3253 = vpop.f32.mrf.mxu0
  %v3254 = vpop.f32.mrf.mxu0
  %v3255 = vadd.f32 %v618, %v3254
  %v3256 = vpop.f32.mrf.mxu0
  %3257 = vmatprep.mubr.bf16.mxu0 0
  %3258 = vmatmul.mubr.bf16.gmra.mxu0 %v2182
  %v3259 = vpop.f32.mrf.mxu0
  %v3260 = vadd.f32 %v618, %v3259
  %v3261 = vpop.f32.mrf.mxu0
  %v3262 = vpop.f32.mrf.mxu0
  %v3263 = vadd.f32 %v618, %v3262
  %v3264 = vpop.f32.mrf.mxu0
  %3265 = vmatprep.mubr.bf16.mxu0 0
  %3266 = vmatmul.mubr.bf16.gmra.mxu0 %v2185
  %v3267 = vpop.f32.mrf.mxu0
  %v3268 = vadd.f32 %v618, %v3267
  %v3269 = vpop.f32.mrf.mxu0
  %v3270 = vpop.f32.mrf.mxu0
  %v3271 = vadd.f32 %v618, %v3270
  %v3272 = vpop.f32.mrf.mxu0
  %3273 = vmatprep.mubr.bf16.mxu0 0
  %3274 = vmatmul.mubr.bf16.gmra.mxu0 %v2188
  %v3275 = vpop.f32.mrf.mxu0
  %v3276 = vadd.f32 %v618, %v3275
  %v3277 = vpop.f32.mrf.mxu0
  %v3278 = vpop.f32.mrf.mxu0
  %v3279 = vadd.f32 %v618, %v3278
  %v3280 = vpop.f32.mrf.mxu0
  %3281 = vmatprep.mubr.bf16.mxu0 0
  %3282 = vmatmul.mubr.bf16.gmra.mxu0 %v2191
  %v3283 = vpop.f32.mrf.mxu0
  %v3284 = vadd.f32 %v618, %v3283
  %v3285 = vpop.f32.mrf.mxu0
  %v3286 = vpop.f32.mrf.mxu0
  %v3287 = vadd.f32 %v618, %v3286
  %v3288 = vpop.f32.mrf.mxu0
  %3289 = vmatprep.mubr.bf16.mxu0 0
  %3290 = vmatmul.mubr.bf16.gmra.mxu0 %v2194
  %v3291 = vpop.f32.mrf.mxu0
  %v3292 = vadd.f32 %v618, %v3291
  %v3293 = vpop.f32.mrf.mxu0
  %v3294 = vpop.f32.mrf.mxu0
  %v3295 = vadd.f32 %v618, %v3294
  %v3296 = vpop.f32.mrf.mxu0
  %3297 = vmatprep.mubr.bf16.mxu0 0
  %3298 = vmatmul.mubr.bf16.gmra.mxu0 %v2197
  %v3299 = vpop.f32.mrf.mxu0
  %v3300 = vadd.f32 %v618, %v3299
  %v3301 = vpop.f32.mrf.mxu0
  %v3302 = vpop.f32.mrf.mxu0
  %v3303 = vadd.f32 %v618, %v3302
  %v3304 = vpop.f32.mrf.mxu0
  %3305 = vmatprep.mubr.bf16.mxu0 0
  %3306 = vmatmul.mubr.bf16.gmra.mxu0 %v2200
  %v3307 = vpop.f32.mrf.mxu0
  %v3308 = vadd.f32 %v618, %v3307
  %v3309 = vpop.f32.mrf.mxu0
  %v3310 = vpop.f32.mrf.mxu0
  %v3311 = vadd.f32 %v618, %v3310
  %v3312 = vpop.f32.mrf.mxu0
  %3313 = vmatprep.mubr.bf16.mxu0 0
  %3314 = vmatmul.mubr.bf16.gmra.mxu0 %v2203
  %v3315 = vpop.f32.mrf.mxu0
  %v3316 = vadd.f32 %v618, %v3315
  %v3317 = vpop.f32.mrf.mxu0
  %v3318 = vpop.f32.mrf.mxu0
  %v3319 = vadd.f32 %v618, %v3318
  %v3320 = vpop.f32.mrf.mxu0
  %3321 = vmatprep.mubr.bf16.mxu0 0
  %3322 = vmatmul.mubr.bf16.gmra.mxu0 %v2206
  %v3323 = vpop.f32.mrf.mxu0
  %v3324 = vadd.f32 %v618, %v3323
  %v3325 = vpop.f32.mrf.mxu0
  %v3326 = vpop.f32.mrf.mxu0
  %v3327 = vadd.f32 %v618, %v3326
  %v3328 = vpop.f32.mrf.mxu0
  %3329 = vmatprep.mubr.bf16.mxu0 0
  %3330 = vmatmul.mubr.bf16.gmra.mxu0 %v2209
  %v3331 = vpop.f32.mrf.mxu0
  %v3332 = vadd.f32 %v618, %v3331
  %v3333 = vpop.f32.mrf.mxu0
  %v3334 = vpop.f32.mrf.mxu0
  %v3335 = vadd.f32 %v618, %v3334
  %v3336 = vpop.f32.mrf.mxu0
  %3337 = vmatprep.mubr.bf16.mxu0 0
  %3338 = vmatmul.mubr.bf16.gmra.mxu0 %v2212
  %v3339 = vpop.f32.mrf.mxu0
  %v3340 = vadd.f32 %v618, %v3339
  %v3341 = vpop.f32.mrf.mxu0
  %v3342 = vpop.f32.mrf.mxu0
  %v3343 = vadd.f32 %v618, %v3342
  %v3344 = vpop.f32.mrf.mxu0
  %3345 = vmatprep.mubr.bf16.mxu0 0
  %3346 = vmatmul.mubr.bf16.gmra.mxu0 %v2215
  %v3347 = vpop.f32.mrf.mxu0
  %v3348 = vadd.f32 %v618, %v3347
  %v3349 = vpop.f32.mrf.mxu0
  %v3350 = vpop.f32.mrf.mxu0
  %v3351 = vadd.f32 %v618, %v3350
  %v3352 = vpop.f32.mrf.mxu0
  %3353 = vmatprep.mubr.bf16.mxu0 0
  %3354 = vmatmul.mubr.bf16.gmra.mxu0 %v2218
  %v3355 = vpop.f32.mrf.mxu0
  %v3356 = vadd.f32 %v618, %v3355
  %v3357 = vpop.f32.mrf.mxu0
  %v3358 = vpop.f32.mrf.mxu0
  %v3359 = vadd.f32 %v618, %v3358
  %v3360 = vpop.f32.mrf.mxu0
  %3361 = vmatprep.mubr.bf16.mxu0 0
  %3362 = vmatmul.mubr.bf16.gmra.mxu0 %v2221
  %v3363 = vpop.f32.mrf.mxu0
  %v3364 = vadd.f32 %v618, %v3363
  %v3365 = vpop.f32.mrf.mxu0
  %v3366 = vpop.f32.mrf.mxu0
  %v3367 = vadd.f32 %v618, %v3366
  %v3368 = vpop.f32.mrf.mxu0
  %3369 = vmatprep.mubr.bf16.mxu0 0
  %3370 = vmatmul.mubr.bf16.gmra.mxu0 %v2224
  %v3371 = vpop.f32.mrf.mxu0
  %v3372 = vadd.f32 %v618, %v3371
  %v3373 = vpop.f32.mrf.mxu0
  %v3374 = vpop.f32.mrf.mxu0
  %v3375 = vadd.f32 %v618, %v3374
  %v3376 = vpop.f32.mrf.mxu0
  %3377 = vmatprep.mubr.bf16.mxu0 0
  %3378 = vmatmul.mubr.bf16.gmra.mxu0 %v2227
  %v3379 = vpop.f32.mrf.mxu0
  %v3380 = vadd.f32 %v618, %v3379
  %v3381 = vpop.f32.mrf.mxu0
  %v3382 = vpop.f32.mrf.mxu0
  %v3383 = vadd.f32 %v618, %v3382
  %v3384 = vpop.f32.mrf.mxu0
  %3385 = vmatprep.mubr.bf16.mxu0 0
  %3386 = vmatmul.mubr.bf16.gmra.mxu0 %v2230
  %v3387 = vpop.f32.mrf.mxu0
  %v3388 = vadd.f32 %v618, %v3387
  %v3389 = vpop.f32.mrf.mxu0
  %v3390 = vpop.f32.mrf.mxu0
  %v3391 = vadd.f32 %v618, %v3390
  %v3392 = vpop.f32.mrf.mxu0
  %3393 = vmatprep.mubr.bf16.mxu0 0
  %3394 = vmatmul.mubr.bf16.gmra.mxu0 %v2233
  %v3395 = vpop.f32.mrf.mxu0
  %v3396 = vadd.f32 %v618, %v3395
  %v3397 = vpop.f32.mrf.mxu0
  %v3398 = vpop.f32.mrf.mxu0
  %v3399 = vadd.f32 %v618, %v3398
  %v3400 = vpop.f32.mrf.mxu0
  %3401 = vmatprep.mubr.bf16.mxu0 0
  %3402 = vmatmul.mubr.bf16.gmra.mxu0 %v2236
  %v3403 = vpop.f32.mrf.mxu0
  %v3404 = vadd.f32 %v618, %v3403
  %v3405 = vpop.f32.mrf.mxu0
  %v3406 = vpop.f32.mrf.mxu0
  %v3407 = vadd.f32 %v618, %v3406
  %v3408 = vpop.f32.mrf.mxu0
  %3409 = vmatprep.mubr.bf16.mxu0 0
  %3410 = vmatmul.mubr.bf16.gmra.mxu0 %v2239
  %v3411 = vpop.f32.mrf.mxu0
  %v3412 = vadd.f32 %v618, %v3411
  %v3413 = vpop.f32.mrf.mxu0
  %v3414 = vpop.f32.mrf.mxu0
  %v3415 = vadd.f32 %v618, %v3414
  %v3416 = vpop.f32.mrf.mxu0
  %3417 = vmatprep.mubr.bf16.mxu0 0
  %3418 = vmatmul.mubr.bf16.gmra.mxu0 %v2242
  %v3419 = vpop.f32.mrf.mxu0
  %v3420 = vadd.f32 %v618, %v3419
  %v3421 = vpop.f32.mrf.mxu0
  %v3422 = vpop.f32.mrf.mxu0
  %v3423 = vadd.f32 %v618, %v3422
  %v3424 = vpop.f32.mrf.mxu0
  %3425 = vmatprep.mubr.bf16.mxu0 0
  %3426 = vmatmul.mubr.bf16.gmra.mxu0 %v2245
  %v3427 = vpop.f32.mrf.mxu0
  %v3428 = vadd.f32 %v618, %v3427
  %v3429 = vpop.f32.mrf.mxu0
  %v3430 = vpop.f32.mrf.mxu0
  %v3431 = vadd.f32 %v618, %v3430
  %v3432 = vpop.f32.mrf.mxu0
  %3433 = vmatprep.mubr.bf16.mxu0 0
  %3434 = vmatmul.mubr.bf16.gmra.mxu0 %v2248
  %v3435 = vpop.f32.mrf.mxu0
  %v3436 = vadd.f32 %v618, %v3435
  %v3437 = vpop.f32.mrf.mxu0
  %v3438 = vpop.f32.mrf.mxu0
  %v3439 = vadd.f32 %v618, %v3438
  %v3440 = vpop.f32.mrf.mxu0
  %3441 = vmatprep.mubr.bf16.mxu0 0
  %3442 = vmatmul.mubr.bf16.gmra.mxu0 %v2251
  %v3443 = vpop.f32.mrf.mxu0
  %v3444 = vadd.f32 %v618, %v3443
  %v3445 = vpop.f32.mrf.mxu0
  %v3446 = vpop.f32.mrf.mxu0
  %v3447 = vadd.f32 %v618, %v3446
  %v3448 = vpop.f32.mrf.mxu0
  %3449 = vmatprep.mubr.bf16.mxu0 0
  %3450 = vmatmul.mubr.bf16.gmra.mxu0 %v2254
  %v3451 = vpop.f32.mrf.mxu0
  %v3452 = vadd.f32 %v618, %v3451
  %v3453 = vpop.f32.mrf.mxu0
  %v3454 = vpop.f32.mrf.mxu0
  %v3455 = vadd.f32 %v618, %v3454
  %v3456 = vpop.f32.mrf.mxu0
  %3457 = vmatprep.mubr.bf16.mxu0 0
  %3458 = vmatmul.mubr.bf16.gmra.mxu0 %v2257
  %v3459 = vpop.f32.mrf.mxu0
  %v3460 = vadd.f32 %v618, %v3459
  %v3461 = vpop.f32.mrf.mxu0
  %v3462 = vpop.f32.mrf.mxu0
  %v3463 = vadd.f32 %v618, %v3462
  %v3464 = vpop.f32.mrf.mxu0
  %3465 = vmatprep.mubr.bf16.mxu0 0
  %3466 = vmatmul.mubr.bf16.gmra.mxu0 %v2260
  %v3467 = vpop.f32.mrf.mxu0
  %v3468 = vadd.f32 %v618, %v3467
  %v3469 = vpop.f32.mrf.mxu0
  %v3470 = vpop.f32.mrf.mxu0
  %v3471 = vadd.f32 %v618, %v3470
  %v3472 = vpop.f32.mrf.mxu0
  %3473 = vmatprep.mubr.bf16.mxu0 0
  %3474 = vmatmul.mubr.bf16.gmra.mxu0 %v2263
  %v3475 = vpop.f32.mrf.mxu0
  %v3476 = vadd.f32 %v618, %v3475
  %v3477 = vpop.f32.mrf.mxu0
  %v3478 = vpop.f32.mrf.mxu0
  %v3479 = vadd.f32 %v618, %v3478
  %v3480 = vpop.f32.mrf.mxu0
  %3481 = vmatprep.mubr.bf16.mxu0 0
  %3482 = vmatmul.mubr.bf16.gmra.mxu0 %v2266
  %v3483 = vpop.f32.mrf.mxu0
  %v3484 = vadd.f32 %v618, %v3483
  %v3485 = vpop.f32.mrf.mxu0
  %v3486 = vpop.f32.mrf.mxu0
  %v3487 = vadd.f32 %v618, %v3486
  %v3488 = vpop.f32.mrf.mxu0
  %3489 = vmatprep.mubr.bf16.mxu0 0
  %3490 = vmatmul.mubr.bf16.gmra.mxu0 %v2269
  %v3491 = vpop.f32.mrf.mxu0
  %v3492 = vadd.f32 %v618, %v3491
  %v3493 = vpop.f32.mrf.mxu0
  %v3494 = vpop.f32.mrf.mxu0
  %v3495 = vadd.f32 %v618, %v3494
  %v3496 = vpop.f32.mrf.mxu0
  %3497 = vmatprep.mubr.bf16.mxu0 0
  %3498 = vmatmul.mubr.bf16.gmra.mxu0 %v2272
  %v3499 = vpop.f32.mrf.mxu0
  %v3500 = vadd.f32 %v618, %v3499
  %v3501 = vpop.f32.mrf.mxu0
  %v3502 = vpop.f32.mrf.mxu0
  %v3503 = vadd.f32 %v618, %v3502
  %v3504 = vpop.f32.mrf.mxu0
  %3505 = vmatprep.mubr.bf16.mxu0 0
  %3506 = vmatmul.mubr.bf16.gmra.mxu0 %v2275
  %v3507 = vpop.f32.mrf.mxu0
  %v3508 = vadd.f32 %v618, %v3507
  %v3509 = vpop.f32.mrf.mxu0
  %v3510 = vpop.f32.mrf.mxu0
  %v3511 = vadd.f32 %v618, %v3510
  %v3512 = vpop.f32.mrf.mxu0
  %3513 = vmatprep.mubr.bf16.mxu0 0
  %3514 = vmatmul.mubr.bf16.gmra.mxu0 %v2278
  %v3515 = vpop.f32.mrf.mxu0
  %v3516 = vadd.f32 %v618, %v3515
  %v3517 = vpop.f32.mrf.mxu0
  %v3518 = vpop.f32.mrf.mxu0
  %v3519 = vadd.f32 %v618, %v3518
  %v3520 = vpop.f32.mrf.mxu0
  %3521 = vmatprep.mubr.bf16.mxu0 0
  %3522 = vmatmul.mubr.bf16.gmra.mxu0 %v2281
  %v3523 = vpop.f32.mrf.mxu0
  %v3524 = vadd.f32 %v618, %v3523
  %v3525 = vpop.f32.mrf.mxu0
  %v3526 = vpop.f32.mrf.mxu0
  %v3527 = vadd.f32 %v618, %v3526
  %v3528 = vpop.f32.mrf.mxu0
  %3529 = vmatprep.mubr.bf16.mxu0 0
  %3530 = vmatmul.mubr.bf16.gmra.mxu0 %v2284
  %v3531 = vpop.f32.mrf.mxu0
  %v3532 = vadd.f32 %v618, %v3531
  %v3533 = vpop.f32.mrf.mxu0
  %v3534 = vpop.f32.mrf.mxu0
  %v3535 = vadd.f32 %v618, %v3534
  %v3536 = vpop.f32.mrf.mxu0
  %3537 = vmatprep.mubr.bf16.mxu0 0
  %3538 = vmatmul.mubr.bf16.gmra.mxu0 %v2287
  %v3539 = vpop.f32.mrf.mxu0
  %v3540 = vadd.f32 %v618, %v3539
  %v3541 = vpop.f32.mrf.mxu0
  %v3542 = vpop.f32.mrf.mxu0
  %v3543 = vadd.f32 %v618, %v3542
  %v3544 = vpop.f32.mrf.mxu0
  %3545 = vmatprep.mubr.bf16.mxu0 0
  %3546 = vmatmul.mubr.bf16.gmra.mxu0 %v2290
  %v3547 = vpop.f32.mrf.mxu0
  %v3548 = vadd.f32 %v618, %v3547
  %v3549 = vpop.f32.mrf.mxu0
  %v3550 = vpop.f32.mrf.mxu0
  %v3551 = vadd.f32 %v618, %v3550
  %v3552 = vpop.f32.mrf.mxu0
  %3553 = vmatprep.mubr.bf16.mxu0 0
  %3554 = vmatmul.mubr.bf16.gmra.mxu0 %v2293
  %v3555 = vpop.f32.mrf.mxu0
  %v3556 = vadd.f32 %v618, %v3555
  %v3557 = vpop.f32.mrf.mxu0
  %v3558 = vpop.f32.mrf.mxu0
  %v3559 = vadd.f32 %v618, %v3558
  %v3560 = vpop.f32.mrf.mxu0
  %3561 = vmatprep.mubr.bf16.mxu0 0
  %3562 = vmatmul.mubr.bf16.gmra.mxu0 %v2296
  %v3563 = vpop.f32.mrf.mxu0
  %v3564 = vadd.f32 %v618, %v3563
  %v3565 = vpop.f32.mrf.mxu0
  %v3566 = vpop.f32.mrf.mxu0
  %v3567 = vadd.f32 %v618, %v3566
  %v3568 = vpop.f32.mrf.mxu0
  %3569 = vmatprep.mubr.bf16.mxu0 0
  %3570 = vmatmul.mubr.bf16.gmra.mxu0 %v2299
  %v3571 = vpop.f32.mrf.mxu0
  %v3572 = vadd.f32 %v618, %v3571
  %v3573 = vpop.f32.mrf.mxu0
  %v3574 = vpop.f32.mrf.mxu0
  %v3575 = vadd.f32 %v618, %v3574
  %v3576 = vpop.f32.mrf.mxu0
  %3577 = vmatprep.mubr.bf16.mxu0 0
  %3578 = vmatmul.mubr.bf16.gmra.mxu0 %v2302
  %v3579 = vpop.f32.mrf.mxu0
  %v3580 = vadd.f32 %v618, %v3579
  %v3581 = vpop.f32.mrf.mxu0
  %v3582 = vpop.f32.mrf.mxu0
  %v3583 = vadd.f32 %v618, %v3582
  %v3584 = vpop.f32.mrf.mxu0
  %3585 = vmatprep.mubr.bf16.mxu0 0
  %3586 = vmatmul.mubr.bf16.gmra.mxu0 %v2305
  %v3587 = vpop.f32.mrf.mxu0
  %v3588 = vadd.f32 %v618, %v3587
  %v3589 = vpop.f32.mrf.mxu0
  %v3590 = vpop.f32.mrf.mxu0
  %v3591 = vadd.f32 %v618, %v3590
  %v3592 = vpop.f32.mrf.mxu0
  %3593 = vmatprep.mubr.bf16.mxu0 0
  %3594 = vmatmul.mubr.bf16.gmra.mxu0 %v2308
  %v3595 = vpop.f32.mrf.mxu0
  %v3596 = vadd.f32 %v618, %v3595
  %v3597 = vpop.f32.mrf.mxu0
  %v3598 = vpop.f32.mrf.mxu0
  %v3599 = vadd.f32 %v618, %v3598
  %v3600 = vpop.f32.mrf.mxu0
  %3601 = vmatprep.mubr.bf16.mxu0 0
  %3602 = vmatmul.mubr.bf16.gmra.mxu0 %v2311
  %v3603 = vpop.f32.mrf.mxu0
  %v3604 = vadd.f32 %v618, %v3603
  %v3605 = vpop.f32.mrf.mxu0
  %v3606 = vpop.f32.mrf.mxu0
  %v3607 = vadd.f32 %v618, %v3606
  %v3608 = vpop.f32.mrf.mxu0
  %3609 = vmatprep.mubr.bf16.mxu0 0
  %3610 = vmatmul.mubr.bf16.gmra.mxu0 %v2314
  %v3611 = vpop.f32.mrf.mxu0
  %v3612 = vadd.f32 %v618, %v3611
  %v3613 = vpop.f32.mrf.mxu0
  %v3614 = vpop.f32.mrf.mxu0
  %v3615 = vadd.f32 %v618, %v3614
  %v3616 = vpop.f32.mrf.mxu0
  %3617 = vmatprep.mubr.bf16.mxu0 0
  %3618 = vmatmul.mubr.bf16.gmra.mxu0 %v2317
  %v3619 = vpop.f32.mrf.mxu0
  %v3620 = vadd.f32 %v618, %v3619
  %v3621 = vpop.f32.mrf.mxu0
  %v3622 = vpop.f32.mrf.mxu0
  %v3623 = vadd.f32 %v618, %v3622
  %v3624 = vpop.f32.mrf.mxu0
  %3625 = vmatprep.mubr.bf16.mxu0 0
  %3626 = vmatmul.mubr.bf16.gmra.mxu0 %v2320
  %v3627 = vpop.f32.mrf.mxu0
  %v3628 = vadd.f32 %v618, %v3627
  %v3629 = vpop.f32.mrf.mxu0
  %v3630 = vpop.f32.mrf.mxu0
  %v3631 = vadd.f32 %v618, %v3630
  %v3632 = vpop.f32.mrf.mxu0
  %3633 = vmatprep.mubr.bf16.mxu0 0
  %3634 = vmatmul.mubr.bf16.gmra.mxu0 %v2323
  %v3635 = vpop.f32.mrf.mxu0
  %v3636 = vadd.f32 %v618, %v3635
  %v3637 = vpop.f32.mrf.mxu0
  %v3638 = vpop.f32.mrf.mxu0
  %v3639 = vadd.f32 %v618, %v3638
  %v3640 = vpop.f32.mrf.mxu0
  %3641 = vmatprep.mubr.bf16.mxu0 0
  %3642 = vmatmul.mubr.bf16.gmra.mxu0 %v2326
  %v3643 = vpop.f32.mrf.mxu0
  %v3644 = vadd.f32 %v618, %v3643
  %v3645 = vpop.f32.mrf.mxu0
  %v3646 = vpop.f32.mrf.mxu0
  %v3647 = vadd.f32 %v618, %v3646
  %v3648 = vpop.f32.mrf.mxu0
  %3649 = vmatprep.mubr.bf16.mxu0 0
  %3650 = vmatmul.mubr.bf16.gmra.mxu0 %v2329
  %v3651 = vpop.f32.mrf.mxu0
  %v3652 = vadd.f32 %v618, %v3651
  %v3653 = vpop.f32.mrf.mxu0
  %v3654 = vpop.f32.mrf.mxu0
  %v3655 = vadd.f32 %v618, %v3654
  %v3656 = vpop.f32.mrf.mxu0
  %3657 = vmatprep.mubr.bf16.mxu0 0
  %3658 = vmatmul.mubr.bf16.gmra.mxu0 %v2332
  %v3659 = vpop.f32.mrf.mxu0
  %v3660 = vadd.f32 %v618, %v3659
  %v3661 = vpop.f32.mrf.mxu0
  %v3662 = vpop.f32.mrf.mxu0
  %v3663 = vadd.f32 %v618, %v3662
  %v3664 = vpop.f32.mrf.mxu0
  %3665 = vmatprep.mubr.bf16.mxu0 0
  %3666 = vmatmul.mubr.bf16.gmra.mxu0 %v2335
  %v3667 = vpop.f32.mrf.mxu0
  %v3668 = vadd.f32 %v618, %v3667
  %v3669 = vpop.f32.mrf.mxu0
  %v3670 = vpop.f32.mrf.mxu0
  %v3671 = vadd.f32 %v618, %v3670
  %v3672 = vpop.f32.mrf.mxu0
  %3673 = vmatprep.mubr.bf16.mxu0 0
  %3674 = vmatmul.mubr.bf16.gmra.mxu0 %v2338
  %v3675 = vpop.f32.mrf.mxu0
  %v3676 = vadd.f32 %v618, %v3675
  %v3677 = vpop.f32.mrf.mxu0
  %v3678 = vpop.f32.mrf.mxu0
  %v3679 = vadd.f32 %v618, %v3678
  %v3680 = vpop.f32.mrf.mxu0
  %3681 = vmatprep.mubr.bf16.mxu0 0
  %3682 = vmatmul.mubr.bf16.gmra.mxu0 %v2341
  %v3683 = vpop.f32.mrf.mxu0
  %v3684 = vadd.f32 %v618, %v3683
  %v3685 = vpop.f32.mrf.mxu0
  %v3686 = vpop.f32.mrf.mxu0
  %v3687 = vadd.f32 %v618, %v3686
  %v3688 = vpop.f32.mrf.mxu0
  %3689 = vmatprep.mubr.bf16.mxu0 0
  %3690 = vmatmul.mubr.bf16.gmra.mxu0 %v2344
  %v3691 = vpop.f32.mrf.mxu0
  %v3692 = vadd.f32 %v618, %v3691
  %v3693 = vpop.f32.mrf.mxu0
  %v3694 = vpop.f32.mrf.mxu0
  %v3695 = vadd.f32 %v618, %v3694
  %v3696 = vpop.f32.mrf.mxu0
  %3697 = vmatprep.mubr.bf16.mxu0 0
  %3698 = vmatmul.mubr.bf16.gmra.mxu0 %v2347
  %v3699 = vpop.f32.mrf.mxu0
  %v3700 = vadd.f32 %v618, %v3699
  %v3701 = vpop.f32.mrf.mxu0
  %v3702 = vpop.f32.mrf.mxu0
  %v3703 = vadd.f32 %v618, %v3702
  %v3704 = vpop.f32.mrf.mxu0
  %3705 = vmatprep.mubr.bf16.mxu0 0
  %3706 = vmatmul.mubr.bf16.gmra.mxu0 %v2350
  %v3707 = vpop.f32.mrf.mxu0
  %v3708 = vadd.f32 %v618, %v3707
  %v3709 = vpop.f32.mrf.mxu0
  %v3710 = vpop.f32.mrf.mxu0
  %v3711 = vadd.f32 %v618, %v3710
  %v3712 = vpop.f32.mrf.mxu0
  %3713 = vmatprep.mubr.bf16.mxu0 0
  %3714 = vmatmul.mubr.bf16.gmra.mxu0 %v2353
  %v3715 = vpop.f32.mrf.mxu0
  %v3716 = vadd.f32 %v618, %v3715
  %v3717 = vpop.f32.mrf.mxu0
  %v3718 = vpop.f32.mrf.mxu0
  %v3719 = vadd.f32 %v618, %v3718
  %v3720 = vpop.f32.mrf.mxu0
  %3721 = vmatprep.mubr.bf16.mxu0 0
  %3722 = vmatmul.mubr.bf16.gmra.mxu0 %v2356
  %v3723 = vpop.f32.mrf.mxu0
  %v3724 = vadd.f32 %v618, %v3723
  %v3725 = vpop.f32.mrf.mxu0
  %v3726 = vpop.f32.mrf.mxu0
  %v3727 = vadd.f32 %v618, %v3726
  %v3728 = vpop.f32.mrf.mxu0
  %3729 = vmatprep.mubr.bf16.mxu0 0
  %3730 = vmatmul.mubr.bf16.gmra.mxu0 %v2359
  %v3731 = vpop.f32.mrf.mxu0
  %v3732 = vadd.f32 %v618, %v3731
  %v3733 = vpop.f32.mrf.mxu0
  %v3734 = vpop.f32.mrf.mxu0
  %v3735 = vadd.f32 %v618, %v3734
  %v3736 = vpop.f32.mrf.mxu0
  %3737 = vmatprep.mubr.bf16.mxu0 0
  %3738 = vmatmul.mubr.bf16.gmra.mxu0 %v2362
  %v3739 = vpop.f32.mrf.mxu0
  %v3740 = vadd.f32 %v618, %v3739
  %v3741 = vpop.f32.mrf.mxu0
  %v3742 = vpop.f32.mrf.mxu0
  %v3743 = vadd.f32 %v618, %v3742
  %v3744 = vpop.f32.mrf.mxu0
  %3745 = vmatprep.mubr.bf16.mxu0 0
  %3746 = vmatmul.mubr.bf16.gmra.mxu0 %v2365
  %v3747 = vpop.f32.mrf.mxu0
  %v3748 = vadd.f32 %v618, %v3747
  %v3749 = vpop.f32.mrf.mxu0
  %v3750 = vpop.f32.mrf.mxu0
  %v3751 = vadd.f32 %v618, %v3750
  %v3752 = vpop.f32.mrf.mxu0
  %3753 = vmatprep.mubr.bf16.mxu0 0
  %3754 = vmatmul.mubr.bf16.gmra.mxu0 %v2368
  %v3755 = vpop.f32.mrf.mxu0
  %v3756 = vadd.f32 %v618, %v3755
  %v3757 = vpop.f32.mrf.mxu0
  %v3758 = vpop.f32.mrf.mxu0
  %v3759 = vadd.f32 %v618, %v3758
  %v3760 = vpop.f32.mrf.mxu0
  %3761 = vmatprep.mubr.bf16.mxu0 0
  %3762 = vmatmul.mubr.bf16.gmra.mxu0 %v2371
  %v3763 = vpop.f32.mrf.mxu0
  %v3764 = vadd.f32 %v618, %v3763
  %v3765 = vpop.f32.mrf.mxu0
  %v3766 = vpop.f32.mrf.mxu0
  %v3767 = vadd.f32 %v618, %v3766
  %v3768 = vpop.f32.mrf.mxu0
  %3769 = vmatprep.mubr.bf16.mxu0 0
  %3770 = vmatmul.mubr.bf16.gmra.mxu0 %v2374
  %v3771 = vpop.f32.mrf.mxu0
  %v3772 = vadd.f32 %v618, %v3771
  %v3773 = vpop.f32.mrf.mxu0
  %v3774 = vpop.f32.mrf.mxu0
  %v3775 = vadd.f32 %v618, %v3774
  %v3776 = vpop.f32.mrf.mxu0
  %3777 = vmatprep.mubr.bf16.mxu0 0
  %3778 = vmatmul.mubr.bf16.gmra.mxu0 %v2377
  %v3779 = vpop.f32.mrf.mxu0
  %v3780 = vadd.f32 %v618, %v3779
  %v3781 = vpop.f32.mrf.mxu0
  %v3782 = vpop.f32.mrf.mxu0
  %v3783 = vadd.f32 %v618, %v3782
  %v3784 = vpop.f32.mrf.mxu0
  %3785 = vmatprep.mubr.bf16.mxu0 0
  %3786 = vmatmul.mubr.bf16.gmra.mxu0 %v2380
  %v3787 = vpop.f32.mrf.mxu0
  %v3788 = vadd.f32 %v618, %v3787
  %v3789 = vpop.f32.mrf.mxu0
  %v3790 = vpop.f32.mrf.mxu0
  %v3791 = vadd.f32 %v618, %v3790
  %v3792 = vpop.f32.mrf.mxu0
  %3793 = vmatprep.mubr.bf16.mxu0 0
  %3794 = vmatmul.mubr.bf16.gmra.mxu0 %v2383
  %v3795 = vpop.f32.mrf.mxu0
  %v3796 = vadd.f32 %v618, %v3795
  %v3797 = vpop.f32.mrf.mxu0
  %v3798 = vpop.f32.mrf.mxu0
  %v3799 = vadd.f32 %v618, %v3798
  %v3800 = vpop.f32.mrf.mxu0
  %3801 = vmatprep.mubr.bf16.mxu0 0
  %3802 = vmatmul.mubr.bf16.gmra.mxu0 %v2386
  %v3803 = vpop.f32.mrf.mxu0
  %v3804 = vadd.f32 %v618, %v3803
  %v3805 = vpop.f32.mrf.mxu0
  %v3806 = vpop.f32.mrf.mxu0
  %v3807 = vadd.f32 %v618, %v3806
  %v3808 = vpop.f32.mrf.mxu0
  %3809 = vmatprep.mubr.bf16.mxu0 0
  %3810 = vmatmul.mubr.bf16.gmra.mxu0 %v2389
  %v3811 = vpop.f32.mrf.mxu0
  %v3812 = vadd.f32 %v618, %v3811
  %v3813 = vpop.f32.mrf.mxu0
  %v3814 = vpop.f32.mrf.mxu0
  %v3815 = vadd.f32 %v618, %v3814
  %v3816 = vpop.f32.mrf.mxu0
  %3817 = vmatprep.mubr.bf16.mxu0 0
  %3818 = vmatmul.mubr.bf16.gmra.mxu0 %v2392
  %v3819 = vpop.f32.mrf.mxu0
  %v3820 = vadd.f32 %v618, %v3819
  %v3821 = vpop.f32.mrf.mxu0
  %v3822 = vpop.f32.mrf.mxu0
  %v3823 = vadd.f32 %v618, %v3822
  %v3824 = vpop.f32.mrf.mxu0
  %3825 = vmatprep.mubr.bf16.mxu0 0
  %3826 = vmatmul.mubr.bf16.gmra.mxu0 %v2395
  %v3827 = vpop.f32.mrf.mxu0
  %v3828 = vadd.f32 %v618, %v3827
  %v3829 = vpop.f32.mrf.mxu0
  %v3830 = vpop.f32.mrf.mxu0
  %v3831 = vadd.f32 %v618, %v3830
  %v3832 = vpop.f32.mrf.mxu0
  %3833 = vmatprep.mubr.bf16.mxu0 0
  %3834 = vmatmul.mubr.bf16.gmra.mxu0 %v2398
  %v3835 = vpop.f32.mrf.mxu0
  %v3836 = vadd.f32 %v618, %v3835
  %v3837 = vpop.f32.mrf.mxu0
  %v3838 = vpop.f32.mrf.mxu0
  %v3839 = vadd.f32 %v618, %v3838
  %v3840 = vpop.f32.mrf.mxu0
  %3841 = vmatprep.mubr.bf16.mxu0 0
  %3842 = vmatmul.mubr.bf16.gmra.mxu0 %v2401
  %v3843 = vpop.f32.mrf.mxu0
  %v3844 = vadd.f32 %v618, %v3843
  %v3845 = vpop.f32.mrf.mxu0
  %v3846 = vpop.f32.mrf.mxu0
  %v3847 = vadd.f32 %v618, %v3846
  %v3848 = vpop.f32.mrf.mxu0
  %3849 = vmatprep.mubr.bf16.mxu0 0
  %3850 = vmatmul.mubr.bf16.gmra.mxu0 %v2404
  %v3851 = vpop.f32.mrf.mxu0
  %v3852 = vadd.f32 %v618, %v3851
  %v3853 = vpop.f32.mrf.mxu0
  %v3854 = vpop.f32.mrf.mxu0
  %v3855 = vadd.f32 %v618, %v3854
  %v3856 = vpop.f32.mrf.mxu0
  %3857 = vmatprep.mubr.bf16.mxu0 0
  %3858 = vmatmul.mubr.bf16.gmra.mxu0 %v2407
  %v3859 = vpop.f32.mrf.mxu0
  %v3860 = vadd.f32 %v618, %v3859
  %v3861 = vpop.f32.mrf.mxu0
  %v3862 = vpop.f32.mrf.mxu0
  %v3863 = vadd.f32 %v618, %v3862
  %v3864 = vpop.f32.mrf.mxu0
  %3865 = vmatprep.mubr.bf16.mxu0 0
  %3866 = vmatmul.mubr.bf16.gmra.mxu0 %v2410
  %v3867 = vpop.f32.mrf.mxu0
  %v3868 = vadd.f32 %v618, %v3867
  %v3869 = vpop.f32.mrf.mxu0
  %v3870 = vpop.f32.mrf.mxu0
  %v3871 = vadd.f32 %v618, %v3870
  %v3872 = vpop.f32.mrf.mxu0
  %3873 = vmatprep.mubr.bf16.mxu0 0
  %3874 = vmatmul.mubr.bf16.gmra.mxu0 %v2413
  %v3875 = vpop.f32.mrf.mxu0
  %v3876 = vadd.f32 %v618, %v3875
  %v3877 = vpop.f32.mrf.mxu0
  %v3878 = vpop.f32.mrf.mxu0
  %v3879 = vadd.f32 %v618, %v3878
  %v3880 = vpop.f32.mrf.mxu0
  %3881 = vmatprep.mubr.bf16.mxu0 0
  %3882 = vmatmul.mubr.bf16.gmra.mxu0 %v2416
  %v3883 = vpop.f32.mrf.mxu0
  %v3884 = vadd.f32 %v618, %v3883
  %v3885 = vpop.f32.mrf.mxu0
  %v3886 = vpop.f32.mrf.mxu0
  %v3887 = vadd.f32 %v618, %v3886
  %v3888 = vpop.f32.mrf.mxu0
  %3889 = vmatprep.mubr.bf16.mxu0 0
  %3890 = vmatmul.mubr.bf16.gmra.mxu0 %v2419
  %v3891 = vpop.f32.mrf.mxu0
  %v3892 = vadd.f32 %v618, %v3891
  %v3893 = vpop.f32.mrf.mxu0
  %v3894 = vpop.f32.mrf.mxu0
  %v3895 = vadd.f32 %v618, %v3894
  %v3896 = vpop.f32.mrf.mxu0
  %3897 = vmatprep.mubr.bf16.mxu0 0
  %3898 = vmatmul.mubr.bf16.gmra.mxu0 %v2422
  %v3899 = vpop.f32.mrf.mxu0
  %v3900 = vadd.f32 %v618, %v3899
  %v3901 = vpop.f32.mrf.mxu0
  %v3902 = vpop.f32.mrf.mxu0
  %v3903 = vadd.f32 %v618, %v3902
  %v3904 = vpop.f32.mrf.mxu0
  %3905 = vmatprep.mubr.bf16.mxu0 0
  %3906 = vmatmul.mubr.bf16.gmra.mxu0 %v2425
  %v3907 = vpop.f32.mrf.mxu0
  %v3908 = vadd.f32 %v618, %v3907
  %v3909 = vpop.f32.mrf.mxu0
  %v3910 = vpop.f32.mrf.mxu0
  %v3911 = vadd.f32 %v618, %v3910
  %v3912 = vpop.f32.mrf.mxu0
  %3913 = vmatprep.mubr.bf16.mxu0 0
  %3914 = vmatmul.mubr.bf16.gmra.mxu0 %v2428
  %v3915 = vpop.f32.mrf.mxu0
  %v3916 = vadd.f32 %v618, %v3915
  %v3917 = vpop.f32.mrf.mxu0
  %v3918 = vpop.f32.mrf.mxu0
  %v3919 = vadd.f32 %v618, %v3918
  %v3920 = vpop.f32.mrf.mxu0
  %3921 = vmatprep.mubr.bf16.mxu0 0
  %3922 = vmatmul.mubr.bf16.gmra.mxu0 %v2431
  %v3923 = vpop.f32.mrf.mxu0
  %v3924 = vadd.f32 %v618, %v3923
  %v3925 = vpop.f32.mrf.mxu0
  %v3926 = vpop.f32.mrf.mxu0
  %v3927 = vadd.f32 %v618, %v3926
  %v3928 = vpop.f32.mrf.mxu0
  %3929 = vmatprep.mubr.bf16.mxu0 0
  %3930 = vmatmul.mubr.bf16.gmra.mxu0 %v2434
  %v3931 = vpop.f32.mrf.mxu0
  %v3932 = vadd.f32 %v618, %v3931
  %v3933 = vpop.f32.mrf.mxu0
  %v3934 = vpop.f32.mrf.mxu0
  %v3935 = vadd.f32 %v618, %v3934
  %v3936 = vpop.f32.mrf.mxu0
  %3937 = vmatprep.mubr.bf16.mxu0 0
  %3938 = vmatmul.mubr.bf16.gmra.mxu0 %v2437
  %v3939 = vpop.f32.mrf.mxu0
  %v3940 = vadd.f32 %v618, %v3939
  %v3941 = vpop.f32.mrf.mxu0
  %v3942 = vpop.f32.mrf.mxu0
  %v3943 = vadd.f32 %v618, %v3942
  %v3944 = vpop.f32.mrf.mxu0
  %3945 = vmatprep.mubr.bf16.mxu0 0
  %3946 = vmatmul.mubr.bf16.gmra.mxu0 %v2440
  %v3947 = vpop.f32.mrf.mxu0
  %v3948 = vadd.f32 %v618, %v3947
  %v3949 = vpop.f32.mrf.mxu0
  %v3950 = vpop.f32.mrf.mxu0
  %v3951 = vadd.f32 %v618, %v3950
  %v3952 = vpop.f32.mrf.mxu0
  %3953 = vmatprep.mubr.bf16.mxu0 0
  %3954 = vmatmul.mubr.bf16.gmra.mxu0 %v2443
  %v3955 = vpop.f32.mrf.mxu0
  %v3956 = vadd.f32 %v618, %v3955
  %v3957 = vpop.f32.mrf.mxu0
  %v3958 = vpop.f32.mrf.mxu0
  %v3959 = vadd.f32 %v618, %v3958
  %v3960 = vpop.f32.mrf.mxu0
  %3961 = vmatprep.mubr.bf16.mxu0 0
  %3962 = vmatmul.mubr.bf16.gmra.mxu0 %v2446
  %v3963 = vpop.f32.mrf.mxu0
  %v3964 = vadd.f32 %v618, %v3963
  %v3965 = vpop.f32.mrf.mxu0
  %v3966 = vpop.f32.mrf.mxu0
  %v3967 = vadd.f32 %v618, %v3966
  %v3968 = vpop.f32.mrf.mxu0
  %3969 = vmatprep.mubr.bf16.mxu0 0
  %3970 = vmatmul.mubr.bf16.gmra.mxu0 %v2449
  %v3971 = vpop.f32.mrf.mxu0
  %v3972 = vadd.f32 %v618, %v3971
  %v3973 = vpop.f32.mrf.mxu0
  %v3974 = vpop.f32.mrf.mxu0
  %v3975 = vadd.f32 %v618, %v3974
  %v3976 = vpop.f32.mrf.mxu0
  %3977 = vmatprep.mubr.bf16.mxu0 0
  %3978 = vmatmul.mubr.bf16.gmra.mxu0 %v2452
  %v3979 = vpop.f32.mrf.mxu0
  %v3980 = vadd.f32 %v618, %v3979
  %v3981 = vpop.f32.mrf.mxu0
  %v3982 = vpop.f32.mrf.mxu0
  %v3983 = vadd.f32 %v618, %v3982
  %v3984 = vpop.f32.mrf.mxu0
  %3985 = vmatprep.mubr.bf16.mxu0 0
  %3986 = vmatmul.mubr.bf16.gmra.mxu0 %v2455
  %v3987 = vpop.f32.mrf.mxu0
  %v3988 = vadd.f32 %v618, %v3987
  %v3989 = vpop.f32.mrf.mxu0
  %v3990 = vpop.f32.mrf.mxu0
  %v3991 = vadd.f32 %v618, %v3990
  %v3992 = vpop.f32.mrf.mxu0
  %3993 = vmatprep.mubr.bf16.mxu0 0
  %3994 = vmatmul.mubr.bf16.gmra.mxu0 %v2458
  %v3995 = vpop.f32.mrf.mxu0
  %v3996 = vadd.f32 %v618, %v3995
  %v3997 = vpop.f32.mrf.mxu0
  %v3998 = vpop.f32.mrf.mxu0
  %v3999 = vadd.f32 %v618, %v3998
  %v4000 = vpop.f32.mrf.mxu0
  %4001 = vmatprep.mubr.bf16.mxu0 0
  %4002 = vmatmul.mubr.bf16.gmra.mxu0 %v2461
  %v4003 = vpop.f32.mrf.mxu0
  %v4004 = vadd.f32 %v618, %v4003
  %v4005 = vpop.f32.mrf.mxu0
  %v4006 = vpop.f32.mrf.mxu0
  %v4007 = vadd.f32 %v618, %v4006
  %v4008 = vpop.f32.mrf.mxu0
  %4009 = vmatprep.mubr.bf16.mxu0 0
  %4010 = vmatmul.mubr.bf16.gmra.mxu0 %v2464
  %v4011 = vpop.f32.mrf.mxu0
  %v4012 = vadd.f32 %v618, %v4011
  %v4013 = vpop.f32.mrf.mxu0
  %v4014 = vpop.f32.mrf.mxu0
  %v4015 = vadd.f32 %v618, %v4014
  %v4016 = vpop.f32.mrf.mxu0
  %4017 = vmatprep.mubr.bf16.mxu0 0
  %4018 = vmatmul.mubr.bf16.gmra.mxu0 %v2467
  %v4019 = vpop.f32.mrf.mxu0
  %v4020 = vadd.f32 %v618, %v4019
  %v4021 = vpop.f32.mrf.mxu0
  %v4022 = vpop.f32.mrf.mxu0
  %v4023 = vadd.f32 %v618, %v4022
  %v4024 = vpop.f32.mrf.mxu0
  %4025 = vmatprep.mubr.bf16.mxu0 0
  %4026 = vmatmul.mubr.bf16.gmra.mxu0 %v2470
  %v4027 = vpop.f32.mrf.mxu0
  %v4028 = vadd.f32 %v618, %v4027
  %v4029 = vpop.f32.mrf.mxu0
  %v4030 = vpop.f32.mrf.mxu0
  %v4031 = vadd.f32 %v618, %v4030
  %v4032 = vpop.f32.mrf.mxu0
  %4033 = vmatprep.mubr.bf16.mxu0 0
  %4034 = vmatmul.mubr.bf16.gmra.mxu0 %v2473
  %v4035 = vpop.f32.mrf.mxu0
  %v4036 = vadd.f32 %v618, %v4035
  %v4037 = vpop.f32.mrf.mxu0
  %v4038 = vpop.f32.mrf.mxu0
  %v4039 = vadd.f32 %v618, %v4038
  %v4040 = vpop.f32.mrf.mxu0
  %4041 = vmatprep.mubr.bf16.mxu0 0
  %4042 = vmatmul.mubr.bf16.gmra.mxu0 %v2476
  %v4043 = vpop.f32.mrf.mxu0
  %v4044 = vadd.f32 %v618, %v4043
  %v4045 = vpop.f32.mrf.mxu0
  %v4046 = vpop.f32.mrf.mxu0
  %v4047 = vadd.f32 %v618, %v4046
  %v4048 = vpop.f32.mrf.mxu0
  %4049 = vmatprep.mubr.bf16.mxu0 0
  %4050 = vmatmul.mubr.bf16.gmra.mxu0 %v2479
  %v4051 = vpop.f32.mrf.mxu0
  %v4052 = vadd.f32 %v618, %v4051
  %v4053 = vpop.f32.mrf.mxu0
  %v4054 = vpop.f32.mrf.mxu0
  %v4055 = vadd.f32 %v618, %v4054
  %v4056 = vpop.f32.mrf.mxu0
  %4057 = vmatprep.mubr.bf16.mxu0 0
  %4058 = vmatmul.mubr.bf16.gmra.mxu0 %v2482
  %v4059 = vpop.f32.mrf.mxu0
  %v4060 = vadd.f32 %v618, %v4059
  %v4061 = vpop.f32.mrf.mxu0
  %v4062 = vpop.f32.mrf.mxu0
  %v4063 = vadd.f32 %v618, %v4062
  %v4064 = vpop.f32.mrf.mxu0
  %4065 = vmatprep.mubr.bf16.mxu0 0
  %4066 = vmatmul.mubr.bf16.gmra.mxu0 %v2485
  %v4067 = vpop.f32.mrf.mxu0
  %v4068 = vadd.f32 %v618, %v4067
  %v4069 = vpop.f32.mrf.mxu0
  %v4070 = vpop.f32.mrf.mxu0
  %v4071 = vadd.f32 %v618, %v4070
  %v4072 = vpop.f32.mrf.mxu0
  %4073 = vmatprep.mubr.bf16.mxu0 0
  %4074 = vmatmul.mubr.bf16.gmra.mxu0 %v2488
  %v4075 = vpop.f32.mrf.mxu0
  %v4076 = vadd.f32 %v618, %v4075
  %v4077 = vpop.f32.mrf.mxu0
  %v4078 = vpop.f32.mrf.mxu0
  %v4079 = vadd.f32 %v618, %v4078
  %v4080 = vpop.f32.mrf.mxu0
  %4081 = vmatprep.mubr.bf16.mxu0 0
  %4082 = vmatmul.mubr.bf16.gmra.mxu0 %v2491
  %v4083 = vpop.f32.mrf.mxu0
  %v4084 = vadd.f32 %v618, %v4083
  %v4085 = vpop.f32.mrf.mxu0
  %v4086 = vpop.f32.mrf.mxu0
  %v4087 = vadd.f32 %v618, %v4086
  %v4088 = vpop.f32.mrf.mxu0
  %4089 = vmatprep.mubr.bf16.mxu0 0
  %4090 = vmatmul.mubr.bf16.gmra.mxu0 %v2494
  %v4091 = vpop.f32.mrf.mxu0
  %v4092 = vadd.f32 %v618, %v4091
  %v4093 = vpop.f32.mrf.mxu0
  %v4094 = vpop.f32.mrf.mxu0
  %v4095 = vadd.f32 %v618, %v4094
  %v4096 = vpop.f32.mrf.mxu0
  %4097 = vmatprep.mubr.bf16.mxu0 0
  %4098 = vmatmul.mubr.bf16.gmra.mxu0 %v2497
  %v4099 = vpop.f32.mrf.mxu0
  %v4100 = vadd.f32 %v618, %v4099
  %v4101 = vpop.f32.mrf.mxu0
  %v4102 = vpop.f32.mrf.mxu0
  %v4103 = vadd.f32 %v618, %v4102
  %v4104 = vpop.f32.mrf.mxu0
  %4105 = vmatprep.mubr.bf16.mxu0 0
  %4106 = vmatmul.mubr.bf16.gmra.mxu0 %v2500
  %v4107 = vpop.f32.mrf.mxu0
  %v4108 = vadd.f32 %v618, %v4107
  %v4109 = vpop.f32.mrf.mxu0
  %v4110 = vpop.f32.mrf.mxu0
  %v4111 = vadd.f32 %v618, %v4110
  %v4112 = vpop.f32.mrf.mxu0
  %4113 = vmatprep.mubr.bf16.mxu0 0
  %4114 = vmatmul.mubr.bf16.gmra.mxu0 %v2503
  %v4115 = vpop.f32.mrf.mxu0
  %v4116 = vadd.f32 %v618, %v4115
  %v4117 = vpop.f32.mrf.mxu0
  %v4118 = vpop.f32.mrf.mxu0
  %v4119 = vadd.f32 %v618, %v4118
  %v4120 = vpop.f32.mrf.mxu0
  %4121 = vmatprep.mubr.bf16.mxu0 0
  %4122 = vmatmul.mubr.bf16.gmra.mxu0 %v2506
  %v4123 = vpop.f32.mrf.mxu0
  %v4124 = vadd.f32 %v618, %v4123
  %v4125 = vpop.f32.mrf.mxu0
  %v4126 = vpop.f32.mrf.mxu0
  %v4127 = vadd.f32 %v618, %v4126
  %v4128 = vpop.f32.mrf.mxu0
  %4129 = vmatprep.mubr.bf16.mxu0 0
  %4130 = vmatmul.mubr.bf16.gmra.mxu0 %v2509
  %v4131 = vpop.f32.mrf.mxu0
  %v4132 = vadd.f32 %v618, %v4131
  %v4133 = vpop.f32.mrf.mxu0
  %v4134 = vpop.f32.mrf.mxu0
  %v4135 = vadd.f32 %v618, %v4134
  %v4136 = vpop.f32.mrf.mxu0
  %4137 = vmatprep.mubr.bf16.mxu0 0
  %4138 = vmatmul.mubr.bf16.gmra.mxu0 %v2512
  %v4139 = vpop.f32.mrf.mxu0
  %v4140 = vadd.f32 %v618, %v4139
  %v4141 = vpop.f32.mrf.mxu0
  %v4142 = vpop.f32.mrf.mxu0
  %v4143 = vadd.f32 %v618, %v4142
  %v4144 = vpop.f32.mrf.mxu0
  %4145 = vmatprep.mubr.bf16.mxu0 0
  %4146 = vmatmul.mubr.bf16.gmra.mxu0 %v2515
  %v4147 = vpop.f32.mrf.mxu0
  %v4148 = vadd.f32 %v618, %v4147
  %v4149 = vpop.f32.mrf.mxu0
  %v4150 = vpop.f32.mrf.mxu0
  %v4151 = vadd.f32 %v618, %v4150
  %v4152 = vpop.f32.mrf.mxu0
  %4153 = vmatprep.mubr.bf16.mxu0 0
  %4154 = vmatmul.mubr.bf16.gmra.mxu0 %v2518
  %v4155 = vpop.f32.mrf.mxu0
  %v4156 = vadd.f32 %v618, %v4155
  %v4157 = vpop.f32.mrf.mxu0
  %v4158 = vpop.f32.mrf.mxu0
  %v4159 = vadd.f32 %v618, %v4158
  %v4160 = vpop.f32.mrf.mxu0
  %4161 = vmatprep.mubr.bf16.mxu0 0
  %4162 = vmatmul.mubr.bf16.gmra.mxu0 %v2521
  %v4163 = vpop.f32.mrf.mxu0
  %v4164 = vadd.f32 %v618, %v4163
  %v4165 = vpop.f32.mrf.mxu0
  %v4166 = vpop.f32.mrf.mxu0
  %v4167 = vadd.f32 %v618, %v4166
  %v4168 = vpop.f32.mrf.mxu0
  %4169 = vmatprep.mubr.bf16.mxu0 0
  %4170 = vmatmul.mubr.bf16.gmra.mxu0 %v2524
  %v4171 = vpop.f32.mrf.mxu0
  %v4172 = vadd.f32 %v618, %v4171
  %v4173 = vpop.f32.mrf.mxu0
  %v4174 = vpop.f32.mrf.mxu0
  %v4175 = vadd.f32 %v618, %v4174
  %v4176 = vpop.f32.mrf.mxu0
  %4177 = vmatprep.mubr.bf16.mxu0 0
  %4178 = vmatmul.mubr.bf16.gmra.mxu0 %v2527
  %v4179 = vpop.f32.mrf.mxu0
  %v4180 = vadd.f32 %v618, %v4179
  %v4181 = vpop.f32.mrf.mxu0
  %v4182 = vpop.f32.mrf.mxu0
  %v4183 = vadd.f32 %v618, %v4182
  %v4184 = vpop.f32.mrf.mxu0
  %4185 = vmatprep.mubr.bf16.mxu0 0
  %4186 = vmatmul.mubr.bf16.gmra.mxu0 %v2530
  %v4187 = vpop.f32.mrf.mxu0
  %v4188 = vadd.f32 %v618, %v4187
  %v4189 = vpop.f32.mrf.mxu0
  %v4190 = vpop.f32.mrf.mxu0
  %v4191 = vadd.f32 %v618, %v4190
  %v4192 = vpop.f32.mrf.mxu0
  %4193 = vmatprep.mubr.bf16.mxu0 0
  %4194 = vmatmul.mubr.bf16.gmra.mxu0 %v2533
  %v4195 = vpop.f32.mrf.mxu0
  %v4196 = vadd.f32 %v618, %v4195
  %v4197 = vpop.f32.mrf.mxu0
  %v4198 = vpop.f32.mrf.mxu0
  %v4199 = vadd.f32 %v618, %v4198
  %v4200 = vpop.f32.mrf.mxu0
  %4201 = vmatprep.mubr.bf16.mxu0 0
  %4202 = vmatmul.mubr.bf16.gmra.mxu0 %v2536
  %v4203 = vpop.f32.mrf.mxu0
  %v4204 = vadd.f32 %v618, %v4203
  %v4205 = vpop.f32.mrf.mxu0
  %v4206 = vpop.f32.mrf.mxu0
  %v4207 = vadd.f32 %v618, %v4206
  %v4208 = vpop.f32.mrf.mxu0
  %4209 = vmatprep.mubr.bf16.mxu0 0
  %4210 = vmatmul.mubr.bf16.gmra.mxu0 %v2539
  %v4211 = vpop.f32.mrf.mxu0
  %v4212 = vadd.f32 %v618, %v4211
  %v4213 = vpop.f32.mrf.mxu0
  %v4214 = vpop.f32.mrf.mxu0
  %v4215 = vadd.f32 %v618, %v4214
  %v4216 = vpop.f32.mrf.mxu0
  %4217 = vmatprep.mubr.bf16.mxu0 0
  %4218 = vmatmul.mubr.bf16.gmra.mxu0 %v2542
  %v4219 = vpop.f32.mrf.mxu0
  %v4220 = vadd.f32 %v618, %v4219
  %v4221 = vpop.f32.mrf.mxu0
  %v4222 = vpop.f32.mrf.mxu0
  %v4223 = vadd.f32 %v618, %v4222
  %v4224 = vpop.f32.mrf.mxu0
  %4225 = vmatprep.mubr.bf16.mxu0 0
  %4226 = vmatmul.mubr.bf16.gmra.mxu0 %v2545
  %v4227 = vpop.f32.mrf.mxu0
  %v4228 = vadd.f32 %v618, %v4227
  %v4229 = vpop.f32.mrf.mxu0
  %v4230 = vpop.f32.mrf.mxu0
  %v4231 = vadd.f32 %v618, %v4230
  %v4232 = vpop.f32.mrf.mxu0
  %4233 = vmatprep.mubr.bf16.mxu0 0
  %4234 = vmatmul.mubr.bf16.gmra.mxu0 %v2548
  %v4235 = vpop.f32.mrf.mxu0
  %v4236 = vadd.f32 %v618, %v4235
  %v4237 = vpop.f32.mrf.mxu0
  %v4238 = vpop.f32.mrf.mxu0
  %v4239 = vadd.f32 %v618, %v4238
  %v4240 = vpop.f32.mrf.mxu0
  %4241 = vmatprep.mubr.bf16.mxu0 0
  %4242 = vmatmul.mubr.bf16.gmra.mxu0 %v2551
  %v4243 = vpop.f32.mrf.mxu0
  %v4244 = vadd.f32 %v618, %v4243
  %v4245 = vpop.f32.mrf.mxu0
  %v4246 = vpop.f32.mrf.mxu0
  %v4247 = vadd.f32 %v618, %v4246
  %v4248 = vpop.f32.mrf.mxu0
  %4249 = vmatprep.mubr.bf16.mxu0 0
  %4250 = vmatmul.mubr.bf16.gmra.mxu0 %v2554
  %v4251 = vpop.f32.mrf.mxu0
  %v4252 = vadd.f32 %v618, %v4251
  %v4253 = vpop.f32.mrf.mxu0
  %v4254 = vpop.f32.mrf.mxu0
  %v4255 = vadd.f32 %v618, %v4254
  %v4256 = vpop.f32.mrf.mxu0
  %4257 = vmatprep.mubr.bf16.mxu0 0
  %4258 = vmatmul.mubr.bf16.gmra.mxu0 %v2557
  %v4259 = vpop.f32.mrf.mxu0
  %v4260 = vadd.f32 %v618, %v4259
  %v4261 = vpop.f32.mrf.mxu0
  %v4262 = vpop.f32.mrf.mxu0
  %v4263 = vadd.f32 %v618, %v4262
  %v4264 = vpop.f32.mrf.mxu0
  %4265 = vmatprep.mubr.bf16.mxu0 0
  %4266 = vmatmul.mubr.bf16.gmra.mxu0 %v2560
  %v4267 = vpop.f32.mrf.mxu0
  %v4268 = vadd.f32 %v618, %v4267
  %v4269 = vpop.f32.mrf.mxu0
  %v4270 = vpop.f32.mrf.mxu0
  %v4271 = vadd.f32 %v618, %v4270
  %v4272 = vpop.f32.mrf.mxu0
  %4273 = vmatprep.mubr.bf16.mxu0 0
  %4274 = vmatmul.mubr.bf16.gmra.mxu0 %v2563
  %v4275 = vpop.f32.mrf.mxu0
  %v4276 = vadd.f32 %v618, %v4275
  %v4277 = vpop.f32.mrf.mxu0
  %v4278 = vpop.f32.mrf.mxu0
  %v4279 = vadd.f32 %v618, %v4278
  %v4280 = vpop.f32.mrf.mxu0
  %4281 = vmatprep.mubr.bf16.mxu0 0
  %4282 = vmatmul.mubr.bf16.gmra.mxu0 %v2566
  %v4283 = vpop.f32.mrf.mxu0
  %v4284 = vadd.f32 %v618, %v4283
  %v4285 = vpop.f32.mrf.mxu0
  %v4286 = vpop.f32.mrf.mxu0
  %v4287 = vadd.f32 %v618, %v4286
  %v4288 = vpop.f32.mrf.mxu0
  %4289 = vmatprep.mubr.bf16.mxu0 0
  %4290 = vmatmul.mubr.bf16.gmra.mxu0 %v2569
  %v4291 = vpop.f32.mrf.mxu0
  %v4292 = vadd.f32 %v618, %v4291
  %v4293 = vpop.f32.mrf.mxu0
  %v4294 = vpop.f32.mrf.mxu0
  %v4295 = vadd.f32 %v618, %v4294
  %v4296 = vpop.f32.mrf.mxu0
  %4297 = vmatprep.mubr.bf16.mxu0 0
  %4298 = vmatmul.mubr.bf16.gmra.mxu0 %v2572
  %v4299 = vpop.f32.mrf.mxu0
  %v4300 = vadd.f32 %v618, %v4299
  %v4301 = vpop.f32.mrf.mxu0
  %v4302 = vpop.f32.mrf.mxu0
  %v4303 = vadd.f32 %v618, %v4302
  %v4304 = vpop.f32.mrf.mxu0
  %4305 = vmatprep.mubr.bf16.mxu0 0
  %4306 = vmatmul.mubr.bf16.gmra.mxu0 %v2575
  %v4307 = vpop.f32.mrf.mxu0
  %v4308 = vadd.f32 %v618, %v4307
  %v4309 = vpop.f32.mrf.mxu0
  %v4310 = vpop.f32.mrf.mxu0
  %v4311 = vadd.f32 %v618, %v4310
  %v4312 = vpop.f32.mrf.mxu0
  %4313 = vmatprep.mubr.bf16.mxu0 0
  %4314 = vmatmul.mubr.bf16.gmra.mxu0 %v2578
  %v4315 = vpop.f32.mrf.mxu0
  %v4316 = vadd.f32 %v618, %v4315
  %v4317 = vpop.f32.mrf.mxu0
  %v4318 = vpop.f32.mrf.mxu0
  %v4319 = vadd.f32 %v618, %v4318
  %v4320 = vpop.f32.mrf.mxu0
  %4321 = vmatprep.mubr.bf16.mxu0 0
  %4322 = vmatmul.mubr.bf16.gmra.mxu0 %v2581
  %v4323 = vpop.f32.mrf.mxu0
  %v4324 = vadd.f32 %v618, %v4323
  %v4325 = vpop.f32.mrf.mxu0
  %v4326 = vpop.f32.mrf.mxu0
  %v4327 = vadd.f32 %v618, %v4326
  %v4328 = vpop.f32.mrf.mxu0
  %4329 = vmatprep.mubr.bf16.mxu0 0
  %4330 = vmatmul.mubr.bf16.gmra.mxu0 %v2584
  %v4331 = vpop.f32.mrf.mxu0
  %v4332 = vadd.f32 %v618, %v4331
  %v4333 = vpop.f32.mrf.mxu0
  %v4334 = vpop.f32.mrf.mxu0
  %v4335 = vadd.f32 %v618, %v4334
  %v4336 = vpop.f32.mrf.mxu0
  %4337 = vmatprep.mubr.bf16.mxu0 0
  %4338 = vmatmul.mubr.bf16.gmra.mxu0 %v2587
  %v4339 = vpop.f32.mrf.mxu0
  %v4340 = vadd.f32 %v618, %v4339
  %v4341 = vpop.f32.mrf.mxu0
  %v4342 = vpop.f32.mrf.mxu0
  %v4343 = vadd.f32 %v618, %v4342
  %v4344 = vpop.f32.mrf.mxu0
  %4345 = vmatprep.mubr.bf16.mxu0 0
  %4346 = vmatmul.mubr.bf16.gmra.mxu0 %v2590
  %v4347 = vpop.f32.mrf.mxu0
  %v4348 = vadd.f32 %v618, %v4347
  %v4349 = vpop.f32.mrf.mxu0
  %v4350 = vpop.f32.mrf.mxu0
  %v4351 = vadd.f32 %v618, %v4350
  %v4352 = vpop.f32.mrf.mxu0
  %4353 = vmatprep.mubr.bf16.mxu0 0
  %4354 = vmatmul.mubr.bf16.gmra.mxu0 %v2593
  %v4355 = vpop.f32.mrf.mxu0
  %v4356 = vadd.f32 %v618, %v4355
  %v4357 = vpop.f32.mrf.mxu0
  %v4358 = vpop.f32.mrf.mxu0
  %v4359 = vadd.f32 %v618, %v4358
  %v4360 = vpop.f32.mrf.mxu0
  %4361 = vmatprep.mubr.bf16.mxu0 0
  %4362 = vmatmul.mubr.bf16.gmra.mxu0 %v2596
  %v4363 = vpop.f32.mrf.mxu0
  %v4364 = vadd.f32 %v618, %v4363
  %v4365 = vpop.f32.mrf.mxu0
  %v4366 = vpop.f32.mrf.mxu0
  %v4367 = vadd.f32 %v618, %v4366
  %v4368 = vpop.f32.mrf.mxu0
  %4369 = vmatprep.mubr.bf16.mxu0 0
  %4370 = vmatmul.mubr.bf16.gmra.mxu0 %v2599
  %v4371 = vpop.f32.mrf.mxu0
  %v4372 = vadd.f32 %v618, %v4371
  %v4373 = vpop.f32.mrf.mxu0
  %v4374 = vpop.f32.mrf.mxu0
  %v4375 = vadd.f32 %v618, %v4374
  %v4376 = vpop.f32.mrf.mxu0
  %4377 = vmatprep.mubr.bf16.mxu0 0
  %4378 = vmatmul.mubr.bf16.gmra.mxu0 %v2602
  %v4379 = vpop.f32.mrf.mxu0
  %v4380 = vadd.f32 %v618, %v4379
  %v4381 = vpop.f32.mrf.mxu0
  %v4382 = vpop.f32.mrf.mxu0
  %v4383 = vadd.f32 %v618, %v4382
  %v4384 = vpop.f32.mrf.mxu0
  %4385 = vmatprep.mubr.bf16.mxu0 0
  %4386 = vmatmul.mubr.bf16.gmra.mxu0 %v2605
  %v4387 = vpop.f32.mrf.mxu0
  %v4388 = vadd.f32 %v618, %v4387
  %v4389 = vpop.f32.mrf.mxu0
  %v4390 = vpop.f32.mrf.mxu0
  %v4391 = vadd.f32 %v618, %v4390
  %v4392 = vpop.f32.mrf.mxu0
  %4393 = vmatprep.mubr.bf16.mxu0 0
  %4394 = vmatmul.mubr.bf16.gmra.mxu0 %v2608
  %v4395 = vpop.f32.mrf.mxu0
  %v4396 = vadd.f32 %v618, %v4395
  %v4397 = vpop.f32.mrf.mxu0
  %v4398 = vpop.f32.mrf.mxu0
  %v4399 = vadd.f32 %v618, %v4398
  %v4400 = vpop.f32.mrf.mxu0
  %4401 = vmatprep.mubr.bf16.mxu0 0
  %4402 = vmatmul.mubr.bf16.gmra.mxu0 %v2611
  %v4403 = vpop.f32.mrf.mxu0
  %v4404 = vadd.f32 %v618, %v4403
  %v4405 = vpop.f32.mrf.mxu0
  %v4406 = vpop.f32.mrf.mxu0
  %v4407 = vadd.f32 %v618, %v4406
  %v4408 = vpop.f32.mrf.mxu0
  %4409 = vmatprep.mubr.bf16.mxu0 0
  %4410 = vmatmul.mubr.bf16.gmra.mxu0 %v2614
  %v4411 = vpop.f32.mrf.mxu0
  %v4412 = vadd.f32 %v618, %v4411
  %v4413 = vpop.f32.mrf.mxu0
  %v4414 = vpop.f32.mrf.mxu0
  %v4415 = vadd.f32 %v618, %v4414
  %v4416 = vpop.f32.mrf.mxu0
  %4417 = vmatprep.mubr.bf16.mxu0 0
  %4418 = vmatmul.mubr.bf16.gmra.mxu0 %v2617
  %v4419 = vpop.f32.mrf.mxu0
  %v4420 = vadd.f32 %v618, %v4419
  %v4421 = vpop.f32.mrf.mxu0
  %v4422 = vpop.f32.mrf.mxu0
  %v4423 = vadd.f32 %v618, %v4422
  %v4424 = vpop.f32.mrf.mxu0
  %4425 = vmatprep.mubr.bf16.mxu0 0
  %4426 = vmatmul.mubr.bf16.gmra.mxu0 %v2620
  %v4427 = vpop.f32.mrf.mxu0
  %v4428 = vadd.f32 %v618, %v4427
  %v4429 = vpop.f32.mrf.mxu0
  %v4430 = vpop.f32.mrf.mxu0
  %v4431 = vadd.f32 %v618, %v4430
  %v4432 = vpop.f32.mrf.mxu0
  %4433 = vmatprep.mubr.bf16.mxu0 0
  %4434 = vmatmul.mubr.bf16.gmra.mxu0 %v2623
  %v4435 = vpop.f32.mrf.mxu0
  %v4436 = vadd.f32 %v618, %v4435
  %v4437 = vpop.f32.mrf.mxu0
  %v4438 = vpop.f32.mrf.mxu0
  %v4439 = vadd.f32 %v618, %v4438
  %v4440 = vpop.f32.mrf.mxu0
  %4441 = vmatprep.mubr.bf16.mxu0 0
  %4442 = vmatmul.mubr.bf16.gmra.mxu0 %v2626
  %v4443 = vpop.f32.mrf.mxu0
  %v4444 = vadd.f32 %v618, %v4443
  %v4445 = vpop.f32.mrf.mxu0
  %v4446 = vpop.f32.mrf.mxu0
  %v4447 = vadd.f32 %v618, %v4446
  %v4448 = vpop.f32.mrf.mxu0
  %4449 = vmatprep.mubr.bf16.mxu0 0
  %4450 = vmatmul.mubr.bf16.gmra.mxu0 %v2629
  %v4451 = vpop.f32.mrf.mxu0
  %v4452 = vadd.f32 %v618, %v4451
  %v4453 = vpop.f32.mrf.mxu0
  %v4454 = vpop.f32.mrf.mxu0
  %v4455 = vadd.f32 %v618, %v4454
  %v4456 = vpop.f32.mrf.mxu0
  %4457 = vmatprep.mubr.bf16.mxu0 0
  %4458 = vmatmul.mubr.bf16.gmra.mxu0 %v2632
  %v4459 = vpop.f32.mrf.mxu0
  %v4460 = vadd.f32 %v618, %v4459
  %v4461 = vpop.f32.mrf.mxu0
  %v4462 = vpop.f32.mrf.mxu0
  %v4463 = vadd.f32 %v618, %v4462
  %v4464 = vpop.f32.mrf.mxu0
  %4465 = vmatprep.mubr.bf16.mxu0 0
  %4466 = vmatmul.mubr.bf16.gmra.mxu0 %v2635
  %v4467 = vpop.f32.mrf.mxu0
  %v4468 = vadd.f32 %v618, %v4467
  %v4469 = vpop.f32.mrf.mxu0
  %v4470 = vpop.f32.mrf.mxu0
  %v4471 = vadd.f32 %v618, %v4470
  %v4472 = vpop.f32.mrf.mxu0
  %4473 = vmatprep.mubr.bf16.mxu0 0
  %4474 = vmatmul.mubr.bf16.gmra.mxu0 %v2638
  %v4475 = vpop.f32.mrf.mxu0
  %v4476 = vadd.f32 %v618, %v4475
  %v4477 = vpop.f32.mrf.mxu0
  %v4478 = vpop.f32.mrf.mxu0
  %v4479 = vadd.f32 %v618, %v4478
  %v4480 = vpop.f32.mrf.mxu0
  %4481 = vmatprep.mubr.bf16.mxu0 0
  %4482 = vmatmul.mubr.bf16.gmra.mxu0 %v2641
  %v4483 = vpop.f32.mrf.mxu0
  %v4484 = vadd.f32 %v618, %v4483
  %v4485 = vpop.f32.mrf.mxu0
  %v4486 = vpop.f32.mrf.mxu0
  %v4487 = vadd.f32 %v618, %v4486
  %v4488 = vpop.f32.mrf.mxu0
  %4489 = vmatprep.mubr.bf16.mxu0 0
  %4490 = vmatmul.mubr.bf16.gmra.mxu0 %v2644
  %v4491 = vpop.f32.mrf.mxu0
  %v4492 = vadd.f32 %v618, %v4491
  %v4493 = vpop.f32.mrf.mxu0
  %v4494 = vpop.f32.mrf.mxu0
  %v4495 = vadd.f32 %v618, %v4494
  %v4496 = vpop.f32.mrf.mxu0
  %4497 = vmatprep.mubr.bf16.mxu0 0
  %4498 = vmatmul.mubr.bf16.gmra.mxu0 %v2647
  %v4499 = vpop.f32.mrf.mxu0
  %v4500 = vadd.f32 %v618, %v4499
  %v4501 = vpop.f32.mrf.mxu0
  %v4502 = vpop.f32.mrf.mxu0
  %v4503 = vadd.f32 %v618, %v4502
  %v4504 = vpop.f32.mrf.mxu0
  %4505 = vmatprep.mubr.bf16.mxu0 0
  %4506 = vmatmul.mubr.bf16.gmra.mxu0 %v2650
  %v4507 = vpop.f32.mrf.mxu0
  %v4508 = vadd.f32 %v618, %v4507
  %v4509 = vpop.f32.mrf.mxu0
  %v4510 = vpop.f32.mrf.mxu0
  %v4511 = vadd.f32 %v618, %v4510
  %v4512 = vpop.f32.mrf.mxu0
  %4513 = vmatprep.mubr.bf16.mxu0 0
  %4514 = vmatmul.mubr.bf16.gmra.mxu0 %v2653
  %v4515 = vpop.f32.mrf.mxu0
  %v4516 = vadd.f32 %v618, %v4515
  %v4517 = vpop.f32.mrf.mxu0
  %v4518 = vpop.f32.mrf.mxu0
  %v4519 = vadd.f32 %v618, %v4518
  %v4520 = vpop.f32.mrf.mxu0
  %4521 = vmatprep.mubr.bf16.mxu0 0
  %4522 = vmatmul.mubr.bf16.gmra.mxu0 %v2656
  %v4523 = vpop.f32.mrf.mxu0
  %v4524 = vadd.f32 %v618, %v4523
  %v4525 = vpop.f32.mrf.mxu0
  %v4526 = vpop.f32.mrf.mxu0
  %v4527 = vadd.f32 %v618, %v4526
  %v4528 = vpop.f32.mrf.mxu0
  %4529 = vmatprep.mubr.bf16.mxu0 0
  %4530 = vmatmul.mubr.bf16.gmra.mxu0 %v2659
  %v4531 = vpop.f32.mrf.mxu0
  %v4532 = vadd.f32 %v618, %v4531
  %v4533 = vpop.f32.mrf.mxu0
  %v4534 = vpop.f32.mrf.mxu0
  %v4535 = vadd.f32 %v618, %v4534
  %v4536 = vpop.f32.mrf.mxu0
  %4537 = vmatprep.mubr.bf16.mxu0 0
  %4538 = vmatmul.mubr.bf16.gmra.mxu0 %v2662
  %v4539 = vpop.f32.mrf.mxu0
  %v4540 = vadd.f32 %v618, %v4539
  %v4541 = vpop.f32.mrf.mxu0
  %v4542 = vpop.f32.mrf.mxu0
  %v4543 = vadd.f32 %v618, %v4542
  %v4544 = vpop.f32.mrf.mxu0
  %4545 = vmatprep.mubr.bf16.mxu0 0
  %4546 = vmatmul.mubr.bf16.gmra.mxu0 %v2665
  %v4547 = vpop.f32.mrf.mxu0
  %v4548 = vadd.f32 %v618, %v4547
  %v4549 = vpop.f32.mrf.mxu0
  %v4550 = vpop.f32.mrf.mxu0
  %v4551 = vadd.f32 %v618, %v4550
  %v4552 = vpop.f32.mrf.mxu0
  %4553 = vmatprep.mubr.bf16.mxu0 0
  %4554 = vmatmul.mubr.bf16.gmra.mxu0 %v2668
  %v4555 = vpop.f32.mrf.mxu0
  %v4556 = vadd.f32 %v618, %v4555
  %v4557 = vpop.f32.mrf.mxu0
  %v4558 = vpop.f32.mrf.mxu0
  %v4559 = vadd.f32 %v618, %v4558
  %v4560 = vpop.f32.mrf.mxu0
  %4561 = vmatprep.mubr.bf16.mxu0 0
  %4562 = vmatmul.mubr.bf16.gmra.mxu0 %v2671
  %v4563 = vpop.f32.mrf.mxu0
  %v4564 = vadd.f32 %v618, %v4563
  %v4565 = vpop.f32.mrf.mxu0
  %v4566 = vpop.f32.mrf.mxu0
  %v4567 = vadd.f32 %v618, %v4566
  %v4568 = vpop.f32.mrf.mxu0
  %4569 = vmatprep.mubr.bf16.mxu0 0
  %4570 = vmatmul.mubr.bf16.gmra.mxu0 %v2674
  %v4571 = vpop.f32.mrf.mxu0
  %v4572 = vadd.f32 %v618, %v4571
  %v4573 = vpop.f32.mrf.mxu0
  %v4574 = vpop.f32.mrf.mxu0
  %v4575 = vadd.f32 %v618, %v4574
  %v4576 = vpop.f32.mrf.mxu0
  %4577 = vmatprep.mubr.bf16.mxu0 0
  %4578 = vmatmul.mubr.bf16.gmra.mxu0 %v2677
  %v4579 = vpop.f32.mrf.mxu0
  %v4580 = vadd.f32 %v618, %v4579
  %v4581 = vpop.f32.mrf.mxu0
  %v4582 = vpop.f32.mrf.mxu0
  %v4583 = vadd.f32 %v618, %v4582
  %v4584 = vpop.f32.mrf.mxu0
  %4585 = vmatprep.mubr.bf16.mxu0 0
  %4586 = vmatmul.mubr.bf16.gmra.mxu0 %v2680
  %v4587 = vpop.f32.mrf.mxu0
  %v4588 = vadd.f32 %v618, %v4587
  %v4589 = vpop.f32.mrf.mxu0
  %v4590 = vpop.f32.mrf.mxu0
  %v4591 = vadd.f32 %v618, %v4590
  %v4592 = vpop.f32.mrf.mxu0
  %4593 = vmatprep.mubr.bf16.mxu0 0
  %4594 = vmatmul.mubr.bf16.gmra.mxu0 %v2683
  %v4595 = vpop.f32.mrf.mxu0
  %v4596 = vadd.f32 %v618, %v4595
  %v4597 = vpop.f32.mrf.mxu0
  %v4598 = vpop.f32.mrf.mxu0
  %v4599 = vadd.f32 %v618, %v4598
  %v4600 = vpop.f32.mrf.mxu0
  %4601 = vmatprep.mubr.bf16.mxu0 0
  %4602 = vmatmul.mubr.bf16.gmra.mxu0 %v2686
  %v4603 = vpop.f32.mrf.mxu0
  %v4604 = vadd.f32 %v618, %v4603
  %v4605 = vpop.f32.mrf.mxu0
  %v4606 = vpop.f32.mrf.mxu0
  %v4607 = vadd.f32 %v618, %v4606
  %v4608 = vpop.f32.mrf.mxu0
  %4609 = vmatprep.mubr.bf16.mxu0 0
  %4610 = vmatmul.mubr.bf16.gmra.mxu0 %v2689
  %v4611 = vpop.f32.mrf.mxu0
  %v4612 = vadd.f32 %v618, %v4611
  %v4613 = vpop.f32.mrf.mxu0
  %v4614 = vpop.f32.mrf.mxu0
  %v4615 = vadd.f32 %v618, %v4614
  %v4616 = vpop.f32.mrf.mxu0
  %4617 = vmatprep.mubr.bf16.mxu0 0
  %4618 = vmatmul.mubr.bf16.gmra.mxu0 %v2692
  %v4619 = vpop.f32.mrf.mxu0
  %v4620 = vadd.f32 %v618, %v4619
  %v4621 = vpop.f32.mrf.mxu0
  %v4622 = vpop.f32.mrf.mxu0
  %v4623 = vadd.f32 %v618, %v4622
  %v4624 = vpop.f32.mrf.mxu0
  %4625 = vmatprep.mubr.bf16.mxu0 0
  %4626 = vmatmul.mubr.bf16.gmra.mxu0 %v2695
  %v4627 = vpop.f32.mrf.mxu0
  %v4628 = vadd.f32 %v618, %v4627
  %v4629 = vpop.f32.mrf.mxu0
  %v4630 = vpop.f32.mrf.mxu0
  %v4631 = vadd.f32 %v618, %v4630
  %v4632 = vpop.f32.mrf.mxu0
  %4633 = vmatprep.mubr.bf16.mxu0 0
  %4634 = vmatmul.mubr.bf16.gmra.mxu0 %v2698
  %v4635 = vpop.f32.mrf.mxu0
  %v4636 = vadd.f32 %v618, %v4635
  %v4637 = vpop.f32.mrf.mxu0
  %v4638 = vpop.f32.mrf.mxu0
  %v4639 = vadd.f32 %v618, %v4638
  %v4640 = vpop.f32.mrf.mxu0
  %4641 = vmatprep.mubr.bf16.mxu0 0
  %4642 = vmatmul.mubr.bf16.gmra.mxu0 %v2701
  %v4643 = vpop.f32.mrf.mxu0
  %v4644 = vadd.f32 %v618, %v4643
  %v4645 = vpop.f32.mrf.mxu0
  %v4646 = vpop.f32.mrf.mxu0
  %v4647 = vadd.f32 %v618, %v4646
  %v4648 = vpop.f32.mrf.mxu0
  %4649 = vmatprep.mubr.bf16.mxu0 0
  %4650 = vmatmul.mubr.bf16.gmra.mxu0 %v2704
  %v4651 = vpop.f32.mrf.mxu0
  %v4652 = vadd.f32 %v618, %v4651
  %v4653 = vpop.f32.mrf.mxu0
  %v4654 = vpop.f32.mrf.mxu0
  %v4655 = vadd.f32 %v618, %v4654
  %v4656 = vpop.f32.mrf.mxu0
  %4657 = vmatprep.mubr.bf16.mxu0 0
  %4658 = vmatmul.mubr.bf16.gmra.mxu0 %v2707
  %v4659 = vpop.f32.mrf.mxu0
  %v4660 = vadd.f32 %v618, %v4659
  %v4661 = vpop.f32.mrf.mxu0
  %v4662 = vpop.f32.mrf.mxu0
  %v4663 = vadd.f32 %v618, %v4662
  %v4664 = vpop.f32.mrf.mxu0
  %4665 = vmatprep.mubr.bf16.mxu0 0
  %4666 = vmatmul.mubr.bf16.gmra.mxu0 %v2710
  %v4667 = vpop.f32.mrf.mxu0
  %v4668 = vadd.f32 %v618, %v4667
  %v4669 = vpop.f32.mrf.mxu0
  %v4670 = vpop.f32.mrf.mxu0
  %v4671 = vadd.f32 %v618, %v4670
  %v4672 = vpop.f32.mrf.mxu0
  %4673 = vmatprep.mubr.bf16.mxu0 0
  %4674 = vmatmul.mubr.bf16.gmra.mxu0 %v2713
  %v4675 = vpop.f32.mrf.mxu0
  %v4676 = vadd.f32 %v618, %v4675
  %v4677 = vpop.f32.mrf.mxu0
  %v4678 = vpop.f32.mrf.mxu0
  %v4679 = vadd.f32 %v618, %v4678
  %v4680 = vpop.f32.mrf.mxu0
  %4681 = vmatprep.mubr.bf16.mxu0 0
  %4682 = vmatmul.mubr.bf16.gmra.mxu0 %v2716
  %v4683 = vpop.f32.mrf.mxu0
  %v4684 = vadd.f32 %v618, %v4683
  %v4685 = vpop.f32.mrf.mxu0
  %v4686 = vpop.f32.mrf.mxu0
  %v4687 = vadd.f32 %v618, %v4686
  %v4688 = vpop.f32.mrf.mxu0
  %4689 = vmatprep.mubr.bf16.mxu0 0
  %4690 = vmatmul.mubr.bf16.gmra.mxu0 %v2719
  %v4691 = vpop.f32.mrf.mxu0
  %v4692 = vadd.f32 %v618, %v4691
  %v4693 = vpop.f32.mrf.mxu0
  %v4694 = vpop.f32.mrf.mxu0
  %v4695 = vadd.f32 %v618, %v4694
  %v4696 = vpop.f32.mrf.mxu0
  %4697 = vmatprep.mubr.bf16.mxu0 0
  %4698 = vmatmul.mubr.bf16.gmra.mxu0 %v2722
  %v4699 = vpop.f32.mrf.mxu0
  %v4700 = vadd.f32 %v618, %v4699
  %v4701 = vpop.f32.mrf.mxu0
  %v4702 = vpop.f32.mrf.mxu0
  %v4703 = vadd.f32 %v618, %v4702
  %v4704 = vpop.f32.mrf.mxu0
  %4705 = vmatprep.mubr.bf16.mxu0 0
  %4706 = vmatmul.mubr.bf16.gmra.mxu0 %v2725
  %v4707 = vpop.f32.mrf.mxu0
  %v4708 = vadd.f32 %v618, %v4707
  %v4709 = vpop.f32.mrf.mxu0
  %v4710 = vpop.f32.mrf.mxu0
  %v4711 = vadd.f32 %v618, %v4710
  %v4712 = vpop.f32.mrf.mxu0
  %4713 = vmatprep.mubr.bf16.mxu0 0
  %4714 = vmatmul.mubr.bf16.gmra.mxu0 %v2728
  %v4715 = vpop.f32.mrf.mxu0
  %v4716 = vadd.f32 %v618, %v4715
  %v4717 = vpop.f32.mrf.mxu0
  %v4718 = vpop.f32.mrf.mxu0
  %v4719 = vadd.f32 %v618, %v4718
  %v4720 = vpop.f32.mrf.mxu0
  %4721 = vmatprep.mubr.bf16.mxu0 0
  %4722 = vmatmul.mubr.bf16.gmra.mxu0 %v2731
  %v4723 = vpop.f32.mrf.mxu0
  %v4724 = vadd.f32 %v618, %v4723
  %v4725 = vpop.f32.mrf.mxu0
  %v4726 = vpop.f32.mrf.mxu0
  %v4727 = vadd.f32 %v618, %v4726
  %v4728 = vpop.f32.mrf.mxu0
  %4729 = vmatprep.mubr.bf16.mxu0 0
  %4730 = vmatmul.mubr.bf16.gmra.mxu0 %v2734
  %v4731 = vpop.f32.mrf.mxu0
  %v4732 = vadd.f32 %v618, %v4731
  %v4733 = vpop.f32.mrf.mxu0
  %v4734 = vpop.f32.mrf.mxu0
  %v4735 = vadd.f32 %v618, %v4734
  %v4736 = vpop.f32.mrf.mxu0
  %4737 = vmatprep.mubr.bf16.mxu0 0
  %4738 = vmatmul.mubr.bf16.gmra.mxu0 %v2737
  %v4739 = vpop.f32.mrf.mxu0
  %v4740 = vadd.f32 %v618, %v4739
  %v4741 = vpop.f32.mrf.mxu0
  %v4742 = vpop.f32.mrf.mxu0
  %v4743 = vadd.f32 %v618, %v4742
  %v4744 = vpop.f32.mrf.mxu0
  %4745 = vmatprep.mubr.bf16.mxu0 0
  %4746 = vmatmul.mubr.bf16.gmra.mxu0 %v2740
  %v4747 = vpop.f32.mrf.mxu0
  %v4748 = vadd.f32 %v618, %v4747
  %v4749 = vpop.f32.mrf.mxu0
  %v4750 = vpop.f32.mrf.mxu0
  %v4751 = vadd.f32 %v618, %v4750
  %v4752 = vpop.f32.mrf.mxu0
  %4753 = vmatprep.mubr.bf16.mxu0 0
  %4754 = vmatmul.mubr.bf16.gmra.mxu0 %v2743
  %v4755 = vpop.f32.mrf.mxu0
  %v4756 = vadd.f32 %v618, %v4755
  %v4757 = vpop.f32.mrf.mxu0
  %v4758 = vpop.f32.mrf.mxu0
  %v4759 = vadd.f32 %v618, %v4758
  %v4760 = vpop.f32.mrf.mxu0
  %4761 = vmatprep.mubr.bf16.mxu0 0
  %4762 = vmatmul.mubr.bf16.gmra.mxu0 %v2746
  %v4763 = vpop.f32.mrf.mxu0
  %v4764 = vadd.f32 %v618, %v4763
  %v4765 = vpop.f32.mrf.mxu0
  %v4766 = vpop.f32.mrf.mxu0
  %v4767 = vadd.f32 %v618, %v4766
  %v4768 = vpop.f32.mrf.mxu0
  %4769 = vmatprep.mubr.bf16.mxu0 0
  %4770 = vmatmul.mubr.bf16.gmra.mxu0 %v2749
  %v4771 = vpop.f32.mrf.mxu0
  %v4772 = vadd.f32 %v618, %v4771
  %v4773 = vpop.f32.mrf.mxu0
  %v4774 = vpop.f32.mrf.mxu0
  %v4775 = vadd.f32 %v618, %v4774
  %v4776 = vpop.f32.mrf.mxu0
  %4777 = vmatprep.mubr.bf16.mxu0 0
  %4778 = vmatmul.mubr.bf16.gmra.mxu0 %v2752
  %v4779 = vpop.f32.mrf.mxu0
  %v4780 = vadd.f32 %v618, %v4779
  %v4781 = vpop.f32.mrf.mxu0
  %v4782 = vpop.f32.mrf.mxu0
  %v4783 = vadd.f32 %v618, %v4782
  %v4784 = vpop.f32.mrf.mxu0
  %4785 = vmatprep.mubr.bf16.mxu0 0
  %4786 = vmatmul.mubr.bf16.gmra.mxu0 %v2755
  %v4787 = vpop.f32.mrf.mxu0
  %v4788 = vadd.f32 %v618, %v4787
  %v4789 = vpop.f32.mrf.mxu0
  %v4790 = vpop.f32.mrf.mxu0
  %v4791 = vadd.f32 %v618, %v4790
  %v4792 = vpop.f32.mrf.mxu0
  %4793 = vmatprep.mubr.bf16.mxu0 0
  %4794 = vmatmul.mubr.bf16.gmra.mxu0 %v2758
  %v4795 = vpop.f32.mrf.mxu0
  %v4796 = vadd.f32 %v618, %v4795
  %v4797 = vpop.f32.mrf.mxu0
  %v4798 = vpop.f32.mrf.mxu0
  %v4799 = vadd.f32 %v618, %v4798
  %v4800 = vpop.f32.mrf.mxu0
  %4801 = vmatprep.mubr.bf16.mxu0 0
  %4802 = vmatmul.mubr.bf16.gmra.mxu0 %v2761
  %v4803 = vpop.f32.mrf.mxu0
  %v4804 = vadd.f32 %v618, %v4803
  %v4805 = vpop.f32.mrf.mxu0
  %v4806 = vpop.f32.mrf.mxu0
  %v4807 = vadd.f32 %v618, %v4806
  %v4808 = vpop.f32.mrf.mxu0
  %4809 = vmatprep.mubr.bf16.mxu0 0
  %4810 = vmatmul.mubr.bf16.gmra.mxu0 %v2764
  %v4811 = vpop.f32.mrf.mxu0
  %v4812 = vadd.f32 %v618, %v4811
  %v4813 = vpop.f32.mrf.mxu0
  %v4814 = vpop.f32.mrf.mxu0
  %v4815 = vadd.f32 %v618, %v4814
  %v4816 = vpop.f32.mrf.mxu0
  %4817 = vmatprep.mubr.bf16.mxu0 0
  %4818 = vmatmul.mubr.bf16.gmra.mxu0 %v2767
  %v4819 = vpop.f32.mrf.mxu0
  %v4820 = vadd.f32 %v618, %v4819
  %v4821 = vpop.f32.mrf.mxu0
  %v4822 = vpop.f32.mrf.mxu0
  %v4823 = vadd.f32 %v618, %v4822
  %v4824 = vpop.f32.mrf.mxu0
  %4825 = vmatprep.mubr.bf16.mxu0 0
  %4826 = vmatmul.mubr.bf16.gmra.mxu0 %v2770
  %v4827 = vpop.f32.mrf.mxu0
  %v4828 = vadd.f32 %v618, %v4827
  %v4829 = vpop.f32.mrf.mxu0
  %v4830 = vpop.f32.mrf.mxu0
  %v4831 = vadd.f32 %v618, %v4830
  %v4832 = vpop.f32.mrf.mxu0
  %4833 = vmatprep.mubr.bf16.mxu0 0
  %4834 = vmatmul.mubr.bf16.gmra.mxu0 %v2773
  %v4835 = vpop.f32.mrf.mxu0
  %v4836 = vadd.f32 %v618, %v4835
  %v4837 = vpop.f32.mrf.mxu0
  %v4838 = vpop.f32.mrf.mxu0
  %v4839 = vadd.f32 %v618, %v4838
  %v4840 = vpop.f32.mrf.mxu0
  %4841 = vmatprep.mubr.bf16.mxu0 0
  %4842 = vmatmul.mubr.bf16.gmra.mxu0 %v2776
  %v4843 = vpop.f32.mrf.mxu0
  %v4844 = vadd.f32 %v618, %v4843
  %v4845 = vpop.f32.mrf.mxu0
  %v4846 = vpop.f32.mrf.mxu0
  %v4847 = vadd.f32 %v618, %v4846
  %v4848 = vpop.f32.mrf.mxu0
  %4849 = vmatprep.mubr.bf16.mxu0 0
  %4850 = vmatmul.mubr.bf16.gmra.mxu0 %v2779
  %v4851 = vpop.f32.mrf.mxu0
  %v4852 = vadd.f32 %v618, %v4851
  %v4853 = vpop.f32.mrf.mxu0
  %v4854 = vpop.f32.mrf.mxu0
  %v4855 = vadd.f32 %v618, %v4854
  %v4856 = vpop.f32.mrf.mxu0
  %4857 = vmatprep.mubr.bf16.mxu0 0
  %4858 = vmatmul.mubr.bf16.gmra.mxu0 %v2782
  %v4859 = vpop.f32.mrf.mxu0
  %v4860 = vadd.f32 %v618, %v4859
  %v4861 = vpop.f32.mrf.mxu0
  %v4862 = vpop.f32.mrf.mxu0
  %v4863 = vadd.f32 %v618, %v4862
  %v4864 = vpop.f32.mrf.mxu0
  %4865 = vmatprep.mubr.bf16.mxu0 0
  %4866 = vmatmul.mubr.bf16.gmra.mxu0 %v2785
  %v4867 = vpop.f32.mrf.mxu0
  %v4868 = vadd.f32 %v618, %v4867
  %v4869 = vpop.f32.mrf.mxu0
  %v4870 = vpop.f32.mrf.mxu0
  %v4871 = vadd.f32 %v618, %v4870
  %v4872 = vpop.f32.mrf.mxu0
  %4873 = vmatprep.mubr.bf16.mxu0 0
  %4874 = vmatmul.mubr.bf16.gmra.mxu0 %v2788
  %v4875 = vpop.f32.mrf.mxu0
  %v4876 = vadd.f32 %v618, %v4875
  %v4877 = vpop.f32.mrf.mxu0
  %v4878 = vpop.f32.mrf.mxu0
  %v4879 = vadd.f32 %v618, %v4878
  %v4880 = vpop.f32.mrf.mxu0
  %4881 = vmatprep.mubr.bf16.mxu0 0
  %4882 = vmatmul.mubr.bf16.gmra.mxu0 %v2791
  %v4883 = vpop.f32.mrf.mxu0
  %v4884 = vadd.f32 %v618, %v4883
  %v4885 = vpop.f32.mrf.mxu0
  %v4886 = vpop.f32.mrf.mxu0
  %v4887 = vadd.f32 %v618, %v4886
  %v4888 = vpop.f32.mrf.mxu0
  %4889 = vmatprep.mubr.bf16.mxu0 0
  %4890 = vmatmul.mubr.bf16.gmra.mxu0 %v2794
  %v4891 = vpop.f32.mrf.mxu0
  %v4892 = vadd.f32 %v618, %v4891
  %v4893 = vpop.f32.mrf.mxu0
  %v4894 = vpop.f32.mrf.mxu0
  %v4895 = vadd.f32 %v618, %v4894
  %v4896 = vpop.f32.mrf.mxu0
  %4897 = vmatprep.mubr.bf16.mxu0 0
  %4898 = vmatmul.mubr.bf16.gmra.mxu0 %v2797
  %v4899 = vpop.f32.mrf.mxu0
  %v4900 = vadd.f32 %v618, %v4899
  %v4901 = vpop.f32.mrf.mxu0
  %v4902 = vpop.f32.mrf.mxu0
  %v4903 = vadd.f32 %v618, %v4902
  %v4904 = vpop.f32.mrf.mxu0
  %4905 = vmatprep.mubr.bf16.mxu0 0
  %4906 = vmatmul.mubr.bf16.gmra.mxu0 %v2800
  %v4907 = vpop.f32.mrf.mxu0
  %v4908 = vadd.f32 %v618, %v4907
  %v4909 = vpop.f32.mrf.mxu0
  %v4910 = vpop.f32.mrf.mxu0
  %v4911 = vadd.f32 %v618, %v4910
  %v4912 = vpop.f32.mrf.mxu0
  %4913 = vmatprep.mubr.bf16.mxu0 0
  %4914 = vmatmul.mubr.bf16.gmra.mxu0 %v2803
  %v4915 = vpop.f32.mrf.mxu0
  %v4916 = vadd.f32 %v618, %v4915
  %v4917 = vpop.f32.mrf.mxu0
  %v4918 = vpop.f32.mrf.mxu0
  %v4919 = vadd.f32 %v618, %v4918
  %v4920 = vpop.f32.mrf.mxu0
  %4921 = vmatprep.mubr.bf16.mxu0 0
  %4922 = vmatmul.mubr.bf16.gmra.mxu0 %v2806
  %v4923 = vpop.f32.mrf.mxu0
  %v4924 = vadd.f32 %v618, %v4923
  %v4925 = vpop.f32.mrf.mxu0
  %v4926 = vpop.f32.mrf.mxu0
  %v4927 = vadd.f32 %v618, %v4926
  %v4928 = vpop.f32.mrf.mxu0
  %4929 = vmatprep.mubr.bf16.mxu0 0
  %4930 = vmatmul.mubr.bf16.gmra.mxu0 %v2809
  %v4931 = vpop.f32.mrf.mxu0
  %v4932 = vadd.f32 %v618, %v4931
  %v4933 = vpop.f32.mrf.mxu0
  %v4934 = vpop.f32.mrf.mxu0
  %v4935 = vadd.f32 %v618, %v4934
  %v4936 = vpop.f32.mrf.mxu0
  %4937 = vmatprep.mubr.bf16.mxu0 0
  %4938 = vmatmul.mubr.bf16.gmra.mxu0 %v2812
  %v4939 = vpop.f32.mrf.mxu0
  %v4940 = vadd.f32 %v618, %v4939
  %v4941 = vpop.f32.mrf.mxu0
  %v4942 = vpop.f32.mrf.mxu0
  %v4943 = vadd.f32 %v618, %v4942
  %v4944 = vpop.f32.mrf.mxu0
  %4945 = vmatprep.mubr.bf16.mxu0 0
  %4946 = vmatmul.mubr.bf16.gmra.mxu0 %v2815
  %v4947 = vpop.f32.mrf.mxu0
  %v4948 = vadd.f32 %v618, %v4947
  %v4949 = vpop.f32.mrf.mxu0
  %v4950 = vpop.f32.mrf.mxu0
  %v4951 = vadd.f32 %v618, %v4950
  %v4952 = vpop.f32.mrf.mxu0
  %4953 = vmatprep.mubr.bf16.mxu0 0
  %4954 = vmatmul.mubr.bf16.gmra.mxu0 %v2818
  %v4955 = vpop.f32.mrf.mxu0
  %v4956 = vadd.f32 %v618, %v4955
  %v4957 = vpop.f32.mrf.mxu0
  %v4958 = vpop.f32.mrf.mxu0
  %v4959 = vadd.f32 %v618, %v4958
  %v4960 = vpop.f32.mrf.mxu0
  %4961 = vmatprep.mubr.bf16.mxu0 0
  %4962 = vmatmul.mubr.bf16.gmra.mxu0 %v2821
  %v4963 = vpop.f32.mrf.mxu0
  %v4964 = vadd.f32 %v618, %v4963
  %v4965 = vpop.f32.mrf.mxu0
  %v4966 = vpop.f32.mrf.mxu0
  %v4967 = vadd.f32 %v618, %v4966
  %v4968 = vpop.f32.mrf.mxu0
  %4969 = vmatprep.mubr.bf16.mxu0 0
  %4970 = vmatmul.mubr.bf16.gmra.mxu0 %v2824
  %v4971 = vpop.f32.mrf.mxu0
  %v4972 = vadd.f32 %v618, %v4971
  %v4973 = vpop.f32.mrf.mxu0
  %v4974 = vpop.f32.mrf.mxu0
  %v4975 = vadd.f32 %v618, %v4974
  %v4976 = vpop.f32.mrf.mxu0
  %4977 = vmatprep.mubr.bf16.mxu0 0
  %4978 = vmatmul.mubr.bf16.gmra.mxu0 %v2827
  %v4979 = vpop.f32.mrf.mxu0
  %v4980 = vadd.f32 %v618, %v4979
  %v4981 = vpop.f32.mrf.mxu0
  %v4982 = vpop.f32.mrf.mxu0
  %v4983 = vadd.f32 %v618, %v4982
  %v4984 = vpop.f32.mrf.mxu0
  %4985 = vmatprep.mubr.bf16.mxu0 0
  %4986 = vmatmul.mubr.bf16.gmra.mxu0 %v2830
  %v4987 = vpop.f32.mrf.mxu0
  %v4988 = vadd.f32 %v618, %v4987
  %v4989 = vpop.f32.mrf.mxu0
  %v4990 = vpop.f32.mrf.mxu0
  %v4991 = vadd.f32 %v618, %v4990
  %v4992 = vpop.f32.mrf.mxu0
  %4993 = vmatprep.mubr.bf16.mxu0 0
  %4994 = vmatmul.mubr.bf16.gmra.mxu0 %v2833
  %v4995 = vpop.f32.mrf.mxu0
  %v4996 = vadd.f32 %v618, %v4995
  %v4997 = vpop.f32.mrf.mxu0
  %v4998 = vpop.f32.mrf.mxu0
  %v4999 = vadd.f32 %v618, %v4998
  %v5000 = vpop.f32.mrf.mxu0
  %5001 = vmatprep.mubr.bf16.mxu0 0
  %5002 = vmatmul.mubr.bf16.gmra.mxu0 %v2836
  %v5003 = vpop.f32.mrf.mxu0
  %v5004 = vadd.f32 %v618, %v5003
  %v5005 = vpop.f32.mrf.mxu0
  %v5006 = vpop.f32.mrf.mxu0
  %v5007 = vadd.f32 %v618, %v5006
  %v5008 = vpop.f32.mrf.mxu0
  %5009 = vmatprep.mubr.bf16.mxu0 0
  %5010 = vmatmul.mubr.bf16.gmra.mxu0 %v2839
  %v5011 = vpop.f32.mrf.mxu0
  %v5012 = vadd.f32 %v618, %v5011
  %v5013 = vpop.f32.mrf.mxu0
  %v5014 = vpop.f32.mrf.mxu0
  %v5015 = vadd.f32 %v618, %v5014
  %v5016 = vpop.f32.mrf.mxu0
  %5017 = vmatprep.mubr.bf16.mxu0 0
  %5018 = vmatmul.mubr.bf16.gmra.mxu0 %v2842
  %v5019 = vpop.f32.mrf.mxu0
  %v5020 = vadd.f32 %v618, %v5019
  %v5021 = vpop.f32.mrf.mxu0
  %v5022 = vpop.f32.mrf.mxu0
  %v5023 = vadd.f32 %v618, %v5022
  %v5024 = vpop.f32.mrf.mxu0
  %5025 = vmatprep.mubr.bf16.mxu0 0
  %5026 = vmatmul.mubr.bf16.gmra.mxu0 %v2845
  %v5027 = vpop.f32.mrf.mxu0
  %v5028 = vadd.f32 %v618, %v5027
  %v5029 = vpop.f32.mrf.mxu0
  %v5030 = vpop.f32.mrf.mxu0
  %v5031 = vadd.f32 %v618, %v5030
  %v5032 = vpop.f32.mrf.mxu0
  %5033 = vmatprep.mubr.bf16.mxu0 0
  %5034 = vmatmul.mubr.bf16.gmra.mxu0 %v2848
  %v5035 = vpop.f32.mrf.mxu0
  %v5036 = vadd.f32 %v618, %v5035
  %v5037 = vpop.f32.mrf.mxu0
  %v5038 = vpop.f32.mrf.mxu0
  %v5039 = vadd.f32 %v618, %v5038
  %v5040 = vpop.f32.mrf.mxu0
  %5041 = vmatprep.mubr.bf16.mxu0 0
  %5042 = vmatmul.mubr.bf16.gmra.mxu0 %v2851
  %v5043 = vpop.f32.mrf.mxu0
  %v5044 = vadd.f32 %v618, %v5043
  %v5045 = vpop.f32.mrf.mxu0
  %v5046 = vpop.f32.mrf.mxu0
  %v5047 = vadd.f32 %v618, %v5046
  %v5048 = vpop.f32.mrf.mxu0
  %5049 = vmatprep.mubr.bf16.mxu0 0
  %5050 = vmatmul.mubr.bf16.gmra.mxu0 %v2854
  %v5051 = vpop.f32.mrf.mxu0
  %v5052 = vadd.f32 %v618, %v5051
  %v5053 = vpop.f32.mrf.mxu0
  %v5054 = vpop.f32.mrf.mxu0
  %v5055 = vadd.f32 %v618, %v5054
  %v5056 = vpop.f32.mrf.mxu0
  %5057 = vmatprep.mubr.bf16.mxu0 0
  %5058 = vmatmul.mubr.bf16.gmra.mxu0 %v2857
  %v5059 = vpop.f32.mrf.mxu0
  %v5060 = vadd.f32 %v618, %v5059
  %v5061 = vpop.f32.mrf.mxu0
  %v5062 = vpop.f32.mrf.mxu0
  %v5063 = vadd.f32 %v618, %v5062
  %v5064 = vpop.f32.mrf.mxu0
  %5065 = vmatprep.mubr.bf16.mxu0 0
  %5066 = vmatmul.mubr.bf16.gmra.mxu0 %v2860
  %v5067 = vpop.f32.mrf.mxu0
  %v5068 = vadd.f32 %v618, %v5067
  %v5069 = vpop.f32.mrf.mxu0
  %v5070 = vpop.f32.mrf.mxu0
  %v5071 = vadd.f32 %v618, %v5070
  %v5072 = vpop.f32.mrf.mxu0
  %5073 = vmatprep.mubr.bf16.mxu0 0
  %5074 = vmatmul.mubr.bf16.gmra.mxu0 %v2863
  %v5075 = vpop.f32.mrf.mxu0
  %v5076 = vadd.f32 %v618, %v5075
  %v5077 = vpop.f32.mrf.mxu0
  %v5078 = vpop.f32.mrf.mxu0
  %v5079 = vadd.f32 %v618, %v5078
  %v5080 = vpop.f32.mrf.mxu0
  %5081 = vmatprep.mubr.bf16.mxu0 0
  %5082 = vmatmul.mubr.bf16.gmra.mxu0 %v2866
  %v5083 = vpop.f32.mrf.mxu0
  %v5084 = vadd.f32 %v618, %v5083
  %v5085 = vpop.f32.mrf.mxu0
  %v5086 = vpop.f32.mrf.mxu0
  %v5087 = vadd.f32 %v618, %v5086
  %v5088 = vpop.f32.mrf.mxu0
  %5089 = vmatprep.mubr.bf16.mxu0 0
  %5090 = vmatmul.mubr.bf16.gmra.mxu0 %v2869
  %v5091 = vpop.f32.mrf.mxu0
  %v5092 = vadd.f32 %v618, %v5091
  %v5093 = vpop.f32.mrf.mxu0
  %v5094 = vpop.f32.mrf.mxu0
  %v5095 = vadd.f32 %v618, %v5094
  %v5096 = vpop.f32.mrf.mxu0
  %5097 = vmatprep.mubr.bf16.mxu0 0
  %5098 = vmatmul.mubr.bf16.gmra.mxu0 %v2872
  %v5099 = vpop.f32.mrf.mxu0
  %v5100 = vadd.f32 %v618, %v5099
  %v5101 = vpop.f32.mrf.mxu0
  %v5102 = vpop.f32.mrf.mxu0
  %v5103 = vadd.f32 %v618, %v5102
  %v5104 = vpop.f32.mrf.mxu0
  %5105 = vmatprep.mubr.bf16.mxu0 0
  %5106 = vmatmul.mubr.bf16.gmra.mxu0 %v2875
  %v5107 = vpop.f32.mrf.mxu0
  %v5108 = vadd.f32 %v618, %v5107
  %v5109 = vpop.f32.mrf.mxu0
  %v5110 = vpop.f32.mrf.mxu0
  %v5111 = vadd.f32 %v618, %v5110
  %v5112 = vpop.f32.mrf.mxu0
  %5113 = vmatprep.mubr.bf16.mxu0 0
  %5114 = vmatmul.mubr.bf16.gmra.mxu0 %v2878
  %v5115 = vpop.f32.mrf.mxu0
  %v5116 = vadd.f32 %v618, %v5115
  %v5117 = vpop.f32.mrf.mxu0
  %v5118 = vpop.f32.mrf.mxu0
  %v5119 = vadd.f32 %v618, %v5118
  %v5120 = vpop.f32.mrf.mxu0
  %5121 = vmatprep.mubr.bf16.mxu0 0
  %5122 = vmatmul.mubr.bf16.gmra.mxu0 %v2881
  %v5123 = vpop.f32.mrf.mxu0
  %v5124 = vadd.f32 %v618, %v5123
  %v5125 = vpop.f32.mrf.mxu0
  %v5126 = vpop.f32.mrf.mxu0
  %v5127 = vadd.f32 %v618, %v5126
  %v5128 = vpop.f32.mrf.mxu0
  %5129 = vmatprep.mubr.bf16.mxu0 0
  %5130 = vmatmul.mubr.bf16.gmra.mxu0 %v2884
  %v5131 = vpop.f32.mrf.mxu0
  %v5132 = vadd.f32 %v618, %v5131
  %v5133 = vpop.f32.mrf.mxu0
  %v5134 = vpop.f32.mrf.mxu0
  %v5135 = vadd.f32 %v618, %v5134
  %v5136 = vpop.f32.mrf.mxu0
  %5137 = vmatprep.mubr.bf16.mxu0 0
  %5138 = vmatmul.mubr.bf16.gmra.mxu0 %v2887
  %v5139 = vpop.f32.mrf.mxu0
  %v5140 = vadd.f32 %v618, %v5139
  %v5141 = vpop.f32.mrf.mxu0
  %v5142 = vpop.f32.mrf.mxu0
  %v5143 = vadd.f32 %v618, %v5142
  %v5144 = vpop.f32.mrf.mxu0
  %5145 = vmatprep.mubr.bf16.mxu0 0
  %5146 = vmatmul.mubr.bf16.gmra.mxu0 %v2890
  %v5147 = vpop.f32.mrf.mxu0
  %v5148 = vadd.f32 %v618, %v5147
  %v5149 = vpop.f32.mrf.mxu0
  %v5150 = vpop.f32.mrf.mxu0
  %v5151 = vadd.f32 %v618, %v5150
  %v5152 = vpop.f32.mrf.mxu0
  %5153 = vmatprep.mubr.bf16.mxu0 0
  %5154 = vmatmul.mubr.bf16.gmra.mxu0 %v2893
  %v5155 = vpop.f32.mrf.mxu0
  %v5156 = vadd.f32 %v618, %v5155
  %v5157 = vpop.f32.mrf.mxu0
  %v5158 = vpop.f32.mrf.mxu0
  %v5159 = vadd.f32 %v618, %v5158
  %v5160 = vpop.f32.mrf.mxu0
  %5161 = vmatprep.mubr.bf16.mxu0 0
  %5162 = vmatmul.mubr.bf16.gmra.mxu0 %v2896
  %v5163 = vpop.f32.mrf.mxu0
  %v5164 = vadd.f32 %v618, %v5163
  %v5165 = vpop.f32.mrf.mxu0
  %v5166 = vpop.f32.mrf.mxu0
  %v5167 = vadd.f32 %v618, %v5166
  %v5168 = vpop.f32.mrf.mxu0
  %5169 = vmatprep.mubr.bf16.mxu0 0
  %5170 = vmatmul.mubr.bf16.gmra.mxu0 %v2899
  %v5171 = vpop.f32.mrf.mxu0
  %v5172 = vadd.f32 %v618, %v5171
  %v5173 = vpop.f32.mrf.mxu0
  %v5174 = vpop.f32.mrf.mxu0
  %v5175 = vadd.f32 %v618, %v5174
  %v5176 = vpop.f32.mrf.mxu0
  %5177 = vmatprep.mubr.bf16.mxu0 0
  %5178 = vmatmul.mubr.bf16.gmra.mxu0 %v2902
  %v5179 = vpop.f32.mrf.mxu0
  %v5180 = vadd.f32 %v618, %v5179
  %v5181 = vpop.f32.mrf.mxu0
  %v5182 = vpop.f32.mrf.mxu0
  %v5183 = vadd.f32 %v618, %v5182
  %v5184 = vpop.f32.mrf.mxu0
  %5185 = vmatprep.mubr.bf16.mxu0 0
  %5186 = vmatmul.mubr.bf16.gmra.mxu0 %v2905
  %v5187 = vpop.f32.mrf.mxu0
  %v5188 = vadd.f32 %v618, %v5187
  %v5189 = vpop.f32.mrf.mxu0
  %v5190 = vpop.f32.mrf.mxu0
  %v5191 = vadd.f32 %v618, %v5190
  %v5192 = vpop.f32.mrf.mxu0
  %5193 = vmatprep.mubr.bf16.mxu0 0
  %5194 = vmatmul.mubr.bf16.gmra.mxu0 %v2908
  %v5195 = vpop.f32.mrf.mxu0
  %v5196 = vadd.f32 %v618, %v5195
  %v5197 = vpop.f32.mrf.mxu0
  %v5198 = vpop.f32.mrf.mxu0
  %v5199 = vadd.f32 %v618, %v5198
  %v5200 = vpop.f32.mrf.mxu0
  %5201 = vmatprep.mubr.bf16.mxu0 0
  %5202 = vmatmul.mubr.bf16.gmra.mxu0 %v2911
  %v5203 = vpop.f32.mrf.mxu0
  %v5204 = vadd.f32 %v618, %v5203
  %v5205 = vpop.f32.mrf.mxu0
  %v5206 = vpop.f32.mrf.mxu0
  %v5207 = vadd.f32 %v618, %v5206
  %v5208 = vpop.f32.mrf.mxu0
  %5209 = vmatprep.mubr.bf16.mxu0 0
  %5210 = vmatmul.mubr.bf16.gmra.mxu0 %v2914
  %v5211 = vpop.f32.mrf.mxu0
  %v5212 = vadd.f32 %v618, %v5211
  %v5213 = vpop.f32.mrf.mxu0
  %v5214 = vpop.f32.mrf.mxu0
  %v5215 = vadd.f32 %v618, %v5214
  %v5216 = vpop.f32.mrf.mxu0
  %5217 = vmatprep.mubr.bf16.mxu0 0
  %5218 = vmatmul.mubr.bf16.gmra.mxu0 %v2917
  %v5219 = vpop.f32.mrf.mxu0
  %v5220 = vadd.f32 %v618, %v5219
  %v5221 = vpop.f32.mrf.mxu0
  %v5222 = vpop.f32.mrf.mxu0
  %v5223 = vadd.f32 %v618, %v5222
  %v5224 = vpop.f32.mrf.mxu0
  %5225 = vmatprep.mubr.bf16.mxu0 0
  %5226 = vmatmul.mubr.bf16.gmra.mxu0 %v2920
  %v5227 = vpop.f32.mrf.mxu0
  %v5228 = vadd.f32 %v618, %v5227
  %v5229 = vpop.f32.mrf.mxu0
  %v5230 = vpop.f32.mrf.mxu0
  %v5231 = vadd.f32 %v618, %v5230
  %v5232 = vpop.f32.mrf.mxu0
  %5233 = vmatprep.mubr.bf16.mxu0 0
  %5234 = vmatmul.mubr.bf16.gmra.mxu0 %v2923
  %v5235 = vpop.f32.mrf.mxu0
  %v5236 = vadd.f32 %v618, %v5235
  %v5237 = vpop.f32.mrf.mxu0
  %v5238 = vpop.f32.mrf.mxu0
  %v5239 = vadd.f32 %v618, %v5238
  %v5240 = vpop.f32.mrf.mxu0
  %5241 = vmatprep.mubr.bf16.mxu0 0
  %5242 = vmatmul.mubr.bf16.gmra.mxu0 %v2926
  %v5243 = vpop.f32.mrf.mxu0
  %v5244 = vadd.f32 %v618, %v5243
  %v5245 = vpop.f32.mrf.mxu0
  %v5246 = vpop.f32.mrf.mxu0
  %v5247 = vadd.f32 %v618, %v5246
  %v5248 = vpop.f32.mrf.mxu0
  %5249 = vmatprep.mubr.bf16.mxu0 0
  %5250 = vmatmul.mubr.bf16.gmra.mxu0 %v2929
  %v5251 = vpop.f32.mrf.mxu0
  %v5252 = vadd.f32 %v618, %v5251
  %v5253 = vpop.f32.mrf.mxu0
  %v5254 = vpop.f32.mrf.mxu0
  %v5255 = vadd.f32 %v618, %v5254
  %v5256 = vpop.f32.mrf.mxu0
  %5257 = vmatprep.mubr.bf16.mxu0 0
  %5258 = vmatmul.mubr.bf16.gmra.mxu0 %v2932
  %v5259 = vpop.f32.mrf.mxu0
  %v5260 = vadd.f32 %v618, %v5259
  %v5261 = vpop.f32.mrf.mxu0
  %v5262 = vpop.f32.mrf.mxu0
  %v5263 = vadd.f32 %v618, %v5262
  %v5264 = vpop.f32.mrf.mxu0
  %5265 = vmatprep.mubr.bf16.mxu0 0
  %5266 = vmatmul.mubr.bf16.gmra.mxu0 %v2935
  %v5267 = vpop.f32.mrf.mxu0
  %v5268 = vadd.f32 %v618, %v5267
  %v5269 = vpop.f32.mrf.mxu0
  %v5270 = vpop.f32.mrf.mxu0
  %v5271 = vadd.f32 %v618, %v5270
  %v5272 = vpop.f32.mrf.mxu0
  %5273 = vdwg.mxu0
  %v5274 = vmax.f32 %v2972, %v2975
  %v5275 = vmax.f32 %v2980, %v2983
  %v5276 = vmax.f32 %v2988, %v2991
  %v5277 = vmax.f32 %v2996, %v2999
  %v5278 = vmax.f32 %v3004, %v3007
  %v5279 = vmax.f32 %v3012, %v3015
  %v5280 = vmax.f32 %v3020, %v3023
  %v5281 = vmax.f32 %v3028, %v3031
  %v5282 = vmax.f32 %v3036, %v3039
  %v5283 = vmax.f32 %v3044, %v3047
  %v5284 = vmax.f32 %v3052, %v3055
  %v5285 = vmax.f32 %v3060, %v3063
  %v5286 = vmax.f32 %v3164, %v3167
  %v5287 = vmax.f32 %v3172, %v3175
  %v5288 = vmax.f32 %v3180, %v3183
  %v5289 = vmax.f32 %v3188, %v3191
  %v5290 = vmax.f32 %v3196, %v3199
  %v5291 = vmax.f32 %v3204, %v3207
  %v5292 = vmax.f32 %v3212, %v3215
  %v5293 = vmax.f32 %v3220, %v3223
  %v5294 = vmax.f32 %v3228, %v3231
  %v5295 = vmax.f32 %v3236, %v3239
  %v5296 = vmax.f32 %v3244, %v3247
  %v5297 = vmax.f32 %v3252, %v3255
  %v5298 = vmax.f32 %v3356, %v3359
  %v5299 = vmax.f32 %v3364, %v3367
  %v5300 = vmax.f32 %v3372, %v3375
  %v5301 = vmax.f32 %v3380, %v3383
  %v5302 = vmax.f32 %v3388, %v3391
  %v5303 = vmax.f32 %v3396, %v3399
  %v5304 = vmax.f32 %v3404, %v3407
  %v5305 = vmax.f32 %v3412, %v3415
  %v5306 = vmax.f32 %v3420, %v3423
  %v5307 = vmax.f32 %v3428, %v3431
  %v5308 = vmax.f32 %v3436, %v3439
  %v5309 = vmax.f32 %v3444, %v3447
  %v5310 = vmax.f32 %v3548, %v3551
  %v5311 = vmax.f32 %v3556, %v3559
  %v5312 = vmax.f32 %v3564, %v3567
  %v5313 = vmax.f32 %v3572, %v3575
  %v5314 = vmax.f32 %v3580, %v3583
  %v5315 = vmax.f32 %v3588, %v3591
  %v5316 = vmax.f32 %v3596, %v3599
  %v5317 = vmax.f32 %v3604, %v3607
  %v5318 = vmax.f32 %v3612, %v3615
  %v5319 = vmax.f32 %v3620, %v3623
  %v5320 = vmax.f32 %v3628, %v3631
  %v5321 = vmax.f32 %v3636, %v3639
  %v5322 = vmax.f32 %v3740, %v3743
  %v5323 = vmax.f32 %v3748, %v3751
  %v5324 = vmax.f32 %v3756, %v3759
  %v5325 = vmax.f32 %v3764, %v3767
  %v5326 = vmax.f32 %v3772, %v3775
  %v5327 = vmax.f32 %v3780, %v3783
  %v5328 = vmax.f32 %v3788, %v3791
  %v5329 = vmax.f32 %v3796, %v3799
  %v5330 = vmax.f32 %v3804, %v3807
  %v5331 = vmax.f32 %v3812, %v3815
  %v5332 = vmax.f32 %v3820, %v3823
  %v5333 = vmax.f32 %v3828, %v3831
  %v5334 = vmax.f32 %v3932, %v3935
  %v5335 = vmax.f32 %v3940, %v3943
  %v5336 = vmax.f32 %v3948, %v3951
  %v5337 = vmax.f32 %v3956, %v3959
  %v5338 = vmax.f32 %v3964, %v3967
  %v5339 = vmax.f32 %v3972, %v3975
  %v5340 = vmax.f32 %v3980, %v3983
  %v5341 = vmax.f32 %v3988, %v3991
  %v5342 = vmax.f32 %v3996, %v3999
  %v5343 = vmax.f32 %v4004, %v4007
  %v5344 = vmax.f32 %v4012, %v4015
  %v5345 = vmax.f32 %v4020, %v4023
  %v5346 = vmax.f32 %v4124, %v4127
  %v5347 = vmax.f32 %v4132, %v4135
  %v5348 = vmax.f32 %v4140, %v4143
  %v5349 = vmax.f32 %v4148, %v4151
  %v5350 = vmax.f32 %v4156, %v4159
  %v5351 = vmax.f32 %v4164, %v4167
  %v5352 = vmax.f32 %v4172, %v4175
  %v5353 = vmax.f32 %v4180, %v4183
  %v5354 = vmax.f32 %v4188, %v4191
  %v5355 = vmax.f32 %v4196, %v4199
  %v5356 = vmax.f32 %v4204, %v4207
  %v5357 = vmax.f32 %v4212, %v4215
  %v5358 = vmax.f32 %v4316, %v4319
  %v5359 = vmax.f32 %v4324, %v4327
  %v5360 = vmax.f32 %v4332, %v4335
  %v5361 = vmax.f32 %v4340, %v4343
  %v5362 = vmax.f32 %v4348, %v4351
  %v5363 = vmax.f32 %v4356, %v4359
  %v5364 = vmax.f32 %v4364, %v4367
  %v5365 = vmax.f32 %v4372, %v4375
  %v5366 = vmax.f32 %v4380, %v4383
  %v5367 = vmax.f32 %v4388, %v4391
  %v5368 = vmax.f32 %v4396, %v4399
  %v5369 = vmax.f32 %v4404, %v4407
  %v5370 = vmax.f32 %v4508, %v4511
  %v5371 = vmax.f32 %v4516, %v4519
  %v5372 = vmax.f32 %v4524, %v4527
  %v5373 = vmax.f32 %v4532, %v4535
  %v5374 = vmax.f32 %v4540, %v4543
  %v5375 = vmax.f32 %v4548, %v4551
  %v5376 = vmax.f32 %v4556, %v4559
  %v5377 = vmax.f32 %v4564, %v4567
  %v5378 = vmax.f32 %v4572, %v4575
  %v5379 = vmax.f32 %v4580, %v4583
  %v5380 = vmax.f32 %v4588, %v4591
  %v5381 = vmax.f32 %v4596, %v4599
  %v5382 = vmax.f32 %v4700, %v4703
  %v5383 = vmax.f32 %v4708, %v4711
  %v5384 = vmax.f32 %v4716, %v4719
  %v5385 = vmax.f32 %v4724, %v4727
  %v5386 = vmax.f32 %v4732, %v4735
  %v5387 = vmax.f32 %v4740, %v4743
  %v5388 = vmax.f32 %v4748, %v4751
  %v5389 = vmax.f32 %v4756, %v4759
  %v5390 = vmax.f32 %v4764, %v4767
  %v5391 = vmax.f32 %v4772, %v4775
  %v5392 = vmax.f32 %v4780, %v4783
  %v5393 = vmax.f32 %v4788, %v4791
  %v5394 = vmax.f32 %v4892, %v4895
  %v5395 = vmax.f32 %v4900, %v4903
  %v5396 = vmax.f32 %v4908, %v4911
  %v5397 = vmax.f32 %v4916, %v4919
  %v5398 = vmax.f32 %v4924, %v4927
  %v5399 = vmax.f32 %v4932, %v4935
  %v5400 = vmax.f32 %v4940, %v4943
  %v5401 = vmax.f32 %v4948, %v4951
  %v5402 = vmax.f32 %v4956, %v4959
  %v5403 = vmax.f32 %v4964, %v4967
  %v5404 = vmax.f32 %v4972, %v4975
  %v5405 = vmax.f32 %v4980, %v4983
  %v5406 = vmax.f32 %v5084, %v5087
  %v5407 = vmax.f32 %v5092, %v5095
  %v5408 = vmax.f32 %v5100, %v5103
  %v5409 = vmax.f32 %v5108, %v5111
  %v5410 = vmax.f32 %v5116, %v5119
  %v5411 = vmax.f32 %v5124, %v5127
  %v5412 = vmax.f32 %v5132, %v5135
  %v5413 = vmax.f32 %v5140, %v5143
  %v5414 = vmax.f32 %v5148, %v5151
  %v5415 = vmax.f32 %v5156, %v5159
  %v5416 = vmax.f32 %v5164, %v5167
  %v5417 = vmax.f32 %v5172, %v5175
  %v5418 = vmax.f32 %v3068, %v3071
  %v5419 = vmax.f32 %v3076, %v3079
  %v5420 = vmax.f32 %v3084, %v3087
  %v5421 = vmax.f32 %v3092, %v3095
  %v5422 = vmax.f32 %v3100, %v3103
  %v5423 = vmax.f32 %v3108, %v3111
  %v5424 = vmax.f32 %v3116, %v3119
  %v5425 = vmax.f32 %v3124, %v3127
  %v5426 = vmax.f32 %v3132, %v3135
  %v5427 = vmax.f32 %v3140, %v3143
  %v5428 = vmax.f32 %v3148, %v3151
  %v5429 = vmax.f32 %v3156, %v3159
  %v5430 = vmax.f32 %v3260, %v3263
  %v5431 = vmax.f32 %v3268, %v3271
  %v5432 = vmax.f32 %v3276, %v3279
  %v5433 = vmax.f32 %v3284, %v3287
  %v5434 = vmax.f32 %v3292, %v3295
  %v5435 = vmax.f32 %v3300, %v3303
  %v5436 = vmax.f32 %v3308, %v3311
  %v5437 = vmax.f32 %v3316, %v3319
  %v5438 = vmax.f32 %v3324, %v3327
  %v5439 = vmax.f32 %v3332, %v3335
  %v5440 = vmax.f32 %v3340, %v3343
  %v5441 = vmax.f32 %v3348, %v3351
  %v5442 = vmax.f32 %v3452, %v3455
  %v5443 = vmax.f32 %v3460, %v3463
  %v5444 = vmax.f32 %v3468, %v3471
  %v5445 = vmax.f32 %v3476, %v3479
  %v5446 = vmax.f32 %v3484, %v3487
  %v5447 = vmax.f32 %v3492, %v3495
  %v5448 = vmax.f32 %v3500, %v3503
  %v5449 = vmax.f32 %v3508, %v3511
  %v5450 = vmax.f32 %v3516, %v3519
  %v5451 = vmax.f32 %v3524, %v3527
  %v5452 = vmax.f32 %v3532, %v3535
  %v5453 = vmax.f32 %v3540, %v3543
  %v5454 = vmax.f32 %v3644, %v3647
  %v5455 = vmax.f32 %v3652, %v3655
  %v5456 = vmax.f32 %v3660, %v3663
  %v5457 = vmax.f32 %v3668, %v3671
  %v5458 = vmax.f32 %v3676, %v3679
  %v5459 = vmax.f32 %v3684, %v3687
  %v5460 = vmax.f32 %v3692, %v3695
  %v5461 = vmax.f32 %v3700, %v3703
  %v5462 = vmax.f32 %v3708, %v3711
  %v5463 = vmax.f32 %v3716, %v3719
  %v5464 = vmax.f32 %v3724, %v3727
  %v5465 = vmax.f32 %v3732, %v3735
  %v5466 = vmax.f32 %v3836, %v3839
  %v5467 = vmax.f32 %v3844, %v3847
  %v5468 = vmax.f32 %v3852, %v3855
  %v5469 = vmax.f32 %v3860, %v3863
  %v5470 = vmax.f32 %v3868, %v3871
  %v5471 = vmax.f32 %v3876, %v3879
  %v5472 = vmax.f32 %v3884, %v3887
  %v5473 = vmax.f32 %v3892, %v3895
  %v5474 = vmax.f32 %v3900, %v3903
  %v5475 = vmax.f32 %v3908, %v3911
  %v5476 = vmax.f32 %v3916, %v3919
  %v5477 = vmax.f32 %v3924, %v3927
  %v5478 = vmax.f32 %v4028, %v4031
  %v5479 = vmax.f32 %v4036, %v4039
  %v5480 = vmax.f32 %v4044, %v4047
  %v5481 = vmax.f32 %v4052, %v4055
  %v5482 = vmax.f32 %v4060, %v4063
  %v5483 = vmax.f32 %v4068, %v4071
  %v5484 = vmax.f32 %v4076, %v4079
  %v5485 = vmax.f32 %v4084, %v4087
  %v5486 = vmax.f32 %v4092, %v4095
  %v5487 = vmax.f32 %v4100, %v4103
  %v5488 = vmax.f32 %v4108, %v4111
  %v5489 = vmax.f32 %v4116, %v4119
  %v5490 = vmax.f32 %v4220, %v4223
  %v5491 = vmax.f32 %v4228, %v4231
  %v5492 = vmax.f32 %v4236, %v4239
  %v5493 = vmax.f32 %v4244, %v4247
  %v5494 = vmax.f32 %v4252, %v4255
  %v5495 = vmax.f32 %v4260, %v4263
  %v5496 = vmax.f32 %v4268, %v4271
  %v5497 = vmax.f32 %v4276, %v4279
  %v5498 = vmax.f32 %v4284, %v4287
  %v5499 = vmax.f32 %v4292, %v4295
  %v5500 = vmax.f32 %v4300, %v4303
  %v5501 = vmax.f32 %v4308, %v4311
  %v5502 = vmax.f32 %v4412, %v4415
  %v5503 = vmax.f32 %v4420, %v4423
  %v5504 = vmax.f32 %v4428, %v4431
  %v5505 = vmax.f32 %v4436, %v4439
  %v5506 = vmax.f32 %v4444, %v4447
  %v5507 = vmax.f32 %v4452, %v4455
  %v5508 = vmax.f32 %v4460, %v4463
  %v5509 = vmax.f32 %v4468, %v4471
  %v5510 = vmax.f32 %v4476, %v4479
  %v5511 = vmax.f32 %v4484, %v4487
  %v5512 = vmax.f32 %v4492, %v4495
  %v5513 = vmax.f32 %v4500, %v4503
  %v5514 = vmax.f32 %v4604, %v4607
  %v5515 = vmax.f32 %v4612, %v4615
  %v5516 = vmax.f32 %v4620, %v4623
  %v5517 = vmax.f32 %v4628, %v4631
  %v5518 = vmax.f32 %v4636, %v4639
  %v5519 = vmax.f32 %v4644, %v4647
  %v5520 = vmax.f32 %v4652, %v4655
  %v5521 = vmax.f32 %v4660, %v4663
  %v5522 = vmax.f32 %v4668, %v4671
  %v5523 = vmax.f32 %v4676, %v4679
  %v5524 = vmax.f32 %v4684, %v4687
  %v5525 = vmax.f32 %v4692, %v4695
  %v5526 = vmax.f32 %v4796, %v4799
  %v5527 = vmax.f32 %v4804, %v4807
  %v5528 = vmax.f32 %v4812, %v4815
  %v5529 = vmax.f32 %v4820, %v4823
  %v5530 = vmax.f32 %v4828, %v4831
  %v5531 = vmax.f32 %v4836, %v4839
  %v5532 = vmax.f32 %v4844, %v4847
  %v5533 = vmax.f32 %v4852, %v4855
  %v5534 = vmax.f32 %v4860, %v4863
  %v5535 = vmax.f32 %v4868, %v4871
  %v5536 = vmax.f32 %v4876, %v4879
  %v5537 = vmax.f32 %v4884, %v4887
  %v5538 = vmax.f32 %v4988, %v4991
  %v5539 = vmax.f32 %v4996, %v4999
  %v5540 = vmax.f32 %v5004, %v5007
  %v5541 = vmax.f32 %v5012, %v5015
  %v5542 = vmax.f32 %v5020, %v5023
  %v5543 = vmax.f32 %v5028, %v5031
  %v5544 = vmax.f32 %v5036, %v5039
  %v5545 = vmax.f32 %v5044, %v5047
  %v5546 = vmax.f32 %v5052, %v5055
  %v5547 = vmax.f32 %v5060, %v5063
  %v5548 = vmax.f32 %v5068, %v5071
  %v5549 = vmax.f32 %v5076, %v5079
  %v5550 = vmax.f32 %v5180, %v5183
  %v5551 = vmax.f32 %v5188, %v5191
  %v5552 = vmax.f32 %v5196, %v5199
  %v5553 = vmax.f32 %v5204, %v5207
  %v5554 = vmax.f32 %v5212, %v5215
  %v5555 = vmax.f32 %v5220, %v5223
  %v5556 = vmax.f32 %v5228, %v5231
  %v5557 = vmax.f32 %v5236, %v5239
  %v5558 = vmax.f32 %v5244, %v5247
  %v5559 = vmax.f32 %v5252, %v5255
  %v5560 = vmax.f32 %v5260, %v5263
  %v5561 = vmax.f32 %v5268, %v5271
  %v5562 = vmax.f32 %v5274, %v5418
  %v5563 = vmax.f32 %v5275, %v5419
  %v5564 = vmax.f32 %v5276, %v5420
  %v5565 = vmax.f32 %v5277, %v5421
  %v5566 = vmax.f32 %v5278, %v5422
  %v5567 = vmax.f32 %v5279, %v5423
  %v5568 = vmax.f32 %v5280, %v5424
  %v5569 = vmax.f32 %v5281, %v5425
  %v5570 = vmax.f32 %v5282, %v5426
  %v5571 = vmax.f32 %v5283, %v5427
  %v5572 = vmax.f32 %v5284, %v5428
  %v5573 = vmax.f32 %v5285, %v5429
  %v5574 = vmax.f32 %v5286, %v5430
  %v5575 = vmax.f32 %v5287, %v5431
  %v5576 = vmax.f32 %v5288, %v5432
  %v5577 = vmax.f32 %v5289, %v5433
  %v5578 = vmax.f32 %v5290, %v5434
  %v5579 = vmax.f32 %v5291, %v5435
  %v5580 = vmax.f32 %v5292, %v5436
  %v5581 = vmax.f32 %v5293, %v5437
  %v5582 = vmax.f32 %v5294, %v5438
  %v5583 = vmax.f32 %v5295, %v5439
  %v5584 = vmax.f32 %v5296, %v5440
  %v5585 = vmax.f32 %v5297, %v5441
  %v5586 = vmax.f32 %v5298, %v5442
  %v5587 = vmax.f32 %v5299, %v5443
  %v5588 = vmax.f32 %v5300, %v5444
  %v5589 = vmax.f32 %v5301, %v5445
  %v5590 = vmax.f32 %v5302, %v5446
  %v5591 = vmax.f32 %v5303, %v5447
  %v5592 = vmax.f32 %v5304, %v5448
  %v5593 = vmax.f32 %v5305, %v5449
  %v5594 = vmax.f32 %v5306, %v5450
  %v5595 = vmax.f32 %v5307, %v5451
  %v5596 = vmax.f32 %v5308, %v5452
  %v5597 = vmax.f32 %v5309, %v5453
  %v5598 = vmax.f32 %v5310, %v5454
  %v5599 = vmax.f32 %v5311, %v5455
  %v5600 = vmax.f32 %v5312, %v5456
  %v5601 = vmax.f32 %v5313, %v5457
  %v5602 = vmax.f32 %v5314, %v5458
  %v5603 = vmax.f32 %v5315, %v5459
  %v5604 = vmax.f32 %v5316, %v5460
  %v5605 = vmax.f32 %v5317, %v5461
  %v5606 = vmax.f32 %v5318, %v5462
  %v5607 = vmax.f32 %v5319, %v5463
  %v5608 = vmax.f32 %v5320, %v5464
  %v5609 = vmax.f32 %v5321, %v5465
  %v5610 = vmax.f32 %v5322, %v5466
  %v5611 = vmax.f32 %v5323, %v5467
  %v5612 = vmax.f32 %v5324, %v5468
  %v5613 = vmax.f32 %v5325, %v5469
  %v5614 = vmax.f32 %v5326, %v5470
  %v5615 = vmax.f32 %v5327, %v5471
  %v5616 = vmax.f32 %v5328, %v5472
  %v5617 = vmax.f32 %v5329, %v5473
  %v5618 = vmax.f32 %v5330, %v5474
  %v5619 = vmax.f32 %v5331, %v5475
  %v5620 = vmax.f32 %v5332, %v5476
  %v5621 = vmax.f32 %v5333, %v5477
  %v5622 = vmax.f32 %v5334, %v5478
  %v5623 = vmax.f32 %v5335, %v5479
  %v5624 = vmax.f32 %v5336, %v5480
  %v5625 = vmax.f32 %v5337, %v5481
  %v5626 = vmax.f32 %v5338, %v5482
  %v5627 = vmax.f32 %v5339, %v5483
  %v5628 = vmax.f32 %v5340, %v5484
  %v5629 = vmax.f32 %v5341, %v5485
  %v5630 = vmax.f32 %v5342, %v5486
  %v5631 = vmax.f32 %v5343, %v5487
  %v5632 = vmax.f32 %v5344, %v5488
  %v5633 = vmax.f32 %v5345, %v5489
  %v5634 = vmax.f32 %v5346, %v5490
  %v5635 = vmax.f32 %v5347, %v5491
  %v5636 = vmax.f32 %v5348, %v5492
  %v5637 = vmax.f32 %v5349, %v5493
  %v5638 = vmax.f32 %v5350, %v5494
  %v5639 = vmax.f32 %v5351, %v5495
  %v5640 = vmax.f32 %v5352, %v5496
  %v5641 = vmax.f32 %v5353, %v5497
  %v5642 = vmax.f32 %v5354, %v5498
  %v5643 = vmax.f32 %v5355, %v5499
  %v5644 = vmax.f32 %v5356, %v5500
  %v5645 = vmax.f32 %v5357, %v5501
  %v5646 = vmax.f32 %v5358, %v5502
  %v5647 = vmax.f32 %v5359, %v5503
  %v5648 = vmax.f32 %v5360, %v5504
  %v5649 = vmax.f32 %v5361, %v5505
  %v5650 = vmax.f32 %v5362, %v5506
  %v5651 = vmax.f32 %v5363, %v5507
  %v5652 = vmax.f32 %v5364, %v5508
  %v5653 = vmax.f32 %v5365, %v5509
  %v5654 = vmax.f32 %v5366, %v5510
  %v5655 = vmax.f32 %v5367, %v5511
  %v5656 = vmax.f32 %v5368, %v5512
  %v5657 = vmax.f32 %v5369, %v5513
  %v5658 = vmax.f32 %v5370, %v5514
  %v5659 = vmax.f32 %v5371, %v5515
  %v5660 = vmax.f32 %v5372, %v5516
  %v5661 = vmax.f32 %v5373, %v5517
  %v5662 = vmax.f32 %v5374, %v5518
  %v5663 = vmax.f32 %v5375, %v5519
  %v5664 = vmax.f32 %v5376, %v5520
  %v5665 = vmax.f32 %v5377, %v5521
  %v5666 = vmax.f32 %v5378, %v5522
  %v5667 = vmax.f32 %v5379, %v5523
  %v5668 = vmax.f32 %v5380, %v5524
  %v5669 = vmax.f32 %v5381, %v5525
  %v5670 = vmax.f32 %v5382, %v5526
  %v5671 = vmax.f32 %v5383, %v5527
  %v5672 = vmax.f32 %v5384, %v5528
  %v5673 = vmax.f32 %v5385, %v5529
  %v5674 = vmax.f32 %v5386, %v5530
  %v5675 = vmax.f32 %v5387, %v5531
  %v5676 = vmax.f32 %v5388, %v5532
  %v5677 = vmax.f32 %v5389, %v5533
  %v5678 = vmax.f32 %v5390, %v5534
  %v5679 = vmax.f32 %v5391, %v5535
  %v5680 = vmax.f32 %v5392, %v5536
  %v5681 = vmax.f32 %v5393, %v5537
  %v5682 = vmax.f32 %v5394, %v5538
  %v5683 = vmax.f32 %v5395, %v5539
  %v5684 = vmax.f32 %v5396, %v5540
  %v5685 = vmax.f32 %v5397, %v5541
  %v5686 = vmax.f32 %v5398, %v5542
  %v5687 = vmax.f32 %v5399, %v5543
  %v5688 = vmax.f32 %v5400, %v5544
  %v5689 = vmax.f32 %v5401, %v5545
  %v5690 = vmax.f32 %v5402, %v5546
  %v5691 = vmax.f32 %v5403, %v5547
  %v5692 = vmax.f32 %v5404, %v5548
  %v5693 = vmax.f32 %v5405, %v5549
  %v5694 = vmax.f32 %v5406, %v5550
  %v5695 = vmax.f32 %v5407, %v5551
  %v5696 = vmax.f32 %v5408, %v5552
  %v5697 = vmax.f32 %v5409, %v5553
  %v5698 = vmax.f32 %v5410, %v5554
  %v5699 = vmax.f32 %v5411, %v5555
  %v5700 = vmax.f32 %v5412, %v5556
  %v5701 = vmax.f32 %v5413, %v5557
  %v5702 = vmax.f32 %v5414, %v5558
  %v5703 = vmax.f32 %v5415, %v5559
  %v5704 = vmax.f32 %v5416, %v5560
  %v5705 = vmax.f32 %v5417, %v5561
  %v5706 = vmax.f32 %v5562, 0.0
  %v5707 = vmax.f32 %v5563, 0.0
  %v5708 = vmax.f32 %v5564, 0.0
  %v5709 = vmax.f32 %v5565, 0.0
  %v5710 = vmax.f32 %v5566, 0.0
  %v5711 = vmax.f32 %v5567, 0.0
  %v5712 = vmax.f32 %v5568, 0.0
  %v5713 = vmax.f32 %v5569, 0.0
  %v5714 = vmax.f32 %v5570, 0.0
  %v5715 = vmax.f32 %v5571, 0.0
  %v5716 = vmax.f32 %v5572, 0.0
  %v5717 = vmax.f32 %v5573, 0.0
  %v5718 = vmax.f32 %v5574, 0.0
  %v5719 = vmax.f32 %v5575, 0.0
  %v5720 = vmax.f32 %v5576, 0.0
  %v5721 = vmax.f32 %v5577, 0.0
  %v5722 = vmax.f32 %v5578, 0.0
  %v5723 = vmax.f32 %v5579, 0.0
  %v5724 = vmax.f32 %v5580, 0.0
  %v5725 = vmax.f32 %v5581, 0.0
  %v5726 = vmax.f32 %v5582, 0.0
  %v5727 = vmax.f32 %v5583, 0.0
  %v5728 = vmax.f32 %v5584, 0.0
  %v5729 = vmax.f32 %v5585, 0.0
  %v5730 = vmax.f32 %v5586, 0.0
  %v5731 = vmax.f32 %v5587, 0.0
  %v5732 = vmax.f32 %v5588, 0.0
  %v5733 = vmax.f32 %v5589, 0.0
  %v5734 = vmax.f32 %v5590, 0.0
  %v5735 = vmax.f32 %v5591, 0.0
  %v5736 = vmax.f32 %v5592, 0.0
  %v5737 = vmax.f32 %v5593, 0.0
  %v5738 = vmax.f32 %v5594, 0.0
  %v5739 = vmax.f32 %v5595, 0.0
  %v5740 = vmax.f32 %v5596, 0.0
  %v5741 = vmax.f32 %v5597, 0.0
  %v5742 = vmax.f32 %v5598, 0.0
  %v5743 = vmax.f32 %v5599, 0.0
  %v5744 = vmax.f32 %v5600, 0.0
  %v5745 = vmax.f32 %v5601, 0.0
  %v5746 = vmax.f32 %v5602, 0.0
  %v5747 = vmax.f32 %v5603, 0.0
  %v5748 = vmax.f32 %v5604, 0.0
  %v5749 = vmax.f32 %v5605, 0.0
  %v5750 = vmax.f32 %v5606, 0.0
  %v5751 = vmax.f32 %v5607, 0.0
  %v5752 = vmax.f32 %v5608, 0.0
  %v5753 = vmax.f32 %v5609, 0.0
  %v5754 = vmax.f32 %v5610, 0.0
  %v5755 = vmax.f32 %v5611, 0.0
  %v5756 = vmax.f32 %v5612, 0.0
  %v5757 = vmax.f32 %v5613, 0.0
  %v5758 = vmax.f32 %v5614, 0.0
  %v5759 = vmax.f32 %v5615, 0.0
  %v5760 = vmax.f32 %v5616, 0.0
  %v5761 = vmax.f32 %v5617, 0.0
  %v5762 = vmax.f32 %v5618, 0.0
  %v5763 = vmax.f32 %v5619, 0.0
  %v5764 = vmax.f32 %v5620, 0.0
  %v5765 = vmax.f32 %v5621, 0.0
  %v5766 = vmax.f32 %v5622, 0.0
  %v5767 = vmax.f32 %v5623, 0.0
  %v5768 = vmax.f32 %v5624, 0.0
  %v5769 = vmax.f32 %v5625, 0.0
  %v5770 = vmax.f32 %v5626, 0.0
  %v5771 = vmax.f32 %v5627, 0.0
  %v5772 = vmax.f32 %v5628, 0.0
  %v5773 = vmax.f32 %v5629, 0.0
  %v5774 = vmax.f32 %v5630, 0.0
  %v5775 = vmax.f32 %v5631, 0.0
  %v5776 = vmax.f32 %v5632, 0.0
  %v5777 = vmax.f32 %v5633, 0.0
  %v5778 = vmax.f32 %v5634, 0.0
  %v5779 = vmax.f32 %v5635, 0.0
  %v5780 = vmax.f32 %v5636, 0.0
  %v5781 = vmax.f32 %v5637, 0.0
  %v5782 = vmax.f32 %v5638, 0.0
  %v5783 = vmax.f32 %v5639, 0.0
  %v5784 = vmax.f32 %v5640, 0.0
  %v5785 = vmax.f32 %v5641, 0.0
  %v5786 = vmax.f32 %v5642, 0.0
  %v5787 = vmax.f32 %v5643, 0.0
  %v5788 = vmax.f32 %v5644, 0.0
  %v5789 = vmax.f32 %v5645, 0.0
  %v5790 = vmax.f32 %v5646, 0.0
  %v5791 = vmax.f32 %v5647, 0.0
  %v5792 = vmax.f32 %v5648, 0.0
  %v5793 = vmax.f32 %v5649, 0.0
  %v5794 = vmax.f32 %v5650, 0.0
  %v5795 = vmax.f32 %v5651, 0.0
  %v5796 = vmax.f32 %v5652, 0.0
  %v5797 = vmax.f32 %v5653, 0.0
  %v5798 = vmax.f32 %v5654, 0.0
  %v5799 = vmax.f32 %v5655, 0.0
  %v5800 = vmax.f32 %v5656, 0.0
  %v5801 = vmax.f32 %v5657, 0.0
  %v5802 = vmax.f32 %v5658, 0.0
  %v5803 = vmax.f32 %v5659, 0.0
  %v5804 = vmax.f32 %v5660, 0.0
  %v5805 = vmax.f32 %v5661, 0.0
  %v5806 = vmax.f32 %v5662, 0.0
  %v5807 = vmax.f32 %v5663, 0.0
  %v5808 = vmax.f32 %v5664, 0.0
  %v5809 = vmax.f32 %v5665, 0.0
  %v5810 = vmax.f32 %v5666, 0.0
  %v5811 = vmax.f32 %v5667, 0.0
  %v5812 = vmax.f32 %v5668, 0.0
  %v5813 = vmax.f32 %v5669, 0.0
  %v5814 = vmax.f32 %v5670, 0.0
  %v5815 = vmax.f32 %v5671, 0.0
  %v5816 = vmax.f32 %v5672, 0.0
  %v5817 = vmax.f32 %v5673, 0.0
  %v5818 = vmax.f32 %v5674, 0.0
  %v5819 = vmax.f32 %v5675, 0.0
  %v5820 = vmax.f32 %v5676, 0.0
  %v5821 = vmax.f32 %v5677, 0.0
  %v5822 = vmax.f32 %v5678, 0.0
  %v5823 = vmax.f32 %v5679, 0.0
  %v5824 = vmax.f32 %v5680, 0.0
  %v5825 = vmax.f32 %v5681, 0.0
  %v5826 = vmax.f32 %v5682, 0.0
  %v5827 = vmax.f32 %v5683, 0.0
  %v5828 = vmax.f32 %v5684, 0.0
  %v5829 = vmax.f32 %v5685, 0.0
  %v5830 = vmax.f32 %v5686, 0.0
  %v5831 = vmax.f32 %v5687, 0.0
  %v5832 = vmax.f32 %v5688, 0.0
  %v5833 = vmax.f32 %v5689, 0.0
  %v5834 = vmax.f32 %v5690, 0.0
  %v5835 = vmax.f32 %v5691, 0.0
  %v5836 = vmax.f32 %v5692, 0.0
  %v5837 = vmax.f32 %v5693, 0.0
  %v5838 = vmax.f32 %v5694, 0.0
  %v5839 = vmax.f32 %v5695, 0.0
  %v5840 = vmax.f32 %v5696, 0.0
  %v5841 = vmax.f32 %v5697, 0.0
  %v5842 = vmax.f32 %v5698, 0.0
  %v5843 = vmax.f32 %v5699, 0.0
  %v5844 = vmax.f32 %v5700, 0.0
  %v5845 = vmax.f32 %v5701, 0.0
  %v5846 = vmax.f32 %v5702, 0.0
  %v5847 = vmax.f32 %v5703, 0.0
  %v5848 = vmax.f32 %v5704, 0.0
  %v5849 = vmax.f32 %v5705, 0.0
  %5850 = vrot.lane.b32.xlu0 %v5707, 16
  %v5851 = vpop.permute.xlu0 %5850
  %5852 = vrot.lane.b32.xlu0 %v5708, 16
  %v5853 = vpop.permute.xlu0 %5852
  %5854 = vrot.lane.b32.xlu0 %v5709, 16
  %v5855 = vpop.permute.xlu0 %5854
  %5856 = vrot.lane.b32.xlu0 %v5710, 16
  %v5857 = vpop.permute.xlu0 %5856
  %5858 = vrot.lane.b32.xlu0 %v5711, 16
  %v5859 = vpop.permute.xlu0 %5858
  %5860 = vrot.lane.b32.xlu0 %v5712, 16
  %v5861 = vpop.permute.xlu0 %5860
  %5862 = vrot.lane.b32.xlu0 %v5713, 16
  %v5863 = vpop.permute.xlu0 %5862
  %5864 = vrot.lane.b32.xlu0 %v5714, 16
  %v5865 = vpop.permute.xlu0 %5864
  %5866 = vrot.lane.b32.xlu0 %v5719, 16
  %v5867 = vpop.permute.xlu0 %5866
  %5868 = vrot.lane.b32.xlu0 %v5720, 16
  %v5869 = vpop.permute.xlu0 %5868
  %5870 = vrot.lane.b32.xlu0 %v5721, 16
  %v5871 = vpop.permute.xlu0 %5870
  %5872 = vrot.lane.b32.xlu0 %v5722, 16
  %v5873 = vpop.permute.xlu0 %5872
  %5874 = vrot.lane.b32.xlu0 %v5723, 16
  %v5875 = vpop.permute.xlu0 %5874
  %5876 = vrot.lane.b32.xlu0 %v5724, 16
  %v5877 = vpop.permute.xlu0 %5876
  %5878 = vrot.lane.b32.xlu0 %v5725, 16
  %v5879 = vpop.permute.xlu0 %5878
  %5880 = vrot.lane.b32.xlu0 %v5726, 16
  %v5881 = vpop.permute.xlu0 %5880
  %5882 = vrot.lane.b32.xlu0 %v5731, 16
  %v5883 = vpop.permute.xlu0 %5882
  %5884 = vrot.lane.b32.xlu0 %v5732, 16
  %v5885 = vpop.permute.xlu0 %5884
  %5886 = vrot.lane.b32.xlu0 %v5733, 16
  %v5887 = vpop.permute.xlu0 %5886
  %5888 = vrot.lane.b32.xlu0 %v5734, 16
  %v5889 = vpop.permute.xlu0 %5888
  %5890 = vrot.lane.b32.xlu0 %v5735, 16
  %v5891 = vpop.permute.xlu0 %5890
  %5892 = vrot.lane.b32.xlu0 %v5736, 16
  %v5893 = vpop.permute.xlu0 %5892
  %5894 = vrot.lane.b32.xlu0 %v5737, 16
  %v5895 = vpop.permute.xlu0 %5894
  %5896 = vrot.lane.b32.xlu0 %v5738, 16
  %v5897 = vpop.permute.xlu0 %5896
  %5898 = vrot.lane.b32.xlu0 %v5743, 16
  %v5899 = vpop.permute.xlu0 %5898
  %5900 = vrot.lane.b32.xlu0 %v5744, 16
  %v5901 = vpop.permute.xlu0 %5900
  %5902 = vrot.lane.b32.xlu0 %v5745, 16
  %v5903 = vpop.permute.xlu0 %5902
  %5904 = vrot.lane.b32.xlu0 %v5746, 16
  %v5905 = vpop.permute.xlu0 %5904
  %5906 = vrot.lane.b32.xlu0 %v5747, 16
  %v5907 = vpop.permute.xlu0 %5906
  %5908 = vrot.lane.b32.xlu0 %v5748, 16
  %v5909 = vpop.permute.xlu0 %5908
  %5910 = vrot.lane.b32.xlu0 %v5749, 16
  %v5911 = vpop.permute.xlu0 %5910
  %5912 = vrot.lane.b32.xlu0 %v5750, 16
  %v5913 = vpop.permute.xlu0 %5912
  %5914 = vrot.lane.b32.xlu0 %v5755, 16
  %v5915 = vpop.permute.xlu0 %5914
  %5916 = vrot.lane.b32.xlu0 %v5756, 16
  %v5917 = vpop.permute.xlu0 %5916
  %5918 = vrot.lane.b32.xlu0 %v5757, 16
  %v5919 = vpop.permute.xlu0 %5918
  %5920 = vrot.lane.b32.xlu0 %v5758, 16
  %v5921 = vpop.permute.xlu0 %5920
  %5922 = vrot.lane.b32.xlu0 %v5759, 16
  %v5923 = vpop.permute.xlu0 %5922
  %5924 = vrot.lane.b32.xlu0 %v5760, 16
  %v5925 = vpop.permute.xlu0 %5924
  %5926 = vrot.lane.b32.xlu0 %v5761, 16
  %v5927 = vpop.permute.xlu0 %5926
  %5928 = vrot.lane.b32.xlu0 %v5762, 16
  %v5929 = vpop.permute.xlu0 %5928
  %5930 = vrot.lane.b32.xlu0 %v5767, 16
  %v5931 = vpop.permute.xlu0 %5930
  %5932 = vrot.lane.b32.xlu0 %v5768, 16
  %v5933 = vpop.permute.xlu0 %5932
  %5934 = vrot.lane.b32.xlu0 %v5769, 16
  %v5935 = vpop.permute.xlu0 %5934
  %5936 = vrot.lane.b32.xlu0 %v5770, 16
  %v5937 = vpop.permute.xlu0 %5936
  %5938 = vrot.lane.b32.xlu0 %v5771, 16
  %v5939 = vpop.permute.xlu0 %5938
  %5940 = vrot.lane.b32.xlu0 %v5772, 16
  %v5941 = vpop.permute.xlu0 %5940
  %5942 = vrot.lane.b32.xlu0 %v5773, 16
  %v5943 = vpop.permute.xlu0 %5942
  %5944 = vrot.lane.b32.xlu0 %v5774, 16
  %v5945 = vpop.permute.xlu0 %5944
  %5946 = vrot.lane.b32.xlu0 %v5779, 16
  %v5947 = vpop.permute.xlu0 %5946
  %5948 = vrot.lane.b32.xlu0 %v5780, 16
  %v5949 = vpop.permute.xlu0 %5948
  %5950 = vrot.lane.b32.xlu0 %v5781, 16
  %v5951 = vpop.permute.xlu0 %5950
  %5952 = vrot.lane.b32.xlu0 %v5782, 16
  %v5953 = vpop.permute.xlu0 %5952
  %5954 = vrot.lane.b32.xlu0 %v5783, 16
  %v5955 = vpop.permute.xlu0 %5954
  %5956 = vrot.lane.b32.xlu0 %v5784, 16
  %v5957 = vpop.permute.xlu0 %5956
  %5958 = vrot.lane.b32.xlu0 %v5785, 16
  %v5959 = vpop.permute.xlu0 %5958
  %5960 = vrot.lane.b32.xlu0 %v5786, 16
  %v5961 = vpop.permute.xlu0 %5960
  %5962 = vrot.lane.b32.xlu0 %v5791, 16
  %v5963 = vpop.permute.xlu0 %5962
  %5964 = vrot.lane.b32.xlu0 %v5792, 16
  %v5965 = vpop.permute.xlu0 %5964
  %5966 = vrot.lane.b32.xlu0 %v5793, 16
  %v5967 = vpop.permute.xlu0 %5966
  %5968 = vrot.lane.b32.xlu0 %v5794, 16
  %v5969 = vpop.permute.xlu0 %5968
  %5970 = vrot.lane.b32.xlu0 %v5795, 16
  %v5971 = vpop.permute.xlu0 %5970
  %5972 = vrot.lane.b32.xlu0 %v5796, 16
  %v5973 = vpop.permute.xlu0 %5972
  %5974 = vrot.lane.b32.xlu0 %v5797, 16
  %v5975 = vpop.permute.xlu0 %5974
  %5976 = vrot.lane.b32.xlu0 %v5798, 16
  %v5977 = vpop.permute.xlu0 %5976
  %5978 = vrot.lane.b32.xlu0 %v5803, 16
  %v5979 = vpop.permute.xlu0 %5978
  %5980 = vrot.lane.b32.xlu0 %v5804, 16
  %v5981 = vpop.permute.xlu0 %5980
  %5982 = vrot.lane.b32.xlu0 %v5805, 16
  %v5983 = vpop.permute.xlu0 %5982
  %5984 = vrot.lane.b32.xlu0 %v5806, 16
  %v5985 = vpop.permute.xlu0 %5984
  %5986 = vrot.lane.b32.xlu0 %v5807, 16
  %v5987 = vpop.permute.xlu0 %5986
  %5988 = vrot.lane.b32.xlu0 %v5808, 16
  %v5989 = vpop.permute.xlu0 %5988
  %5990 = vrot.lane.b32.xlu0 %v5809, 16
  %v5991 = vpop.permute.xlu0 %5990
  %5992 = vrot.lane.b32.xlu0 %v5810, 16
  %v5993 = vpop.permute.xlu0 %5992
  %5994 = vrot.lane.b32.xlu0 %v5815, 16
  %v5995 = vpop.permute.xlu0 %5994
  %5996 = vrot.lane.b32.xlu0 %v5816, 16
  %v5997 = vpop.permute.xlu0 %5996
  %5998 = vrot.lane.b32.xlu0 %v5817, 16
  %v5999 = vpop.permute.xlu0 %5998
  %6000 = vrot.lane.b32.xlu0 %v5818, 16
  %v6001 = vpop.permute.xlu0 %6000
  %6002 = vrot.lane.b32.xlu0 %v5819, 16
  %v6003 = vpop.permute.xlu0 %6002
  %6004 = vrot.lane.b32.xlu0 %v5820, 16
  %v6005 = vpop.permute.xlu0 %6004
  %6006 = vrot.lane.b32.xlu0 %v5821, 16
  %v6007 = vpop.permute.xlu0 %6006
  %6008 = vrot.lane.b32.xlu0 %v5822, 16
  %v6009 = vpop.permute.xlu0 %6008
  %6010 = vrot.lane.b32.xlu0 %v5827, 16
  %v6011 = vpop.permute.xlu0 %6010
  %6012 = vrot.lane.b32.xlu0 %v5828, 16
  %v6013 = vpop.permute.xlu0 %6012
  %6014 = vrot.lane.b32.xlu0 %v5829, 16
  %v6015 = vpop.permute.xlu0 %6014
  %6016 = vrot.lane.b32.xlu0 %v5830, 16
  %v6017 = vpop.permute.xlu0 %6016
  %6018 = vrot.lane.b32.xlu0 %v5831, 16
  %v6019 = vpop.permute.xlu0 %6018
  %6020 = vrot.lane.b32.xlu0 %v5832, 16
  %v6021 = vpop.permute.xlu0 %6020
  %6022 = vrot.lane.b32.xlu0 %v5833, 16
  %v6023 = vpop.permute.xlu0 %6022
  %6024 = vrot.lane.b32.xlu0 %v5834, 16
  %v6025 = vpop.permute.xlu0 %6024
  %6026 = vrot.lane.b32.xlu0 %v5839, 16
  %v6027 = vpop.permute.xlu0 %6026
  %6028 = vrot.lane.b32.xlu0 %v5840, 16
  %v6029 = vpop.permute.xlu0 %6028
  %6030 = vrot.lane.b32.xlu0 %v5841, 16
  %v6031 = vpop.permute.xlu0 %6030
  %6032 = vrot.lane.b32.xlu0 %v5842, 16
  %v6033 = vpop.permute.xlu0 %6032
  %6034 = vrot.lane.b32.xlu0 %v5843, 16
  %v6035 = vpop.permute.xlu0 %6034
  %6036 = vrot.lane.b32.xlu0 %v5844, 16
  %v6037 = vpop.permute.xlu0 %6036
  %6038 = vrot.lane.b32.xlu0 %v5845, 16
  %v6039 = vpop.permute.xlu0 %6038
  %6040 = vrot.lane.b32.xlu0 %v5846, 16
  %v6041 = vpop.permute.xlu0 %6040
  %v6042 = vadd.f32 %v5706, %v5851
  %v6043 = vadd.f32 %v5707, %v5853
  %v6044 = vadd.f32 %v5708, %v5855
  %v6045 = vadd.f32 %v5709, %v5857
  %v6046 = vadd.f32 %v5710, %v5859
  %v6047 = vadd.f32 %v5711, %v5861
  %v6048 = vadd.f32 %v5712, %v5863
  %v6049 = vadd.f32 %v5713, %v5865
  %v6050 = vadd.f32 %v5718, %v5867
  %v6051 = vadd.f32 %v5719, %v5869
  %v6052 = vadd.f32 %v5720, %v5871
  %v6053 = vadd.f32 %v5721, %v5873
  %v6054 = vadd.f32 %v5722, %v5875
  %v6055 = vadd.f32 %v5723, %v5877
  %v6056 = vadd.f32 %v5724, %v5879
  %v6057 = vadd.f32 %v5725, %v5881
  %v6058 = vadd.f32 %v5730, %v5883
  %v6059 = vadd.f32 %v5731, %v5885
  %v6060 = vadd.f32 %v5732, %v5887
  %v6061 = vadd.f32 %v5733, %v5889
  %v6062 = vadd.f32 %v5734, %v5891
  %v6063 = vadd.f32 %v5735, %v5893
  %v6064 = vadd.f32 %v5736, %v5895
  %v6065 = vadd.f32 %v5737, %v5897
  %v6066 = vadd.f32 %v5742, %v5899
  %v6067 = vadd.f32 %v5743, %v5901
  %v6068 = vadd.f32 %v5744, %v5903
  %v6069 = vadd.f32 %v5745, %v5905
  %v6070 = vadd.f32 %v5746, %v5907
  %v6071 = vadd.f32 %v5747, %v5909
  %v6072 = vadd.f32 %v5748, %v5911
  %v6073 = vadd.f32 %v5749, %v5913
  %v6074 = vadd.f32 %v5754, %v5915
  %v6075 = vadd.f32 %v5755, %v5917
  %v6076 = vadd.f32 %v5756, %v5919
  %v6077 = vadd.f32 %v5757, %v5921
  %v6078 = vadd.f32 %v5758, %v5923
  %v6079 = vadd.f32 %v5759, %v5925
  %v6080 = vadd.f32 %v5760, %v5927
  %v6081 = vadd.f32 %v5761, %v5929
  %v6082 = vadd.f32 %v5766, %v5931
  %v6083 = vadd.f32 %v5767, %v5933
  %v6084 = vadd.f32 %v5768, %v5935
  %v6085 = vadd.f32 %v5769, %v5937
  %v6086 = vadd.f32 %v5770, %v5939
  %v6087 = vadd.f32 %v5771, %v5941
  %v6088 = vadd.f32 %v5772, %v5943
  %v6089 = vadd.f32 %v5773, %v5945
  %v6090 = vadd.f32 %v5778, %v5947
  %v6091 = vadd.f32 %v5779, %v5949
  %v6092 = vadd.f32 %v5780, %v5951
  %v6093 = vadd.f32 %v5781, %v5953
  %v6094 = vadd.f32 %v5782, %v5955
  %v6095 = vadd.f32 %v5783, %v5957
  %v6096 = vadd.f32 %v5784, %v5959
  %v6097 = vadd.f32 %v5785, %v5961
  %v6098 = vadd.f32 %v5790, %v5963
  %v6099 = vadd.f32 %v5791, %v5965
  %v6100 = vadd.f32 %v5792, %v5967
  %v6101 = vadd.f32 %v5793, %v5969
  %v6102 = vadd.f32 %v5794, %v5971
  %v6103 = vadd.f32 %v5795, %v5973
  %v6104 = vadd.f32 %v5796, %v5975
  %v6105 = vadd.f32 %v5797, %v5977
  %v6106 = vadd.f32 %v5802, %v5979
  %v6107 = vadd.f32 %v5803, %v5981
  %v6108 = vadd.f32 %v5804, %v5983
  %v6109 = vadd.f32 %v5805, %v5985
  %v6110 = vadd.f32 %v5806, %v5987
  %v6111 = vadd.f32 %v5807, %v5989
  %v6112 = vadd.f32 %v5808, %v5991
  %v6113 = vadd.f32 %v5809, %v5993
  %v6114 = vadd.f32 %v5814, %v5995
  %v6115 = vadd.f32 %v5815, %v5997
  %v6116 = vadd.f32 %v5816, %v5999
  %v6117 = vadd.f32 %v5817, %v6001
  %v6118 = vadd.f32 %v5818, %v6003
  %v6119 = vadd.f32 %v5819, %v6005
  %v6120 = vadd.f32 %v5820, %v6007
  %v6121 = vadd.f32 %v5821, %v6009
  %v6122 = vadd.f32 %v5826, %v6011
  %v6123 = vadd.f32 %v5827, %v6013
  %v6124 = vadd.f32 %v5828, %v6015
  %v6125 = vadd.f32 %v5829, %v6017
  %v6126 = vadd.f32 %v5830, %v6019
  %v6127 = vadd.f32 %v5831, %v6021
  %v6128 = vadd.f32 %v5832, %v6023
  %v6129 = vadd.f32 %v5833, %v6025
  %v6130 = vadd.f32 %v5838, %v6027
  %v6131 = vadd.f32 %v5839, %v6029
  %v6132 = vadd.f32 %v5840, %v6031
  %v6133 = vadd.f32 %v5841, %v6033
  %v6134 = vadd.f32 %v5842, %v6035
  %v6135 = vadd.f32 %v5843, %v6037
  %v6136 = vadd.f32 %v5844, %v6039
  %v6137 = vadd.f32 %v5845, %v6041
  %6138 = vrot.lane.b32.xlu0 %v5708, 32
  %v6139 = vpop.permute.xlu0 %6138
  %6140 = vrot.lane.b32.xlu0 %v5709, 32
  %v6141 = vpop.permute.xlu0 %6140
  %6142 = vrot.lane.b32.xlu0 %v5710, 32
  %v6143 = vpop.permute.xlu0 %6142
  %6144 = vrot.lane.b32.xlu0 %v5711, 32
  %v6145 = vpop.permute.xlu0 %6144
  %6146 = vrot.lane.b32.xlu0 %v5712, 32
  %v6147 = vpop.permute.xlu0 %6146
  %6148 = vrot.lane.b32.xlu0 %v5713, 32
  %v6149 = vpop.permute.xlu0 %6148
  %6150 = vrot.lane.b32.xlu0 %v5714, 32
  %v6151 = vpop.permute.xlu0 %6150
  %6152 = vrot.lane.b32.xlu0 %v5715, 32
  %v6153 = vpop.permute.xlu0 %6152
  %6154 = vrot.lane.b32.xlu0 %v5720, 32
  %v6155 = vpop.permute.xlu0 %6154
  %6156 = vrot.lane.b32.xlu0 %v5721, 32
  %v6157 = vpop.permute.xlu0 %6156
  %6158 = vrot.lane.b32.xlu0 %v5722, 32
  %v6159 = vpop.permute.xlu0 %6158
  %6160 = vrot.lane.b32.xlu0 %v5723, 32
  %v6161 = vpop.permute.xlu0 %6160
  %6162 = vrot.lane.b32.xlu0 %v5724, 32
  %v6163 = vpop.permute.xlu0 %6162
  %6164 = vrot.lane.b32.xlu0 %v5725, 32
  %v6165 = vpop.permute.xlu0 %6164
  %6166 = vrot.lane.b32.xlu0 %v5726, 32
  %v6167 = vpop.permute.xlu0 %6166
  %6168 = vrot.lane.b32.xlu0 %v5727, 32
  %v6169 = vpop.permute.xlu0 %6168
  %6170 = vrot.lane.b32.xlu0 %v5732, 32
  %v6171 = vpop.permute.xlu0 %6170
  %6172 = vrot.lane.b32.xlu0 %v5733, 32
  %v6173 = vpop.permute.xlu0 %6172
  %6174 = vrot.lane.b32.xlu0 %v5734, 32
  %v6175 = vpop.permute.xlu0 %6174
  %6176 = vrot.lane.b32.xlu0 %v5735, 32
  %v6177 = vpop.permute.xlu0 %6176
  %6178 = vrot.lane.b32.xlu0 %v5736, 32
  %v6179 = vpop.permute.xlu0 %6178
  %6180 = vrot.lane.b32.xlu0 %v5737, 32
  %v6181 = vpop.permute.xlu0 %6180
  %6182 = vrot.lane.b32.xlu0 %v5738, 32
  %v6183 = vpop.permute.xlu0 %6182
  %6184 = vrot.lane.b32.xlu0 %v5739, 32
  %v6185 = vpop.permute.xlu0 %6184
  %6186 = vrot.lane.b32.xlu0 %v5744, 32
  %v6187 = vpop.permute.xlu0 %6186
  %6188 = vrot.lane.b32.xlu0 %v5745, 32
  %v6189 = vpop.permute.xlu0 %6188
  %6190 = vrot.lane.b32.xlu0 %v5746, 32
  %v6191 = vpop.permute.xlu0 %6190
  %6192 = vrot.lane.b32.xlu0 %v5747, 32
  %v6193 = vpop.permute.xlu0 %6192
  %6194 = vrot.lane.b32.xlu0 %v5748, 32
  %v6195 = vpop.permute.xlu0 %6194
  %6196 = vrot.lane.b32.xlu0 %v5749, 32
  %v6197 = vpop.permute.xlu0 %6196
  %6198 = vrot.lane.b32.xlu0 %v5750, 32
  %v6199 = vpop.permute.xlu0 %6198
  %6200 = vrot.lane.b32.xlu0 %v5751, 32
  %v6201 = vpop.permute.xlu0 %6200
  %6202 = vrot.lane.b32.xlu0 %v5756, 32
  %v6203 = vpop.permute.xlu0 %6202
  %6204 = vrot.lane.b32.xlu0 %v5757, 32
  %v6205 = vpop.permute.xlu0 %6204
  %6206 = vrot.lane.b32.xlu0 %v5758, 32
  %v6207 = vpop.permute.xlu0 %6206
  %6208 = vrot.lane.b32.xlu0 %v5759, 32
  %v6209 = vpop.permute.xlu0 %6208
  %6210 = vrot.lane.b32.xlu0 %v5760, 32
  %v6211 = vpop.permute.xlu0 %6210
  %6212 = vrot.lane.b32.xlu0 %v5761, 32
  %v6213 = vpop.permute.xlu0 %6212
  %6214 = vrot.lane.b32.xlu0 %v5762, 32
  %v6215 = vpop.permute.xlu0 %6214
  %6216 = vrot.lane.b32.xlu0 %v5763, 32
  %v6217 = vpop.permute.xlu0 %6216
  %6218 = vrot.lane.b32.xlu0 %v5768, 32
  %v6219 = vpop.permute.xlu0 %6218
  %6220 = vrot.lane.b32.xlu0 %v5769, 32
  %v6221 = vpop.permute.xlu0 %6220
  %6222 = vrot.lane.b32.xlu0 %v5770, 32
  %v6223 = vpop.permute.xlu0 %6222
  %6224 = vrot.lane.b32.xlu0 %v5771, 32
  %v6225 = vpop.permute.xlu0 %6224
  %6226 = vrot.lane.b32.xlu0 %v5772, 32
  %v6227 = vpop.permute.xlu0 %6226
  %6228 = vrot.lane.b32.xlu0 %v5773, 32
  %v6229 = vpop.permute.xlu0 %6228
  %6230 = vrot.lane.b32.xlu0 %v5774, 32
  %v6231 = vpop.permute.xlu0 %6230
  %6232 = vrot.lane.b32.xlu0 %v5775, 32
  %v6233 = vpop.permute.xlu0 %6232
  %6234 = vrot.lane.b32.xlu0 %v5780, 32
  %v6235 = vpop.permute.xlu0 %6234
  %6236 = vrot.lane.b32.xlu0 %v5781, 32
  %v6237 = vpop.permute.xlu0 %6236
  %6238 = vrot.lane.b32.xlu0 %v5782, 32
  %v6239 = vpop.permute.xlu0 %6238
  %6240 = vrot.lane.b32.xlu0 %v5783, 32
  %v6241 = vpop.permute.xlu0 %6240
  %6242 = vrot.lane.b32.xlu0 %v5784, 32
  %v6243 = vpop.permute.xlu0 %6242
  %6244 = vrot.lane.b32.xlu0 %v5785, 32
  %v6245 = vpop.permute.xlu0 %6244
  %6246 = vrot.lane.b32.xlu0 %v5786, 32
  %v6247 = vpop.permute.xlu0 %6246
  %6248 = vrot.lane.b32.xlu0 %v5787, 32
  %v6249 = vpop.permute.xlu0 %6248
  %6250 = vrot.lane.b32.xlu0 %v5792, 32
  %v6251 = vpop.permute.xlu0 %6250
  %6252 = vrot.lane.b32.xlu0 %v5793, 32
  %v6253 = vpop.permute.xlu0 %6252
  %6254 = vrot.lane.b32.xlu0 %v5794, 32
  %v6255 = vpop.permute.xlu0 %6254
  %6256 = vrot.lane.b32.xlu0 %v5795, 32
  %v6257 = vpop.permute.xlu0 %6256
  %6258 = vrot.lane.b32.xlu0 %v5796, 32
  %v6259 = vpop.permute.xlu0 %6258
  %6260 = vrot.lane.b32.xlu0 %v5797, 32
  %v6261 = vpop.permute.xlu0 %6260
  %6262 = vrot.lane.b32.xlu0 %v5798, 32
  %v6263 = vpop.permute.xlu0 %6262
  %6264 = vrot.lane.b32.xlu0 %v5799, 32
  %v6265 = vpop.permute.xlu0 %6264
  %6266 = vrot.lane.b32.xlu0 %v5804, 32
  %v6267 = vpop.permute.xlu0 %6266
  %6268 = vrot.lane.b32.xlu0 %v5805, 32
  %v6269 = vpop.permute.xlu0 %6268
  %6270 = vrot.lane.b32.xlu0 %v5806, 32
  %v6271 = vpop.permute.xlu0 %6270
  %6272 = vrot.lane.b32.xlu0 %v5807, 32
  %v6273 = vpop.permute.xlu0 %6272
  %6274 = vrot.lane.b32.xlu0 %v5808, 32
  %v6275 = vpop.permute.xlu0 %6274
  %6276 = vrot.lane.b32.xlu0 %v5809, 32
  %v6277 = vpop.permute.xlu0 %6276
  %6278 = vrot.lane.b32.xlu0 %v5810, 32
  %v6279 = vpop.permute.xlu0 %6278
  %6280 = vrot.lane.b32.xlu0 %v5811, 32
  %v6281 = vpop.permute.xlu0 %6280
  %6282 = vrot.lane.b32.xlu0 %v5816, 32
  %v6283 = vpop.permute.xlu0 %6282
  %6284 = vrot.lane.b32.xlu0 %v5817, 32
  %v6285 = vpop.permute.xlu0 %6284
  %6286 = vrot.lane.b32.xlu0 %v5818, 32
  %v6287 = vpop.permute.xlu0 %6286
  %6288 = vrot.lane.b32.xlu0 %v5819, 32
  %v6289 = vpop.permute.xlu0 %6288
  %6290 = vrot.lane.b32.xlu0 %v5820, 32
  %v6291 = vpop.permute.xlu0 %6290
  %6292 = vrot.lane.b32.xlu0 %v5821, 32
  %v6293 = vpop.permute.xlu0 %6292
  %6294 = vrot.lane.b32.xlu0 %v5822, 32
  %v6295 = vpop.permute.xlu0 %6294
  %6296 = vrot.lane.b32.xlu0 %v5823, 32
  %v6297 = vpop.permute.xlu0 %6296
  %6298 = vrot.lane.b32.xlu0 %v5828, 32
  %v6299 = vpop.permute.xlu0 %6298
  %6300 = vrot.lane.b32.xlu0 %v5829, 32
  %v6301 = vpop.permute.xlu0 %6300
  %6302 = vrot.lane.b32.xlu0 %v5830, 32
  %v6303 = vpop.permute.xlu0 %6302
  %6304 = vrot.lane.b32.xlu0 %v5831, 32
  %v6305 = vpop.permute.xlu0 %6304
  %6306 = vrot.lane.b32.xlu0 %v5832, 32
  %v6307 = vpop.permute.xlu0 %6306
  %6308 = vrot.lane.b32.xlu0 %v5833, 32
  %v6309 = vpop.permute.xlu0 %6308
  %6310 = vrot.lane.b32.xlu0 %v5834, 32
  %v6311 = vpop.permute.xlu0 %6310
  %6312 = vrot.lane.b32.xlu0 %v5835, 32
  %v6313 = vpop.permute.xlu0 %6312
  %6314 = vrot.lane.b32.xlu0 %v5840, 32
  %v6315 = vpop.permute.xlu0 %6314
  %6316 = vrot.lane.b32.xlu0 %v5841, 32
  %v6317 = vpop.permute.xlu0 %6316
  %6318 = vrot.lane.b32.xlu0 %v5842, 32
  %v6319 = vpop.permute.xlu0 %6318
  %6320 = vrot.lane.b32.xlu0 %v5843, 32
  %v6321 = vpop.permute.xlu0 %6320
  %6322 = vrot.lane.b32.xlu0 %v5844, 32
  %v6323 = vpop.permute.xlu0 %6322
  %6324 = vrot.lane.b32.xlu0 %v5845, 32
  %v6325 = vpop.permute.xlu0 %6324
  %6326 = vrot.lane.b32.xlu0 %v5846, 32
  %v6327 = vpop.permute.xlu0 %6326
  %6328 = vrot.lane.b32.xlu0 %v5847, 32
  %v6329 = vpop.permute.xlu0 %6328
  %v6330 = vadd.f32 %v6042, %v6139
  %v6331 = vadd.f32 %v6043, %v6141
  %v6332 = vadd.f32 %v6044, %v6143
  %v6333 = vadd.f32 %v6045, %v6145
  %v6334 = vadd.f32 %v6046, %v6147
  %v6335 = vadd.f32 %v6047, %v6149
  %v6336 = vadd.f32 %v6048, %v6151
  %v6337 = vadd.f32 %v6049, %v6153
  %v6338 = vadd.f32 %v6050, %v6155
  %v6339 = vadd.f32 %v6051, %v6157
  %v6340 = vadd.f32 %v6052, %v6159
  %v6341 = vadd.f32 %v6053, %v6161
  %v6342 = vadd.f32 %v6054, %v6163
  %v6343 = vadd.f32 %v6055, %v6165
  %v6344 = vadd.f32 %v6056, %v6167
  %v6345 = vadd.f32 %v6057, %v6169
  %v6346 = vadd.f32 %v6058, %v6171
  %v6347 = vadd.f32 %v6059, %v6173
  %v6348 = vadd.f32 %v6060, %v6175
  %v6349 = vadd.f32 %v6061, %v6177
  %v6350 = vadd.f32 %v6062, %v6179
  %v6351 = vadd.f32 %v6063, %v6181
  %v6352 = vadd.f32 %v6064, %v6183
  %v6353 = vadd.f32 %v6065, %v6185
  %v6354 = vadd.f32 %v6066, %v6187
  %v6355 = vadd.f32 %v6067, %v6189
  %v6356 = vadd.f32 %v6068, %v6191
  %v6357 = vadd.f32 %v6069, %v6193
  %v6358 = vadd.f32 %v6070, %v6195
  %v6359 = vadd.f32 %v6071, %v6197
  %v6360 = vadd.f32 %v6072, %v6199
  %v6361 = vadd.f32 %v6073, %v6201
  %v6362 = vadd.f32 %v6074, %v6203
  %v6363 = vadd.f32 %v6075, %v6205
  %v6364 = vadd.f32 %v6076, %v6207
  %v6365 = vadd.f32 %v6077, %v6209
  %v6366 = vadd.f32 %v6078, %v6211
  %v6367 = vadd.f32 %v6079, %v6213
  %v6368 = vadd.f32 %v6080, %v6215
  %v6369 = vadd.f32 %v6081, %v6217
  %v6370 = vadd.f32 %v6082, %v6219
  %v6371 = vadd.f32 %v6083, %v6221
  %v6372 = vadd.f32 %v6084, %v6223
  %v6373 = vadd.f32 %v6085, %v6225
  %v6374 = vadd.f32 %v6086, %v6227
  %v6375 = vadd.f32 %v6087, %v6229
  %v6376 = vadd.f32 %v6088, %v6231
  %v6377 = vadd.f32 %v6089, %v6233
  %v6378 = vadd.f32 %v6090, %v6235
  %v6379 = vadd.f32 %v6091, %v6237
  %v6380 = vadd.f32 %v6092, %v6239
  %v6381 = vadd.f32 %v6093, %v6241
  %v6382 = vadd.f32 %v6094, %v6243
  %v6383 = vadd.f32 %v6095, %v6245
  %v6384 = vadd.f32 %v6096, %v6247
  %v6385 = vadd.f32 %v6097, %v6249
  %v6386 = vadd.f32 %v6098, %v6251
  %v6387 = vadd.f32 %v6099, %v6253
  %v6388 = vadd.f32 %v6100, %v6255
  %v6389 = vadd.f32 %v6101, %v6257
  %v6390 = vadd.f32 %v6102, %v6259
  %v6391 = vadd.f32 %v6103, %v6261
  %v6392 = vadd.f32 %v6104, %v6263
  %v6393 = vadd.f32 %v6105, %v6265
  %v6394 = vadd.f32 %v6106, %v6267
  %v6395 = vadd.f32 %v6107, %v6269
  %v6396 = vadd.f32 %v6108, %v6271
  %v6397 = vadd.f32 %v6109, %v6273
  %v6398 = vadd.f32 %v6110, %v6275
  %v6399 = vadd.f32 %v6111, %v6277
  %v6400 = vadd.f32 %v6112, %v6279
  %v6401 = vadd.f32 %v6113, %v6281
  %v6402 = vadd.f32 %v6114, %v6283
  %v6403 = vadd.f32 %v6115, %v6285
  %v6404 = vadd.f32 %v6116, %v6287
  %v6405 = vadd.f32 %v6117, %v6289
  %v6406 = vadd.f32 %v6118, %v6291
  %v6407 = vadd.f32 %v6119, %v6293
  %v6408 = vadd.f32 %v6120, %v6295
  %v6409 = vadd.f32 %v6121, %v6297
  %v6410 = vadd.f32 %v6122, %v6299
  %v6411 = vadd.f32 %v6123, %v6301
  %v6412 = vadd.f32 %v6124, %v6303
  %v6413 = vadd.f32 %v6125, %v6305
  %v6414 = vadd.f32 %v6126, %v6307
  %v6415 = vadd.f32 %v6127, %v6309
  %v6416 = vadd.f32 %v6128, %v6311
  %v6417 = vadd.f32 %v6129, %v6313
  %v6418 = vadd.f32 %v6130, %v6315
  %v6419 = vadd.f32 %v6131, %v6317
  %v6420 = vadd.f32 %v6132, %v6319
  %v6421 = vadd.f32 %v6133, %v6321
  %v6422 = vadd.f32 %v6134, %v6323
  %v6423 = vadd.f32 %v6135, %v6325
  %v6424 = vadd.f32 %v6136, %v6327
  %v6425 = vadd.f32 %v6137, %v6329
  %6426 = vrot.lane.b32.xlu0 %v5709, 48
  %v6427 = vpop.permute.xlu0 %6426
  %6428 = vrot.lane.b32.xlu0 %v5710, 48
  %v6429 = vpop.permute.xlu0 %6428
  %6430 = vrot.lane.b32.xlu0 %v5711, 48
  %v6431 = vpop.permute.xlu0 %6430
  %6432 = vrot.lane.b32.xlu0 %v5712, 48
  %v6433 = vpop.permute.xlu0 %6432
  %6434 = vrot.lane.b32.xlu0 %v5713, 48
  %v6435 = vpop.permute.xlu0 %6434
  %6436 = vrot.lane.b32.xlu0 %v5714, 48
  %v6437 = vpop.permute.xlu0 %6436
  %6438 = vrot.lane.b32.xlu0 %v5715, 48
  %v6439 = vpop.permute.xlu0 %6438
  %6440 = vrot.lane.b32.xlu0 %v5716, 48
  %v6441 = vpop.permute.xlu0 %6440
  %6442 = vrot.lane.b32.xlu0 %v5721, 48
  %v6443 = vpop.permute.xlu0 %6442
  %6444 = vrot.lane.b32.xlu0 %v5722, 48
  %v6445 = vpop.permute.xlu0 %6444
  %6446 = vrot.lane.b32.xlu0 %v5723, 48
  %v6447 = vpop.permute.xlu0 %6446
  %6448 = vrot.lane.b32.xlu0 %v5724, 48
  %v6449 = vpop.permute.xlu0 %6448
  %6450 = vrot.lane.b32.xlu0 %v5725, 48
  %v6451 = vpop.permute.xlu0 %6450
  %6452 = vrot.lane.b32.xlu0 %v5726, 48
  %v6453 = vpop.permute.xlu0 %6452
  %6454 = vrot.lane.b32.xlu0 %v5727, 48
  %v6455 = vpop.permute.xlu0 %6454
  %6456 = vrot.lane.b32.xlu0 %v5728, 48
  %v6457 = vpop.permute.xlu0 %6456
  %6458 = vrot.lane.b32.xlu0 %v5733, 48
  %v6459 = vpop.permute.xlu0 %6458
  %6460 = vrot.lane.b32.xlu0 %v5734, 48
  %v6461 = vpop.permute.xlu0 %6460
  %6462 = vrot.lane.b32.xlu0 %v5735, 48
  %v6463 = vpop.permute.xlu0 %6462
  %6464 = vrot.lane.b32.xlu0 %v5736, 48
  %v6465 = vpop.permute.xlu0 %6464
  %6466 = vrot.lane.b32.xlu0 %v5737, 48
  %v6467 = vpop.permute.xlu0 %6466
  %6468 = vrot.lane.b32.xlu0 %v5738, 48
  %v6469 = vpop.permute.xlu0 %6468
  %6470 = vrot.lane.b32.xlu0 %v5739, 48
  %v6471 = vpop.permute.xlu0 %6470
  %6472 = vrot.lane.b32.xlu0 %v5740, 48
  %v6473 = vpop.permute.xlu0 %6472
  %6474 = vrot.lane.b32.xlu0 %v5745, 48
  %v6475 = vpop.permute.xlu0 %6474
  %6476 = vrot.lane.b32.xlu0 %v5746, 48
  %v6477 = vpop.permute.xlu0 %6476
  %6478 = vrot.lane.b32.xlu0 %v5747, 48
  %v6479 = vpop.permute.xlu0 %6478
  %6480 = vrot.lane.b32.xlu0 %v5748, 48
  %v6481 = vpop.permute.xlu0 %6480
  %6482 = vrot.lane.b32.xlu0 %v5749, 48
  %v6483 = vpop.permute.xlu0 %6482
  %6484 = vrot.lane.b32.xlu0 %v5750, 48
  %v6485 = vpop.permute.xlu0 %6484
  %6486 = vrot.lane.b32.xlu0 %v5751, 48
  %v6487 = vpop.permute.xlu0 %6486
  %6488 = vrot.lane.b32.xlu0 %v5752, 48
  %v6489 = vpop.permute.xlu0 %6488
  %6490 = vrot.lane.b32.xlu0 %v5757, 48
  %v6491 = vpop.permute.xlu0 %6490
  %6492 = vrot.lane.b32.xlu0 %v5758, 48
  %v6493 = vpop.permute.xlu0 %6492
  %6494 = vrot.lane.b32.xlu0 %v5759, 48
  %v6495 = vpop.permute.xlu0 %6494
  %6496 = vrot.lane.b32.xlu0 %v5760, 48
  %v6497 = vpop.permute.xlu0 %6496
  %6498 = vrot.lane.b32.xlu0 %v5761, 48
  %v6499 = vpop.permute.xlu0 %6498
  %6500 = vrot.lane.b32.xlu0 %v5762, 48
  %v6501 = vpop.permute.xlu0 %6500
  %6502 = vrot.lane.b32.xlu0 %v5763, 48
  %v6503 = vpop.permute.xlu0 %6502
  %6504 = vrot.lane.b32.xlu0 %v5764, 48
  %v6505 = vpop.permute.xlu0 %6504
  %6506 = vrot.lane.b32.xlu0 %v5769, 48
  %v6507 = vpop.permute.xlu0 %6506
  %6508 = vrot.lane.b32.xlu0 %v5770, 48
  %v6509 = vpop.permute.xlu0 %6508
  %6510 = vrot.lane.b32.xlu0 %v5771, 48
  %v6511 = vpop.permute.xlu0 %6510
  %6512 = vrot.lane.b32.xlu0 %v5772, 48
  %v6513 = vpop.permute.xlu0 %6512
  %6514 = vrot.lane.b32.xlu0 %v5773, 48
  %v6515 = vpop.permute.xlu0 %6514
  %6516 = vrot.lane.b32.xlu0 %v5774, 48
  %v6517 = vpop.permute.xlu0 %6516
  %6518 = vrot.lane.b32.xlu0 %v5775, 48
  %v6519 = vpop.permute.xlu0 %6518
  %6520 = vrot.lane.b32.xlu0 %v5776, 48
  %v6521 = vpop.permute.xlu0 %6520
  %6522 = vrot.lane.b32.xlu0 %v5781, 48
  %v6523 = vpop.permute.xlu0 %6522
  %6524 = vrot.lane.b32.xlu0 %v5782, 48
  %v6525 = vpop.permute.xlu0 %6524
  %6526 = vrot.lane.b32.xlu0 %v5783, 48
  %v6527 = vpop.permute.xlu0 %6526
  %6528 = vrot.lane.b32.xlu0 %v5784, 48
  %v6529 = vpop.permute.xlu0 %6528
  %6530 = vrot.lane.b32.xlu0 %v5785, 48
  %v6531 = vpop.permute.xlu0 %6530
  %6532 = vrot.lane.b32.xlu0 %v5786, 48
  %v6533 = vpop.permute.xlu0 %6532
  %6534 = vrot.lane.b32.xlu0 %v5787, 48
  %v6535 = vpop.permute.xlu0 %6534
  %6536 = vrot.lane.b32.xlu0 %v5788, 48
  %v6537 = vpop.permute.xlu0 %6536
  %6538 = vrot.lane.b32.xlu0 %v5793, 48
  %v6539 = vpop.permute.xlu0 %6538
  %6540 = vrot.lane.b32.xlu0 %v5794, 48
  %v6541 = vpop.permute.xlu0 %6540
  %6542 = vrot.lane.b32.xlu0 %v5795, 48
  %v6543 = vpop.permute.xlu0 %6542
  %6544 = vrot.lane.b32.xlu0 %v5796, 48
  %v6545 = vpop.permute.xlu0 %6544
  %6546 = vrot.lane.b32.xlu0 %v5797, 48
  %v6547 = vpop.permute.xlu0 %6546
  %6548 = vrot.lane.b32.xlu0 %v5798, 48
  %v6549 = vpop.permute.xlu0 %6548
  %6550 = vrot.lane.b32.xlu0 %v5799, 48
  %v6551 = vpop.permute.xlu0 %6550
  %6552 = vrot.lane.b32.xlu0 %v5800, 48
  %v6553 = vpop.permute.xlu0 %6552
  %6554 = vrot.lane.b32.xlu0 %v5805, 48
  %v6555 = vpop.permute.xlu0 %6554
  %6556 = vrot.lane.b32.xlu0 %v5806, 48
  %v6557 = vpop.permute.xlu0 %6556
  %6558 = vrot.lane.b32.xlu0 %v5807, 48
  %v6559 = vpop.permute.xlu0 %6558
  %6560 = vrot.lane.b32.xlu0 %v5808, 48
  %v6561 = vpop.permute.xlu0 %6560
  %6562 = vrot.lane.b32.xlu0 %v5809, 48
  %v6563 = vpop.permute.xlu0 %6562
  %6564 = vrot.lane.b32.xlu0 %v5810, 48
  %v6565 = vpop.permute.xlu0 %6564
  %6566 = vrot.lane.b32.xlu0 %v5811, 48
  %v6567 = vpop.permute.xlu0 %6566
  %6568 = vrot.lane.b32.xlu0 %v5812, 48
  %v6569 = vpop.permute.xlu0 %6568
  %6570 = vrot.lane.b32.xlu0 %v5817, 48
  %v6571 = vpop.permute.xlu0 %6570
  %6572 = vrot.lane.b32.xlu0 %v5818, 48
  %v6573 = vpop.permute.xlu0 %6572
  %6574 = vrot.lane.b32.xlu0 %v5819, 48
  %v6575 = vpop.permute.xlu0 %6574
  %6576 = vrot.lane.b32.xlu0 %v5820, 48
  %v6577 = vpop.permute.xlu0 %6576
  %6578 = vrot.lane.b32.xlu0 %v5821, 48
  %v6579 = vpop.permute.xlu0 %6578
  %6580 = vrot.lane.b32.xlu0 %v5822, 48
  %v6581 = vpop.permute.xlu0 %6580
  %6582 = vrot.lane.b32.xlu0 %v5823, 48
  %v6583 = vpop.permute.xlu0 %6582
  %6584 = vrot.lane.b32.xlu0 %v5824, 48
  %v6585 = vpop.permute.xlu0 %6584
  %6586 = vrot.lane.b32.xlu0 %v5829, 48
  %v6587 = vpop.permute.xlu0 %6586
  %6588 = vrot.lane.b32.xlu0 %v5830, 48
  %v6589 = vpop.permute.xlu0 %6588
  %6590 = vrot.lane.b32.xlu0 %v5831, 48
  %v6591 = vpop.permute.xlu0 %6590
  %6592 = vrot.lane.b32.xlu0 %v5832, 48
  %v6593 = vpop.permute.xlu0 %6592
  %6594 = vrot.lane.b32.xlu0 %v5833, 48
  %v6595 = vpop.permute.xlu0 %6594
  %6596 = vrot.lane.b32.xlu0 %v5834, 48
  %v6597 = vpop.permute.xlu0 %6596
  %6598 = vrot.lane.b32.xlu0 %v5835, 48
  %v6599 = vpop.permute.xlu0 %6598
  %6600 = vrot.lane.b32.xlu0 %v5836, 48
  %v6601 = vpop.permute.xlu0 %6600
  %6602 = vrot.lane.b32.xlu0 %v5841, 48
  %v6603 = vpop.permute.xlu0 %6602
  %6604 = vrot.lane.b32.xlu0 %v5842, 48
  %v6605 = vpop.permute.xlu0 %6604
  %6606 = vrot.lane.b32.xlu0 %v5843, 48
  %v6607 = vpop.permute.xlu0 %6606
  %6608 = vrot.lane.b32.xlu0 %v5844, 48
  %v6609 = vpop.permute.xlu0 %6608
  %6610 = vrot.lane.b32.xlu0 %v5845, 48
  %v6611 = vpop.permute.xlu0 %6610
  %6612 = vrot.lane.b32.xlu0 %v5846, 48
  %v6613 = vpop.permute.xlu0 %6612
  %6614 = vrot.lane.b32.xlu0 %v5847, 48
  %v6615 = vpop.permute.xlu0 %6614
  %6616 = vrot.lane.b32.xlu0 %v5848, 48
  %v6617 = vpop.permute.xlu0 %6616
  %v6618 = vadd.f32 %v6330, %v6427
  %v6619 = vadd.f32 %v6331, %v6429
  %v6620 = vadd.f32 %v6332, %v6431
  %v6621 = vadd.f32 %v6333, %v6433
  %v6622 = vadd.f32 %v6334, %v6435
  %v6623 = vadd.f32 %v6335, %v6437
  %v6624 = vadd.f32 %v6336, %v6439
  %v6625 = vadd.f32 %v6337, %v6441
  %v6626 = vadd.f32 %v6338, %v6443
  %v6627 = vadd.f32 %v6339, %v6445
  %v6628 = vadd.f32 %v6340, %v6447
  %v6629 = vadd.f32 %v6341, %v6449
  %v6630 = vadd.f32 %v6342, %v6451
  %v6631 = vadd.f32 %v6343, %v6453
  %v6632 = vadd.f32 %v6344, %v6455
  %v6633 = vadd.f32 %v6345, %v6457
  %v6634 = vadd.f32 %v6346, %v6459
  %v6635 = vadd.f32 %v6347, %v6461
  %v6636 = vadd.f32 %v6348, %v6463
  %v6637 = vadd.f32 %v6349, %v6465
  %v6638 = vadd.f32 %v6350, %v6467
  %v6639 = vadd.f32 %v6351, %v6469
  %v6640 = vadd.f32 %v6352, %v6471
  %v6641 = vadd.f32 %v6353, %v6473
  %v6642 = vadd.f32 %v6354, %v6475
  %v6643 = vadd.f32 %v6355, %v6477
  %v6644 = vadd.f32 %v6356, %v6479
  %v6645 = vadd.f32 %v6357, %v6481
  %v6646 = vadd.f32 %v6358, %v6483
  %v6647 = vadd.f32 %v6359, %v6485
  %v6648 = vadd.f32 %v6360, %v6487
  %v6649 = vadd.f32 %v6361, %v6489
  %v6650 = vadd.f32 %v6362, %v6491
  %v6651 = vadd.f32 %v6363, %v6493
  %v6652 = vadd.f32 %v6364, %v6495
  %v6653 = vadd.f32 %v6365, %v6497
  %v6654 = vadd.f32 %v6366, %v6499
  %v6655 = vadd.f32 %v6367, %v6501
  %v6656 = vadd.f32 %v6368, %v6503
  %v6657 = vadd.f32 %v6369, %v6505
  %v6658 = vadd.f32 %v6370, %v6507
  %v6659 = vadd.f32 %v6371, %v6509
  %v6660 = vadd.f32 %v6372, %v6511
  %v6661 = vadd.f32 %v6373, %v6513
  %v6662 = vadd.f32 %v6374, %v6515
  %v6663 = vadd.f32 %v6375, %v6517
  %v6664 = vadd.f32 %v6376, %v6519
  %v6665 = vadd.f32 %v6377, %v6521
  %v6666 = vadd.f32 %v6378, %v6523
  %v6667 = vadd.f32 %v6379, %v6525
  %v6668 = vadd.f32 %v6380, %v6527
  %v6669 = vadd.f32 %v6381, %v6529
  %v6670 = vadd.f32 %v6382, %v6531
  %v6671 = vadd.f32 %v6383, %v6533
  %v6672 = vadd.f32 %v6384, %v6535
  %v6673 = vadd.f32 %v6385, %v6537
  %v6674 = vadd.f32 %v6386, %v6539
  %v6675 = vadd.f32 %v6387, %v6541
  %v6676 = vadd.f32 %v6388, %v6543
  %v6677 = vadd.f32 %v6389, %v6545
  %v6678 = vadd.f32 %v6390, %v6547
  %v6679 = vadd.f32 %v6391, %v6549
  %v6680 = vadd.f32 %v6392, %v6551
  %v6681 = vadd.f32 %v6393, %v6553
  %v6682 = vadd.f32 %v6394, %v6555
  %v6683 = vadd.f32 %v6395, %v6557
  %v6684 = vadd.f32 %v6396, %v6559
  %v6685 = vadd.f32 %v6397, %v6561
  %v6686 = vadd.f32 %v6398, %v6563
  %v6687 = vadd.f32 %v6399, %v6565
  %v6688 = vadd.f32 %v6400, %v6567
  %v6689 = vadd.f32 %v6401, %v6569
  %v6690 = vadd.f32 %v6402, %v6571
  %v6691 = vadd.f32 %v6403, %v6573
  %v6692 = vadd.f32 %v6404, %v6575
  %v6693 = vadd.f32 %v6405, %v6577
  %v6694 = vadd.f32 %v6406, %v6579
  %v6695 = vadd.f32 %v6407, %v6581
  %v6696 = vadd.f32 %v6408, %v6583
  %v6697 = vadd.f32 %v6409, %v6585
  %v6698 = vadd.f32 %v6410, %v6587
  %v6699 = vadd.f32 %v6411, %v6589
  %v6700 = vadd.f32 %v6412, %v6591
  %v6701 = vadd.f32 %v6413, %v6593
  %v6702 = vadd.f32 %v6414, %v6595
  %v6703 = vadd.f32 %v6415, %v6597
  %v6704 = vadd.f32 %v6416, %v6599
  %v6705 = vadd.f32 %v6417, %v6601
  %v6706 = vadd.f32 %v6418, %v6603
  %v6707 = vadd.f32 %v6419, %v6605
  %v6708 = vadd.f32 %v6420, %v6607
  %v6709 = vadd.f32 %v6421, %v6609
  %v6710 = vadd.f32 %v6422, %v6611
  %v6711 = vadd.f32 %v6423, %v6613
  %v6712 = vadd.f32 %v6424, %v6615
  %v6713 = vadd.f32 %v6425, %v6617
  %6714 = vrot.lane.b32.xlu0 %v5710, 64
  %v6715 = vpop.permute.xlu0 %6714
  %6716 = vrot.lane.b32.xlu0 %v5711, 64
  %v6717 = vpop.permute.xlu0 %6716
  %6718 = vrot.lane.b32.xlu0 %v5712, 64
  %v6719 = vpop.permute.xlu0 %6718
  %6720 = vrot.lane.b32.xlu0 %v5713, 64
  %v6721 = vpop.permute.xlu0 %6720
  %6722 = vrot.lane.b32.xlu0 %v5714, 64
  %v6723 = vpop.permute.xlu0 %6722
  %6724 = vrot.lane.b32.xlu0 %v5715, 64
  %v6725 = vpop.permute.xlu0 %6724
  %6726 = vrot.lane.b32.xlu0 %v5716, 64
  %v6727 = vpop.permute.xlu0 %6726
  %6728 = vrot.lane.b32.xlu0 %v5717, 64
  %v6729 = vpop.permute.xlu0 %6728
  %6730 = vrot.lane.b32.xlu0 %v5722, 64
  %v6731 = vpop.permute.xlu0 %6730
  %6732 = vrot.lane.b32.xlu0 %v5723, 64
  %v6733 = vpop.permute.xlu0 %6732
  %6734 = vrot.lane.b32.xlu0 %v5724, 64
  %v6735 = vpop.permute.xlu0 %6734
  %6736 = vrot.lane.b32.xlu0 %v5725, 64
  %v6737 = vpop.permute.xlu0 %6736
  %6738 = vrot.lane.b32.xlu0 %v5726, 64
  %v6739 = vpop.permute.xlu0 %6738
  %6740 = vrot.lane.b32.xlu0 %v5727, 64
  %v6741 = vpop.permute.xlu0 %6740
  %6742 = vrot.lane.b32.xlu0 %v5728, 64
  %v6743 = vpop.permute.xlu0 %6742
  %6744 = vrot.lane.b32.xlu0 %v5729, 64
  %v6745 = vpop.permute.xlu0 %6744
  %6746 = vrot.lane.b32.xlu0 %v5734, 64
  %v6747 = vpop.permute.xlu0 %6746
  %6748 = vrot.lane.b32.xlu0 %v5735, 64
  %v6749 = vpop.permute.xlu0 %6748
  %6750 = vrot.lane.b32.xlu0 %v5736, 64
  %v6751 = vpop.permute.xlu0 %6750
  %6752 = vrot.lane.b32.xlu0 %v5737, 64
  %v6753 = vpop.permute.xlu0 %6752
  %6754 = vrot.lane.b32.xlu0 %v5738, 64
  %v6755 = vpop.permute.xlu0 %6754
  %6756 = vrot.lane.b32.xlu0 %v5739, 64
  %v6757 = vpop.permute.xlu0 %6756
  %6758 = vrot.lane.b32.xlu0 %v5740, 64
  %v6759 = vpop.permute.xlu0 %6758
  %6760 = vrot.lane.b32.xlu0 %v5741, 64
  %v6761 = vpop.permute.xlu0 %6760
  %6762 = vrot.lane.b32.xlu0 %v5746, 64
  %v6763 = vpop.permute.xlu0 %6762
  %6764 = vrot.lane.b32.xlu0 %v5747, 64
  %v6765 = vpop.permute.xlu0 %6764
  %6766 = vrot.lane.b32.xlu0 %v5748, 64
  %v6767 = vpop.permute.xlu0 %6766
  %6768 = vrot.lane.b32.xlu0 %v5749, 64
  %v6769 = vpop.permute.xlu0 %6768
  %6770 = vrot.lane.b32.xlu0 %v5750, 64
  %v6771 = vpop.permute.xlu0 %6770
  %6772 = vrot.lane.b32.xlu0 %v5751, 64
  %v6773 = vpop.permute.xlu0 %6772
  %6774 = vrot.lane.b32.xlu0 %v5752, 64
  %v6775 = vpop.permute.xlu0 %6774
  %6776 = vrot.lane.b32.xlu0 %v5753, 64
  %v6777 = vpop.permute.xlu0 %6776
  %6778 = vrot.lane.b32.xlu0 %v5758, 64
  %v6779 = vpop.permute.xlu0 %6778
  %6780 = vrot.lane.b32.xlu0 %v5759, 64
  %v6781 = vpop.permute.xlu0 %6780
  %6782 = vrot.lane.b32.xlu0 %v5760, 64
  %v6783 = vpop.permute.xlu0 %6782
  %6784 = vrot.lane.b32.xlu0 %v5761, 64
  %v6785 = vpop.permute.xlu0 %6784
  %6786 = vrot.lane.b32.xlu0 %v5762, 64
  %v6787 = vpop.permute.xlu0 %6786
  %6788 = vrot.lane.b32.xlu0 %v5763, 64
  %v6789 = vpop.permute.xlu0 %6788
  %6790 = vrot.lane.b32.xlu0 %v5764, 64
  %v6791 = vpop.permute.xlu0 %6790
  %6792 = vrot.lane.b32.xlu0 %v5765, 64
  %v6793 = vpop.permute.xlu0 %6792
  %6794 = vrot.lane.b32.xlu0 %v5770, 64
  %v6795 = vpop.permute.xlu0 %6794
  %6796 = vrot.lane.b32.xlu0 %v5771, 64
  %v6797 = vpop.permute.xlu0 %6796
  %6798 = vrot.lane.b32.xlu0 %v5772, 64
  %v6799 = vpop.permute.xlu0 %6798
  %6800 = vrot.lane.b32.xlu0 %v5773, 64
  %v6801 = vpop.permute.xlu0 %6800
  %6802 = vrot.lane.b32.xlu0 %v5774, 64
  %v6803 = vpop.permute.xlu0 %6802
  %6804 = vrot.lane.b32.xlu0 %v5775, 64
  %v6805 = vpop.permute.xlu0 %6804
  %6806 = vrot.lane.b32.xlu0 %v5776, 64
  %v6807 = vpop.permute.xlu0 %6806
  %6808 = vrot.lane.b32.xlu0 %v5777, 64
  %v6809 = vpop.permute.xlu0 %6808
  %6810 = vrot.lane.b32.xlu0 %v5782, 64
  %v6811 = vpop.permute.xlu0 %6810
  %6812 = vrot.lane.b32.xlu0 %v5783, 64
  %v6813 = vpop.permute.xlu0 %6812
  %6814 = vrot.lane.b32.xlu0 %v5784, 64
  %v6815 = vpop.permute.xlu0 %6814
  %6816 = vrot.lane.b32.xlu0 %v5785, 64
  %v6817 = vpop.permute.xlu0 %6816
  %6818 = vrot.lane.b32.xlu0 %v5786, 64
  %v6819 = vpop.permute.xlu0 %6818
  %6820 = vrot.lane.b32.xlu0 %v5787, 64
  %v6821 = vpop.permute.xlu0 %6820
  %6822 = vrot.lane.b32.xlu0 %v5788, 64
  %v6823 = vpop.permute.xlu0 %6822
  %6824 = vrot.lane.b32.xlu0 %v5789, 64
  %v6825 = vpop.permute.xlu0 %6824
  %6826 = vrot.lane.b32.xlu0 %v5794, 64
  %v6827 = vpop.permute.xlu0 %6826
  %6828 = vrot.lane.b32.xlu0 %v5795, 64
  %v6829 = vpop.permute.xlu0 %6828
  %6830 = vrot.lane.b32.xlu0 %v5796, 64
  %v6831 = vpop.permute.xlu0 %6830
  %6832 = vrot.lane.b32.xlu0 %v5797, 64
  %v6833 = vpop.permute.xlu0 %6832
  %6834 = vrot.lane.b32.xlu0 %v5798, 64
  %v6835 = vpop.permute.xlu0 %6834
  %6836 = vrot.lane.b32.xlu0 %v5799, 64
  %v6837 = vpop.permute.xlu0 %6836
  %6838 = vrot.lane.b32.xlu0 %v5800, 64
  %v6839 = vpop.permute.xlu0 %6838
  %6840 = vrot.lane.b32.xlu0 %v5801, 64
  %v6841 = vpop.permute.xlu0 %6840
  %6842 = vrot.lane.b32.xlu0 %v5806, 64
  %v6843 = vpop.permute.xlu0 %6842
  %6844 = vrot.lane.b32.xlu0 %v5807, 64
  %v6845 = vpop.permute.xlu0 %6844
  %6846 = vrot.lane.b32.xlu0 %v5808, 64
  %v6847 = vpop.permute.xlu0 %6846
  %6848 = vrot.lane.b32.xlu0 %v5809, 64
  %v6849 = vpop.permute.xlu0 %6848
  %6850 = vrot.lane.b32.xlu0 %v5810, 64
  %v6851 = vpop.permute.xlu0 %6850
  %6852 = vrot.lane.b32.xlu0 %v5811, 64
  %v6853 = vpop.permute.xlu0 %6852
  %6854 = vrot.lane.b32.xlu0 %v5812, 64
  %v6855 = vpop.permute.xlu0 %6854
  %6856 = vrot.lane.b32.xlu0 %v5813, 64
  %v6857 = vpop.permute.xlu0 %6856
  %6858 = vrot.lane.b32.xlu0 %v5818, 64
  %v6859 = vpop.permute.xlu0 %6858
  %6860 = vrot.lane.b32.xlu0 %v5819, 64
  %v6861 = vpop.permute.xlu0 %6860
  %6862 = vrot.lane.b32.xlu0 %v5820, 64
  %v6863 = vpop.permute.xlu0 %6862
  %6864 = vrot.lane.b32.xlu0 %v5821, 64
  %v6865 = vpop.permute.xlu0 %6864
  %6866 = vrot.lane.b32.xlu0 %v5822, 64
  %v6867 = vpop.permute.xlu0 %6866
  %6868 = vrot.lane.b32.xlu0 %v5823, 64
  %v6869 = vpop.permute.xlu0 %6868
  %6870 = vrot.lane.b32.xlu0 %v5824, 64
  %v6871 = vpop.permute.xlu0 %6870
  %6872 = vrot.lane.b32.xlu0 %v5825, 64
  %v6873 = vpop.permute.xlu0 %6872
  %6874 = vrot.lane.b32.xlu0 %v5830, 64
  %v6875 = vpop.permute.xlu0 %6874
  %6876 = vrot.lane.b32.xlu0 %v5831, 64
  %v6877 = vpop.permute.xlu0 %6876
  %6878 = vrot.lane.b32.xlu0 %v5832, 64
  %v6879 = vpop.permute.xlu0 %6878
  %6880 = vrot.lane.b32.xlu0 %v5833, 64
  %v6881 = vpop.permute.xlu0 %6880
  %6882 = vrot.lane.b32.xlu0 %v5834, 64
  %v6883 = vpop.permute.xlu0 %6882
  %6884 = vrot.lane.b32.xlu0 %v5835, 64
  %v6885 = vpop.permute.xlu0 %6884
  %6886 = vrot.lane.b32.xlu0 %v5836, 64
  %v6887 = vpop.permute.xlu0 %6886
  %6888 = vrot.lane.b32.xlu0 %v5837, 64
  %v6889 = vpop.permute.xlu0 %6888
  %6890 = vrot.lane.b32.xlu0 %v5842, 64
  %v6891 = vpop.permute.xlu0 %6890
  %6892 = vrot.lane.b32.xlu0 %v5843, 64
  %v6893 = vpop.permute.xlu0 %6892
  %6894 = vrot.lane.b32.xlu0 %v5844, 64
  %v6895 = vpop.permute.xlu0 %6894
  %6896 = vrot.lane.b32.xlu0 %v5845, 64
  %v6897 = vpop.permute.xlu0 %6896
  %6898 = vrot.lane.b32.xlu0 %v5846, 64
  %v6899 = vpop.permute.xlu0 %6898
  %6900 = vrot.lane.b32.xlu0 %v5847, 64
  %v6901 = vpop.permute.xlu0 %6900
  %6902 = vrot.lane.b32.xlu0 %v5848, 64
  %v6903 = vpop.permute.xlu0 %6902
  %6904 = vrot.lane.b32.xlu0 %v5849, 64
  %v6905 = vpop.permute.xlu0 %6904
  %v6906 = vadd.f32 %v6618, %v6715
  %v6907 = vadd.f32 %v6619, %v6717
  %v6908 = vadd.f32 %v6620, %v6719
  %v6909 = vadd.f32 %v6621, %v6721
  %v6910 = vadd.f32 %v6622, %v6723
  %v6911 = vadd.f32 %v6623, %v6725
  %v6912 = vadd.f32 %v6624, %v6727
  %v6913 = vadd.f32 %v6625, %v6729
  %v6914 = vadd.f32 %v6626, %v6731
  %v6915 = vadd.f32 %v6627, %v6733
  %v6916 = vadd.f32 %v6628, %v6735
  %v6917 = vadd.f32 %v6629, %v6737
  %v6918 = vadd.f32 %v6630, %v6739
  %v6919 = vadd.f32 %v6631, %v6741
  %v6920 = vadd.f32 %v6632, %v6743
  %v6921 = vadd.f32 %v6633, %v6745
  %v6922 = vadd.f32 %v6634, %v6747
  %v6923 = vadd.f32 %v6635, %v6749
  %v6924 = vadd.f32 %v6636, %v6751
  %v6925 = vadd.f32 %v6637, %v6753
  %v6926 = vadd.f32 %v6638, %v6755
  %v6927 = vadd.f32 %v6639, %v6757
  %v6928 = vadd.f32 %v6640, %v6759
  %v6929 = vadd.f32 %v6641, %v6761
  %v6930 = vadd.f32 %v6642, %v6763
  %v6931 = vadd.f32 %v6643, %v6765
  %v6932 = vadd.f32 %v6644, %v6767
  %v6933 = vadd.f32 %v6645, %v6769
  %v6934 = vadd.f32 %v6646, %v6771
  %v6935 = vadd.f32 %v6647, %v6773
  %v6936 = vadd.f32 %v6648, %v6775
  %v6937 = vadd.f32 %v6649, %v6777
  %v6938 = vadd.f32 %v6650, %v6779
  %v6939 = vadd.f32 %v6651, %v6781
  %v6940 = vadd.f32 %v6652, %v6783
  %v6941 = vadd.f32 %v6653, %v6785
  %v6942 = vadd.f32 %v6654, %v6787
  %v6943 = vadd.f32 %v6655, %v6789
  %v6944 = vadd.f32 %v6656, %v6791
  %v6945 = vadd.f32 %v6657, %v6793
  %v6946 = vadd.f32 %v6658, %v6795
  %v6947 = vadd.f32 %v6659, %v6797
  %v6948 = vadd.f32 %v6660, %v6799
  %v6949 = vadd.f32 %v6661, %v6801
  %v6950 = vadd.f32 %v6662, %v6803
  %v6951 = vadd.f32 %v6663, %v6805
  %v6952 = vadd.f32 %v6664, %v6807
  %v6953 = vadd.f32 %v6665, %v6809
  %v6954 = vadd.f32 %v6666, %v6811
  %v6955 = vadd.f32 %v6667, %v6813
  %v6956 = vadd.f32 %v6668, %v6815
  %v6957 = vadd.f32 %v6669, %v6817
  %v6958 = vadd.f32 %v6670, %v6819
  %v6959 = vadd.f32 %v6671, %v6821
  %v6960 = vadd.f32 %v6672, %v6823
  %v6961 = vadd.f32 %v6673, %v6825
  %v6962 = vadd.f32 %v6674, %v6827
  %v6963 = vadd.f32 %v6675, %v6829
  %v6964 = vadd.f32 %v6676, %v6831
  %v6965 = vadd.f32 %v6677, %v6833
  %v6966 = vadd.f32 %v6678, %v6835
  %v6967 = vadd.f32 %v6679, %v6837
  %v6968 = vadd.f32 %v6680, %v6839
  %v6969 = vadd.f32 %v6681, %v6841
  %v6970 = vadd.f32 %v6682, %v6843
  %v6971 = vadd.f32 %v6683, %v6845
  %v6972 = vadd.f32 %v6684, %v6847
  %v6973 = vadd.f32 %v6685, %v6849
  %v6974 = vadd.f32 %v6686, %v6851
  %v6975 = vadd.f32 %v6687, %v6853
  %v6976 = vadd.f32 %v6688, %v6855
  %v6977 = vadd.f32 %v6689, %v6857
  %v6978 = vadd.f32 %v6690, %v6859
  %v6979 = vadd.f32 %v6691, %v6861
  %v6980 = vadd.f32 %v6692, %v6863
  %v6981 = vadd.f32 %v6693, %v6865
  %v6982 = vadd.f32 %v6694, %v6867
  %v6983 = vadd.f32 %v6695, %v6869
  %v6984 = vadd.f32 %v6696, %v6871
  %v6985 = vadd.f32 %v6697, %v6873
  %v6986 = vadd.f32 %v6698, %v6875
  %v6987 = vadd.f32 %v6699, %v6877
  %v6988 = vadd.f32 %v6700, %v6879
  %v6989 = vadd.f32 %v6701, %v6881
  %v6990 = vadd.f32 %v6702, %v6883
  %v6991 = vadd.f32 %v6703, %v6885
  %v6992 = vadd.f32 %v6704, %v6887
  %v6993 = vadd.f32 %v6705, %v6889
  %v6994 = vadd.f32 %v6706, %v6891
  %v6995 = vadd.f32 %v6707, %v6893
  %v6996 = vadd.f32 %v6708, %v6895
  %v6997 = vadd.f32 %v6709, %v6897
  %v6998 = vadd.f32 %v6710, %v6899
  %v6999 = vadd.f32 %v6711, %v6901
  %v7000 = vadd.f32 %v6712, %v6903
  %v7001 = vadd.f32 %v6713, %v6905
  %v7002 = vpack.c.bf16 %v6907, %v6906
  %v7003 = vpack.c.bf16 %v6909, %v6908
  %v7004 = vpack.c.bf16 %v6911, %v6910
  %v7005 = vpack.c.bf16 %v6913, %v6912
  %v7006 = vpack.c.bf16 %v6915, %v6914
  %v7007 = vpack.c.bf16 %v6917, %v6916
  %v7008 = vpack.c.bf16 %v6919, %v6918
  %v7009 = vpack.c.bf16 %v6921, %v6920
  %v7010 = vpack.c.bf16 %v6923, %v6922
  %v7011 = vpack.c.bf16 %v6925, %v6924
  %v7012 = vpack.c.bf16 %v6927, %v6926
  %v7013 = vpack.c.bf16 %v6929, %v6928
  %v7014 = vpack.c.bf16 %v6931, %v6930
  %v7015 = vpack.c.bf16 %v6933, %v6932
  %v7016 = vpack.c.bf16 %v6935, %v6934
  %v7017 = vpack.c.bf16 %v6937, %v6936
  %v7018 = vpack.c.bf16 %v6939, %v6938
  %v7019 = vpack.c.bf16 %v6941, %v6940
  %v7020 = vpack.c.bf16 %v6943, %v6942
  %v7021 = vpack.c.bf16 %v6945, %v6944
  %v7022 = vpack.c.bf16 %v6947, %v6946
  %v7023 = vpack.c.bf16 %v6949, %v6948
  %v7024 = vpack.c.bf16 %v6951, %v6950
  %v7025 = vpack.c.bf16 %v6953, %v6952
  %v7026 = vpack.c.bf16 %v6955, %v6954
  %v7027 = vpack.c.bf16 %v6957, %v6956
  %v7028 = vpack.c.bf16 %v6959, %v6958
  %v7029 = vpack.c.bf16 %v6961, %v6960
  %v7030 = vpack.c.bf16 %v6963, %v6962
  %v7031 = vpack.c.bf16 %v6965, %v6964
  %v7032 = vpack.c.bf16 %v6967, %v6966
  %v7033 = vpack.c.bf16 %v6969, %v6968
  %v7034 = vpack.c.bf16 %v6971, %v6970
  %v7035 = vpack.c.bf16 %v6973, %v6972
  %v7036 = vpack.c.bf16 %v6975, %v6974
  %v7037 = vpack.c.bf16 %v6977, %v6976
  %v7038 = vpack.c.bf16 %v6979, %v6978
  %v7039 = vpack.c.bf16 %v6981, %v6980
  %v7040 = vpack.c.bf16 %v6983, %v6982
  %v7041 = vpack.c.bf16 %v6985, %v6984
  %v7042 = vpack.c.bf16 %v6987, %v6986
  %v7043 = vpack.c.bf16 %v6989, %v6988
  %v7044 = vpack.c.bf16 %v6991, %v6990
  %v7045 = vpack.c.bf16 %v6993, %v6992
  %v7046 = vpack.c.bf16 %v6995, %v6994
  %v7047 = vpack.c.bf16 %v6997, %v6996
  %v7048 = vpack.c.bf16 %v6999, %v6998
  %v7049 = vpack.c.bf16 %v7001, %v7000
  %v7050 = vld [vmem:[%s3] sm:$0xf]
  %v7051 = vld [vmem:[%s3 + $0x4] sm:$0xf]
  %v7052 = vld [vmem:[%s3 + $0x8] sm:$0xf]
  %v7053 = vld [vmem:[%s3 + $0xc] sm:$0xf]
  %v7054 = vld [vmem:[%s3 + $0x10] sm:$0xf]
  %v7055 = vld [vmem:[%s3 + $0x14] sm:$0xf]
  %v7056 = vld [vmem:[%s3 + $0x18] sm:$0xf]
  %v7057 = vld [vmem:[%s3 + $0x1c] sm:$0xf]
  %v7058 = vld [vmem:[%s3 + $0x20] sm:$0xf]
  %v7059 = vld [vmem:[%s3 + $0x24] sm:$0xf]
  %v7060 = vld [vmem:[%s3 + $0x28] sm:$0xf]
  %v7061 = vld [vmem:[%s3 + $0x2c] sm:$0xf]
  %v7062 = vld [vmem:[%s3 + $0x30] sm:$0xf]
  %v7063 = vld [vmem:[%s3 + $0x34] sm:$0xf]
  %v7064 = vld [vmem:[%s3 + $0x38] sm:$0xf]
  %v7065 = vld [vmem:[%s3 + $0x3c] sm:$0xf]
  %s7066 = scalar_lea.vmem %s3, 64
  %v7067 = vld [vmem:[%s7066] sm:$0xf]
  %v7068 = vld [vmem:[%s7066 + $0x4] sm:$0xf]
  %v7069 = vld [vmem:[%s7066 + $0x8] sm:$0xf]
  %v7070 = vld [vmem:[%s7066 + $0xc] sm:$0xf]
  %v7071 = vld [vmem:[%s7066 + $0x10] sm:$0xf]
  %v7072 = vld [vmem:[%s7066 + $0x14] sm:$0xf]
  %v7073 = vld [vmem:[%s7066 + $0x18] sm:$0xf]
  %v7074 = vld [vmem:[%s7066 + $0x1c] sm:$0xf]
  %v7075 = vld [vmem:[%s7066 + $0x20] sm:$0xf]
  %v7076 = vld [vmem:[%s7066 + $0x24] sm:$0xf]
  %v7077 = vld [vmem:[%s7066 + $0x28] sm:$0xf]
  %v7078 = vld [vmem:[%s7066 + $0x2c] sm:$0xf]
  %v7079 = vld [vmem:[%s7066 + $0x30] sm:$0xf]
  %v7080 = vld [vmem:[%s7066 + $0x34] sm:$0xf]
  %v7081 = vld [vmem:[%s7066 + $0x38] sm:$0xf]
  %v7082 = vld [vmem:[%s7066 + $0x3c] sm:$0xf]
  %v7099 = vunpack.c.l.b16 %v7067
  %v7100 = vunpack.c.l.b16 %v7068
  %v7101 = vunpack.c.l.b16 %v7069
  %v7102 = vunpack.c.l.b16 %v7070
  %v7103 = vunpack.c.l.b16 %v7071
  %v7104 = vunpack.c.l.b16 %v7072
  %v7105 = vunpack.c.l.b16 %v7073
  %v7106 = vunpack.c.l.b16 %v7074
  %v7107 = vunpack.c.l.b16 %v7075
  %v7108 = vunpack.c.l.b16 %v7076
  %v7109 = vunpack.c.l.b16 %v7077
  %v7110 = vunpack.c.l.b16 %v7078
  %v7111 = vunpack.c.l.b16 %v7079
  %v7112 = vunpack.c.l.b16 %v7080
  %v7113 = vunpack.c.l.b16 %v7081
  %v7114 = vunpack.c.l.b16 %v7082
  %v7115 = vpack.c.b16 %v7100, %v7099
  %v7116 = vpack.c.b16 %v7102, %v7101
  %v7117 = vpack.c.b16 %v7104, %v7103
  %v7118 = vpack.c.b16 %v7106, %v7105
  %v7119 = vpack.c.b16 %v7108, %v7107
  %v7120 = vpack.c.b16 %v7110, %v7109
  %v7121 = vpack.c.b16 %v7112, %v7111
  %v7122 = vpack.c.b16 %v7114, %v7113
  %7131 = vmatprep.subr.bf16.mxu0 0
  %7132 = vmatpush1.bf16.msra.mxu0 %v7122
  %7133 = vmatprep.subr.bf16.mxu0 0
  %7134 = vmatpush1.bf16.msra.mxu0 %v7121
  %7135 = vmatprep.subr.bf16.mxu0 0
  %7136 = vmatpush1.bf16.msra.mxu0 %v7120
  %7137 = vmatprep.subr.bf16.mxu0 0
  %7138 = vmatpush1.bf16.msra.mxu0 %v7119
  %7139 = vmatprep.subr.bf16.mxu0 0
  %7140 = vmatpush1.bf16.msra.mxu0 %v7118
  %7141 = vmatprep.subr.bf16.mxu0 0
  %7142 = vmatpush1.bf16.msra.mxu0 %v7117
  %7143 = vmatprep.subr.bf16.mxu0 0
  %7144 = vmatpush1.bf16.msra.mxu0 %v7116
  %7145 = vmatprep.subr.bf16.mxu0 0
  %7146 = vmatpush1.bf16.msra.mxu0 %v7115
  %7147 = vmatprep.subr.bf16.mxu0 0
  %7148 = vmatpush2.bf16.msra.mxu0 0
  %7149 = vmatprep.subr.bf16.mxu0 0
  %7150 = vmatpush2.bf16.msra.mxu0 0
  %7151 = vmatprep.subr.bf16.mxu0 0
  %7152 = vmatpush2.bf16.msra.mxu0 0
  %7153 = vmatprep.subr.bf16.mxu0 0
  %7154 = vmatpush2.bf16.msra.mxu0 0
  %7155 = vmatprep.subr.bf16.mxu0 0
  %7156 = vmatpush2.bf16.msra.mxu0 0
  %7157 = vmatprep.subr.bf16.mxu0 0
  %7158 = vmatpush2.bf16.msra.mxu0 0
  %7159 = vmatprep.subr.bf16.mxu0 0
  %7160 = vmatpush2.bf16.msra.mxu0 0
  %7161 = vmatprep.subr.bf16.mxu0 0
  %7162 = vmatpush2.bf16.msra.mxu0 0
  %7163 = vmatprep.mubr.bf16.mxu0 0
  %7164 = vmatmul.mubr.bf16.gmra.mxu0 %v7006
  %v7165 = vpop.f32.mrf.mxu0
  %v7166 = vadd.f32 0.0, %v7165
  %v7167 = vpop.f32.mrf.mxu0
  %v7168 = vpop.f32.mrf.mxu0
  %v7169 = vadd.f32 0.0, %v7168
  %v7170 = vpop.f32.mrf.mxu0
  %7171 = vmatprep.mubr.bf16.mxu0 0
  %7172 = vmatmul.mubr.bf16.gmra.mxu0 %v7007
  %v7173 = vpop.f32.mrf.mxu0
  %v7174 = vadd.f32 0.0, %v7173
  %v7175 = vpop.f32.mrf.mxu0
  %v7176 = vpop.f32.mrf.mxu0
  %v7177 = vadd.f32 0.0, %v7176
  %v7178 = vpop.f32.mrf.mxu0
  %7179 = vmatprep.mubr.bf16.mxu0 0
  %7180 = vmatmul.mubr.bf16.gmra.mxu0 %v7008
  %v7181 = vpop.f32.mrf.mxu0
  %v7182 = vadd.f32 0.0, %v7181
  %v7183 = vpop.f32.mrf.mxu0
  %v7184 = vpop.f32.mrf.mxu0
  %v7185 = vadd.f32 0.0, %v7184
  %v7186 = vpop.f32.mrf.mxu0
  %7187 = vmatprep.mubr.bf16.mxu0 0
  %7188 = vmatmul.mubr.bf16.gmra.mxu0 %v7009
  %v7189 = vpop.f32.mrf.mxu0
  %v7190 = vadd.f32 0.0, %v7189
  %v7191 = vpop.f32.mrf.mxu0
  %v7192 = vpop.f32.mrf.mxu0
  %v7193 = vadd.f32 0.0, %v7192
  %v7194 = vpop.f32.mrf.mxu0
  %7195 = vmatprep.mubr.bf16.mxu0 0
  %7196 = vmatmul.mubr.bf16.gmra.mxu0 %v7010
  %v7197 = vpop.f32.mrf.mxu0
  %v7198 = vadd.f32 0.0, %v7197
  %v7199 = vpop.f32.mrf.mxu0
  %v7200 = vpop.f32.mrf.mxu0
  %v7201 = vadd.f32 0.0, %v7200
  %v7202 = vpop.f32.mrf.mxu0
  %7203 = vmatprep.mubr.bf16.mxu0 0
  %7204 = vmatmul.mubr.bf16.gmra.mxu0 %v7011
  %v7205 = vpop.f32.mrf.mxu0
  %v7206 = vadd.f32 0.0, %v7205
  %v7207 = vpop.f32.mrf.mxu0
  %v7208 = vpop.f32.mrf.mxu0
  %v7209 = vadd.f32 0.0, %v7208
  %v7210 = vpop.f32.mrf.mxu0
  %7211 = vmatprep.mubr.bf16.mxu0 0
  %7212 = vmatmul.mubr.bf16.gmra.mxu0 %v7012
  %v7213 = vpop.f32.mrf.mxu0
  %v7214 = vadd.f32 0.0, %v7213
  %v7215 = vpop.f32.mrf.mxu0
  %v7216 = vpop.f32.mrf.mxu0
  %v7217 = vadd.f32 0.0, %v7216
  %v7218 = vpop.f32.mrf.mxu0
  %7219 = vmatprep.mubr.bf16.mxu0 0
  %7220 = vmatmul.mubr.bf16.gmra.mxu0 %v7013
  %v7221 = vpop.f32.mrf.mxu0
  %v7222 = vadd.f32 0.0, %v7221
  %v7223 = vpop.f32.mrf.mxu0
  %v7224 = vpop.f32.mrf.mxu0
  %v7225 = vadd.f32 0.0, %v7224
  %v7226 = vpop.f32.mrf.mxu0
  %7227 = vmatprep.mubr.bf16.mxu0 0
  %7228 = vmatmul.mubr.bf16.gmra.mxu0 %v7014
  %v7229 = vpop.f32.mrf.mxu0
  %v7230 = vadd.f32 0.0, %v7229
  %v7231 = vpop.f32.mrf.mxu0
  %v7232 = vpop.f32.mrf.mxu0
  %v7233 = vadd.f32 0.0, %v7232
  %v7234 = vpop.f32.mrf.mxu0
  %7235 = vmatprep.mubr.bf16.mxu0 0
  %7236 = vmatmul.mubr.bf16.gmra.mxu0 %v7015
  %v7237 = vpop.f32.mrf.mxu0
  %v7238 = vadd.f32 0.0, %v7237
  %v7239 = vpop.f32.mrf.mxu0
  %v7240 = vpop.f32.mrf.mxu0
  %v7241 = vadd.f32 0.0, %v7240
  %v7242 = vpop.f32.mrf.mxu0
  %7243 = vmatprep.mubr.bf16.mxu0 0
  %7244 = vmatmul.mubr.bf16.gmra.mxu0 %v7016
  %v7245 = vpop.f32.mrf.mxu0
  %v7246 = vadd.f32 0.0, %v7245
  %v7247 = vpop.f32.mrf.mxu0
  %v7248 = vpop.f32.mrf.mxu0
  %v7249 = vadd.f32 0.0, %v7248
  %v7250 = vpop.f32.mrf.mxu0
  %7251 = vmatprep.mubr.bf16.mxu0 0
  %7252 = vmatmul.mubr.bf16.gmra.mxu0 %v7017
  %v7253 = vpop.f32.mrf.mxu0
  %v7254 = vadd.f32 0.0, %v7253
  %v7255 = vpop.f32.mrf.mxu0
  %v7256 = vpop.f32.mrf.mxu0
  %v7257 = vadd.f32 0.0, %v7256
  %v7258 = vpop.f32.mrf.mxu0
  %7259 = vmatprep.mubr.bf16.mxu0 0
  %7260 = vmatmul.mubr.bf16.gmra.mxu0 %v7018
  %v7261 = vpop.f32.mrf.mxu0
  %v7262 = vadd.f32 0.0, %v7261
  %v7263 = vpop.f32.mrf.mxu0
  %v7264 = vpop.f32.mrf.mxu0
  %v7265 = vadd.f32 0.0, %v7264
  %v7266 = vpop.f32.mrf.mxu0
  %7267 = vmatprep.mubr.bf16.mxu0 0
  %7268 = vmatmul.mubr.bf16.gmra.mxu0 %v7019
  %v7269 = vpop.f32.mrf.mxu0
  %v7270 = vadd.f32 0.0, %v7269
  %v7271 = vpop.f32.mrf.mxu0
  %v7272 = vpop.f32.mrf.mxu0
  %v7273 = vadd.f32 0.0, %v7272
  %v7274 = vpop.f32.mrf.mxu0
  %7275 = vmatprep.mubr.bf16.mxu0 0
  %7276 = vmatmul.mubr.bf16.gmra.mxu0 %v7020
  %v7277 = vpop.f32.mrf.mxu0
  %v7278 = vadd.f32 0.0, %v7277
  %v7279 = vpop.f32.mrf.mxu0
  %v7280 = vpop.f32.mrf.mxu0
  %v7281 = vadd.f32 0.0, %v7280
  %v7282 = vpop.f32.mrf.mxu0
  %7283 = vmatprep.mubr.bf16.mxu0 0
  %7284 = vmatmul.mubr.bf16.gmra.mxu0 %v7021
  %v7285 = vpop.f32.mrf.mxu0
  %v7286 = vadd.f32 0.0, %v7285
  %v7287 = vpop.f32.mrf.mxu0
  %v7288 = vpop.f32.mrf.mxu0
  %v7289 = vadd.f32 0.0, %v7288
  %v7290 = vpop.f32.mrf.mxu0
  %7291 = vmatprep.mubr.bf16.mxu0 0
  %7292 = vmatmul.mubr.bf16.gmra.mxu0 %v7022
  %v7293 = vpop.f32.mrf.mxu0
  %v7294 = vadd.f32 0.0, %v7293
  %v7295 = vpop.f32.mrf.mxu0
  %v7296 = vpop.f32.mrf.mxu0
  %v7297 = vadd.f32 0.0, %v7296
  %v7298 = vpop.f32.mrf.mxu0
  %7299 = vmatprep.mubr.bf16.mxu0 0
  %7300 = vmatmul.mubr.bf16.gmra.mxu0 %v7023
  %v7301 = vpop.f32.mrf.mxu0
  %v7302 = vadd.f32 0.0, %v7301
  %v7303 = vpop.f32.mrf.mxu0
  %v7304 = vpop.f32.mrf.mxu0
  %v7305 = vadd.f32 0.0, %v7304
  %v7306 = vpop.f32.mrf.mxu0
  %7307 = vmatprep.mubr.bf16.mxu0 0
  %7308 = vmatmul.mubr.bf16.gmra.mxu0 %v7024
  %v7309 = vpop.f32.mrf.mxu0
  %v7310 = vadd.f32 0.0, %v7309
  %v7311 = vpop.f32.mrf.mxu0
  %v7312 = vpop.f32.mrf.mxu0
  %v7313 = vadd.f32 0.0, %v7312
  %v7314 = vpop.f32.mrf.mxu0
  %7315 = vmatprep.mubr.bf16.mxu0 0
  %7316 = vmatmul.mubr.bf16.gmra.mxu0 %v7025
  %v7317 = vpop.f32.mrf.mxu0
  %v7318 = vadd.f32 0.0, %v7317
  %v7319 = vpop.f32.mrf.mxu0
  %v7320 = vpop.f32.mrf.mxu0
  %v7321 = vadd.f32 0.0, %v7320
  %v7322 = vpop.f32.mrf.mxu0
  %7323 = vmatprep.mubr.bf16.mxu0 0
  %7324 = vmatmul.mubr.bf16.gmra.mxu0 %v7026
  %v7325 = vpop.f32.mrf.mxu0
  %v7326 = vadd.f32 0.0, %v7325
  %v7327 = vpop.f32.mrf.mxu0
  %v7328 = vpop.f32.mrf.mxu0
  %v7329 = vadd.f32 0.0, %v7328
  %v7330 = vpop.f32.mrf.mxu0
  %7331 = vmatprep.mubr.bf16.mxu0 0
  %7332 = vmatmul.mubr.bf16.gmra.mxu0 %v7027
  %v7333 = vpop.f32.mrf.mxu0
  %v7334 = vadd.f32 0.0, %v7333
  %v7335 = vpop.f32.mrf.mxu0
  %v7336 = vpop.f32.mrf.mxu0
  %v7337 = vadd.f32 0.0, %v7336
  %v7338 = vpop.f32.mrf.mxu0
  %7339 = vmatprep.mubr.bf16.mxu0 0
  %7340 = vmatmul.mubr.bf16.gmra.mxu0 %v7028
  %v7341 = vpop.f32.mrf.mxu0
  %v7342 = vadd.f32 0.0, %v7341
  %v7343 = vpop.f32.mrf.mxu0
  %v7344 = vpop.f32.mrf.mxu0
  %v7345 = vadd.f32 0.0, %v7344
  %v7346 = vpop.f32.mrf.mxu0
  %7347 = vmatprep.mubr.bf16.mxu0 0
  %7348 = vmatmul.mubr.bf16.gmra.mxu0 %v7029
  %v7349 = vpop.f32.mrf.mxu0
  %v7350 = vadd.f32 0.0, %v7349
  %v7351 = vpop.f32.mrf.mxu0
  %v7352 = vpop.f32.mrf.mxu0
  %v7353 = vadd.f32 0.0, %v7352
  %v7354 = vpop.f32.mrf.mxu0
  %7355 = vmatprep.mubr.bf16.mxu0 0
  %7356 = vmatmul.mubr.bf16.gmra.mxu0 %v7030
  %v7357 = vpop.f32.mrf.mxu0
  %v7358 = vadd.f32 0.0, %v7357
  %v7359 = vpop.f32.mrf.mxu0
  %v7360 = vpop.f32.mrf.mxu0
  %v7361 = vadd.f32 0.0, %v7360
  %v7362 = vpop.f32.mrf.mxu0
  %7363 = vmatprep.mubr.bf16.mxu0 0
  %7364 = vmatmul.mubr.bf16.gmra.mxu0 %v7031
  %v7365 = vpop.f32.mrf.mxu0
  %v7366 = vadd.f32 0.0, %v7365
  %v7367 = vpop.f32.mrf.mxu0
  %v7368 = vpop.f32.mrf.mxu0
  %v7369 = vadd.f32 0.0, %v7368
  %v7370 = vpop.f32.mrf.mxu0
  %7371 = vmatprep.mubr.bf16.mxu0 0
  %7372 = vmatmul.mubr.bf16.gmra.mxu0 %v7032
  %v7373 = vpop.f32.mrf.mxu0
  %v7374 = vadd.f32 0.0, %v7373
  %v7375 = vpop.f32.mrf.mxu0
  %v7376 = vpop.f32.mrf.mxu0
  %v7377 = vadd.f32 0.0, %v7376
  %v7378 = vpop.f32.mrf.mxu0
  %7379 = vmatprep.mubr.bf16.mxu0 0
  %7380 = vmatmul.mubr.bf16.gmra.mxu0 %v7033
  %v7381 = vpop.f32.mrf.mxu0
  %v7382 = vadd.f32 0.0, %v7381
  %v7383 = vpop.f32.mrf.mxu0
  %v7384 = vpop.f32.mrf.mxu0
  %v7385 = vadd.f32 0.0, %v7384
  %v7386 = vpop.f32.mrf.mxu0
  %7387 = vmatprep.mubr.bf16.mxu0 0
  %7388 = vmatmul.mubr.bf16.gmra.mxu0 %v7034
  %v7389 = vpop.f32.mrf.mxu0
  %v7390 = vadd.f32 0.0, %v7389
  %v7391 = vpop.f32.mrf.mxu0
  %v7392 = vpop.f32.mrf.mxu0
  %v7393 = vadd.f32 0.0, %v7392
  %v7394 = vpop.f32.mrf.mxu0
  %7395 = vmatprep.mubr.bf16.mxu0 0
  %7396 = vmatmul.mubr.bf16.gmra.mxu0 %v7035
  %v7397 = vpop.f32.mrf.mxu0
  %v7398 = vadd.f32 0.0, %v7397
  %v7399 = vpop.f32.mrf.mxu0
  %v7400 = vpop.f32.mrf.mxu0
  %v7401 = vadd.f32 0.0, %v7400
  %v7402 = vpop.f32.mrf.mxu0
  %7403 = vmatprep.mubr.bf16.mxu0 0
  %7404 = vmatmul.mubr.bf16.gmra.mxu0 %v7036
  %v7405 = vpop.f32.mrf.mxu0
  %v7406 = vadd.f32 0.0, %v7405
  %v7407 = vpop.f32.mrf.mxu0
  %v7408 = vpop.f32.mrf.mxu0
  %v7409 = vadd.f32 0.0, %v7408
  %v7410 = vpop.f32.mrf.mxu0
  %7411 = vmatprep.mubr.bf16.mxu0 0
  %7412 = vmatmul.mubr.bf16.gmra.mxu0 %v7037
  %v7413 = vpop.f32.mrf.mxu0
  %v7414 = vadd.f32 0.0, %v7413
  %v7415 = vpop.f32.mrf.mxu0
  %v7416 = vpop.f32.mrf.mxu0
  %v7417 = vadd.f32 0.0, %v7416
  %v7418 = vpop.f32.mrf.mxu0
  %7419 = vdwg.mxu0
  %v7436 = vunpack.c.l.b16 %v7050
  %v7437 = vunpack.c.l.b16 %v7051
  %v7438 = vunpack.c.l.b16 %v7052
  %v7439 = vunpack.c.l.b16 %v7053
  %v7440 = vunpack.c.l.b16 %v7054
  %v7441 = vunpack.c.l.b16 %v7055
  %v7442 = vunpack.c.l.b16 %v7056
  %v7443 = vunpack.c.l.b16 %v7057
  %v7444 = vunpack.c.l.b16 %v7058
  %v7445 = vunpack.c.l.b16 %v7059
  %v7446 = vunpack.c.l.b16 %v7060
  %v7447 = vunpack.c.l.b16 %v7061
  %v7448 = vunpack.c.l.b16 %v7062
  %v7449 = vunpack.c.l.b16 %v7063
  %v7450 = vunpack.c.l.b16 %v7064
  %v7451 = vunpack.c.l.b16 %v7065
  %v7452 = vpack.c.b16 %v7437, %v7436
  %v7453 = vpack.c.b16 %v7439, %v7438
  %v7454 = vpack.c.b16 %v7441, %v7440
  %v7455 = vpack.c.b16 %v7443, %v7442
  %v7456 = vpack.c.b16 %v7445, %v7444
  %v7457 = vpack.c.b16 %v7447, %v7446
  %v7458 = vpack.c.b16 %v7449, %v7448
  %v7459 = vpack.c.b16 %v7451, %v7450
  %7468 = vmatprep.subr.bf16.mxu0 0
  %7469 = vmatpush1.bf16.msra.mxu0 %v7459
  %7470 = vmatprep.subr.bf16.mxu0 0
  %7471 = vmatpush1.bf16.msra.mxu0 %v7458
  %7472 = vmatprep.subr.bf16.mxu0 0
  %7473 = vmatpush1.bf16.msra.mxu0 %v7457
  %7474 = vmatprep.subr.bf16.mxu0 0
  %7475 = vmatpush1.bf16.msra.mxu0 %v7456
  %7476 = vmatprep.subr.bf16.mxu0 0
  %7477 = vmatpush1.bf16.msra.mxu0 %v7455
  %7478 = vmatprep.subr.bf16.mxu0 0
  %7479 = vmatpush1.bf16.msra.mxu0 %v7454
  %7480 = vmatprep.subr.bf16.mxu0 0
  %7481 = vmatpush1.bf16.msra.mxu0 %v7453
  %7482 = vmatprep.subr.bf16.mxu0 0
  %7483 = vmatpush1.bf16.msra.mxu0 %v7452
  %7484 = vmatprep.subr.bf16.mxu0 0
  %7485 = vmatpush2.bf16.msra.mxu0 0
  %7486 = vmatprep.subr.bf16.mxu0 0
  %7487 = vmatpush2.bf16.msra.mxu0 0
  %7488 = vmatprep.subr.bf16.mxu0 0
  %7489 = vmatpush2.bf16.msra.mxu0 0
  %7490 = vmatprep.subr.bf16.mxu0 0
  %7491 = vmatpush2.bf16.msra.mxu0 0
  %7492 = vmatprep.subr.bf16.mxu0 0
  %7493 = vmatpush2.bf16.msra.mxu0 0
  %7494 = vmatprep.subr.bf16.mxu0 0
  %7495 = vmatpush2.bf16.msra.mxu0 0
  %7496 = vmatprep.subr.bf16.mxu0 0
  %7497 = vmatpush2.bf16.msra.mxu0 0
  %7498 = vmatprep.subr.bf16.mxu0 0
  %7499 = vmatpush2.bf16.msra.mxu0 0
  %7500 = vmatprep.mubr.bf16.mxu0 0
  %7501 = vmatmul.mubr.bf16.gmra.mxu0 %v7002
  %v7502 = vpop.f32.mrf.mxu0
  %v7503 = vadd.f32 %v7166, %v7502
  %v7504 = vpop.f32.mrf.mxu0
  %v7505 = vpop.f32.mrf.mxu0
  %v7506 = vadd.f32 %v7169, %v7505
  %v7507 = vpop.f32.mrf.mxu0
  %7508 = vmatprep.mubr.bf16.mxu0 0
  %7509 = vmatmul.mubr.bf16.gmra.mxu0 %v7003
  %v7510 = vpop.f32.mrf.mxu0
  %v7511 = vadd.f32 %v7174, %v7510
  %v7512 = vpop.f32.mrf.mxu0
  %v7513 = vpop.f32.mrf.mxu0
  %v7514 = vadd.f32 %v7177, %v7513
  %v7515 = vpop.f32.mrf.mxu0
  %7516 = vmatprep.mubr.bf16.mxu0 0
  %7517 = vmatmul.mubr.bf16.gmra.mxu0 %v7004
  %v7518 = vpop.f32.mrf.mxu0
  %v7519 = vadd.f32 %v7182, %v7518
  %v7520 = vpop.f32.mrf.mxu0
  %v7521 = vpop.f32.mrf.mxu0
  %v7522 = vadd.f32 %v7185, %v7521
  %v7523 = vpop.f32.mrf.mxu0
  %7524 = vmatprep.mubr.bf16.mxu0 0
  %7525 = vmatmul.mubr.bf16.gmra.mxu0 %v7005
  %v7526 = vpop.f32.mrf.mxu0
  %v7527 = vadd.f32 %v7190, %v7526
  %v7528 = vpop.f32.mrf.mxu0
  %v7529 = vpop.f32.mrf.mxu0
  %v7530 = vadd.f32 %v7193, %v7529
  %v7531 = vpop.f32.mrf.mxu0
  %7532 = vmatprep.mubr.bf16.mxu0 0
  %7533 = vmatmul.mubr.bf16.gmra.mxu0 %v7006
  %v7534 = vpop.f32.mrf.mxu0
  %v7535 = vadd.f32 %v7198, %v7534
  %v7536 = vpop.f32.mrf.mxu0
  %v7537 = vpop.f32.mrf.mxu0
  %v7538 = vadd.f32 %v7201, %v7537
  %v7539 = vpop.f32.mrf.mxu0
  %7540 = vmatprep.mubr.bf16.mxu0 0
  %7541 = vmatmul.mubr.bf16.gmra.mxu0 %v7007
  %v7542 = vpop.f32.mrf.mxu0
  %v7543 = vadd.f32 %v7206, %v7542
  %v7544 = vpop.f32.mrf.mxu0
  %v7545 = vpop.f32.mrf.mxu0
  %v7546 = vadd.f32 %v7209, %v7545
  %v7547 = vpop.f32.mrf.mxu0
  %7548 = vmatprep.mubr.bf16.mxu0 0
  %7549 = vmatmul.mubr.bf16.gmra.mxu0 %v7008
  %v7550 = vpop.f32.mrf.mxu0
  %v7551 = vadd.f32 %v7214, %v7550
  %v7552 = vpop.f32.mrf.mxu0
  %v7553 = vpop.f32.mrf.mxu0
  %v7554 = vadd.f32 %v7217, %v7553
  %v7555 = vpop.f32.mrf.mxu0
  %7556 = vmatprep.mubr.bf16.mxu0 0
  %7557 = vmatmul.mubr.bf16.gmra.mxu0 %v7009
  %v7558 = vpop.f32.mrf.mxu0
  %v7559 = vadd.f32 %v7222, %v7558
  %v7560 = vpop.f32.mrf.mxu0
  %v7561 = vpop.f32.mrf.mxu0
  %v7562 = vadd.f32 %v7225, %v7561
  %v7563 = vpop.f32.mrf.mxu0
  %7564 = vmatprep.mubr.bf16.mxu0 0
  %7565 = vmatmul.mubr.bf16.gmra.mxu0 %v7010
  %v7566 = vpop.f32.mrf.mxu0
  %v7567 = vadd.f32 %v7230, %v7566
  %v7568 = vpop.f32.mrf.mxu0
  %v7569 = vpop.f32.mrf.mxu0
  %v7570 = vadd.f32 %v7233, %v7569
  %v7571 = vpop.f32.mrf.mxu0
  %7572 = vmatprep.mubr.bf16.mxu0 0
  %7573 = vmatmul.mubr.bf16.gmra.mxu0 %v7011
  %v7574 = vpop.f32.mrf.mxu0
  %v7575 = vadd.f32 %v7238, %v7574
  %v7576 = vpop.f32.mrf.mxu0
  %v7577 = vpop.f32.mrf.mxu0
  %v7578 = vadd.f32 %v7241, %v7577
  %v7579 = vpop.f32.mrf.mxu0
  %7580 = vmatprep.mubr.bf16.mxu0 0
  %7581 = vmatmul.mubr.bf16.gmra.mxu0 %v7012
  %v7582 = vpop.f32.mrf.mxu0
  %v7583 = vadd.f32 %v7246, %v7582
  %v7584 = vpop.f32.mrf.mxu0
  %v7585 = vpop.f32.mrf.mxu0
  %v7586 = vadd.f32 %v7249, %v7585
  %v7587 = vpop.f32.mrf.mxu0
  %7588 = vmatprep.mubr.bf16.mxu0 0
  %7589 = vmatmul.mubr.bf16.gmra.mxu0 %v7013
  %v7590 = vpop.f32.mrf.mxu0
  %v7591 = vadd.f32 %v7254, %v7590
  %v7592 = vpop.f32.mrf.mxu0
  %v7593 = vpop.f32.mrf.mxu0
  %v7594 = vadd.f32 %v7257, %v7593
  %v7595 = vpop.f32.mrf.mxu0
  %7596 = vmatprep.mubr.bf16.mxu0 0
  %7597 = vmatmul.mubr.bf16.gmra.mxu0 %v7014
  %v7598 = vpop.f32.mrf.mxu0
  %v7599 = vadd.f32 %v7262, %v7598
  %v7600 = vpop.f32.mrf.mxu0
  %v7601 = vpop.f32.mrf.mxu0
  %v7602 = vadd.f32 %v7265, %v7601
  %v7603 = vpop.f32.mrf.mxu0
  %7604 = vmatprep.mubr.bf16.mxu0 0
  %7605 = vmatmul.mubr.bf16.gmra.mxu0 %v7015
  %v7606 = vpop.f32.mrf.mxu0
  %v7607 = vadd.f32 %v7270, %v7606
  %v7608 = vpop.f32.mrf.mxu0
  %v7609 = vpop.f32.mrf.mxu0
  %v7610 = vadd.f32 %v7273, %v7609
  %v7611 = vpop.f32.mrf.mxu0
  %7612 = vmatprep.mubr.bf16.mxu0 0
  %7613 = vmatmul.mubr.bf16.gmra.mxu0 %v7016
  %v7614 = vpop.f32.mrf.mxu0
  %v7615 = vadd.f32 %v7278, %v7614
  %v7616 = vpop.f32.mrf.mxu0
  %v7617 = vpop.f32.mrf.mxu0
  %v7618 = vadd.f32 %v7281, %v7617
  %v7619 = vpop.f32.mrf.mxu0
  %7620 = vmatprep.mubr.bf16.mxu0 0
  %7621 = vmatmul.mubr.bf16.gmra.mxu0 %v7017
  %v7622 = vpop.f32.mrf.mxu0
  %v7623 = vadd.f32 %v7286, %v7622
  %v7624 = vpop.f32.mrf.mxu0
  %v7625 = vpop.f32.mrf.mxu0
  %v7626 = vadd.f32 %v7289, %v7625
  %v7627 = vpop.f32.mrf.mxu0
  %7628 = vmatprep.mubr.bf16.mxu0 0
  %7629 = vmatmul.mubr.bf16.gmra.mxu0 %v7018
  %v7630 = vpop.f32.mrf.mxu0
  %v7631 = vadd.f32 %v7294, %v7630
  %v7632 = vpop.f32.mrf.mxu0
  %v7633 = vpop.f32.mrf.mxu0
  %v7634 = vadd.f32 %v7297, %v7633
  %v7635 = vpop.f32.mrf.mxu0
  %7636 = vmatprep.mubr.bf16.mxu0 0
  %7637 = vmatmul.mubr.bf16.gmra.mxu0 %v7019
  %v7638 = vpop.f32.mrf.mxu0
  %v7639 = vadd.f32 %v7302, %v7638
  %v7640 = vpop.f32.mrf.mxu0
  %v7641 = vpop.f32.mrf.mxu0
  %v7642 = vadd.f32 %v7305, %v7641
  %v7643 = vpop.f32.mrf.mxu0
  %7644 = vmatprep.mubr.bf16.mxu0 0
  %7645 = vmatmul.mubr.bf16.gmra.mxu0 %v7020
  %v7646 = vpop.f32.mrf.mxu0
  %v7647 = vadd.f32 %v7310, %v7646
  %v7648 = vpop.f32.mrf.mxu0
  %v7649 = vpop.f32.mrf.mxu0
  %v7650 = vadd.f32 %v7313, %v7649
  %v7651 = vpop.f32.mrf.mxu0
  %7652 = vmatprep.mubr.bf16.mxu0 0
  %7653 = vmatmul.mubr.bf16.gmra.mxu0 %v7021
  %v7654 = vpop.f32.mrf.mxu0
  %v7655 = vadd.f32 %v7318, %v7654
  %v7656 = vpop.f32.mrf.mxu0
  %v7657 = vpop.f32.mrf.mxu0
  %v7658 = vadd.f32 %v7321, %v7657
  %v7659 = vpop.f32.mrf.mxu0
  %7660 = vmatprep.mubr.bf16.mxu0 0
  %7661 = vmatmul.mubr.bf16.gmra.mxu0 %v7022
  %v7662 = vpop.f32.mrf.mxu0
  %v7663 = vadd.f32 %v7326, %v7662
  %v7664 = vpop.f32.mrf.mxu0
  %v7665 = vpop.f32.mrf.mxu0
  %v7666 = vadd.f32 %v7329, %v7665
  %v7667 = vpop.f32.mrf.mxu0
  %7668 = vmatprep.mubr.bf16.mxu0 0
  %7669 = vmatmul.mubr.bf16.gmra.mxu0 %v7023
  %v7670 = vpop.f32.mrf.mxu0
  %v7671 = vadd.f32 %v7334, %v7670
  %v7672 = vpop.f32.mrf.mxu0
  %v7673 = vpop.f32.mrf.mxu0
  %v7674 = vadd.f32 %v7337, %v7673
  %v7675 = vpop.f32.mrf.mxu0
  %7676 = vmatprep.mubr.bf16.mxu0 0
  %7677 = vmatmul.mubr.bf16.gmra.mxu0 %v7024
  %v7678 = vpop.f32.mrf.mxu0
  %v7679 = vadd.f32 %v7342, %v7678
  %v7680 = vpop.f32.mrf.mxu0
  %v7681 = vpop.f32.mrf.mxu0
  %v7682 = vadd.f32 %v7345, %v7681
  %v7683 = vpop.f32.mrf.mxu0
  %7684 = vmatprep.mubr.bf16.mxu0 0
  %7685 = vmatmul.mubr.bf16.gmra.mxu0 %v7025
  %v7686 = vpop.f32.mrf.mxu0
  %v7687 = vadd.f32 %v7350, %v7686
  %v7688 = vpop.f32.mrf.mxu0
  %v7689 = vpop.f32.mrf.mxu0
  %v7690 = vadd.f32 %v7353, %v7689
  %v7691 = vpop.f32.mrf.mxu0
  %7692 = vmatprep.mubr.bf16.mxu0 0
  %7693 = vmatmul.mubr.bf16.gmra.mxu0 %v7026
  %v7694 = vpop.f32.mrf.mxu0
  %v7695 = vadd.f32 %v7358, %v7694
  %v7696 = vpop.f32.mrf.mxu0
  %v7697 = vpop.f32.mrf.mxu0
  %v7698 = vadd.f32 %v7361, %v7697
  %v7699 = vpop.f32.mrf.mxu0
  %7700 = vmatprep.mubr.bf16.mxu0 0
  %7701 = vmatmul.mubr.bf16.gmra.mxu0 %v7027
  %v7702 = vpop.f32.mrf.mxu0
  %v7703 = vadd.f32 %v7366, %v7702
  %v7704 = vpop.f32.mrf.mxu0
  %v7705 = vpop.f32.mrf.mxu0
  %v7706 = vadd.f32 %v7369, %v7705
  %v7707 = vpop.f32.mrf.mxu0
  %7708 = vmatprep.mubr.bf16.mxu0 0
  %7709 = vmatmul.mubr.bf16.gmra.mxu0 %v7028
  %v7710 = vpop.f32.mrf.mxu0
  %v7711 = vadd.f32 %v7374, %v7710
  %v7712 = vpop.f32.mrf.mxu0
  %v7713 = vpop.f32.mrf.mxu0
  %v7714 = vadd.f32 %v7377, %v7713
  %v7715 = vpop.f32.mrf.mxu0
  %7716 = vmatprep.mubr.bf16.mxu0 0
  %7717 = vmatmul.mubr.bf16.gmra.mxu0 %v7029
  %v7718 = vpop.f32.mrf.mxu0
  %v7719 = vadd.f32 %v7382, %v7718
  %v7720 = vpop.f32.mrf.mxu0
  %v7721 = vpop.f32.mrf.mxu0
  %v7722 = vadd.f32 %v7385, %v7721
  %v7723 = vpop.f32.mrf.mxu0
  %7724 = vmatprep.mubr.bf16.mxu0 0
  %7725 = vmatmul.mubr.bf16.gmra.mxu0 %v7030
  %v7726 = vpop.f32.mrf.mxu0
  %v7727 = vadd.f32 %v7390, %v7726
  %v7728 = vpop.f32.mrf.mxu0
  %v7729 = vpop.f32.mrf.mxu0
  %v7730 = vadd.f32 %v7393, %v7729
  %v7731 = vpop.f32.mrf.mxu0
  %7732 = vmatprep.mubr.bf16.mxu0 0
  %7733 = vmatmul.mubr.bf16.gmra.mxu0 %v7031
  %v7734 = vpop.f32.mrf.mxu0
  %v7735 = vadd.f32 %v7398, %v7734
  %v7736 = vpop.f32.mrf.mxu0
  %v7737 = vpop.f32.mrf.mxu0
  %v7738 = vadd.f32 %v7401, %v7737
  %v7739 = vpop.f32.mrf.mxu0
  %7740 = vmatprep.mubr.bf16.mxu0 0
  %7741 = vmatmul.mubr.bf16.gmra.mxu0 %v7032
  %v7742 = vpop.f32.mrf.mxu0
  %v7743 = vadd.f32 %v7406, %v7742
  %v7744 = vpop.f32.mrf.mxu0
  %v7745 = vpop.f32.mrf.mxu0
  %v7746 = vadd.f32 %v7409, %v7745
  %v7747 = vpop.f32.mrf.mxu0
  %7748 = vmatprep.mubr.bf16.mxu0 0
  %7749 = vmatmul.mubr.bf16.gmra.mxu0 %v7033
  %v7750 = vpop.f32.mrf.mxu0
  %v7751 = vadd.f32 %v7414, %v7750
  %v7752 = vpop.f32.mrf.mxu0
  %v7753 = vpop.f32.mrf.mxu0
  %v7754 = vadd.f32 %v7417, %v7753
  %v7755 = vpop.f32.mrf.mxu0
  %7756 = vdwg.mxu0
  %s7757 = scalar_lea.vmem %s3, 128
  %v7758 = vld [vmem:[%s7757] sm:$0xf]
  %v7759 = vld [vmem:[%s7757 + $0x4] sm:$0xf]
  %v7760 = vld [vmem:[%s7757 + $0x8] sm:$0xf]
  %v7761 = vld [vmem:[%s7757 + $0xc] sm:$0xf]
  %v7762 = vld [vmem:[%s7757 + $0x10] sm:$0xf]
  %v7763 = vld [vmem:[%s7757 + $0x14] sm:$0xf]
  %v7764 = vld [vmem:[%s7757 + $0x18] sm:$0xf]
  %v7765 = vld [vmem:[%s7757 + $0x1c] sm:$0xf]
  %v7766 = vld [vmem:[%s7757 + $0x20] sm:$0xf]
  %v7767 = vld [vmem:[%s7757 + $0x24] sm:$0xf]
  %v7768 = vld [vmem:[%s7757 + $0x28] sm:$0xf]
  %v7769 = vld [vmem:[%s7757 + $0x2c] sm:$0xf]
  %v7770 = vld [vmem:[%s7757 + $0x30] sm:$0xf]
  %v7771 = vld [vmem:[%s7757 + $0x34] sm:$0xf]
  %v7772 = vld [vmem:[%s7757 + $0x38] sm:$0xf]
  %v7773 = vld [vmem:[%s7757 + $0x3c] sm:$0xf]
  %v7790 = vunpack.c.l.b16 %v7758
  %v7791 = vunpack.c.l.b16 %v7759
  %v7792 = vunpack.c.l.b16 %v7760
  %v7793 = vunpack.c.l.b16 %v7761
  %v7794 = vunpack.c.l.b16 %v7762
  %v7795 = vunpack.c.l.b16 %v7763
  %v7796 = vunpack.c.l.b16 %v7764
  %v7797 = vunpack.c.l.b16 %v7765
  %v7798 = vunpack.c.l.b16 %v7766
  %v7799 = vunpack.c.l.b16 %v7767
  %v7800 = vunpack.c.l.b16 %v7768
  %v7801 = vunpack.c.l.b16 %v7769
  %v7802 = vunpack.c.l.b16 %v7770
  %v7803 = vunpack.c.l.b16 %v7771
  %v7804 = vunpack.c.l.b16 %v7772
  %v7805 = vunpack.c.l.b16 %v7773
  %v7806 = vpack.c.b16 %v7791, %v7790
  %v7807 = vpack.c.b16 %v7793, %v7792
  %v7808 = vpack.c.b16 %v7795, %v7794
  %v7809 = vpack.c.b16 %v7797, %v7796
  %v7810 = vpack.c.b16 %v7799, %v7798
  %v7811 = vpack.c.b16 %v7801, %v7800
  %v7812 = vpack.c.b16 %v7803, %v7802
  %v7813 = vpack.c.b16 %v7805, %v7804
  %7822 = vmatprep.subr.bf16.mxu0 0
  %7823 = vmatpush1.bf16.msra.mxu0 %v7813
  %7824 = vmatprep.subr.bf16.mxu0 0
  %7825 = vmatpush1.bf16.msra.mxu0 %v7812
  %7826 = vmatprep.subr.bf16.mxu0 0
  %7827 = vmatpush1.bf16.msra.mxu0 %v7811
  %7828 = vmatprep.subr.bf16.mxu0 0
  %7829 = vmatpush1.bf16.msra.mxu0 %v7810
  %7830 = vmatprep.subr.bf16.mxu0 0
  %7831 = vmatpush1.bf16.msra.mxu0 %v7809
  %7832 = vmatprep.subr.bf16.mxu0 0
  %7833 = vmatpush1.bf16.msra.mxu0 %v7808
  %7834 = vmatprep.subr.bf16.mxu0 0
  %7835 = vmatpush1.bf16.msra.mxu0 %v7807
  %7836 = vmatprep.subr.bf16.mxu0 0
  %7837 = vmatpush1.bf16.msra.mxu0 %v7806
  %7838 = vmatprep.subr.bf16.mxu0 0
  %7839 = vmatpush2.bf16.msra.mxu0 0
  %7840 = vmatprep.subr.bf16.mxu0 0
  %7841 = vmatpush2.bf16.msra.mxu0 0
  %7842 = vmatprep.subr.bf16.mxu0 0
  %7843 = vmatpush2.bf16.msra.mxu0 0
  %7844 = vmatprep.subr.bf16.mxu0 0
  %7845 = vmatpush2.bf16.msra.mxu0 0
  %7846 = vmatprep.subr.bf16.mxu0 0
  %7847 = vmatpush2.bf16.msra.mxu0 0
  %7848 = vmatprep.subr.bf16.mxu0 0
  %7849 = vmatpush2.bf16.msra.mxu0 0
  %7850 = vmatprep.subr.bf16.mxu0 0
  %7851 = vmatpush2.bf16.msra.mxu0 0
  %7852 = vmatprep.subr.bf16.mxu0 0
  %7853 = vmatpush2.bf16.msra.mxu0 0
  %7854 = vmatprep.mubr.bf16.mxu0 0
  %7855 = vmatmul.mubr.bf16.gmra.mxu0 %v7010
  %v7856 = vpop.f32.mrf.mxu0
  %v7857 = vadd.f32 0.0, %v7856
  %v7858 = vpop.f32.mrf.mxu0
  %v7859 = vpop.f32.mrf.mxu0
  %v7860 = vadd.f32 0.0, %v7859
  %v7861 = vpop.f32.mrf.mxu0
  %7862 = vmatprep.mubr.bf16.mxu0 0
  %7863 = vmatmul.mubr.bf16.gmra.mxu0 %v7011
  %v7864 = vpop.f32.mrf.mxu0
  %v7865 = vadd.f32 0.0, %v7864
  %v7866 = vpop.f32.mrf.mxu0
  %v7867 = vpop.f32.mrf.mxu0
  %v7868 = vadd.f32 0.0, %v7867
  %v7869 = vpop.f32.mrf.mxu0
  %7870 = vmatprep.mubr.bf16.mxu0 0
  %7871 = vmatmul.mubr.bf16.gmra.mxu0 %v7012
  %v7872 = vpop.f32.mrf.mxu0
  %v7873 = vadd.f32 0.0, %v7872
  %v7874 = vpop.f32.mrf.mxu0
  %v7875 = vpop.f32.mrf.mxu0
  %v7876 = vadd.f32 0.0, %v7875
  %v7877 = vpop.f32.mrf.mxu0
  %7878 = vmatprep.mubr.bf16.mxu0 0
  %7879 = vmatmul.mubr.bf16.gmra.mxu0 %v7013
  %v7880 = vpop.f32.mrf.mxu0
  %v7881 = vadd.f32 0.0, %v7880
  %v7882 = vpop.f32.mrf.mxu0
  %v7883 = vpop.f32.mrf.mxu0
  %v7884 = vadd.f32 0.0, %v7883
  %v7885 = vpop.f32.mrf.mxu0
  %7886 = vmatprep.mubr.bf16.mxu0 0
  %7887 = vmatmul.mubr.bf16.gmra.mxu0 %v7014
  %v7888 = vpop.f32.mrf.mxu0
  %v7889 = vadd.f32 0.0, %v7888
  %v7890 = vpop.f32.mrf.mxu0
  %v7891 = vpop.f32.mrf.mxu0
  %v7892 = vadd.f32 0.0, %v7891
  %v7893 = vpop.f32.mrf.mxu0
  %7894 = vmatprep.mubr.bf16.mxu0 0
  %7895 = vmatmul.mubr.bf16.gmra.mxu0 %v7015
  %v7896 = vpop.f32.mrf.mxu0
  %v7897 = vadd.f32 0.0, %v7896
  %v7898 = vpop.f32.mrf.mxu0
  %v7899 = vpop.f32.mrf.mxu0
  %v7900 = vadd.f32 0.0, %v7899
  %v7901 = vpop.f32.mrf.mxu0
  %7902 = vmatprep.mubr.bf16.mxu0 0
  %7903 = vmatmul.mubr.bf16.gmra.mxu0 %v7016
  %v7904 = vpop.f32.mrf.mxu0
  %v7905 = vadd.f32 0.0, %v7904
  %v7906 = vpop.f32.mrf.mxu0
  %v7907 = vpop.f32.mrf.mxu0
  %v7908 = vadd.f32 0.0, %v7907
  %v7909 = vpop.f32.mrf.mxu0
  %7910 = vmatprep.mubr.bf16.mxu0 0
  %7911 = vmatmul.mubr.bf16.gmra.mxu0 %v7017
  %v7912 = vpop.f32.mrf.mxu0
  %v7913 = vadd.f32 0.0, %v7912
  %v7914 = vpop.f32.mrf.mxu0
  %v7915 = vpop.f32.mrf.mxu0
  %v7916 = vadd.f32 0.0, %v7915
  %v7917 = vpop.f32.mrf.mxu0
  %7918 = vmatprep.mubr.bf16.mxu0 0
  %7919 = vmatmul.mubr.bf16.gmra.mxu0 %v7018
  %v7920 = vpop.f32.mrf.mxu0
  %v7921 = vadd.f32 0.0, %v7920
  %v7922 = vpop.f32.mrf.mxu0
  %v7923 = vpop.f32.mrf.mxu0
  %v7924 = vadd.f32 0.0, %v7923
  %v7925 = vpop.f32.mrf.mxu0
  %7926 = vmatprep.mubr.bf16.mxu0 0
  %7927 = vmatmul.mubr.bf16.gmra.mxu0 %v7019
  %v7928 = vpop.f32.mrf.mxu0
  %v7929 = vadd.f32 0.0, %v7928
  %v7930 = vpop.f32.mrf.mxu0
  %v7931 = vpop.f32.mrf.mxu0
  %v7932 = vadd.f32 0.0, %v7931
  %v7933 = vpop.f32.mrf.mxu0
  %7934 = vmatprep.mubr.bf16.mxu0 0
  %7935 = vmatmul.mubr.bf16.gmra.mxu0 %v7020
  %v7936 = vpop.f32.mrf.mxu0
  %v7937 = vadd.f32 0.0, %v7936
  %v7938 = vpop.f32.mrf.mxu0
  %v7939 = vpop.f32.mrf.mxu0
  %v7940 = vadd.f32 0.0, %v7939
  %v7941 = vpop.f32.mrf.mxu0
  %7942 = vmatprep.mubr.bf16.mxu0 0
  %7943 = vmatmul.mubr.bf16.gmra.mxu0 %v7021
  %v7944 = vpop.f32.mrf.mxu0
  %v7945 = vadd.f32 0.0, %v7944
  %v7946 = vpop.f32.mrf.mxu0
  %v7947 = vpop.f32.mrf.mxu0
  %v7948 = vadd.f32 0.0, %v7947
  %v7949 = vpop.f32.mrf.mxu0
  %7950 = vmatprep.mubr.bf16.mxu0 0
  %7951 = vmatmul.mubr.bf16.gmra.mxu0 %v7022
  %v7952 = vpop.f32.mrf.mxu0
  %v7953 = vadd.f32 0.0, %v7952
  %v7954 = vpop.f32.mrf.mxu0
  %v7955 = vpop.f32.mrf.mxu0
  %v7956 = vadd.f32 0.0, %v7955
  %v7957 = vpop.f32.mrf.mxu0
  %7958 = vmatprep.mubr.bf16.mxu0 0
  %7959 = vmatmul.mubr.bf16.gmra.mxu0 %v7023
  %v7960 = vpop.f32.mrf.mxu0
  %v7961 = vadd.f32 0.0, %v7960
  %v7962 = vpop.f32.mrf.mxu0
  %v7963 = vpop.f32.mrf.mxu0
  %v7964 = vadd.f32 0.0, %v7963
  %v7965 = vpop.f32.mrf.mxu0
  %7966 = vmatprep.mubr.bf16.mxu0 0
  %7967 = vmatmul.mubr.bf16.gmra.mxu0 %v7024
  %v7968 = vpop.f32.mrf.mxu0
  %v7969 = vadd.f32 0.0, %v7968
  %v7970 = vpop.f32.mrf.mxu0
  %v7971 = vpop.f32.mrf.mxu0
  %v7972 = vadd.f32 0.0, %v7971
  %v7973 = vpop.f32.mrf.mxu0
  %7974 = vmatprep.mubr.bf16.mxu0 0
  %7975 = vmatmul.mubr.bf16.gmra.mxu0 %v7025
  %v7976 = vpop.f32.mrf.mxu0
  %v7977 = vadd.f32 0.0, %v7976
  %v7978 = vpop.f32.mrf.mxu0
  %v7979 = vpop.f32.mrf.mxu0
  %v7980 = vadd.f32 0.0, %v7979
  %v7981 = vpop.f32.mrf.mxu0
  %7982 = vmatprep.mubr.bf16.mxu0 0
  %7983 = vmatmul.mubr.bf16.gmra.mxu0 %v7026
  %v7984 = vpop.f32.mrf.mxu0
  %v7985 = vadd.f32 0.0, %v7984
  %v7986 = vpop.f32.mrf.mxu0
  %v7987 = vpop.f32.mrf.mxu0
  %v7988 = vadd.f32 0.0, %v7987
  %v7989 = vpop.f32.mrf.mxu0
  %7990 = vmatprep.mubr.bf16.mxu0 0
  %7991 = vmatmul.mubr.bf16.gmra.mxu0 %v7027
  %v7992 = vpop.f32.mrf.mxu0
  %v7993 = vadd.f32 0.0, %v7992
  %v7994 = vpop.f32.mrf.mxu0
  %v7995 = vpop.f32.mrf.mxu0
  %v7996 = vadd.f32 0.0, %v7995
  %v7997 = vpop.f32.mrf.mxu0
  %7998 = vmatprep.mubr.bf16.mxu0 0
  %7999 = vmatmul.mubr.bf16.gmra.mxu0 %v7028
  %v8000 = vpop.f32.mrf.mxu0
  %v8001 = vadd.f32 0.0, %v8000
  %v8002 = vpop.f32.mrf.mxu0
  %v8003 = vpop.f32.mrf.mxu0
  %v8004 = vadd.f32 0.0, %v8003
  %v8005 = vpop.f32.mrf.mxu0
  %8006 = vmatprep.mubr.bf16.mxu0 0
  %8007 = vmatmul.mubr.bf16.gmra.mxu0 %v7029
  %v8008 = vpop.f32.mrf.mxu0
  %v8009 = vadd.f32 0.0, %v8008
  %v8010 = vpop.f32.mrf.mxu0
  %v8011 = vpop.f32.mrf.mxu0
  %v8012 = vadd.f32 0.0, %v8011
  %v8013 = vpop.f32.mrf.mxu0
  %8014 = vmatprep.mubr.bf16.mxu0 0
  %8015 = vmatmul.mubr.bf16.gmra.mxu0 %v7030
  %v8016 = vpop.f32.mrf.mxu0
  %v8017 = vadd.f32 0.0, %v8016
  %v8018 = vpop.f32.mrf.mxu0
  %v8019 = vpop.f32.mrf.mxu0
  %v8020 = vadd.f32 0.0, %v8019
  %v8021 = vpop.f32.mrf.mxu0
  %8022 = vmatprep.mubr.bf16.mxu0 0
  %8023 = vmatmul.mubr.bf16.gmra.mxu0 %v7031
  %v8024 = vpop.f32.mrf.mxu0
  %v8025 = vadd.f32 0.0, %v8024
  %v8026 = vpop.f32.mrf.mxu0
  %v8027 = vpop.f32.mrf.mxu0
  %v8028 = vadd.f32 0.0, %v8027
  %v8029 = vpop.f32.mrf.mxu0
  %8030 = vmatprep.mubr.bf16.mxu0 0
  %8031 = vmatmul.mubr.bf16.gmra.mxu0 %v7032
  %v8032 = vpop.f32.mrf.mxu0
  %v8033 = vadd.f32 0.0, %v8032
  %v8034 = vpop.f32.mrf.mxu0
  %v8035 = vpop.f32.mrf.mxu0
  %v8036 = vadd.f32 0.0, %v8035
  %v8037 = vpop.f32.mrf.mxu0
  %8038 = vmatprep.mubr.bf16.mxu0 0
  %8039 = vmatmul.mubr.bf16.gmra.mxu0 %v7033
  %v8040 = vpop.f32.mrf.mxu0
  %v8041 = vadd.f32 0.0, %v8040
  %v8042 = vpop.f32.mrf.mxu0
  %v8043 = vpop.f32.mrf.mxu0
  %v8044 = vadd.f32 0.0, %v8043
  %v8045 = vpop.f32.mrf.mxu0
  %8046 = vmatprep.mubr.bf16.mxu0 0
  %8047 = vmatmul.mubr.bf16.gmra.mxu0 %v7034
  %v8048 = vpop.f32.mrf.mxu0
  %v8049 = vadd.f32 0.0, %v8048
  %v8050 = vpop.f32.mrf.mxu0
  %v8051 = vpop.f32.mrf.mxu0
  %v8052 = vadd.f32 0.0, %v8051
  %v8053 = vpop.f32.mrf.mxu0
  %8054 = vmatprep.mubr.bf16.mxu0 0
  %8055 = vmatmul.mubr.bf16.gmra.mxu0 %v7035
  %v8056 = vpop.f32.mrf.mxu0
  %v8057 = vadd.f32 0.0, %v8056
  %v8058 = vpop.f32.mrf.mxu0
  %v8059 = vpop.f32.mrf.mxu0
  %v8060 = vadd.f32 0.0, %v8059
  %v8061 = vpop.f32.mrf.mxu0
  %8062 = vmatprep.mubr.bf16.mxu0 0
  %8063 = vmatmul.mubr.bf16.gmra.mxu0 %v7036
  %v8064 = vpop.f32.mrf.mxu0
  %v8065 = vadd.f32 0.0, %v8064
  %v8066 = vpop.f32.mrf.mxu0
  %v8067 = vpop.f32.mrf.mxu0
  %v8068 = vadd.f32 0.0, %v8067
  %v8069 = vpop.f32.mrf.mxu0
  %8070 = vmatprep.mubr.bf16.mxu0 0
  %8071 = vmatmul.mubr.bf16.gmra.mxu0 %v7037
  %v8072 = vpop.f32.mrf.mxu0
  %v8073 = vadd.f32 0.0, %v8072
  %v8074 = vpop.f32.mrf.mxu0
  %v8075 = vpop.f32.mrf.mxu0
  %v8076 = vadd.f32 0.0, %v8075
  %v8077 = vpop.f32.mrf.mxu0
  %8078 = vmatprep.mubr.bf16.mxu0 0
  %8079 = vmatmul.mubr.bf16.gmra.mxu0 %v7038
  %v8080 = vpop.f32.mrf.mxu0
  %v8081 = vadd.f32 0.0, %v8080
  %v8082 = vpop.f32.mrf.mxu0
  %v8083 = vpop.f32.mrf.mxu0
  %v8084 = vadd.f32 0.0, %v8083
  %v8085 = vpop.f32.mrf.mxu0
  %8086 = vmatprep.mubr.bf16.mxu0 0
  %8087 = vmatmul.mubr.bf16.gmra.mxu0 %v7039
  %v8088 = vpop.f32.mrf.mxu0
  %v8089 = vadd.f32 0.0, %v8088
  %v8090 = vpop.f32.mrf.mxu0
  %v8091 = vpop.f32.mrf.mxu0
  %v8092 = vadd.f32 0.0, %v8091
  %v8093 = vpop.f32.mrf.mxu0
  %8094 = vmatprep.mubr.bf16.mxu0 0
  %8095 = vmatmul.mubr.bf16.gmra.mxu0 %v7040
  %v8096 = vpop.f32.mrf.mxu0
  %v8097 = vadd.f32 0.0, %v8096
  %v8098 = vpop.f32.mrf.mxu0
  %v8099 = vpop.f32.mrf.mxu0
  %v8100 = vadd.f32 0.0, %v8099
  %v8101 = vpop.f32.mrf.mxu0
  %8102 = vmatprep.mubr.bf16.mxu0 0
  %8103 = vmatmul.mubr.bf16.gmra.mxu0 %v7041
  %v8104 = vpop.f32.mrf.mxu0
  %v8105 = vadd.f32 0.0, %v8104
  %v8106 = vpop.f32.mrf.mxu0
  %v8107 = vpop.f32.mrf.mxu0
  %v8108 = vadd.f32 0.0, %v8107
  %v8109 = vpop.f32.mrf.mxu0
  %8110 = vdwg.mxu0
  %v8111 = vadd.f32 %v7503, %v7857
  %v8112 = vadd.f32 %v7506, %v7860
  %v8113 = vadd.f32 %v7511, %v7865
  %v8114 = vadd.f32 %v7514, %v7868
  %v8115 = vadd.f32 %v7519, %v7873
  %v8116 = vadd.f32 %v7522, %v7876
  %v8117 = vadd.f32 %v7527, %v7881
  %v8118 = vadd.f32 %v7530, %v7884
  %v8119 = vadd.f32 %v7535, %v7889
  %v8120 = vadd.f32 %v7538, %v7892
  %v8121 = vadd.f32 %v7543, %v7897
  %v8122 = vadd.f32 %v7546, %v7900
  %v8123 = vadd.f32 %v7551, %v7905
  %v8124 = vadd.f32 %v7554, %v7908
  %v8125 = vadd.f32 %v7559, %v7913
  %v8126 = vadd.f32 %v7562, %v7916
  %v8127 = vadd.f32 %v7567, %v7921
  %v8128 = vadd.f32 %v7570, %v7924
  %v8129 = vadd.f32 %v7575, %v7929
  %v8130 = vadd.f32 %v7578, %v7932
  %v8131 = vadd.f32 %v7583, %v7937
  %v8132 = vadd.f32 %v7586, %v7940
  %v8133 = vadd.f32 %v7591, %v7945
  %v8134 = vadd.f32 %v7594, %v7948
  %v8135 = vadd.f32 %v7599, %v7953
  %v8136 = vadd.f32 %v7602, %v7956
  %v8137 = vadd.f32 %v7607, %v7961
  %v8138 = vadd.f32 %v7610, %v7964
  %v8139 = vadd.f32 %v7615, %v7969
  %v8140 = vadd.f32 %v7618, %v7972
  %v8141 = vadd.f32 %v7623, %v7977
  %v8142 = vadd.f32 %v7626, %v7980
  %v8143 = vadd.f32 %v7631, %v7985
  %v8144 = vadd.f32 %v7634, %v7988
  %v8145 = vadd.f32 %v7639, %v7993
  %v8146 = vadd.f32 %v7642, %v7996
  %v8147 = vadd.f32 %v7647, %v8001
  %v8148 = vadd.f32 %v7650, %v8004
  %v8149 = vadd.f32 %v7655, %v8009
  %v8150 = vadd.f32 %v7658, %v8012
  %v8151 = vadd.f32 %v7663, %v8017
  %v8152 = vadd.f32 %v7666, %v8020
  %v8153 = vadd.f32 %v7671, %v8025
  %v8154 = vadd.f32 %v7674, %v8028
  %v8155 = vadd.f32 %v7679, %v8033
  %v8156 = vadd.f32 %v7682, %v8036
  %v8157 = vadd.f32 %v7687, %v8041
  %v8158 = vadd.f32 %v7690, %v8044
  %v8159 = vadd.f32 %v7695, %v8049
  %v8160 = vadd.f32 %v7698, %v8052
  %v8161 = vadd.f32 %v7703, %v8057
  %v8162 = vadd.f32 %v7706, %v8060
  %v8163 = vadd.f32 %v7711, %v8065
  %v8164 = vadd.f32 %v7714, %v8068
  %v8165 = vadd.f32 %v7719, %v8073
  %v8166 = vadd.f32 %v7722, %v8076
  %v8167 = vadd.f32 %v7727, %v8081
  %v8168 = vadd.f32 %v7730, %v8084
  %v8169 = vadd.f32 %v7735, %v8089
  %v8170 = vadd.f32 %v7738, %v8092
  %v8171 = vadd.f32 %v7743, %v8097
  %v8172 = vadd.f32 %v7746, %v8100
  %v8173 = vadd.f32 %v7751, %v8105
  %v8174 = vadd.f32 %v7754, %v8108
  %s8175 = scalar_lea.vmem %s3, 192
  %v8176 = vld [vmem:[%s8175] sm:$0xf]
  %v8177 = vld [vmem:[%s8175 + $0x4] sm:$0xf]
  %v8178 = vld [vmem:[%s8175 + $0x8] sm:$0xf]
  %v8179 = vld [vmem:[%s8175 + $0xc] sm:$0xf]
  %v8180 = vld [vmem:[%s8175 + $0x10] sm:$0xf]
  %v8181 = vld [vmem:[%s8175 + $0x14] sm:$0xf]
  %v8182 = vld [vmem:[%s8175 + $0x18] sm:$0xf]
  %v8183 = vld [vmem:[%s8175 + $0x1c] sm:$0xf]
  %v8184 = vld [vmem:[%s8175 + $0x20] sm:$0xf]
  %v8185 = vld [vmem:[%s8175 + $0x24] sm:$0xf]
  %v8186 = vld [vmem:[%s8175 + $0x28] sm:$0xf]
  %v8187 = vld [vmem:[%s8175 + $0x2c] sm:$0xf]
  %v8188 = vld [vmem:[%s8175 + $0x30] sm:$0xf]
  %v8189 = vld [vmem:[%s8175 + $0x34] sm:$0xf]
  %v8190 = vld [vmem:[%s8175 + $0x38] sm:$0xf]
  %v8191 = vld [vmem:[%s8175 + $0x3c] sm:$0xf]
  %v8208 = vunpack.c.l.b16 %v8176
  %v8209 = vunpack.c.l.b16 %v8177
  %v8210 = vunpack.c.l.b16 %v8178
  %v8211 = vunpack.c.l.b16 %v8179
  %v8212 = vunpack.c.l.b16 %v8180
  %v8213 = vunpack.c.l.b16 %v8181
  %v8214 = vunpack.c.l.b16 %v8182
  %v8215 = vunpack.c.l.b16 %v8183
  %v8216 = vunpack.c.l.b16 %v8184
  %v8217 = vunpack.c.l.b16 %v8185
  %v8218 = vunpack.c.l.b16 %v8186
  %v8219 = vunpack.c.l.b16 %v8187
  %v8220 = vunpack.c.l.b16 %v8188
  %v8221 = vunpack.c.l.b16 %v8189
  %v8222 = vunpack.c.l.b16 %v8190
  %v8223 = vunpack.c.l.b16 %v8191
  %v8224 = vpack.c.b16 %v8209, %v8208
  %v8225 = vpack.c.b16 %v8211, %v8210
  %v8226 = vpack.c.b16 %v8213, %v8212
  %v8227 = vpack.c.b16 %v8215, %v8214
  %v8228 = vpack.c.b16 %v8217, %v8216
  %v8229 = vpack.c.b16 %v8219, %v8218
  %v8230 = vpack.c.b16 %v8221, %v8220
  %v8231 = vpack.c.b16 %v8223, %v8222
  %8240 = vmatprep.subr.bf16.mxu0 0
  %8241 = vmatpush1.bf16.msra.mxu0 %v8231
  %8242 = vmatprep.subr.bf16.mxu0 0
  %8243 = vmatpush1.bf16.msra.mxu0 %v8230
  %8244 = vmatprep.subr.bf16.mxu0 0
  %8245 = vmatpush1.bf16.msra.mxu0 %v8229
  %8246 = vmatprep.subr.bf16.mxu0 0
  %8247 = vmatpush1.bf16.msra.mxu0 %v8228
  %8248 = vmatprep.subr.bf16.mxu0 0
  %8249 = vmatpush1.bf16.msra.mxu0 %v8227
  %8250 = vmatprep.subr.bf16.mxu0 0
  %8251 = vmatpush1.bf16.msra.mxu0 %v8226
  %8252 = vmatprep.subr.bf16.mxu0 0
  %8253 = vmatpush1.bf16.msra.mxu0 %v8225
  %8254 = vmatprep.subr.bf16.mxu0 0
  %8255 = vmatpush1.bf16.msra.mxu0 %v8224
  %8256 = vmatprep.subr.bf16.mxu0 0
  %8257 = vmatpush2.bf16.msra.mxu0 0
  %8258 = vmatprep.subr.bf16.mxu0 0
  %8259 = vmatpush2.bf16.msra.mxu0 0
  %8260 = vmatprep.subr.bf16.mxu0 0
  %8261 = vmatpush2.bf16.msra.mxu0 0
  %8262 = vmatprep.subr.bf16.mxu0 0
  %8263 = vmatpush2.bf16.msra.mxu0 0
  %8264 = vmatprep.subr.bf16.mxu0 0
  %8265 = vmatpush2.bf16.msra.mxu0 0
  %8266 = vmatprep.subr.bf16.mxu0 0
  %8267 = vmatpush2.bf16.msra.mxu0 0
  %8268 = vmatprep.subr.bf16.mxu0 0
  %8269 = vmatpush2.bf16.msra.mxu0 0
  %8270 = vmatprep.subr.bf16.mxu0 0
  %8271 = vmatpush2.bf16.msra.mxu0 0
  %8272 = vmatprep.mubr.bf16.mxu0 0
  %8273 = vmatmul.mubr.bf16.gmra.mxu0 %v7014
  %v8274 = vpop.f32.mrf.mxu0
  %v8275 = vadd.f32 0.0, %v8274
  %v8276 = vpop.f32.mrf.mxu0
  %v8277 = vpop.f32.mrf.mxu0
  %v8278 = vadd.f32 0.0, %v8277
  %v8279 = vpop.f32.mrf.mxu0
  %8280 = vmatprep.mubr.bf16.mxu0 0
  %8281 = vmatmul.mubr.bf16.gmra.mxu0 %v7015
  %v8282 = vpop.f32.mrf.mxu0
  %v8283 = vadd.f32 0.0, %v8282
  %v8284 = vpop.f32.mrf.mxu0
  %v8285 = vpop.f32.mrf.mxu0
  %v8286 = vadd.f32 0.0, %v8285
  %v8287 = vpop.f32.mrf.mxu0
  %8288 = vmatprep.mubr.bf16.mxu0 0
  %8289 = vmatmul.mubr.bf16.gmra.mxu0 %v7016
  %v8290 = vpop.f32.mrf.mxu0
  %v8291 = vadd.f32 0.0, %v8290
  %v8292 = vpop.f32.mrf.mxu0
  %v8293 = vpop.f32.mrf.mxu0
  %v8294 = vadd.f32 0.0, %v8293
  %v8295 = vpop.f32.mrf.mxu0
  %8296 = vmatprep.mubr.bf16.mxu0 0
  %8297 = vmatmul.mubr.bf16.gmra.mxu0 %v7017
  %v8298 = vpop.f32.mrf.mxu0
  %v8299 = vadd.f32 0.0, %v8298
  %v8300 = vpop.f32.mrf.mxu0
  %v8301 = vpop.f32.mrf.mxu0
  %v8302 = vadd.f32 0.0, %v8301
  %v8303 = vpop.f32.mrf.mxu0
  %8304 = vmatprep.mubr.bf16.mxu0 0
  %8305 = vmatmul.mubr.bf16.gmra.mxu0 %v7018
  %v8306 = vpop.f32.mrf.mxu0
  %v8307 = vadd.f32 0.0, %v8306
  %v8308 = vpop.f32.mrf.mxu0
  %v8309 = vpop.f32.mrf.mxu0
  %v8310 = vadd.f32 0.0, %v8309
  %v8311 = vpop.f32.mrf.mxu0
  %8312 = vmatprep.mubr.bf16.mxu0 0
  %8313 = vmatmul.mubr.bf16.gmra.mxu0 %v7019
  %v8314 = vpop.f32.mrf.mxu0
  %v8315 = vadd.f32 0.0, %v8314
  %v8316 = vpop.f32.mrf.mxu0
  %v8317 = vpop.f32.mrf.mxu0
  %v8318 = vadd.f32 0.0, %v8317
  %v8319 = vpop.f32.mrf.mxu0
  %8320 = vmatprep.mubr.bf16.mxu0 0
  %8321 = vmatmul.mubr.bf16.gmra.mxu0 %v7020
  %v8322 = vpop.f32.mrf.mxu0
  %v8323 = vadd.f32 0.0, %v8322
  %v8324 = vpop.f32.mrf.mxu0
  %v8325 = vpop.f32.mrf.mxu0
  %v8326 = vadd.f32 0.0, %v8325
  %v8327 = vpop.f32.mrf.mxu0
  %8328 = vmatprep.mubr.bf16.mxu0 0
  %8329 = vmatmul.mubr.bf16.gmra.mxu0 %v7021
  %v8330 = vpop.f32.mrf.mxu0
  %v8331 = vadd.f32 0.0, %v8330
  %v8332 = vpop.f32.mrf.mxu0
  %v8333 = vpop.f32.mrf.mxu0
  %v8334 = vadd.f32 0.0, %v8333
  %v8335 = vpop.f32.mrf.mxu0
  %8336 = vmatprep.mubr.bf16.mxu0 0
  %8337 = vmatmul.mubr.bf16.gmra.mxu0 %v7022
  %v8338 = vpop.f32.mrf.mxu0
  %v8339 = vadd.f32 0.0, %v8338
  %v8340 = vpop.f32.mrf.mxu0
  %v8341 = vpop.f32.mrf.mxu0
  %v8342 = vadd.f32 0.0, %v8341
  %v8343 = vpop.f32.mrf.mxu0
  %8344 = vmatprep.mubr.bf16.mxu0 0
  %8345 = vmatmul.mubr.bf16.gmra.mxu0 %v7023
  %v8346 = vpop.f32.mrf.mxu0
  %v8347 = vadd.f32 0.0, %v8346
  %v8348 = vpop.f32.mrf.mxu0
  %v8349 = vpop.f32.mrf.mxu0
  %v8350 = vadd.f32 0.0, %v8349
  %v8351 = vpop.f32.mrf.mxu0
  %8352 = vmatprep.mubr.bf16.mxu0 0
  %8353 = vmatmul.mubr.bf16.gmra.mxu0 %v7024
  %v8354 = vpop.f32.mrf.mxu0
  %v8355 = vadd.f32 0.0, %v8354
  %v8356 = vpop.f32.mrf.mxu0
  %v8357 = vpop.f32.mrf.mxu0
  %v8358 = vadd.f32 0.0, %v8357
  %v8359 = vpop.f32.mrf.mxu0
  %8360 = vmatprep.mubr.bf16.mxu0 0
  %8361 = vmatmul.mubr.bf16.gmra.mxu0 %v7025
  %v8362 = vpop.f32.mrf.mxu0
  %v8363 = vadd.f32 0.0, %v8362
  %v8364 = vpop.f32.mrf.mxu0
  %v8365 = vpop.f32.mrf.mxu0
  %v8366 = vadd.f32 0.0, %v8365
  %v8367 = vpop.f32.mrf.mxu0
  %8368 = vmatprep.mubr.bf16.mxu0 0
  %8369 = vmatmul.mubr.bf16.gmra.mxu0 %v7026
  %v8370 = vpop.f32.mrf.mxu0
  %v8371 = vadd.f32 0.0, %v8370
  %v8372 = vpop.f32.mrf.mxu0
  %v8373 = vpop.f32.mrf.mxu0
  %v8374 = vadd.f32 0.0, %v8373
  %v8375 = vpop.f32.mrf.mxu0
  %8376 = vmatprep.mubr.bf16.mxu0 0
  %8377 = vmatmul.mubr.bf16.gmra.mxu0 %v7027
  %v8378 = vpop.f32.mrf.mxu0
  %v8379 = vadd.f32 0.0, %v8378
  %v8380 = vpop.f32.mrf.mxu0
  %v8381 = vpop.f32.mrf.mxu0
  %v8382 = vadd.f32 0.0, %v8381
  %v8383 = vpop.f32.mrf.mxu0
  %8384 = vmatprep.mubr.bf16.mxu0 0
  %8385 = vmatmul.mubr.bf16.gmra.mxu0 %v7028
  %v8386 = vpop.f32.mrf.mxu0
  %v8387 = vadd.f32 0.0, %v8386
  %v8388 = vpop.f32.mrf.mxu0
  %v8389 = vpop.f32.mrf.mxu0
  %v8390 = vadd.f32 0.0, %v8389
  %v8391 = vpop.f32.mrf.mxu0
  %8392 = vmatprep.mubr.bf16.mxu0 0
  %8393 = vmatmul.mubr.bf16.gmra.mxu0 %v7029
  %v8394 = vpop.f32.mrf.mxu0
  %v8395 = vadd.f32 0.0, %v8394
  %v8396 = vpop.f32.mrf.mxu0
  %v8397 = vpop.f32.mrf.mxu0
  %v8398 = vadd.f32 0.0, %v8397
  %v8399 = vpop.f32.mrf.mxu0
  %8400 = vmatprep.mubr.bf16.mxu0 0
  %8401 = vmatmul.mubr.bf16.gmra.mxu0 %v7030
  %v8402 = vpop.f32.mrf.mxu0
  %v8403 = vadd.f32 0.0, %v8402
  %v8404 = vpop.f32.mrf.mxu0
  %v8405 = vpop.f32.mrf.mxu0
  %v8406 = vadd.f32 0.0, %v8405
  %v8407 = vpop.f32.mrf.mxu0
  %8408 = vmatprep.mubr.bf16.mxu0 0
  %8409 = vmatmul.mubr.bf16.gmra.mxu0 %v7031
  %v8410 = vpop.f32.mrf.mxu0
  %v8411 = vadd.f32 0.0, %v8410
  %v8412 = vpop.f32.mrf.mxu0
  %v8413 = vpop.f32.mrf.mxu0
  %v8414 = vadd.f32 0.0, %v8413
  %v8415 = vpop.f32.mrf.mxu0
  %8416 = vmatprep.mubr.bf16.mxu0 0
  %8417 = vmatmul.mubr.bf16.gmra.mxu0 %v7032
  %v8418 = vpop.f32.mrf.mxu0
  %v8419 = vadd.f32 0.0, %v8418
  %v8420 = vpop.f32.mrf.mxu0
  %v8421 = vpop.f32.mrf.mxu0
  %v8422 = vadd.f32 0.0, %v8421
  %v8423 = vpop.f32.mrf.mxu0
  %8424 = vmatprep.mubr.bf16.mxu0 0
  %8425 = vmatmul.mubr.bf16.gmra.mxu0 %v7033
  %v8426 = vpop.f32.mrf.mxu0
  %v8427 = vadd.f32 0.0, %v8426
  %v8428 = vpop.f32.mrf.mxu0
  %v8429 = vpop.f32.mrf.mxu0
  %v8430 = vadd.f32 0.0, %v8429
  %v8431 = vpop.f32.mrf.mxu0
  %8432 = vmatprep.mubr.bf16.mxu0 0
  %8433 = vmatmul.mubr.bf16.gmra.mxu0 %v7034
  %v8434 = vpop.f32.mrf.mxu0
  %v8435 = vadd.f32 0.0, %v8434
  %v8436 = vpop.f32.mrf.mxu0
  %v8437 = vpop.f32.mrf.mxu0
  %v8438 = vadd.f32 0.0, %v8437
  %v8439 = vpop.f32.mrf.mxu0
  %8440 = vmatprep.mubr.bf16.mxu0 0
  %8441 = vmatmul.mubr.bf16.gmra.mxu0 %v7035
  %v8442 = vpop.f32.mrf.mxu0
  %v8443 = vadd.f32 0.0, %v8442
  %v8444 = vpop.f32.mrf.mxu0
  %v8445 = vpop.f32.mrf.mxu0
  %v8446 = vadd.f32 0.0, %v8445
  %v8447 = vpop.f32.mrf.mxu0
  %8448 = vmatprep.mubr.bf16.mxu0 0
  %8449 = vmatmul.mubr.bf16.gmra.mxu0 %v7036
  %v8450 = vpop.f32.mrf.mxu0
  %v8451 = vadd.f32 0.0, %v8450
  %v8452 = vpop.f32.mrf.mxu0
  %v8453 = vpop.f32.mrf.mxu0
  %v8454 = vadd.f32 0.0, %v8453
  %v8455 = vpop.f32.mrf.mxu0
  %8456 = vmatprep.mubr.bf16.mxu0 0
  %8457 = vmatmul.mubr.bf16.gmra.mxu0 %v7037
  %v8458 = vpop.f32.mrf.mxu0
  %v8459 = vadd.f32 0.0, %v8458
  %v8460 = vpop.f32.mrf.mxu0
  %v8461 = vpop.f32.mrf.mxu0
  %v8462 = vadd.f32 0.0, %v8461
  %v8463 = vpop.f32.mrf.mxu0
  %8464 = vmatprep.mubr.bf16.mxu0 0
  %8465 = vmatmul.mubr.bf16.gmra.mxu0 %v7038
  %v8466 = vpop.f32.mrf.mxu0
  %v8467 = vadd.f32 0.0, %v8466
  %v8468 = vpop.f32.mrf.mxu0
  %v8469 = vpop.f32.mrf.mxu0
  %v8470 = vadd.f32 0.0, %v8469
  %v8471 = vpop.f32.mrf.mxu0
  %8472 = vmatprep.mubr.bf16.mxu0 0
  %8473 = vmatmul.mubr.bf16.gmra.mxu0 %v7039
  %v8474 = vpop.f32.mrf.mxu0
  %v8475 = vadd.f32 0.0, %v8474
  %v8476 = vpop.f32.mrf.mxu0
  %v8477 = vpop.f32.mrf.mxu0
  %v8478 = vadd.f32 0.0, %v8477
  %v8479 = vpop.f32.mrf.mxu0
  %8480 = vmatprep.mubr.bf16.mxu0 0
  %8481 = vmatmul.mubr.bf16.gmra.mxu0 %v7040
  %v8482 = vpop.f32.mrf.mxu0
  %v8483 = vadd.f32 0.0, %v8482
  %v8484 = vpop.f32.mrf.mxu0
  %v8485 = vpop.f32.mrf.mxu0
  %v8486 = vadd.f32 0.0, %v8485
  %v8487 = vpop.f32.mrf.mxu0
  %8488 = vmatprep.mubr.bf16.mxu0 0
  %8489 = vmatmul.mubr.bf16.gmra.mxu0 %v7041
  %v8490 = vpop.f32.mrf.mxu0
  %v8491 = vadd.f32 0.0, %v8490
  %v8492 = vpop.f32.mrf.mxu0
  %v8493 = vpop.f32.mrf.mxu0
  %v8494 = vadd.f32 0.0, %v8493
  %v8495 = vpop.f32.mrf.mxu0
  %8496 = vmatprep.mubr.bf16.mxu0 0
  %8497 = vmatmul.mubr.bf16.gmra.mxu0 %v7042
  %v8498 = vpop.f32.mrf.mxu0
  %v8499 = vadd.f32 0.0, %v8498
  %v8500 = vpop.f32.mrf.mxu0
  %v8501 = vpop.f32.mrf.mxu0
  %v8502 = vadd.f32 0.0, %v8501
  %v8503 = vpop.f32.mrf.mxu0
  %8504 = vmatprep.mubr.bf16.mxu0 0
  %8505 = vmatmul.mubr.bf16.gmra.mxu0 %v7043
  %v8506 = vpop.f32.mrf.mxu0
  %v8507 = vadd.f32 0.0, %v8506
  %v8508 = vpop.f32.mrf.mxu0
  %v8509 = vpop.f32.mrf.mxu0
  %v8510 = vadd.f32 0.0, %v8509
  %v8511 = vpop.f32.mrf.mxu0
  %8512 = vmatprep.mubr.bf16.mxu0 0
  %8513 = vmatmul.mubr.bf16.gmra.mxu0 %v7044
  %v8514 = vpop.f32.mrf.mxu0
  %v8515 = vadd.f32 0.0, %v8514
  %v8516 = vpop.f32.mrf.mxu0
  %v8517 = vpop.f32.mrf.mxu0
  %v8518 = vadd.f32 0.0, %v8517
  %v8519 = vpop.f32.mrf.mxu0
  %8520 = vmatprep.mubr.bf16.mxu0 0
  %8521 = vmatmul.mubr.bf16.gmra.mxu0 %v7045
  %v8522 = vpop.f32.mrf.mxu0
  %v8523 = vadd.f32 0.0, %v8522
  %v8524 = vpop.f32.mrf.mxu0
  %v8525 = vpop.f32.mrf.mxu0
  %v8526 = vadd.f32 0.0, %v8525
  %v8527 = vpop.f32.mrf.mxu0
  %8528 = vdwg.mxu0
  %v8529 = vadd.f32 %v8111, %v8275
  %v8530 = vadd.f32 %v8112, %v8278
  %v8531 = vadd.f32 %v8113, %v8283
  %v8532 = vadd.f32 %v8114, %v8286
  %v8533 = vadd.f32 %v8115, %v8291
  %v8534 = vadd.f32 %v8116, %v8294
  %v8535 = vadd.f32 %v8117, %v8299
  %v8536 = vadd.f32 %v8118, %v8302
  %v8537 = vadd.f32 %v8119, %v8307
  %v8538 = vadd.f32 %v8120, %v8310
  %v8539 = vadd.f32 %v8121, %v8315
  %v8540 = vadd.f32 %v8122, %v8318
  %v8541 = vadd.f32 %v8123, %v8323
  %v8542 = vadd.f32 %v8124, %v8326
  %v8543 = vadd.f32 %v8125, %v8331
  %v8544 = vadd.f32 %v8126, %v8334
  %v8545 = vadd.f32 %v8127, %v8339
  %v8546 = vadd.f32 %v8128, %v8342
  %v8547 = vadd.f32 %v8129, %v8347
  %v8548 = vadd.f32 %v8130, %v8350
  %v8549 = vadd.f32 %v8131, %v8355
  %v8550 = vadd.f32 %v8132, %v8358
  %v8551 = vadd.f32 %v8133, %v8363
  %v8552 = vadd.f32 %v8134, %v8366
  %v8553 = vadd.f32 %v8135, %v8371
  %v8554 = vadd.f32 %v8136, %v8374
  %v8555 = vadd.f32 %v8137, %v8379
  %v8556 = vadd.f32 %v8138, %v8382
  %v8557 = vadd.f32 %v8139, %v8387
  %v8558 = vadd.f32 %v8140, %v8390
  %v8559 = vadd.f32 %v8141, %v8395
  %v8560 = vadd.f32 %v8142, %v8398
  %v8561 = vadd.f32 %v8143, %v8403
  %v8562 = vadd.f32 %v8144, %v8406
  %v8563 = vadd.f32 %v8145, %v8411
  %v8564 = vadd.f32 %v8146, %v8414
  %v8565 = vadd.f32 %v8147, %v8419
  %v8566 = vadd.f32 %v8148, %v8422
  %v8567 = vadd.f32 %v8149, %v8427
  %v8568 = vadd.f32 %v8150, %v8430
  %v8569 = vadd.f32 %v8151, %v8435
  %v8570 = vadd.f32 %v8152, %v8438
  %v8571 = vadd.f32 %v8153, %v8443
  %v8572 = vadd.f32 %v8154, %v8446
  %v8573 = vadd.f32 %v8155, %v8451
  %v8574 = vadd.f32 %v8156, %v8454
  %v8575 = vadd.f32 %v8157, %v8459
  %v8576 = vadd.f32 %v8158, %v8462
  %v8577 = vadd.f32 %v8159, %v8467
  %v8578 = vadd.f32 %v8160, %v8470
  %v8579 = vadd.f32 %v8161, %v8475
  %v8580 = vadd.f32 %v8162, %v8478
  %v8581 = vadd.f32 %v8163, %v8483
  %v8582 = vadd.f32 %v8164, %v8486
  %v8583 = vadd.f32 %v8165, %v8491
  %v8584 = vadd.f32 %v8166, %v8494
  %v8585 = vadd.f32 %v8167, %v8499
  %v8586 = vadd.f32 %v8168, %v8502
  %v8587 = vadd.f32 %v8169, %v8507
  %v8588 = vadd.f32 %v8170, %v8510
  %v8589 = vadd.f32 %v8171, %v8515
  %v8590 = vadd.f32 %v8172, %v8518
  %v8591 = vadd.f32 %v8173, %v8523
  %v8592 = vadd.f32 %v8174, %v8526
  %s8593 = scalar_lea.vmem %s3, 256
  %v8594 = vld [vmem:[%s8593] sm:$0xf]
  %v8595 = vld [vmem:[%s8593 + $0x4] sm:$0xf]
  %v8596 = vld [vmem:[%s8593 + $0x8] sm:$0xf]
  %v8597 = vld [vmem:[%s8593 + $0xc] sm:$0xf]
  %v8598 = vld [vmem:[%s8593 + $0x10] sm:$0xf]
  %v8599 = vld [vmem:[%s8593 + $0x14] sm:$0xf]
  %v8600 = vld [vmem:[%s8593 + $0x18] sm:$0xf]
  %v8601 = vld [vmem:[%s8593 + $0x1c] sm:$0xf]
  %v8602 = vld [vmem:[%s8593 + $0x20] sm:$0xf]
  %v8603 = vld [vmem:[%s8593 + $0x24] sm:$0xf]
  %v8604 = vld [vmem:[%s8593 + $0x28] sm:$0xf]
  %v8605 = vld [vmem:[%s8593 + $0x2c] sm:$0xf]
  %v8606 = vld [vmem:[%s8593 + $0x30] sm:$0xf]
  %v8607 = vld [vmem:[%s8593 + $0x34] sm:$0xf]
  %v8608 = vld [vmem:[%s8593 + $0x38] sm:$0xf]
  %v8609 = vld [vmem:[%s8593 + $0x3c] sm:$0xf]
  %v8626 = vunpack.c.l.b16 %v8594
  %v8627 = vunpack.c.l.b16 %v8595
  %v8628 = vunpack.c.l.b16 %v8596
  %v8629 = vunpack.c.l.b16 %v8597
  %v8630 = vunpack.c.l.b16 %v8598
  %v8631 = vunpack.c.l.b16 %v8599
  %v8632 = vunpack.c.l.b16 %v8600
  %v8633 = vunpack.c.l.b16 %v8601
  %v8634 = vunpack.c.l.b16 %v8602
  %v8635 = vunpack.c.l.b16 %v8603
  %v8636 = vunpack.c.l.b16 %v8604
  %v8637 = vunpack.c.l.b16 %v8605
  %v8638 = vunpack.c.l.b16 %v8606
  %v8639 = vunpack.c.l.b16 %v8607
  %v8640 = vunpack.c.l.b16 %v8608
  %v8641 = vunpack.c.l.b16 %v8609
  %v8642 = vpack.c.b16 %v8627, %v8626
  %v8643 = vpack.c.b16 %v8629, %v8628
  %v8644 = vpack.c.b16 %v8631, %v8630
  %v8645 = vpack.c.b16 %v8633, %v8632
  %v8646 = vpack.c.b16 %v8635, %v8634
  %v8647 = vpack.c.b16 %v8637, %v8636
  %v8648 = vpack.c.b16 %v8639, %v8638
  %v8649 = vpack.c.b16 %v8641, %v8640
  %8658 = vmatprep.subr.bf16.mxu0 0
  %8659 = vmatpush1.bf16.msra.mxu0 %v8649
  %8660 = vmatprep.subr.bf16.mxu0 0
  %8661 = vmatpush1.bf16.msra.mxu0 %v8648
  %8662 = vmatprep.subr.bf16.mxu0 0
  %8663 = vmatpush1.bf16.msra.mxu0 %v8647
  %8664 = vmatprep.subr.bf16.mxu0 0
  %8665 = vmatpush1.bf16.msra.mxu0 %v8646
  %8666 = vmatprep.subr.bf16.mxu0 0
  %8667 = vmatpush1.bf16.msra.mxu0 %v8645
  %8668 = vmatprep.subr.bf16.mxu0 0
  %8669 = vmatpush1.bf16.msra.mxu0 %v8644
  %8670 = vmatprep.subr.bf16.mxu0 0
  %8671 = vmatpush1.bf16.msra.mxu0 %v8643
  %8672 = vmatprep.subr.bf16.mxu0 0
  %8673 = vmatpush1.bf16.msra.mxu0 %v8642
  %8674 = vmatprep.subr.bf16.mxu0 0
  %8675 = vmatpush2.bf16.msra.mxu0 0
  %8676 = vmatprep.subr.bf16.mxu0 0
  %8677 = vmatpush2.bf16.msra.mxu0 0
  %8678 = vmatprep.subr.bf16.mxu0 0
  %8679 = vmatpush2.bf16.msra.mxu0 0
  %8680 = vmatprep.subr.bf16.mxu0 0
  %8681 = vmatpush2.bf16.msra.mxu0 0
  %8682 = vmatprep.subr.bf16.mxu0 0
  %8683 = vmatpush2.bf16.msra.mxu0 0
  %8684 = vmatprep.subr.bf16.mxu0 0
  %8685 = vmatpush2.bf16.msra.mxu0 0
  %8686 = vmatprep.subr.bf16.mxu0 0
  %8687 = vmatpush2.bf16.msra.mxu0 0
  %8688 = vmatprep.subr.bf16.mxu0 0
  %8689 = vmatpush2.bf16.msra.mxu0 0
  %8690 = vmatprep.mubr.bf16.mxu0 0
  %8691 = vmatmul.mubr.bf16.gmra.mxu0 %v7018
  %v8692 = vpop.f32.mrf.mxu0
  %v8693 = vadd.f32 0.0, %v8692
  %v8694 = vpop.f32.mrf.mxu0
  %v8695 = vpop.f32.mrf.mxu0
  %v8696 = vadd.f32 0.0, %v8695
  %v8697 = vpop.f32.mrf.mxu0
  %8698 = vmatprep.mubr.bf16.mxu0 0
  %8699 = vmatmul.mubr.bf16.gmra.mxu0 %v7019
  %v8700 = vpop.f32.mrf.mxu0
  %v8701 = vadd.f32 0.0, %v8700
  %v8702 = vpop.f32.mrf.mxu0
  %v8703 = vpop.f32.mrf.mxu0
  %v8704 = vadd.f32 0.0, %v8703
  %v8705 = vpop.f32.mrf.mxu0
  %8706 = vmatprep.mubr.bf16.mxu0 0
  %8707 = vmatmul.mubr.bf16.gmra.mxu0 %v7020
  %v8708 = vpop.f32.mrf.mxu0
  %v8709 = vadd.f32 0.0, %v8708
  %v8710 = vpop.f32.mrf.mxu0
  %v8711 = vpop.f32.mrf.mxu0
  %v8712 = vadd.f32 0.0, %v8711
  %v8713 = vpop.f32.mrf.mxu0
  %8714 = vmatprep.mubr.bf16.mxu0 0
  %8715 = vmatmul.mubr.bf16.gmra.mxu0 %v7021
  %v8716 = vpop.f32.mrf.mxu0
  %v8717 = vadd.f32 0.0, %v8716
  %v8718 = vpop.f32.mrf.mxu0
  %v8719 = vpop.f32.mrf.mxu0
  %v8720 = vadd.f32 0.0, %v8719
  %v8721 = vpop.f32.mrf.mxu0
  %8722 = vmatprep.mubr.bf16.mxu0 0
  %8723 = vmatmul.mubr.bf16.gmra.mxu0 %v7022
  %v8724 = vpop.f32.mrf.mxu0
  %v8725 = vadd.f32 0.0, %v8724
  %v8726 = vpop.f32.mrf.mxu0
  %v8727 = vpop.f32.mrf.mxu0
  %v8728 = vadd.f32 0.0, %v8727
  %v8729 = vpop.f32.mrf.mxu0
  %8730 = vmatprep.mubr.bf16.mxu0 0
  %8731 = vmatmul.mubr.bf16.gmra.mxu0 %v7023
  %v8732 = vpop.f32.mrf.mxu0
  %v8733 = vadd.f32 0.0, %v8732
  %v8734 = vpop.f32.mrf.mxu0
  %v8735 = vpop.f32.mrf.mxu0
  %v8736 = vadd.f32 0.0, %v8735
  %v8737 = vpop.f32.mrf.mxu0
  %8738 = vmatprep.mubr.bf16.mxu0 0
  %8739 = vmatmul.mubr.bf16.gmra.mxu0 %v7024
  %v8740 = vpop.f32.mrf.mxu0
  %v8741 = vadd.f32 0.0, %v8740
  %v8742 = vpop.f32.mrf.mxu0
  %v8743 = vpop.f32.mrf.mxu0
  %v8744 = vadd.f32 0.0, %v8743
  %v8745 = vpop.f32.mrf.mxu0
  %8746 = vmatprep.mubr.bf16.mxu0 0
  %8747 = vmatmul.mubr.bf16.gmra.mxu0 %v7025
  %v8748 = vpop.f32.mrf.mxu0
  %v8749 = vadd.f32 0.0, %v8748
  %v8750 = vpop.f32.mrf.mxu0
  %v8751 = vpop.f32.mrf.mxu0
  %v8752 = vadd.f32 0.0, %v8751
  %v8753 = vpop.f32.mrf.mxu0
  %8754 = vmatprep.mubr.bf16.mxu0 0
  %8755 = vmatmul.mubr.bf16.gmra.mxu0 %v7026
  %v8756 = vpop.f32.mrf.mxu0
  %v8757 = vadd.f32 0.0, %v8756
  %v8758 = vpop.f32.mrf.mxu0
  %v8759 = vpop.f32.mrf.mxu0
  %v8760 = vadd.f32 0.0, %v8759
  %v8761 = vpop.f32.mrf.mxu0
  %8762 = vmatprep.mubr.bf16.mxu0 0
  %8763 = vmatmul.mubr.bf16.gmra.mxu0 %v7027
  %v8764 = vpop.f32.mrf.mxu0
  %v8765 = vadd.f32 0.0, %v8764
  %v8766 = vpop.f32.mrf.mxu0
  %v8767 = vpop.f32.mrf.mxu0
  %v8768 = vadd.f32 0.0, %v8767
  %v8769 = vpop.f32.mrf.mxu0
  %8770 = vmatprep.mubr.bf16.mxu0 0
  %8771 = vmatmul.mubr.bf16.gmra.mxu0 %v7028
  %v8772 = vpop.f32.mrf.mxu0
  %v8773 = vadd.f32 0.0, %v8772
  %v8774 = vpop.f32.mrf.mxu0
  %v8775 = vpop.f32.mrf.mxu0
  %v8776 = vadd.f32 0.0, %v8775
  %v8777 = vpop.f32.mrf.mxu0
  %8778 = vmatprep.mubr.bf16.mxu0 0
  %8779 = vmatmul.mubr.bf16.gmra.mxu0 %v7029
  %v8780 = vpop.f32.mrf.mxu0
  %v8781 = vadd.f32 0.0, %v8780
  %v8782 = vpop.f32.mrf.mxu0
  %v8783 = vpop.f32.mrf.mxu0
  %v8784 = vadd.f32 0.0, %v8783
  %v8785 = vpop.f32.mrf.mxu0
  %8786 = vmatprep.mubr.bf16.mxu0 0
  %8787 = vmatmul.mubr.bf16.gmra.mxu0 %v7030
  %v8788 = vpop.f32.mrf.mxu0
  %v8789 = vadd.f32 0.0, %v8788
  %v8790 = vpop.f32.mrf.mxu0
  %v8791 = vpop.f32.mrf.mxu0
  %v8792 = vadd.f32 0.0, %v8791
  %v8793 = vpop.f32.mrf.mxu0
  %8794 = vmatprep.mubr.bf16.mxu0 0
  %8795 = vmatmul.mubr.bf16.gmra.mxu0 %v7031
  %v8796 = vpop.f32.mrf.mxu0
  %v8797 = vadd.f32 0.0, %v8796
  %v8798 = vpop.f32.mrf.mxu0
  %v8799 = vpop.f32.mrf.mxu0
  %v8800 = vadd.f32 0.0, %v8799
  %v8801 = vpop.f32.mrf.mxu0
  %8802 = vmatprep.mubr.bf16.mxu0 0
  %8803 = vmatmul.mubr.bf16.gmra.mxu0 %v7032
  %v8804 = vpop.f32.mrf.mxu0
  %v8805 = vadd.f32 0.0, %v8804
  %v8806 = vpop.f32.mrf.mxu0
  %v8807 = vpop.f32.mrf.mxu0
  %v8808 = vadd.f32 0.0, %v8807
  %v8809 = vpop.f32.mrf.mxu0
  %8810 = vmatprep.mubr.bf16.mxu0 0
  %8811 = vmatmul.mubr.bf16.gmra.mxu0 %v7033
  %v8812 = vpop.f32.mrf.mxu0
  %v8813 = vadd.f32 0.0, %v8812
  %v8814 = vpop.f32.mrf.mxu0
  %v8815 = vpop.f32.mrf.mxu0
  %v8816 = vadd.f32 0.0, %v8815
  %v8817 = vpop.f32.mrf.mxu0
  %8818 = vmatprep.mubr.bf16.mxu0 0
  %8819 = vmatmul.mubr.bf16.gmra.mxu0 %v7034
  %v8820 = vpop.f32.mrf.mxu0
  %v8821 = vadd.f32 0.0, %v8820
  %v8822 = vpop.f32.mrf.mxu0
  %v8823 = vpop.f32.mrf.mxu0
  %v8824 = vadd.f32 0.0, %v8823
  %v8825 = vpop.f32.mrf.mxu0
  %8826 = vmatprep.mubr.bf16.mxu0 0
  %8827 = vmatmul.mubr.bf16.gmra.mxu0 %v7035
  %v8828 = vpop.f32.mrf.mxu0
  %v8829 = vadd.f32 0.0, %v8828
  %v8830 = vpop.f32.mrf.mxu0
  %v8831 = vpop.f32.mrf.mxu0
  %v8832 = vadd.f32 0.0, %v8831
  %v8833 = vpop.f32.mrf.mxu0
  %8834 = vmatprep.mubr.bf16.mxu0 0
  %8835 = vmatmul.mubr.bf16.gmra.mxu0 %v7036
  %v8836 = vpop.f32.mrf.mxu0
  %v8837 = vadd.f32 0.0, %v8836
  %v8838 = vpop.f32.mrf.mxu0
  %v8839 = vpop.f32.mrf.mxu0
  %v8840 = vadd.f32 0.0, %v8839
  %v8841 = vpop.f32.mrf.mxu0
  %8842 = vmatprep.mubr.bf16.mxu0 0
  %8843 = vmatmul.mubr.bf16.gmra.mxu0 %v7037
  %v8844 = vpop.f32.mrf.mxu0
  %v8845 = vadd.f32 0.0, %v8844
  %v8846 = vpop.f32.mrf.mxu0
  %v8847 = vpop.f32.mrf.mxu0
  %v8848 = vadd.f32 0.0, %v8847
  %v8849 = vpop.f32.mrf.mxu0
  %8850 = vmatprep.mubr.bf16.mxu0 0
  %8851 = vmatmul.mubr.bf16.gmra.mxu0 %v7038
  %v8852 = vpop.f32.mrf.mxu0
  %v8853 = vadd.f32 0.0, %v8852
  %v8854 = vpop.f32.mrf.mxu0
  %v8855 = vpop.f32.mrf.mxu0
  %v8856 = vadd.f32 0.0, %v8855
  %v8857 = vpop.f32.mrf.mxu0
  %8858 = vmatprep.mubr.bf16.mxu0 0
  %8859 = vmatmul.mubr.bf16.gmra.mxu0 %v7039
  %v8860 = vpop.f32.mrf.mxu0
  %v8861 = vadd.f32 0.0, %v8860
  %v8862 = vpop.f32.mrf.mxu0
  %v8863 = vpop.f32.mrf.mxu0
  %v8864 = vadd.f32 0.0, %v8863
  %v8865 = vpop.f32.mrf.mxu0
  %8866 = vmatprep.mubr.bf16.mxu0 0
  %8867 = vmatmul.mubr.bf16.gmra.mxu0 %v7040
  %v8868 = vpop.f32.mrf.mxu0
  %v8869 = vadd.f32 0.0, %v8868
  %v8870 = vpop.f32.mrf.mxu0
  %v8871 = vpop.f32.mrf.mxu0
  %v8872 = vadd.f32 0.0, %v8871
  %v8873 = vpop.f32.mrf.mxu0
  %8874 = vmatprep.mubr.bf16.mxu0 0
  %8875 = vmatmul.mubr.bf16.gmra.mxu0 %v7041
  %v8876 = vpop.f32.mrf.mxu0
  %v8877 = vadd.f32 0.0, %v8876
  %v8878 = vpop.f32.mrf.mxu0
  %v8879 = vpop.f32.mrf.mxu0
  %v8880 = vadd.f32 0.0, %v8879
  %v8881 = vpop.f32.mrf.mxu0
  %8882 = vmatprep.mubr.bf16.mxu0 0
  %8883 = vmatmul.mubr.bf16.gmra.mxu0 %v7042
  %v8884 = vpop.f32.mrf.mxu0
  %v8885 = vadd.f32 0.0, %v8884
  %v8886 = vpop.f32.mrf.mxu0
  %v8887 = vpop.f32.mrf.mxu0
  %v8888 = vadd.f32 0.0, %v8887
  %v8889 = vpop.f32.mrf.mxu0
  %8890 = vmatprep.mubr.bf16.mxu0 0
  %8891 = vmatmul.mubr.bf16.gmra.mxu0 %v7043
  %v8892 = vpop.f32.mrf.mxu0
  %v8893 = vadd.f32 0.0, %v8892
  %v8894 = vpop.f32.mrf.mxu0
  %v8895 = vpop.f32.mrf.mxu0
  %v8896 = vadd.f32 0.0, %v8895
  %v8897 = vpop.f32.mrf.mxu0
  %8898 = vmatprep.mubr.bf16.mxu0 0
  %8899 = vmatmul.mubr.bf16.gmra.mxu0 %v7044
  %v8900 = vpop.f32.mrf.mxu0
  %v8901 = vadd.f32 0.0, %v8900
  %v8902 = vpop.f32.mrf.mxu0
  %v8903 = vpop.f32.mrf.mxu0
  %v8904 = vadd.f32 0.0, %v8903
  %v8905 = vpop.f32.mrf.mxu0
  %8906 = vmatprep.mubr.bf16.mxu0 0
  %8907 = vmatmul.mubr.bf16.gmra.mxu0 %v7045
  %v8908 = vpop.f32.mrf.mxu0
  %v8909 = vadd.f32 0.0, %v8908
  %v8910 = vpop.f32.mrf.mxu0
  %v8911 = vpop.f32.mrf.mxu0
  %v8912 = vadd.f32 0.0, %v8911
  %v8913 = vpop.f32.mrf.mxu0
  %8914 = vmatprep.mubr.bf16.mxu0 0
  %8915 = vmatmul.mubr.bf16.gmra.mxu0 %v7046
  %v8916 = vpop.f32.mrf.mxu0
  %v8917 = vadd.f32 0.0, %v8916
  %v8918 = vpop.f32.mrf.mxu0
  %v8919 = vpop.f32.mrf.mxu0
  %v8920 = vadd.f32 0.0, %v8919
  %v8921 = vpop.f32.mrf.mxu0
  %8922 = vmatprep.mubr.bf16.mxu0 0
  %8923 = vmatmul.mubr.bf16.gmra.mxu0 %v7047
  %v8924 = vpop.f32.mrf.mxu0
  %v8925 = vadd.f32 0.0, %v8924
  %v8926 = vpop.f32.mrf.mxu0
  %v8927 = vpop.f32.mrf.mxu0
  %v8928 = vadd.f32 0.0, %v8927
  %v8929 = vpop.f32.mrf.mxu0
  %8930 = vmatprep.mubr.bf16.mxu0 0
  %8931 = vmatmul.mubr.bf16.gmra.mxu0 %v7048
  %v8932 = vpop.f32.mrf.mxu0
  %v8933 = vadd.f32 0.0, %v8932
  %v8934 = vpop.f32.mrf.mxu0
  %v8935 = vpop.f32.mrf.mxu0
  %v8936 = vadd.f32 0.0, %v8935
  %v8937 = vpop.f32.mrf.mxu0
  %8938 = vmatprep.mubr.bf16.mxu0 0
  %8939 = vmatmul.mubr.bf16.gmra.mxu0 %v7049
  %v8940 = vpop.f32.mrf.mxu0
  %v8941 = vadd.f32 0.0, %v8940
  %v8942 = vpop.f32.mrf.mxu0
  %v8943 = vpop.f32.mrf.mxu0
  %v8944 = vadd.f32 0.0, %v8943
  %v8945 = vpop.f32.mrf.mxu0
  %8946 = vdwg.mxu0
  %v8947 = vadd.f32 %v8529, %v8693
  %v8948 = vadd.f32 %v8530, %v8696
  %v8949 = vadd.f32 %v8531, %v8701
  %v8950 = vadd.f32 %v8532, %v8704
  %v8951 = vadd.f32 %v8533, %v8709
  %v8952 = vadd.f32 %v8534, %v8712
  %v8953 = vadd.f32 %v8535, %v8717
  %v8954 = vadd.f32 %v8536, %v8720
  %v8955 = vadd.f32 %v8537, %v8725
  %v8956 = vadd.f32 %v8538, %v8728
  %v8957 = vadd.f32 %v8539, %v8733
  %v8958 = vadd.f32 %v8540, %v8736
  %v8959 = vadd.f32 %v8541, %v8741
  %v8960 = vadd.f32 %v8542, %v8744
  %v8961 = vadd.f32 %v8543, %v8749
  %v8962 = vadd.f32 %v8544, %v8752
  %v8963 = vadd.f32 %v8545, %v8757
  %v8964 = vadd.f32 %v8546, %v8760
  %v8965 = vadd.f32 %v8547, %v8765
  %v8966 = vadd.f32 %v8548, %v8768
  %v8967 = vadd.f32 %v8549, %v8773
  %v8968 = vadd.f32 %v8550, %v8776
  %v8969 = vadd.f32 %v8551, %v8781
  %v8970 = vadd.f32 %v8552, %v8784
  %v8971 = vadd.f32 %v8553, %v8789
  %v8972 = vadd.f32 %v8554, %v8792
  %v8973 = vadd.f32 %v8555, %v8797
  %v8974 = vadd.f32 %v8556, %v8800
  %v8975 = vadd.f32 %v8557, %v8805
  %v8976 = vadd.f32 %v8558, %v8808
  %v8977 = vadd.f32 %v8559, %v8813
  %v8978 = vadd.f32 %v8560, %v8816
  %v8979 = vadd.f32 %v8561, %v8821
  %v8980 = vadd.f32 %v8562, %v8824
  %v8981 = vadd.f32 %v8563, %v8829
  %v8982 = vadd.f32 %v8564, %v8832
  %v8983 = vadd.f32 %v8565, %v8837
  %v8984 = vadd.f32 %v8566, %v8840
  %v8985 = vadd.f32 %v8567, %v8845
  %v8986 = vadd.f32 %v8568, %v8848
  %v8987 = vadd.f32 %v8569, %v8853
  %v8988 = vadd.f32 %v8570, %v8856
  %v8989 = vadd.f32 %v8571, %v8861
  %v8990 = vadd.f32 %v8572, %v8864
  %v8991 = vadd.f32 %v8573, %v8869
  %v8992 = vadd.f32 %v8574, %v8872
  %v8993 = vadd.f32 %v8575, %v8877
  %v8994 = vadd.f32 %v8576, %v8880
  %v8995 = vadd.f32 %v8577, %v8885
  %v8996 = vadd.f32 %v8578, %v8888
  %v8997 = vadd.f32 %v8579, %v8893
  %v8998 = vadd.f32 %v8580, %v8896
  %v8999 = vadd.f32 %v8581, %v8901
  %v9000 = vadd.f32 %v8582, %v8904
  %v9001 = vadd.f32 %v8583, %v8909
  %v9002 = vadd.f32 %v8584, %v8912
  %v9003 = vadd.f32 %v8585, %v8917
  %v9004 = vadd.f32 %v8586, %v8920
  %v9005 = vadd.f32 %v8587, %v8925
  %v9006 = vadd.f32 %v8588, %v8928
  %v9007 = vadd.f32 %v8589, %v8933
  %v9008 = vadd.f32 %v8590, %v8936
  %v9009 = vadd.f32 %v8591, %v8941
  %v9010 = vadd.f32 %v8592, %v8944
  %v9011 = vld [vmem:[%s4] sm:$0x1]
  %v9013 = vlaneseq
  %v9014 = vshrl.u32 %v9013, 7
  %v9015 = vsub.s32 0, %v9014
  %v9016 = vrot.slane %v9011, %v9015
  %v9018 = vadd.f32 %v8947, %v9016
  %v9019 = vadd.f32 %v8948, %v9016
  %v9020 = vadd.f32 %v8949, %v9016
  %v9021 = vadd.f32 %v8950, %v9016
  %v9022 = vadd.f32 %v8951, %v9016
  %v9023 = vadd.f32 %v8952, %v9016
  %v9024 = vadd.f32 %v8953, %v9016
  %v9025 = vadd.f32 %v8954, %v9016
  %v9026 = vadd.f32 %v8955, %v9016
  %v9027 = vadd.f32 %v8956, %v9016
  %v9028 = vadd.f32 %v8957, %v9016
  %v9029 = vadd.f32 %v8958, %v9016
  %v9030 = vadd.f32 %v8959, %v9016
  %v9031 = vadd.f32 %v8960, %v9016
  %v9032 = vadd.f32 %v8961, %v9016
  %v9033 = vadd.f32 %v8962, %v9016
  %v9034 = vadd.f32 %v8963, %v9016
  %v9035 = vadd.f32 %v8964, %v9016
  %v9036 = vadd.f32 %v8965, %v9016
  %v9037 = vadd.f32 %v8966, %v9016
  %v9038 = vadd.f32 %v8967, %v9016
  %v9039 = vadd.f32 %v8968, %v9016
  %v9040 = vadd.f32 %v8969, %v9016
  %v9041 = vadd.f32 %v8970, %v9016
  %v9042 = vadd.f32 %v8971, %v9016
  %v9043 = vadd.f32 %v8972, %v9016
  %v9044 = vadd.f32 %v8973, %v9016
  %v9045 = vadd.f32 %v8974, %v9016
  %v9046 = vadd.f32 %v8975, %v9016
  %v9047 = vadd.f32 %v8976, %v9016
  %v9048 = vadd.f32 %v8977, %v9016
  %v9049 = vadd.f32 %v8978, %v9016
  %v9050 = vadd.f32 %v8979, %v9016
  %v9051 = vadd.f32 %v8980, %v9016
  %v9052 = vadd.f32 %v8981, %v9016
  %v9053 = vadd.f32 %v8982, %v9016
  %v9054 = vadd.f32 %v8983, %v9016
  %v9055 = vadd.f32 %v8984, %v9016
  %v9056 = vadd.f32 %v8985, %v9016
  %v9057 = vadd.f32 %v8986, %v9016
  %v9058 = vadd.f32 %v8987, %v9016
  %v9059 = vadd.f32 %v8988, %v9016
  %v9060 = vadd.f32 %v8989, %v9016
  %v9061 = vadd.f32 %v8990, %v9016
  %v9062 = vadd.f32 %v8991, %v9016
  %v9063 = vadd.f32 %v8992, %v9016
  %v9064 = vadd.f32 %v8993, %v9016
  %v9065 = vadd.f32 %v8994, %v9016
  %v9066 = vadd.f32 %v8995, %v9016
  %v9067 = vadd.f32 %v8996, %v9016
  %v9068 = vadd.f32 %v8997, %v9016
  %v9069 = vadd.f32 %v8998, %v9016
  %v9070 = vadd.f32 %v8999, %v9016
  %v9071 = vadd.f32 %v9000, %v9016
  %v9072 = vadd.f32 %v9001, %v9016
  %v9073 = vadd.f32 %v9002, %v9016
  %v9074 = vadd.f32 %v9003, %v9016
  %v9075 = vadd.f32 %v9004, %v9016
  %v9076 = vadd.f32 %v9005, %v9016
  %v9077 = vadd.f32 %v9006, %v9016
  %v9078 = vadd.f32 %v9007, %v9016
  %v9079 = vadd.f32 %v9008, %v9016
  %v9080 = vadd.f32 %v9009, %v9016
  %v9081 = vadd.f32 %v9010, %v9016
  %v9082 = vmax.f32 %v9018, %v9019
  %v9083 = vmax.f32 %v9020, %v9021
  %v9084 = vmax.f32 %v9022, %v9023
  %v9085 = vmax.f32 %v9024, %v9025
  %v9086 = vmax.f32 %v9034, %v9035
  %v9087 = vmax.f32 %v9036, %v9037
  %v9088 = vmax.f32 %v9038, %v9039
  %v9089 = vmax.f32 %v9040, %v9041
  %v9090 = vmax.f32 %v9050, %v9051
  %v9091 = vmax.f32 %v9052, %v9053
  %v9092 = vmax.f32 %v9054, %v9055
  %v9093 = vmax.f32 %v9056, %v9057
  %v9094 = vmax.f32 %v9066, %v9067
  %v9095 = vmax.f32 %v9068, %v9069
  %v9096 = vmax.f32 %v9070, %v9071
  %v9097 = vmax.f32 %v9072, %v9073
  %v9098 = vmax.f32 %v9026, %v9027
  %v9099 = vmax.f32 %v9028, %v9029
  %v9100 = vmax.f32 %v9030, %v9031
  %v9101 = vmax.f32 %v9032, %v9033
  %v9102 = vmax.f32 %v9042, %v9043
  %v9103 = vmax.f32 %v9044, %v9045
  %v9104 = vmax.f32 %v9046, %v9047
  %v9105 = vmax.f32 %v9048, %v9049
  %v9106 = vmax.f32 %v9058, %v9059
  %v9107 = vmax.f32 %v9060, %v9061
  %v9108 = vmax.f32 %v9062, %v9063
  %v9109 = vmax.f32 %v9064, %v9065
  %v9110 = vmax.f32 %v9074, %v9075
  %v9111 = vmax.f32 %v9076, %v9077
  %v9112 = vmax.f32 %v9078, %v9079
  %v9113 = vmax.f32 %v9080, %v9081
  %v9114 = vmax.f32 %v9082, %v9098
  %v9115 = vmax.f32 %v9083, %v9099
  %v9116 = vmax.f32 %v9084, %v9100
  %v9117 = vmax.f32 %v9085, %v9101
  %v9118 = vmax.f32 %v9086, %v9102
  %v9119 = vmax.f32 %v9087, %v9103
  %v9120 = vmax.f32 %v9088, %v9104
  %v9121 = vmax.f32 %v9089, %v9105
  %v9122 = vmax.f32 %v9090, %v9106
  %v9123 = vmax.f32 %v9091, %v9107
  %v9124 = vmax.f32 %v9092, %v9108
  %v9125 = vmax.f32 %v9093, %v9109
  %v9126 = vmax.f32 %v9094, %v9110
  %v9127 = vmax.f32 %v9095, %v9111
  %v9128 = vmax.f32 %v9096, %v9112
  %v9129 = vmax.f32 %v9097, %v9113
  %v9130 = vmax.f32 %v9114, 0.0
  %v9131 = vmax.f32 %v9115, 0.0
  %v9132 = vmax.f32 %v9116, 0.0
  %v9133 = vmax.f32 %v9117, 0.0
  %v9134 = vmax.f32 %v9118, 0.0
  %v9135 = vmax.f32 %v9119, 0.0
  %v9136 = vmax.f32 %v9120, 0.0
  %v9137 = vmax.f32 %v9121, 0.0
  %v9138 = vmax.f32 %v9122, 0.0
  %v9139 = vmax.f32 %v9123, 0.0
  %v9140 = vmax.f32 %v9124, 0.0
  %v9141 = vmax.f32 %v9125, 0.0
  %v9142 = vmax.f32 %v9126, 0.0
  %v9143 = vmax.f32 %v9127, 0.0
  %v9144 = vmax.f32 %v9128, 0.0
  %v9145 = vmax.f32 %v9129, 0.0
  %9146 = vrot.lane.b32.xlu0 %v9131, 32
  %v9147 = vpop.permute.xlu0 %9146
  %v9148 = vadd.f32 %v9130, %v9147
  %9149 = vrot.lane.b32.xlu0 %v9132, 64
  %v9150 = vpop.permute.xlu0 %9149
  %v9151 = vadd.f32 %v9148, %v9150
  %9152 = vrot.lane.b32.xlu0 %v9133, 96
  %v9153 = vpop.permute.xlu0 %9152
  %v9154 = vadd.f32 %v9151, %v9153
  %v9155 = vpack.c.bf16 %v9154, %v9154
  %v9156 = vld [vmem:[%s5] sm:$0xf]
  %v9157 = vld [vmem:[%s5 + $0x4] sm:$0xf]
  %v9158 = vld [vmem:[%s5 + $0x8] sm:$0xf]
  %v9159 = vld [vmem:[%s5 + $0xc] sm:$0xf]
  %v9160 = vld [vmem:[%s5 + $0x10] sm:$0xf]
  %v9161 = vld [vmem:[%s5 + $0x14] sm:$0xf]
  %v9162 = vld [vmem:[%s5 + $0x18] sm:$0xf]
  %v9163 = vld [vmem:[%s5 + $0x1c] sm:$0xf]
  %v9164 = vld [vmem:[%s5 + $0x20] sm:$0xf]
  %v9165 = vld [vmem:[%s5 + $0x24] sm:$0xf]
  %v9166 = vld [vmem:[%s5 + $0x28] sm:$0xf]
  %v9167 = vld [vmem:[%s5 + $0x2c] sm:$0xf]
  %v9168 = vld [vmem:[%s5 + $0x30] sm:$0xf]
  %v9169 = vld [vmem:[%s5 + $0x34] sm:$0xf]
  %v9170 = vld [vmem:[%s5 + $0x38] sm:$0xf]
  %v9171 = vld [vmem:[%s5 + $0x3c] sm:$0xf]
  %9172 = vrot.lane.b32.xlu0 %v9135, 32
  %v9173 = vpop.permute.xlu0 %9172
  %v9174 = vadd.f32 %v9134, %v9173
  %9175 = vrot.lane.b32.xlu0 %v9136, 64
  %v9176 = vpop.permute.xlu0 %9175
  %v9177 = vadd.f32 %v9174, %v9176
  %9178 = vrot.lane.b32.xlu0 %v9137, 96
  %v9179 = vpop.permute.xlu0 %9178
  %v9180 = vadd.f32 %v9177, %v9179
  %v9181 = vpack.c.bf16 %v9180, %v9180
  %s9182 = scalar_lea.vmem %s5, 64
  %v9183 = vld [vmem:[%s9182] sm:$0xf]
  %v9184 = vld [vmem:[%s9182 + $0x4] sm:$0xf]
  %v9185 = vld [vmem:[%s9182 + $0x8] sm:$0xf]
  %v9186 = vld [vmem:[%s9182 + $0xc] sm:$0xf]
  %v9187 = vld [vmem:[%s9182 + $0x10] sm:$0xf]
  %v9188 = vld [vmem:[%s9182 + $0x14] sm:$0xf]
  %v9189 = vld [vmem:[%s9182 + $0x18] sm:$0xf]
  %v9190 = vld [vmem:[%s9182 + $0x1c] sm:$0xf]
  %v9191 = vld [vmem:[%s9182 + $0x20] sm:$0xf]
  %v9192 = vld [vmem:[%s9182 + $0x24] sm:$0xf]
  %v9193 = vld [vmem:[%s9182 + $0x28] sm:$0xf]
  %v9194 = vld [vmem:[%s9182 + $0x2c] sm:$0xf]
  %v9195 = vld [vmem:[%s9182 + $0x30] sm:$0xf]
  %v9196 = vld [vmem:[%s9182 + $0x34] sm:$0xf]
  %v9197 = vld [vmem:[%s9182 + $0x38] sm:$0xf]
  %v9198 = vld [vmem:[%s9182 + $0x3c] sm:$0xf]
  %v9215 = vunpack.c.l.b16 %v9183
  %v9216 = vunpack.c.l.b16 %v9184
  %v9217 = vunpack.c.l.b16 %v9185
  %v9218 = vunpack.c.l.b16 %v9186
  %v9219 = vunpack.c.l.b16 %v9187
  %v9220 = vunpack.c.l.b16 %v9188
  %v9221 = vunpack.c.l.b16 %v9189
  %v9222 = vunpack.c.l.b16 %v9190
  %v9223 = vunpack.c.l.b16 %v9191
  %v9224 = vunpack.c.l.b16 %v9192
  %v9225 = vunpack.c.l.b16 %v9193
  %v9226 = vunpack.c.l.b16 %v9194
  %v9227 = vunpack.c.l.b16 %v9195
  %v9228 = vunpack.c.l.b16 %v9196
  %v9229 = vunpack.c.l.b16 %v9197
  %v9230 = vunpack.c.l.b16 %v9198
  %v9231 = vpack.c.b16 %v9216, %v9215
  %v9232 = vpack.c.b16 %v9218, %v9217
  %v9233 = vpack.c.b16 %v9220, %v9219
  %v9234 = vpack.c.b16 %v9222, %v9221
  %v9235 = vpack.c.b16 %v9224, %v9223
  %v9236 = vpack.c.b16 %v9226, %v9225
  %v9237 = vpack.c.b16 %v9228, %v9227
  %v9238 = vpack.c.b16 %v9230, %v9229
  %9247 = vmatprep.subr.bf16.mxu0 0
  %9248 = vmatpush1.bf16.msra.mxu0 %v9238
  %9249 = vmatprep.subr.bf16.mxu0 0
  %9250 = vmatpush1.bf16.msra.mxu0 %v9237
  %9251 = vmatprep.subr.bf16.mxu0 0
  %9252 = vmatpush1.bf16.msra.mxu0 %v9236
  %9253 = vmatprep.subr.bf16.mxu0 0
  %9254 = vmatpush1.bf16.msra.mxu0 %v9235
  %9255 = vmatprep.subr.bf16.mxu0 0
  %9256 = vmatpush1.bf16.msra.mxu0 %v9234
  %9257 = vmatprep.subr.bf16.mxu0 0
  %9258 = vmatpush1.bf16.msra.mxu0 %v9233
  %9259 = vmatprep.subr.bf16.mxu0 0
  %9260 = vmatpush1.bf16.msra.mxu0 %v9232
  %9261 = vmatprep.subr.bf16.mxu0 0
  %9262 = vmatpush1.bf16.msra.mxu0 %v9231
  %9263 = vmatprep.subr.bf16.mxu0 0
  %9264 = vmatpush2.bf16.msra.mxu0 0
  %9265 = vmatprep.subr.bf16.mxu0 0
  %9266 = vmatpush2.bf16.msra.mxu0 0
  %9267 = vmatprep.subr.bf16.mxu0 0
  %9268 = vmatpush2.bf16.msra.mxu0 0
  %9269 = vmatprep.subr.bf16.mxu0 0
  %9270 = vmatpush2.bf16.msra.mxu0 0
  %9271 = vmatprep.subr.bf16.mxu0 0
  %9272 = vmatpush2.bf16.msra.mxu0 0
  %9273 = vmatprep.subr.bf16.mxu0 0
  %9274 = vmatpush2.bf16.msra.mxu0 0
  %9275 = vmatprep.subr.bf16.mxu0 0
  %9276 = vmatpush2.bf16.msra.mxu0 0
  %9277 = vmatprep.subr.bf16.mxu0 0
  %9278 = vmatpush2.bf16.msra.mxu0 0
  %9279 = vmatprep.mubr.bf16.mxu0 0
  %9280 = vmatmul.mubr.bf16.gmra.mxu0 %v9181
  %v9281 = vpop.f32.mrf.mxu0
  %v9282 = vadd.f32 0.0, %v9281
  %v9283 = vpop.f32.mrf.mxu0
  %v9284 = vpop.f32.mrf.mxu0
  %v9285 = vpop.f32.mrf.mxu0
  %9286 = vdwg.mxu0
  %v9303 = vunpack.c.l.b16 %v9156
  %v9304 = vunpack.c.l.b16 %v9157
  %v9305 = vunpack.c.l.b16 %v9158
  %v9306 = vunpack.c.l.b16 %v9159
  %v9307 = vunpack.c.l.b16 %v9160
  %v9308 = vunpack.c.l.b16 %v9161
  %v9309 = vunpack.c.l.b16 %v9162
  %v9310 = vunpack.c.l.b16 %v9163
  %v9311 = vunpack.c.l.b16 %v9164
  %v9312 = vunpack.c.l.b16 %v9165
  %v9313 = vunpack.c.l.b16 %v9166
  %v9314 = vunpack.c.l.b16 %v9167
  %v9315 = vunpack.c.l.b16 %v9168
  %v9316 = vunpack.c.l.b16 %v9169
  %v9317 = vunpack.c.l.b16 %v9170
  %v9318 = vunpack.c.l.b16 %v9171
  %v9319 = vpack.c.b16 %v9304, %v9303
  %v9320 = vpack.c.b16 %v9306, %v9305
  %v9321 = vpack.c.b16 %v9308, %v9307
  %v9322 = vpack.c.b16 %v9310, %v9309
  %v9323 = vpack.c.b16 %v9312, %v9311
  %v9324 = vpack.c.b16 %v9314, %v9313
  %v9325 = vpack.c.b16 %v9316, %v9315
  %v9326 = vpack.c.b16 %v9318, %v9317
  %9335 = vmatprep.subr.bf16.mxu0 0
  %9336 = vmatpush1.bf16.msra.mxu0 %v9326
  %9337 = vmatprep.subr.bf16.mxu0 0
  %9338 = vmatpush1.bf16.msra.mxu0 %v9325
  %9339 = vmatprep.subr.bf16.mxu0 0
  %9340 = vmatpush1.bf16.msra.mxu0 %v9324
  %9341 = vmatprep.subr.bf16.mxu0 0
  %9342 = vmatpush1.bf16.msra.mxu0 %v9323
  %9343 = vmatprep.subr.bf16.mxu0 0
  %9344 = vmatpush1.bf16.msra.mxu0 %v9322
  %9345 = vmatprep.subr.bf16.mxu0 0
  %9346 = vmatpush1.bf16.msra.mxu0 %v9321
  %9347 = vmatprep.subr.bf16.mxu0 0
  %9348 = vmatpush1.bf16.msra.mxu0 %v9320
  %9349 = vmatprep.subr.bf16.mxu0 0
  %9350 = vmatpush1.bf16.msra.mxu0 %v9319
  %9351 = vmatprep.subr.bf16.mxu0 0
  %9352 = vmatpush2.bf16.msra.mxu0 0
  %9353 = vmatprep.subr.bf16.mxu0 0
  %9354 = vmatpush2.bf16.msra.mxu0 0
  %9355 = vmatprep.subr.bf16.mxu0 0
  %9356 = vmatpush2.bf16.msra.mxu0 0
  %9357 = vmatprep.subr.bf16.mxu0 0
  %9358 = vmatpush2.bf16.msra.mxu0 0
  %9359 = vmatprep.subr.bf16.mxu0 0
  %9360 = vmatpush2.bf16.msra.mxu0 0
  %9361 = vmatprep.subr.bf16.mxu0 0
  %9362 = vmatpush2.bf16.msra.mxu0 0
  %9363 = vmatprep.subr.bf16.mxu0 0
  %9364 = vmatpush2.bf16.msra.mxu0 0
  %9365 = vmatprep.subr.bf16.mxu0 0
  %9366 = vmatpush2.bf16.msra.mxu0 0
  %9367 = vmatprep.mubr.bf16.mxu0 0
  %9368 = vmatmul.mubr.bf16.gmra.mxu0 %v9155
  %v9369 = vpop.f32.mrf.mxu0
  %v9370 = vadd.f32 %v9282, %v9369
  %v9371 = vpop.f32.mrf.mxu0
  %v9372 = vpop.f32.mrf.mxu0
  %v9373 = vpop.f32.mrf.mxu0
  %9374 = vdwg.mxu0
  %9375 = vrot.lane.b32.xlu0 %v9139, 32
  %v9376 = vpop.permute.xlu0 %9375
  %v9377 = vadd.f32 %v9138, %v9376
  %9378 = vrot.lane.b32.xlu0 %v9140, 64
  %v9379 = vpop.permute.xlu0 %9378
  %v9380 = vadd.f32 %v9377, %v9379
  %9381 = vrot.lane.b32.xlu0 %v9141, 96
  %v9382 = vpop.permute.xlu0 %9381
  %v9383 = vadd.f32 %v9380, %v9382
  %v9384 = vpack.c.bf16 %v9383, %v9383
  %s9385 = scalar_lea.vmem %s5, 128
  %v9386 = vld [vmem:[%s9385] sm:$0xf]
  %v9387 = vld [vmem:[%s9385 + $0x4] sm:$0xf]
  %v9388 = vld [vmem:[%s9385 + $0x8] sm:$0xf]
  %v9389 = vld [vmem:[%s9385 + $0xc] sm:$0xf]
  %v9390 = vld [vmem:[%s9385 + $0x10] sm:$0xf]
  %v9391 = vld [vmem:[%s9385 + $0x14] sm:$0xf]
  %v9392 = vld [vmem:[%s9385 + $0x18] sm:$0xf]
  %v9393 = vld [vmem:[%s9385 + $0x1c] sm:$0xf]
  %v9394 = vld [vmem:[%s9385 + $0x20] sm:$0xf]
  %v9395 = vld [vmem:[%s9385 + $0x24] sm:$0xf]
  %v9396 = vld [vmem:[%s9385 + $0x28] sm:$0xf]
  %v9397 = vld [vmem:[%s9385 + $0x2c] sm:$0xf]
  %v9398 = vld [vmem:[%s9385 + $0x30] sm:$0xf]
  %v9399 = vld [vmem:[%s9385 + $0x34] sm:$0xf]
  %v9400 = vld [vmem:[%s9385 + $0x38] sm:$0xf]
  %v9401 = vld [vmem:[%s9385 + $0x3c] sm:$0xf]
  %v9418 = vunpack.c.l.b16 %v9386
  %v9419 = vunpack.c.l.b16 %v9387
  %v9420 = vunpack.c.l.b16 %v9388
  %v9421 = vunpack.c.l.b16 %v9389
  %v9422 = vunpack.c.l.b16 %v9390
  %v9423 = vunpack.c.l.b16 %v9391
  %v9424 = vunpack.c.l.b16 %v9392
  %v9425 = vunpack.c.l.b16 %v9393
  %v9426 = vunpack.c.l.b16 %v9394
  %v9427 = vunpack.c.l.b16 %v9395
  %v9428 = vunpack.c.l.b16 %v9396
  %v9429 = vunpack.c.l.b16 %v9397
  %v9430 = vunpack.c.l.b16 %v9398
  %v9431 = vunpack.c.l.b16 %v9399
  %v9432 = vunpack.c.l.b16 %v9400
  %v9433 = vunpack.c.l.b16 %v9401
  %v9434 = vpack.c.b16 %v9419, %v9418
  %v9435 = vpack.c.b16 %v9421, %v9420
  %v9436 = vpack.c.b16 %v9423, %v9422
  %v9437 = vpack.c.b16 %v9425, %v9424
  %v9438 = vpack.c.b16 %v9427, %v9426
  %v9439 = vpack.c.b16 %v9429, %v9428
  %v9440 = vpack.c.b16 %v9431, %v9430
  %v9441 = vpack.c.b16 %v9433, %v9432
  %9450 = vmatprep.subr.bf16.mxu0 0
  %9451 = vmatpush1.bf16.msra.mxu0 %v9441
  %9452 = vmatprep.subr.bf16.mxu0 0
  %9453 = vmatpush1.bf16.msra.mxu0 %v9440
  %9454 = vmatprep.subr.bf16.mxu0 0
  %9455 = vmatpush1.bf16.msra.mxu0 %v9439
  %9456 = vmatprep.subr.bf16.mxu0 0
  %9457 = vmatpush1.bf16.msra.mxu0 %v9438
  %9458 = vmatprep.subr.bf16.mxu0 0
  %9459 = vmatpush1.bf16.msra.mxu0 %v9437
  %9460 = vmatprep.subr.bf16.mxu0 0
  %9461 = vmatpush1.bf16.msra.mxu0 %v9436
  %9462 = vmatprep.subr.bf16.mxu0 0
  %9463 = vmatpush1.bf16.msra.mxu0 %v9435
  %9464 = vmatprep.subr.bf16.mxu0 0
  %9465 = vmatpush1.bf16.msra.mxu0 %v9434
  %9466 = vmatprep.subr.bf16.mxu0 0
  %9467 = vmatpush2.bf16.msra.mxu0 0
  %9468 = vmatprep.subr.bf16.mxu0 0
  %9469 = vmatpush2.bf16.msra.mxu0 0
  %9470 = vmatprep.subr.bf16.mxu0 0
  %9471 = vmatpush2.bf16.msra.mxu0 0
  %9472 = vmatprep.subr.bf16.mxu0 0
  %9473 = vmatpush2.bf16.msra.mxu0 0
  %9474 = vmatprep.subr.bf16.mxu0 0
  %9475 = vmatpush2.bf16.msra.mxu0 0
  %9476 = vmatprep.subr.bf16.mxu0 0
  %9477 = vmatpush2.bf16.msra.mxu0 0
  %9478 = vmatprep.subr.bf16.mxu0 0
  %9479 = vmatpush2.bf16.msra.mxu0 0
  %9480 = vmatprep.subr.bf16.mxu0 0
  %9481 = vmatpush2.bf16.msra.mxu0 0
  %9482 = vmatprep.mubr.bf16.mxu0 0
  %9483 = vmatmul.mubr.bf16.gmra.mxu0 %v9384
  %v9484 = vpop.f32.mrf.mxu0
  %v9485 = vadd.f32 0.0, %v9484
  %v9486 = vpop.f32.mrf.mxu0
  %v9487 = vpop.f32.mrf.mxu0
  %v9488 = vpop.f32.mrf.mxu0
  %9489 = vdwg.mxu0
  %v9490 = vadd.f32 %v9370, %v9485
  %9491 = vrot.lane.b32.xlu0 %v9143, 32
  %v9492 = vpop.permute.xlu0 %9491
  %v9493 = vadd.f32 %v9142, %v9492
  %9494 = vrot.lane.b32.xlu0 %v9144, 64
  %v9495 = vpop.permute.xlu0 %9494
  %v9496 = vadd.f32 %v9493, %v9495
  %9497 = vrot.lane.b32.xlu0 %v9145, 96
  %v9498 = vpop.permute.xlu0 %9497
  %v9499 = vadd.f32 %v9496, %v9498
  %v9500 = vpack.c.bf16 %v9499, %v9499
  %s9501 = scalar_lea.vmem %s5, 192
  %v9502 = vld [vmem:[%s9501] sm:$0xf]
  %v9503 = vld [vmem:[%s9501 + $0x4] sm:$0xf]
  %v9504 = vld [vmem:[%s9501 + $0x8] sm:$0xf]
  %v9505 = vld [vmem:[%s9501 + $0xc] sm:$0xf]
  %v9506 = vld [vmem:[%s9501 + $0x10] sm:$0xf]
  %v9507 = vld [vmem:[%s9501 + $0x14] sm:$0xf]
  %v9508 = vld [vmem:[%s9501 + $0x18] sm:$0xf]
  %v9509 = vld [vmem:[%s9501 + $0x1c] sm:$0xf]
  %v9510 = vld [vmem:[%s9501 + $0x20] sm:$0xf]
  %v9511 = vld [vmem:[%s9501 + $0x24] sm:$0xf]
  %v9512 = vld [vmem:[%s9501 + $0x28] sm:$0xf]
  %v9513 = vld [vmem:[%s9501 + $0x2c] sm:$0xf]
  %v9514 = vld [vmem:[%s9501 + $0x30] sm:$0xf]
  %v9515 = vld [vmem:[%s9501 + $0x34] sm:$0xf]
  %v9516 = vld [vmem:[%s9501 + $0x38] sm:$0xf]
  %v9517 = vld [vmem:[%s9501 + $0x3c] sm:$0xf]
  %v9534 = vunpack.c.l.b16 %v9502
  %v9535 = vunpack.c.l.b16 %v9503
  %v9536 = vunpack.c.l.b16 %v9504
  %v9537 = vunpack.c.l.b16 %v9505
  %v9538 = vunpack.c.l.b16 %v9506
  %v9539 = vunpack.c.l.b16 %v9507
  %v9540 = vunpack.c.l.b16 %v9508
  %v9541 = vunpack.c.l.b16 %v9509
  %v9542 = vunpack.c.l.b16 %v9510
  %v9543 = vunpack.c.l.b16 %v9511
  %v9544 = vunpack.c.l.b16 %v9512
  %v9545 = vunpack.c.l.b16 %v9513
  %v9546 = vunpack.c.l.b16 %v9514
  %v9547 = vunpack.c.l.b16 %v9515
  %v9548 = vunpack.c.l.b16 %v9516
  %v9549 = vunpack.c.l.b16 %v9517
  %v9550 = vpack.c.b16 %v9535, %v9534
  %v9551 = vpack.c.b16 %v9537, %v9536
  %v9552 = vpack.c.b16 %v9539, %v9538
  %v9553 = vpack.c.b16 %v9541, %v9540
  %v9554 = vpack.c.b16 %v9543, %v9542
  %v9555 = vpack.c.b16 %v9545, %v9544
  %v9556 = vpack.c.b16 %v9547, %v9546
  %v9557 = vpack.c.b16 %v9549, %v9548
  %9566 = vmatprep.subr.bf16.mxu0 0
  %9567 = vmatpush1.bf16.msra.mxu0 %v9557
  %9568 = vmatprep.subr.bf16.mxu0 0
  %9569 = vmatpush1.bf16.msra.mxu0 %v9556
  %9570 = vmatprep.subr.bf16.mxu0 0
  %9571 = vmatpush1.bf16.msra.mxu0 %v9555
  %9572 = vmatprep.subr.bf16.mxu0 0
  %9573 = vmatpush1.bf16.msra.mxu0 %v9554
  %9574 = vmatprep.subr.bf16.mxu0 0
  %9575 = vmatpush1.bf16.msra.mxu0 %v9553
  %9576 = vmatprep.subr.bf16.mxu0 0
  %9577 = vmatpush1.bf16.msra.mxu0 %v9552
  %9578 = vmatprep.subr.bf16.mxu0 0
  %9579 = vmatpush1.bf16.msra.mxu0 %v9551
  %9580 = vmatprep.subr.bf16.mxu0 0
  %9581 = vmatpush1.bf16.msra.mxu0 %v9550
  %9582 = vmatprep.subr.bf16.mxu0 0
  %9583 = vmatpush2.bf16.msra.mxu0 0
  %9584 = vmatprep.subr.bf16.mxu0 0
  %9585 = vmatpush2.bf16.msra.mxu0 0
  %9586 = vmatprep.subr.bf16.mxu0 0
  %9587 = vmatpush2.bf16.msra.mxu0 0
  %9588 = vmatprep.subr.bf16.mxu0 0
  %9589 = vmatpush2.bf16.msra.mxu0 0
  %9590 = vmatprep.subr.bf16.mxu0 0
  %9591 = vmatpush2.bf16.msra.mxu0 0
  %9592 = vmatprep.subr.bf16.mxu0 0
  %9593 = vmatpush2.bf16.msra.mxu0 0
  %9594 = vmatprep.subr.bf16.mxu0 0
  %9595 = vmatpush2.bf16.msra.mxu0 0
  %9596 = vmatprep.subr.bf16.mxu0 0
  %9597 = vmatpush2.bf16.msra.mxu0 0
  %9598 = vmatprep.mubr.bf16.mxu0 0
  %9599 = vmatmul.mubr.bf16.gmra.mxu0 %v9500
  %v9600 = vpop.f32.mrf.mxu0
  %v9601 = vadd.f32 0.0, %v9600
  %v9602 = vpop.f32.mrf.mxu0
  %v9603 = vpop.f32.mrf.mxu0
  %v9604 = vpop.f32.mrf.mxu0
  %9605 = vdwg.mxu0
  %v9606 = vadd.f32 %v9490, %v9601
  %v9607 = vld [vmem:[%s6] sm:$0x1]
  %v9609 = vlaneseq
  %v9610 = vshrl.u32 %v9609, 7
  %v9611 = vsub.s32 0, %v9610
  %v9612 = vrot.slane %v9607, %v9611
  %v9614 = vadd.f32 %v9606, %v9612
  %v9615 = vmax.f32 %v9614, 0.0
  %v9616 = vpack.c.bf16 %v9615, %v9615
  %v9617 = vld [vmem:[%s7] sm:$0xf]
  %v9618 = vld [vmem:[%s7 + $0x4] sm:$0xf]
  %v9619 = vld [vmem:[%s7 + $0x8] sm:$0xf]
  %v9620 = vld [vmem:[%s7 + $0xc] sm:$0xf]
  %v9621 = vld [vmem:[%s7 + $0x10] sm:$0xf]
  %v9622 = vld [vmem:[%s7 + $0x14] sm:$0xf]
  %v9623 = vld [vmem:[%s7 + $0x18] sm:$0xf]
  %v9624 = vld [vmem:[%s7 + $0x1c] sm:$0xf]
  %v9625 = vld [vmem:[%s7 + $0x20] sm:$0xf]
  %v9626 = vld [vmem:[%s7 + $0x24] sm:$0xf]
  %v9627 = vld [vmem:[%s7 + $0x28] sm:$0xf]
  %v9628 = vld [vmem:[%s7 + $0x2c] sm:$0xf]
  %v9629 = vld [vmem:[%s7 + $0x30] sm:$0xf]
  %v9630 = vld [vmem:[%s7 + $0x34] sm:$0xf]
  %v9631 = vld [vmem:[%s7 + $0x38] sm:$0xf]
  %v9632 = vld [vmem:[%s7 + $0x3c] sm:$0xf]
  %v9633 = vld [vmem:[%s8] sm:$0x1]
  %v9635 = vlaneseq
  %v9636 = vshrl.u32 %v9635, 7
  %v9637 = vsub.s32 0, %v9636
  %v9638 = vrot.slane %v9633, %v9637
  %v9656 = vunpack.c.l.b16 %v9617
  %v9657 = vunpack.c.l.b16 %v9618
  %v9658 = vunpack.c.l.b16 %v9619
  %v9659 = vunpack.c.l.b16 %v9620
  %v9660 = vunpack.c.l.b16 %v9621
  %v9661 = vunpack.c.l.b16 %v9622
  %v9662 = vunpack.c.l.b16 %v9623
  %v9663 = vunpack.c.l.b16 %v9624
  %v9664 = vunpack.c.l.b16 %v9625
  %v9665 = vunpack.c.l.b16 %v9626
  %v9666 = vunpack.c.l.b16 %v9627
  %v9667 = vunpack.c.l.b16 %v9628
  %v9668 = vunpack.c.l.b16 %v9629
  %v9669 = vunpack.c.l.b16 %v9630
  %v9670 = vunpack.c.l.b16 %v9631
  %v9671 = vunpack.c.l.b16 %v9632
  %v9672 = vpack.c.b16 %v9657, %v9656
  %v9673 = vpack.c.b16 %v9659, %v9658
  %v9674 = vpack.c.b16 %v9661, %v9660
  %v9675 = vpack.c.b16 %v9663, %v9662
  %v9676 = vpack.c.b16 %v9665, %v9664
  %v9677 = vpack.c.b16 %v9667, %v9666
  %v9678 = vpack.c.b16 %v9669, %v9668
  %v9679 = vpack.c.b16 %v9671, %v9670
  %9688 = vmatprep.subr.bf16.mxu0 0
  %9689 = vmatpush1.bf16.msra.mxu0 %v9679
  %9690 = vmatprep.subr.bf16.mxu0 0
  %9691 = vmatpush1.bf16.msra.mxu0 %v9678
  %9692 = vmatprep.subr.bf16.mxu0 0
  %9693 = vmatpush1.bf16.msra.mxu0 %v9677
  %9694 = vmatprep.subr.bf16.mxu0 0
  %9695 = vmatpush1.bf16.msra.mxu0 %v9676
  %9696 = vmatprep.subr.bf16.mxu0 0
  %9697 = vmatpush1.bf16.msra.mxu0 %v9675
  %9698 = vmatprep.subr.bf16.mxu0 0
  %9699 = vmatpush1.bf16.msra.mxu0 %v9674
  %9700 = vmatprep.subr.bf16.mxu0 0
  %9701 = vmatpush1.bf16.msra.mxu0 %v9673
  %9702 = vmatprep.subr.bf16.mxu0 0
  %9703 = vmatpush1.bf16.msra.mxu0 %v9672
  %9704 = vmatprep.subr.bf16.mxu0 0
  %9705 = vmatpush2.bf16.msra.mxu0 0
  %9706 = vmatprep.subr.bf16.mxu0 0
  %9707 = vmatpush2.bf16.msra.mxu0 0
  %9708 = vmatprep.subr.bf16.mxu0 0
  %9709 = vmatpush2.bf16.msra.mxu0 0
  %9710 = vmatprep.subr.bf16.mxu0 0
  %9711 = vmatpush2.bf16.msra.mxu0 0
  %9712 = vmatprep.subr.bf16.mxu0 0
  %9713 = vmatpush2.bf16.msra.mxu0 0
  %9714 = vmatprep.subr.bf16.mxu0 0
  %9715 = vmatpush2.bf16.msra.mxu0 0
  %9716 = vmatprep.subr.bf16.mxu0 0
  %9717 = vmatpush2.bf16.msra.mxu0 0
  %9718 = vmatprep.subr.bf16.mxu0 0
  %9719 = vmatpush2.bf16.msra.mxu0 0
  %9720 = vmatprep.mubr.bf16.mxu0 0
  %9721 = vmatmul.mubr.bf16.gmra.mxu0 %v9616
  %v9722 = vpop.f32.mrf.mxu0
  %v9723 = vadd.f32 %v9638, %v9722
  %v9724 = vpop.f32.mrf.mxu0
  %v9725 = vpop.f32.mrf.mxu0
  %v9726 = vpop.f32.mrf.mxu0
  %9727 = vdwg.mxu0
  %v9728 = vlaneseq
  %v9729 = vand.u32 %v9728, 127
  %vm9730 = vcmp.lt.s32.totalorder %v9729, 10
  %v9731 = vsel %vm9730, %v9723, -1e+30
  %9732 = vmax.xlane.f32.xlu0 %v9731
  %v9733 = vpop.xlane.xlu0 %9732
  %v9734 = vsub.f32 %v9731, %v9733
  %v9735 = vmul.f32 %v9734, 1.442695
  %v9736 = vpow.pop %v9735
  %9737 = vadd.xlane.f32.xlu0 %v9736
  %v9738 = vpop.xlane.xlu0 %9737
  %v9739 = vlog2.pop %v9738
  %v9740 = vmul.f32 %v9739, 0.6931472
  %v9741 = vsub.f32 %v9734, %v9740
  %9742 = vst [vmem:[%s9] sm:$0xff] %v9741
  // Predicated region
  $region38: #{net_forward.1} parent=0 // pred_check
    _
  $region39: #{net_forward.1} parent=0 // pred_check_branch
    %9744 = sbr.rel (0) target = $region41
  $region40: #{net_forward.1} parent=0 // pred_region
    _
  $region41: #{net_forward.1} parent=0 // pred_fallthru
    _
  // Predicated region
  $region42: #{net_forward.1} parent=0 // pred_check
    _
  $region43: #{net_forward.1} parent=0 // pred_check_branch
    %9746 = sbr.rel (0) target = $region45
  $region44: #{net_forward.1} parent=0 // pred_region
    _
  $region45: #{net_forward.1} parent=0 // pred_fallthru
    _

</llo_original>
